<compile_context>
chip_gen: v7x
topology: tpu7x:2x2x1
jax: 0.10.0
libtpu: 0.0.40
codegen_flags: <defaults>
</compile_context>

<pallas_src>
import functools

import jax
import jax.numpy as jnp
from jax import lax
from jax.experimental import pallas as pl
from jax.experimental.pallas import tpu as pltpu

BN_EPS = 1e-5


# --------------------------------------------------------------------------- #
# Pass 1: 1x1x1 conv (row-tile matmul) + per-tile BN1 partial statistics.
# --------------------------------------------------------------------------- #
def _conv1x1_stats_kernel(x_ref, w_ref, y_ref, s_ref, q_ref):
    y = jnp.dot(x_ref[...], w_ref[...], preferred_element_type=jnp.float32)
    y_ref[...] = y
    s_ref[0] = jnp.sum(y, axis=0, keepdims=True)          # (1, C) partial sum
    q_ref[0] = jnp.sum(y * y, axis=0, keepdims=True)      # (1, C) partial sumsq


def conv1x1_with_stats(x2d, w, *, row_tile):
    M, K = x2d.shape
    C = w.shape[1]
    nt = M // row_tile
    return pl.pallas_call(
        _conv1x1_stats_kernel,
        out_shape=(jax.ShapeDtypeStruct((M, C), jnp.float32),
                   jax.ShapeDtypeStruct((nt, 1, C), jnp.float32),
                   jax.ShapeDtypeStruct((nt, 1, C), jnp.float32)),
        grid=(nt,),
        in_specs=[pl.BlockSpec((row_tile, K), lambda i: (i, 0)),
                  pl.BlockSpec((K, C), lambda i: (0, 0))],
        out_specs=(pl.BlockSpec((row_tile, C), lambda i: (i, 0)),
                   pl.BlockSpec((1, 1, C), lambda i: (i, 0, 0)),
                   pl.BlockSpec((1, 1, C), lambda i: (i, 0, 0))),
        compiler_params=pltpu.CompilerParams(
            dimension_semantics=("parallel",)),
    )(x2d, w)


# --------------------------------------------------------------------------- #
# Pass 2: fused BN1+ReLU (prev stage) -> 3x3x3 conv (halo'd VMEM slabs, no
#         HBM im2col) -> per-step BN2 partial statistics.
# Grid is (N, D); each step produces one (H, W, planes) output slab.
# --------------------------------------------------------------------------- #
def _bnrelu_conv3x3_stats_kernel(sc_ref, sh_ref, w2_ref, ring_ref,
                                 slab0_ref, slab1_ref, slab2_ref,
                                 y2_ref, s_ref, q_ref,
                                 *, num_d, H, W, planes):
    d = pl.program_id(1)

    scale = sc_ref[...]          # (1, 1, planes)  BN1 scale
    shift = sh_ref[...]          # (1, 1, planes)  BN1 shift
    ring = ring_ref[...]         # (H+2, W+2, planes) interior mask (H/W halo)

    acc = jnp.zeros((H, W, planes), jnp.float32)
    slab_refs = (slab0_ref, slab1_ref, slab2_ref)
    for kd in range(3):
        slab = slab_refs[kd][0]                              # (H+2, W+2, planes)
        # BN1 + ReLU fused on the loaded slab; zero the conv padding *after*
        # the nonlinearity (matches Conv3d(padding=1) on relu(bn(y1))).
        a1 = jnp.maximum(slab * scale + shift, 0.0) * ring
        if kd == 0:              # slab at padded depth d+0 is padding iff d == 0
            a1 = a1 * jnp.where(d >= 1, 1.0, 0.0)
        elif kd == 2:            # slab at padded depth d+2 is padding iff d == D-1
            a1 = a1 * jnp.where(d <= num_d - 2, 1.0, 0.0)
        for kh in range(3):
            for kw in range(3):
                patch = a1[kh:kh + H, kw:kw + W, :]          # (H, W, planes)
                base = (kd * 9 + kh * 3 + kw) * planes
                for ci in range(planes):
                    wrow = w2_ref[base + ci]                 # (1, 1, planes)
                    acc = acc + patch[:, :, ci:ci + 1] * wrow

    y2_ref[0] = acc
    s_ref[...] = jnp.sum(jnp.sum(acc, axis=0, keepdims=True),
                         axis=1, keepdims=True)
    q_ref[...] = jnp.sum(jnp.sum(acc * acc, axis=0, keepdims=True),
                         axis=1, keepdims=True)


def _slab_index_map(j, dp2, n, d):
    # Flattened (N*(D+2)) leading dim of the padded stage-1 output.
    return (n * dp2 + d + j, 0, 0, 0)


def bnrelu_conv3x3_with_stats(y1_pad_flat, scale1, shift1, w2b, ring,
                              *, N, D, H, W, planes):
    Hp, Wp = H + 2, W + 2
    kernel = functools.partial(_bnrelu_conv3x3_stats_kernel,
                               num_d=D, H=H, W=W, planes=planes)
    return pl.pallas_call(
        kernel,
        out_shape=(jax.ShapeDtypeStruct((N * D, H, W, planes), jnp.float32),
                   jax.ShapeDtypeStruct((N * D, 1, planes), jnp.float32),
                   jax.ShapeDtypeStruct((N * D, 1, planes), jnp.float32)),
        grid=(N, D),
        in_specs=[
            pl.BlockSpec((1, 1, planes), lambda n, d: (0, 0, 0)),
            pl.BlockSpec((1, 1, planes), lambda n, d: (0, 0, 0)),
            pl.BlockSpec((27 * planes, 1, 1, planes),
                         lambda n, d: (0, 0, 0, 0)),
            pl.BlockSpec((Hp, Wp, planes), lambda n, d: (0, 0, 0)),
            pl.BlockSpec((1, Hp, Wp, planes),
                         functools.partial(_slab_index_map, 0, D + 2)),
            pl.BlockSpec((1, Hp, Wp, planes),
                         functools.partial(_slab_index_map, 1, D + 2)),
            pl.BlockSpec((1, Hp, Wp, planes),
                         functools.partial(_slab_index_map, 2, D + 2)),
        ],
        out_specs=(
            pl.BlockSpec((1, H, W, planes), lambda n, d: (n * D + d, 0, 0, 0)),
            pl.BlockSpec((1, 1, planes), lambda n, d: (n * D + d, 0, 0)),
            pl.BlockSpec((1, 1, planes), lambda n, d: (n * D + d, 0, 0)),
        ),
        compiler_params=pltpu.CompilerParams(
            dimension_semantics=("parallel", "parallel")),
    )(scale1, shift1, w2b, ring, y1_pad_flat, y1_pad_flat, y1_pad_flat)


# --------------------------------------------------------------------------- #
# Pass 3 (stats only): BN2+ReLU -> 1x1x1 conv in VMEM -> BN3 partial stats.
# y3 is never written to HBM.
# --------------------------------------------------------------------------- #
def _bnrelu_conv1x1_stats_kernel(y_ref, sc_ref, sh_ref, w_ref, s_ref, q_ref):
    a = jnp.maximum(y_ref[...] * sc_ref[...] + sh_ref[...], 0.0)
    y = jnp.dot(a, w_ref[...], preferred_element_type=jnp.float32)
    s_ref[0] = jnp.sum(y, axis=0, keepdims=True)
    q_ref[0] = jnp.sum(y * y, axis=0, keepdims=True)


def bnrelu_conv1x1_stats(y2d, scale, shift, w, *, row_tile):
    M, K = y2d.shape
    C = w.shape[1]
    nt = M // row_tile
    return pl.pallas_call(
        _bnrelu_conv1x1_stats_kernel,
        out_shape=(jax.ShapeDtypeStruct((nt, 1, C), jnp.float32),
                   jax.ShapeDtypeStruct((nt, 1, C), jnp.float32)),
        grid=(nt,),
        in_specs=[pl.BlockSpec((row_tile, K), lambda i: (i, 0)),
                  pl.BlockSpec((1, K), lambda i: (0, 0)),
                  pl.BlockSpec((1, K), lambda i: (0, 0)),
                  pl.BlockSpec((K, C), lambda i: (0, 0))],
        out_specs=(pl.BlockSpec((1, 1, C), lambda i: (i, 0, 0)),
                   pl.BlockSpec((1, 1, C), lambda i: (i, 0, 0))),
        compiler_params=pltpu.CompilerParams(
            dimension_semantics=("parallel",)),
    )(y2d, scale, shift, w)


# --------------------------------------------------------------------------- #
# Pass 4: BN2+ReLU -> 1x1x1 conv -> BN3 -> residual add -> ReLU (fully fused).
# --------------------------------------------------------------------------- #
def _final_fused_kernel(y2_ref, x_ref, sc2_ref, sh2_ref, w3_ref,
                        sc3_ref, sh3_ref, o_ref):
    a2 = jnp.maximum(y2_ref[...] * sc2_ref[...] + sh2_ref[...], 0.0)
    y3 = jnp.dot(a2, w3_ref[...], preferred_element_type=jnp.float32)
    o_ref[...] = jnp.maximum(y3 * sc3_ref[...] + sh3_ref[...] + x_ref[...], 0.0)


def final_fused(y2d, x2d, sc2, sh2, w3, sc3, sh3, *, row_tile):
    M, K = y2d.shape
    C = w3.shape[1]
    return pl.pallas_call(
        _final_fused_kernel,
        out_shape=jax.ShapeDtypeStruct((M, C), jnp.float32),
        grid=(M // row_tile,),
        in_specs=[pl.BlockSpec((row_tile, K), lambda i: (i, 0)),
                  pl.BlockSpec((row_tile, C), lambda i: (i, 0)),
                  pl.BlockSpec((1, K), lambda i: (0, 0)),
                  pl.BlockSpec((1, K), lambda i: (0, 0)),
                  pl.BlockSpec((K, C), lambda i: (0, 0)),
                  pl.BlockSpec((1, C), lambda i: (0, 0)),
                  pl.BlockSpec((1, C), lambda i: (0, 0))],
        out_specs=pl.BlockSpec((row_tile, C), lambda i: (i, 0)),
        compiler_params=pltpu.CompilerParams(
            dimension_semantics=("parallel",)),
    )(y2d, x2d, sc2, sh2, w3, sc3, sh3)


# ------------------------------ Glue (plain JAX) ---------------------------- #

def _bn_affine(s, q, gamma, beta, count):
    """Fold training-mode BN (batch stats, biased var) into scale/shift."""
    mean = s / count
    var = jnp.maximum(q / count - mean * mean, 0.0)
    scale = gamma * lax.rsqrt(var + BN_EPS)
    shift = beta - mean * scale
    return scale, shift


def _pick_row_tile(m, preferred):
    t = min(preferred, m)
    while t >= 8:
        if m % t == 0:
            return t
        t //= 2
    return m


def bottleneck_forward(x_ndhwc, params, *, row_tile=512):
    """Pallas implementation of Bottleneck.forward (stride=1, no downsample,
    drop_path=0 -> identity)."""
    N, D, H, W, Cin = x_ndhwc.shape
    M = N * D * H * W
    planes = params["w1"].shape[1]
    cout = params["w3"].shape[1]
    assert cout == Cin, "identity residual requires Cout == Cin"
    row_tile = _pick_row_tile(M, row_tile)

    x2d = x_ndhwc.reshape(M, Cin)

    # Stage 1: 1x1x1 conv + BN1 partial statistics (BN1+ReLU deferred / fused
    # into stage 2 so y1 crosses HBM only once).
    y1, s1p, q1p = conv1x1_with_stats(x2d, params["w1"], row_tile=row_tile)
    sc1, sh1 = _bn_affine(jnp.sum(s1p, axis=0), jnp.sum(q1p, axis=0),
                          params["g1"], params["b1"], M)

    # Stage 2: fused BN1+ReLU -> 3x3x3 conv (halo'd slabs) + BN2 statistics.
    Hp, Wp = H + 2, W + 2
    y1p = jnp.pad(y1.reshape(N, D, H, W, planes),
                  ((0, 0), (1, 1), (1, 1), (1, 1), (0, 0)))
    y1p = y1p.reshape(N * (D + 2), Hp, Wp, planes)
    hh = jnp.arange(Hp).reshape(Hp, 1, 1)
    ww = jnp.arange(Wp).reshape(1, Wp, 1)
    ring = jnp.broadcast_to(
        ((hh >= 1) & (hh <= H) & (ww >= 1) & (ww <= W)).astype(jnp.float32),
        (Hp, Wp, planes))
    w2b = params["w2"].reshape(27 * planes, 1, 1, planes)
    y2, s2p, q2p = bnrelu_conv3x3_with_stats(
        y1p, sc1.reshape(1, 1, planes), sh1.reshape(1, 1, planes), w2b, ring,
        N=N, D=D, H=H, W=W, planes=planes)
    sc2, sh2 = _bn_affine(jnp.sum(s2p, axis=0), jnp.sum(q2p, axis=0),
                          params["g2"], params["b2"], M)

    # Stage 3: stats-only pass (BN2+ReLU -> conv3 in VMEM -> BN3 partial
    # sums).  y3 is never materialized in HBM.
    y2_2d = y2.reshape(M, planes)
    s3p, q3p = bnrelu_conv1x1_stats(y2_2d, sc2, sh2, params["w3"],
                                    row_tile=row_tile)
    sc3, sh3 = _bn_affine(jnp.sum(s3p, axis=0), jnp.sum(q3p, axis=0),
                          params["g3"], params["b3"], M)

    # Stage 4: BN2+ReLU -> conv3 -> BN3 -> residual add -> ReLU, fully fused.
    out2d = final_fused(y2_2d, x2d, sc2, sh2, params["w3"], sc3, sh3,
                        row_tile=row_tile)
    return out2d.reshape(N, D, H, W, cout)


# ------------------------------ Reference (JAX) ----------------------------- #

def _bn_ref(y, gamma, beta):
    mean = jnp.mean(y, axis=0, keepdims=True)
    var = jnp.mean((y - mean) ** 2, axis=0, keepdims=True)
    return (y - mean) * lax.rsqrt(var + BN_EPS) * gamma + beta


def bottleneck_reference(x_ndhwc, params):
    N, D, H, W, Cin = x_ndhwc.shape
    M = N * D * H * W
    planes = params["w1"].shape[1]

    x2d = x_ndhwc.reshape(M, Cin)
    a1 = jnp.maximum(_bn_ref(x2d @ params["w1"], params["g1"], params["b1"]), 0.0)

    a1_5d = a1.reshape(N, D, H, W, planes)
    w2_dhwio = params["w2"].reshape(3, 3, 3, planes, planes)
    c2 = lax.conv_general_dilated(
        a1_5d, w2_dhwio, window_strides=(1, 1, 1), padding="SAME",
        dimension_numbers=("NDHWC", "DHWIO", "NDHWC"))
    a2 = jnp.maximum(_bn_ref(c2.reshape(M, planes), params["g2"], params["b2"]), 0.0)

    out = jnp.maximum(
        _bn_ref(a2 @ params["w3"], params["g3"], params["b3"]) + x2d, 0.0)
    return out.reshape(N, D, H, W, params["w3"].shape[1])


# ----------------------------------- Main ----------------------------------- #

if __name__ == "__main__":
    # inplanes=16, planes=4, num_expansion=4, stride=1, downsample=None,
    # drop_path=0.0 -> residual shape matches output.
    N, D, H, W = 2, 4, 8, 8
    inplanes, planes, num_expansion = 16, 4, 4
    cout = planes * num_expansion           # == inplanes -> identity residual

    key = jax.random.PRNGKey(0)
    keys = jax.random.split(key, 10)

    x = jax.random.normal(keys[0], (N, D, H, W, inplanes), dtype=jnp.float32)

    params = {
        # Conv3d(inplanes, planes, 1, bias=False): weight stored (Cin, Cout)
        "w1": jax.random.normal(keys[1], (inplanes, planes), jnp.float32) * 0.1,
        # Conv3d(planes, planes, 3, pad=1, bias=False): (kd,kh,kw,Cin,Cout)->(27*Cin,Cout)
        "w2": (jax.random.normal(keys[2], (3, 3, 3, planes, planes), jnp.float32) * 0.1
               ).reshape(27 * planes, planes),
        # Conv3d(planes, planes*expansion, 1, bias=False): (Cin, Cout)
        "w3": jax.random.normal(keys[3], (planes, cout), jnp.float32) * 0.1,
        # BatchNorm3d affine params (gamma, beta), shaped (1, C).
        "g1": 1.0 + 0.1 * jax.random.normal(keys[4], (1, planes), jnp.float32),
        "b1": 0.1 * jax.random.normal(keys[5], (1, planes), jnp.float32),
        "g2": 1.0 + 0.1 * jax.random.normal(keys[6], (1, planes), jnp.float32),
        "b2": 0.1 * jax.random.normal(keys[7], (1, planes), jnp.float32),
        "g3": 1.0 + 0.1 * jax.random.normal(keys[8], (1, cout), jnp.float32),
        "b3": 0.1 * jax.random.normal(keys[9], (1, cout), jnp.float32),
    }

    # row_tile=128 -> 4 grid steps at this toy M=512 (exercises the tiled
    # partial-stats path); use 512-1024 for realistic activation sizes.
    fwd = jax.jit(functools.partial(bottleneck_forward, row_tile=128))
    out = jax.block_until_ready(fwd(x, params))

    ref = bottleneck_reference(x, params)
    assert out.shape == (N, D, H, W, cout), out.shape
    max_err = float(jnp.max(jnp.abs(out - ref)))
    assert jnp.allclose(out, ref, atol=1e-3, rtol=1e-3), max_err

    print("KERNEL_OK")
</pallas_src>

<mosaic_0001>
module attributes {stable_mosaic.version = 11 : i64} {
  func.func @_conv1x1_stats_kernel(%arg0: i32, %arg1: memref<128x16xf32, #tpu.memory_space<vmem>>, %arg2: memref<16x4xf32, #tpu.memory_space<vmem>>, %arg3: memref<128x4xf32, #tpu.memory_space<vmem>>, %arg4: memref<1x1x4xf32, #tpu.memory_space<vmem>>, %arg5: memref<1x1x4xf32, #tpu.memory_space<vmem>>) attributes {dimension_semantics = [#tpu.dimension_semantics<parallel>], iteration_bounds = array<i64: 4>, scalar_prefetch = 0 : i64, scratch_operands = 0 : i64, tpu.core_type = #tpu.core_type<tc>, window_params = [{transform_indices = @transform_0, window_bounds = array<i64: 128, 16>}, {pipeline_mode = #tpu.pipeline_mode<synchronous>, transform_indices = @transform_1, window_bounds = array<i64: 16, 4>}, {transform_indices = @transform_2, window_bounds = array<i64: 128, 4>}, {transform_indices = @transform_3, window_bounds = array<i64: 1, 1, 4>}, {transform_indices = @transform_4, window_bounds = array<i64: 1, 1, 4>}]} {
    %c0 = arith.constant 0 : index
    %c0_0 = arith.constant 0 : index
    %0 = vector.load %arg1[%c0, %c0_0] : memref<128x16xf32, #tpu.memory_space<vmem>>, vector<128x16xf32>
    %c0_1 = arith.constant 0 : index
    %c0_2 = arith.constant 0 : index
    %1 = vector.load %arg2[%c0_1, %c0_2] : memref<16x4xf32, #tpu.memory_space<vmem>>, vector<16x4xf32>
    %cst = arith.constant dense<0.000000e+00> : vector<128x4xf32>
    %2 = tpu.matmul %0, %1, %cst {dimension_numbers = #tpu.dot_dimension_numbers<[1], [0], [0], [1], [0, 0, 1, 1], [], []>} : vector<128x16xf32>, vector<16x4xf32>, vector<128x4xf32> -> vector<128x4xf32>
    %c0_3 = arith.constant 0 : index
    %c0_4 = arith.constant 0 : index
    %3 = vector.load %arg3[%c0_3, %c0_4] : memref<128x4xf32, #tpu.memory_space<vmem>>, vector<128x4xf32>
    tpu.vector_store %arg3[%c0_3, %c0_4], %2 {strides = array<i32>} : memref<128x4xf32, #tpu.memory_space<vmem>>, vector<128x4xf32>,
    %cst_5 = arith.constant dense<0.000000e+00> : vector<4xf32>
    %4 = vector.multi_reduction <add>, %2, %cst_5 [0] : vector<128x4xf32> to vector<4xf32>
    %5 = vector.shape_cast %4 : vector<4xf32> to vector<1x4xf32>
    %c0_6 = arith.constant 0 : index
    %c0_7 = arith.constant 0 : index
    %c0_8 = arith.constant 0 : index
    %6 = vector.load %arg4[%c0_6, %c0_7, %c0_8] : memref<1x1x4xf32, #tpu.memory_space<vmem>>, vector<1x1x4xf32>
    %7 = vector.shape_cast %6 : vector<1x1x4xf32> to vector<1x4xf32>
    %8 = vector.shape_cast %5 : vector<1x4xf32> to vector<1x1x4xf32>
    tpu.vector_store %arg4[%c0_6, %c0_7, %c0_8], %8 {strides = array<i32>} : memref<1x1x4xf32, #tpu.memory_space<vmem>>, vector<1x1x4xf32>,
    %9 = arith.mulf %2, %2 : vector<128x4xf32>
    %cst_9 = arith.constant dense<0.000000e+00> : vector<4xf32>
    %10 = vector.multi_reduction <add>, %9, %cst_9 [0] : vector<128x4xf32> to vector<4xf32>
    %11 = vector.shape_cast %10 : vector<4xf32> to vector<1x4xf32>
    %c0_10 = arith.constant 0 : index
    %c0_11 = arith.constant 0 : index
    %c0_12 = arith.constant 0 : index
    %12 = vector.load %arg5[%c0_10, %c0_11, %c0_12] : memref<1x1x4xf32, #tpu.memory_space<vmem>>, vector<1x1x4xf32>
    %13 = vector.shape_cast %12 : vector<1x1x4xf32> to vector<1x4xf32>
    %14 = vector.shape_cast %11 : vector<1x4xf32> to vector<1x1x4xf32>
    tpu.vector_store %arg5[%c0_10, %c0_11, %c0_12], %14 {strides = array<i32>} : memref<1x1x4xf32, #tpu.memory_space<vmem>>, vector<1x1x4xf32>,
    return
  }
  func.func @transform_0(%arg0: i32) -> (i32, i32) {
    %c0_i32 = arith.constant 0 : i32
    %c0_i32_0 = arith.constant 0 : i32
    return %arg0, %c0_i32 : i32, i32
  }
  func.func @transform_1(%arg0: i32) -> (i32, i32) {
    %c0_i32 = arith.constant 0 : i32
    %c0_i32_0 = arith.constant 0 : i32
    %c0_i32_1 = arith.constant 0 : i32
    return %c0_i32, %c0_i32_0 : i32, i32
  }
  func.func @transform_2(%arg0: i32) -> (i32, i32) {
    %c0_i32 = arith.constant 0 : i32
    %c0_i32_0 = arith.constant 0 : i32
    return %arg0, %c0_i32 : i32, i32
  }
  func.func @transform_3(%arg0: i32) -> (i32, i32, i32) {
    %c0_i32 = arith.constant 0 : i32
    %c0_i32_0 = arith.constant 0 : i32
    %c0_i32_1 = arith.constant 0 : i32
    return %arg0, %c0_i32, %c0_i32_0 : i32, i32, i32
  }
  func.func @transform_4(%arg0: i32) -> (i32, i32, i32) {
    %c0_i32 = arith.constant 0 : i32
    %c0_i32_0 = arith.constant 0 : i32
    %c0_i32_1 = arith.constant 0 : i32
    return %arg0, %c0_i32, %c0_i32_0 : i32, i32, i32
  }
}

module attributes {stable_mosaic.version = 11 : i64} {
  func.func @_bnrelu_conv1x1_stats_kernel(%arg0: i32, %arg1: memref<128x4xf32, #tpu.memory_space<vmem>>, %arg2: memref<1x4xf32, #tpu.memory_space<vmem>>, %arg3: memref<1x4xf32, #tpu.memory_space<vmem>>, %arg4: memref<4x16xf32, #tpu.memory_space<vmem>>, %arg5: memref<1x1x16xf32, #tpu.memory_space<vmem>>, %arg6: memref<1x1x16xf32, #tpu.memory_space<vmem>>) attributes {dimension_semantics = [#tpu.dimension_semantics<parallel>], iteration_bounds = array<i64: 4>, scalar_prefetch = 0 : i64, scratch_operands = 0 : i64, tpu.core_type = #tpu.core_type<tc>, window_params = [{transform_indices = @transform_0, window_bounds = array<i64: 128, 4>}, {pipeline_mode = #tpu.pipeline_mode<synchronous>, transform_indices = @transform_1, window_bounds = array<i64: 1, 4>}, {pipeline_mode = #tpu.pipeline_mode<synchronous>, transform_indices = @transform_2, window_bounds = array<i64: 1, 4>}, {pipeline_mode = #tpu.pipeline_mode<synchronous>, transform_indices = @transform_3, window_bounds = array<i64: 4, 16>}, {transform_indices = @transform_4, window_bounds = array<i64: 1, 1, 16>}, {transform_indices = @transform_5, window_bounds = array<i64: 1, 1, 16>}]} {
    %c0 = arith.constant 0 : index
    %c0_0 = arith.constant 0 : index
    %0 = vector.load %arg1[%c0, %c0_0] : memref<128x4xf32, #tpu.memory_space<vmem>>, vector<128x4xf32>
    %c0_1 = arith.constant 0 : index
    %c0_2 = arith.constant 0 : index
    %1 = vector.load %arg2[%c0_1, %c0_2] : memref<1x4xf32, #tpu.memory_space<vmem>>, vector<1x4xf32>
    %2 = vector.broadcast %1 : vector<1x4xf32> to vector<128x4xf32>
    %3 = arith.mulf %0, %2 : vector<128x4xf32>
    %c0_3 = arith.constant 0 : index
    %c0_4 = arith.constant 0 : index
    %4 = vector.load %arg3[%c0_3, %c0_4] : memref<1x4xf32, #tpu.memory_space<vmem>>, vector<1x4xf32>
    %5 = vector.broadcast %4 : vector<1x4xf32> to vector<128x4xf32>
    %6 = arith.addf %3, %5 : vector<128x4xf32>
    %cst = arith.constant 0.000000e+00 : f32
    %7 = vector.broadcast %cst : f32 to vector<128x4xf32>
    %8 = arith.maximumf %6, %7 : vector<128x4xf32>
    %c0_5 = arith.constant 0 : index
    %c0_6 = arith.constant 0 : index
    %9 = vector.load %arg4[%c0_5, %c0_6] : memref<4x16xf32, #tpu.memory_space<vmem>>, vector<4x16xf32>
    %cst_7 = arith.constant dense<0.000000e+00> : vector<128x16xf32>
    %10 = tpu.matmul %8, %9, %cst_7 {dimension_numbers = #tpu.dot_dimension_numbers<[1], [0], [0], [1], [0, 0, 1, 1], [], []>} : vector<128x4xf32>, vector<4x16xf32>, vector<128x16xf32> -> vector<128x16xf32>
    %cst_8 = arith.constant dense<0.000000e+00> : vector<16xf32>
    %11 = vector.multi_reduction <add>, %10, %cst_8 [0] : vector<128x16xf32> to vector<16xf32>
    %12 = vector.shape_cast %11 : vector<16xf32> to vector<1x16xf32>
    %c0_9 = arith.constant 0 : index
    %c0_10 = arith.constant 0 : index
    %c0_11 = arith.constant 0 : index
    %13 = vector.load %arg5[%c0_9, %c0_10, %c0_11] : memref<1x1x16xf32, #tpu.memory_space<vmem>>, vector<1x1x16xf32>
    %14 = vector.shape_cast %13 : vector<1x1x16xf32> to vector<1x16xf32>
    %15 = vector.shape_cast %12 : vector<1x16xf32> to vector<1x1x16xf32>
    tpu.vector_store %arg5[%c0_9, %c0_10, %c0_11], %15 {strides = array<i32>} : memref<1x1x16xf32, #tpu.memory_space<vmem>>, vector<1x1x16xf32>,
    %16 = arith.mulf %10, %10 : vector<128x16xf32>
    %cst_12 = arith.constant dense<0.000000e+00> : vector<16xf32>
    %17 = vector.multi_reduction <add>, %16, %cst_12 [0] : vector<128x16xf32> to vector<16xf32>
    %18 = vector.shape_cast %17 : vector<16xf32> to vector<1x16xf32>
    %c0_13 = arith.constant 0 : index
    %c0_14 = arith.constant 0 : index
    %c0_15 = arith.constant 0 : index
    %19 = vector.load %arg6[%c0_13, %c0_14, %c0_15] : memref<1x1x16xf32, #tpu.memory_space<vmem>>, vector<1x1x16xf32>
    %20 = vector.shape_cast %19 : vector<1x1x16xf32> to vector<1x16xf32>
    %21 = vector.shape_cast %18 : vector<1x16xf32> to vector<1x1x16xf32>
    tpu.vector_store %arg6[%c0_13, %c0_14, %c0_15], %21 {strides = array<i32>} : memref<1x1x16xf32, #tpu.memory_space<vmem>>, vector<1x1x16xf32>,
    return
  }
  func.func @transform_0(%arg0: i32) -> (i32, i32) {
    %c0_i32 = arith.constant 0 : i32
    %c0_i32_0 = arith.constant 0 : i32
    return %arg0, %c0_i32 : i32, i32
  }
  func.func @transform_1(%arg0: i32) -> (i32, i32) {
    %c0_i32 = arith.constant 0 : i32
    %c0_i32_0 = arith.constant 0 : i32
    %c0_i32_1 = arith.constant 0 : i32
    return %c0_i32, %c0_i32_0 : i32, i32
  }
  func.func @transform_2(%arg0: i32) -> (i32, i32) {
    %c0_i32 = arith.constant 0 : i32
    %c0_i32_0 = arith.constant 0 : i32
    %c0_i32_1 = arith.constant 0 : i32
    return %c0_i32, %c0_i32_0 : i32, i32
  }
  func.func @transform_3(%arg0: i32) -> (i32, i32) {
    %c0_i32 = arith.constant 0 : i32
    %c0_i32_0 = arith.constant 0 : i32
    %c0_i32_1 = arith.constant 0 : i32
    return %c0_i32, %c0_i32_0 : i32, i32
  }
  func.func @transform_4(%arg0: i32) -> (i32, i32, i32) {
    %c0_i32 = arith.constant 0 : i32
    %c0_i32_0 = arith.constant 0 : i32
    %c0_i32_1 = arith.constant 0 : i32
    return %arg0, %c0_i32, %c0_i32_0 : i32, i32, i32
  }
  func.func @transform_5(%arg0: i32) -> (i32, i32, i32) {
    %c0_i32 = arith.constant 0 : i32
    %c0_i32_0 = arith.constant 0 : i32
    %c0_i32_1 = arith.constant 0 : i32
    return %arg0, %c0_i32, %c0_i32_0 : i32, i32, i32
  }
}

module attributes {stable_mosaic.version = 11 : i64} {
  func.func @_bnrelu_conv3x3_stats_kernel(%arg0: i32, %arg1: i32, %arg2: memref<1x1x4xf32, #tpu.memory_space<vmem>>, %arg3: memref<1x1x4xf32, #tpu.memory_space<vmem>>, %arg4: memref<108x1x1x4xf32, #tpu.memory_space<vmem>>, %arg5: memref<10x10x4xf32, #tpu.memory_space<vmem>>, %arg6: memref<1x10x10x4xf32, #tpu.memory_space<vmem>>, %arg7: memref<1x10x10x4xf32, #tpu.memory_space<vmem>>, %arg8: memref<1x10x10x4xf32, #tpu.memory_space<vmem>>, %arg9: memref<1x8x8x4xf32, #tpu.memory_space<vmem>>, %arg10: memref<1x1x4xf32, #tpu.memory_space<vmem>>, %arg11: memref<1x1x4xf32, #tpu.memory_space<vmem>>) attributes {dimension_semantics = [#tpu.dimension_semantics<parallel>, #tpu.dimension_semantics<parallel>], iteration_bounds = array<i64: 2, 4>, scalar_prefetch = 0 : i64, scratch_operands = 0 : i64, tpu.core_type = #tpu.core_type<tc>, window_params = [{pipeline_mode = #tpu.pipeline_mode<synchronous>, transform_indices = @transform_0, window_bounds = array<i64: 1, 1, 4>}, {pipeline_mode = #tpu.pipeline_mode<synchronous>, transform_indices = @transform_1, window_bounds = array<i64: 1, 1, 4>}, {pipeline_mode = #tpu.pipeline_mode<synchronous>, transform_indices = @transform_2, window_bounds = array<i64: 108, 1, 1, 4>}, {pipeline_mode = #tpu.pipeline_mode<synchronous>, transform_indices = @transform_3, window_bounds = array<i64: 10, 10, 4>}, {transform_indices = @transform_4, window_bounds = array<i64: 1, 10, 10, 4>}, {transform_indices = @transform_5, window_bounds = array<i64: 1, 10, 10, 4>}, {transform_indices = @transform_6, window_bounds = array<i64: 1, 10, 10, 4>}, {transform_indices = @transform_7, window_bounds = array<i64: 1, 8, 8, 4>}, {transform_indices = @transform_8, window_bounds = array<i64: 1, 1, 4>}, {transform_indices = @transform_9, window_bounds = array<i64: 1, 1, 4>}]} {
    %c0 = arith.constant 0 : index
    %c0_0 = arith.constant 0 : index
    %c0_1 = arith.constant 0 : index
    %0 = vector.load %arg2[%c0, %c0_0, %c0_1] : memref<1x1x4xf32, #tpu.memory_space<vmem>>, vector<1x1x4xf32>
    %c0_2 = arith.constant 0 : index
    %c0_3 = arith.constant 0 : index
    %c0_4 = arith.constant 0 : index
    %1 = vector.load %arg3[%c0_2, %c0_3, %c0_4] : memref<1x1x4xf32, #tpu.memory_space<vmem>>, vector<1x1x4xf32>
    %c0_5 = arith.constant 0 : index
    %c0_6 = arith.constant 0 : index
    %c0_7 = arith.constant 0 : index
    %2 = vector.load %arg5[%c0_5, %c0_6, %c0_7] : memref<10x10x4xf32, #tpu.memory_space<vmem>>, vector<10x10x4xf32>
    %cst = arith.constant 0.000000e+00 : f32
    %3 = vector.broadcast %cst : f32 to vector<8x8x4xf32>
    %c0_8 = arith.constant 0 : index
    %c0_9 = arith.constant 0 : index
    %c0_10 = arith.constant 0 : index
    %c0_11 = arith.constant 0 : index
    %4 = vector.load %arg6[%c0_8, %c0_9, %c0_10, %c0_11] : memref<1x10x10x4xf32, #tpu.memory_space<vmem>>, vector<1x10x10x4xf32>
    %5 = vector.shape_cast %4 : vector<1x10x10x4xf32> to vector<10x10x4xf32>
    %6 = vector.broadcast %0 : vector<1x1x4xf32> to vector<10x10x4xf32>
    %7 = arith.mulf %5, %6 : vector<10x10x4xf32>
    %8 = vector.broadcast %1 : vector<1x1x4xf32> to vector<10x10x4xf32>
    %9 = arith.addf %7, %8 : vector<10x10x4xf32>
    %cst_12 = arith.constant 0.000000e+00 : f32
    %10 = vector.broadcast %cst_12 : f32 to vector<10x10x4xf32>
    %11 = arith.maximumf %9, %10 : vector<10x10x4xf32>
    %12 = arith.mulf %11, %2 : vector<10x10x4xf32>
    %c1_i32 = arith.constant 1 : i32
    %13 = arith.cmpi sge, %arg1, %c1_i32 : i32
    %cst_13 = arith.constant 1.000000e+00 : f32
    %cst_14 = arith.constant 0.000000e+00 : f32
    %14 = arith.select %13, %cst_13, %cst_14 : f32
    %15 = vector.broadcast %14 : f32 to vector<10x10x4xf32>
    %16 = arith.mulf %12, %15 : vector<10x10x4xf32>
    %17 = vector.extract_strided_slice %16 {offsets = [0, 0, 0], sizes = [8, 8, 4], strides = [1, 1, 1]} : vector<10x10x4xf32> to vector<8x8x4xf32>
    %c0_15 = arith.constant 0 : index
    %c0_16 = arith.constant 0 : index
    %c0_17 = arith.constant 0 : index
    %c0_18 = arith.constant 0 : index
    %18 = vector.load %arg4[%c0_15, %c0_16, %c0_17, %c0_18] : memref<108x1x1x4xf32, #tpu.memory_space<vmem>>, vector<1x1x1x4xf32>
    %19 = vector.shape_cast %18 : vector<1x1x1x4xf32> to vector<1x1x4xf32>
    %20 = vector.extract_strided_slice %17 {offsets = [0, 0, 0], sizes = [8, 8, 1], strides = [1, 1, 1]} : vector<8x8x4xf32> to vector<8x8x1xf32>
    %21 = vector.broadcast %20 : vector<8x8x1xf32> to vector<8x8x4xf32>
    %22 = vector.broadcast %19 : vector<1x1x4xf32> to vector<8x8x4xf32>
    %23 = arith.mulf %21, %22 : vector<8x8x4xf32>
    %24 = arith.addf %3, %23 : vector<8x8x4xf32>
    %c1 = arith.constant 1 : index
    %c0_19 = arith.constant 0 : index
    %c0_20 = arith.constant 0 : index
    %c0_21 = arith.constant 0 : index
    %25 = vector.load %arg4[%c1, %c0_19, %c0_20, %c0_21] : memref<108x1x1x4xf32, #tpu.memory_space<vmem>>, vector<1x1x1x4xf32>
    %26 = vector.shape_cast %25 : vector<1x1x1x4xf32> to vector<1x1x4xf32>
    %27 = vector.extract_strided_slice %17 {offsets = [0, 0, 1], sizes = [8, 8, 1], strides = [1, 1, 1]} : vector<8x8x4xf32> to vector<8x8x1xf32>
    %28 = vector.broadcast %27 : vector<8x8x1xf32> to vector<8x8x4xf32>
    %29 = vector.broadcast %26 : vector<1x1x4xf32> to vector<8x8x4xf32>
    %30 = arith.mulf %28, %29 : vector<8x8x4xf32>
    %31 = arith.addf %24, %30 : vector<8x8x4xf32>
    %c2 = arith.constant 2 : index
    %c0_22 = arith.constant 0 : index
    %c0_23 = arith.constant 0 : index
    %c0_24 = arith.constant 0 : index
    %32 = vector.load %arg4[%c2, %c0_22, %c0_23, %c0_24] : memref<108x1x1x4xf32, #tpu.memory_space<vmem>>, vector<1x1x1x4xf32>
    %33 = vector.shape_cast %32 : vector<1x1x1x4xf32> to vector<1x1x4xf32>
    %34 = vector.extract_strided_slice %17 {offsets = [0, 0, 2], sizes = [8, 8, 1], strides = [1, 1, 1]} : vector<8x8x4xf32> to vector<8x8x1xf32>
    %35 = vector.broadcast %34 : vector<8x8x1xf32> to vector<8x8x4xf32>
    %36 = vector.broadcast %33 : vector<1x1x4xf32> to vector<8x8x4xf32>
    %37 = arith.mulf %35, %36 : vector<8x8x4xf32>
    %38 = arith.addf %31, %37 : vector<8x8x4xf32>
    %c3 = arith.constant 3 : index
    %c0_25 = arith.constant 0 : index
    %c0_26 = arith.constant 0 : index
    %c0_27 = arith.constant 0 : index
    %39 = vector.load %arg4[%c3, %c0_25, %c0_26, %c0_27] : memref<108x1x1x4xf32, #tpu.memory_space<vmem>>, vector<1x1x1x4xf32>
    %40 = vector.shape_cast %39 : vector<1x1x1x4xf32> to vector<1x1x4xf32>
    %41 = vector.extract_strided_slice %17 {offsets = [0, 0, 3], sizes = [8, 8, 1], strides = [1, 1, 1]} : vector<8x8x4xf32> to vector<8x8x1xf32>
    %42 = vector.broadcast %41 : vector<8x8x1xf32> to vector<8x8x4xf32>
    %43 = vector.broadcast %40 : vector<1x1x4xf32> to vector<8x8x4xf32>
    %44 = arith.mulf %42, %43 : vector<8x8x4xf32>
    %45 = arith.addf %38, %44 : vector<8x8x4xf32>
    %46 = vector.extract_strided_slice %16 {offsets = [0, 1, 0], sizes = [8, 8, 4], strides = [1, 1, 1]} : vector<10x10x4xf32> to vector<8x8x4xf32>
    %c4 = arith.constant 4 : index
    %c0_28 = arith.constant 0 : index
    %c0_29 = arith.constant 0 : index
    %c0_30 = arith.constant 0 : index
    %47 = vector.load %arg4[%c4, %c0_28, %c0_29, %c0_30] : memref<108x1x1x4xf32, #tpu.memory_space<vmem>>, vector<1x1x1x4xf32>
    %48 = vector.shape_cast %47 : vector<1x1x1x4xf32> to vector<1x1x4xf32>
    %49 = vector.extract_strided_slice %46 {offsets = [0, 0, 0], sizes = [8, 8, 1], strides = [1, 1, 1]} : vector<8x8x4xf32> to vector<8x8x1xf32>
    %50 = vector.broadcast %49 : vector<8x8x1xf32> to vector<8x8x4xf32>
    %51 = vector.broadcast %48 : vector<1x1x4xf32> to vector<8x8x4xf32>
    %52 = arith.mulf %50, %51 : vector<8x8x4xf32>
    %53 = arith.addf %45, %52 : vector<8x8x4xf32>
    %c5 = arith.constant 5 : index
    %c0_31 = arith.constant 0 : index
    %c0_32 = arith.constant 0 : index
    %c0_33 = arith.constant 0 : index
    %54 = vector.load %arg4[%c5, %c0_31, %c0_32, %c0_33] : memref<108x1x1x4xf32, #tpu.memory_space<vmem>>, vector<1x1x1x4xf32>
    %55 = vector.shape_cast %54 : vector<1x1x1x4xf32> to vector<1x1x4xf32>
    %56 = vector.extract_strided_slice %46 {offsets = [0, 0, 1], sizes = [8, 8, 1], strides = [1, 1, 1]} : vector<8x8x4xf32> to vector<8x8x1xf32>
    %57 = vector.broadcast %56 : vector<8x8x1xf32> to vector<8x8x4xf32>
    %58 = vector.broadcast %55 : vector<1x1x4xf32> to vector<8x8x4xf32>
    %59 = arith.mulf %57, %58 : vector<8x8x4xf32>
    %60 = arith.addf %53, %59 : vector<8x8x4xf32>
    %c6 = arith.constant 6 : index
    %c0_34 = arith.constant 0 : index
    %c0_35 = arith.constant 0 : index
    %c0_36 = arith.constant 0 : index
    %61 = vector.load %arg4[%c6, %c0_34, %c0_35, %c0_36] : memref<108x1x1x4xf32, #tpu.memory_space<vmem>>, vector<1x1x1x4xf32>
    %62 = vector.shape_cast %61 : vector<1x1x1x4xf32> to vector<1x1x4xf32>
    %63 = vector.extract_strided_slice %46 {offsets = [0, 0, 2], sizes = [8, 8, 1], strides = [1, 1, 1]} : vector<8x8x4xf32> to vector<8x8x1xf32>
    %64 = vector.broadcast %63 : vector<8x8x1xf32> to vector<8x8x4xf32>
    %65 = vector.broadcast %62 : vector<1x1x4xf32> to vector<8x8x4xf32>
    %66 = arith.mulf %64, %65 : vector<8x8x4xf32>
    %67 = arith.addf %60, %66 : vector<8x8x4xf32>
    %c7 = arith.constant 7 : index
    %c0_37 = arith.constant 0 : index
    %c0_38 = arith.constant 0 : index
    %c0_39 = arith.constant 0 : index
    %68 = vector.load %arg4[%c7, %c0_37, %c0_38, %c0_39] : memref<108x1x1x4xf32, #tpu.memory_space<vmem>>, vector<1x1x1x4xf32>
    %69 = vector.shape_cast %68 : vector<1x1x1x4xf32> to vector<1x1x4xf32>
    %70 = vector.extract_strided_slice %46 {offsets = [0, 0, 3], sizes = [8, 8, 1], strides = [1, 1, 1]} : vector<8x8x4xf32> to vector<8x8x1xf32>
    %71 = vector.broadcast %70 : vector<8x8x1xf32> to vector<8x8x4xf32>
    %72 = vector.broadcast %69 : vector<1x1x4xf32> to vector<8x8x4xf32>
    %73 = arith.mulf %71, %72 : vector<8x8x4xf32>
    %74 = arith.addf %67, %73 : vector<8x8x4xf32>
    %75 = vector.extract_strided_slice %16 {offsets = [0, 2, 0], sizes = [8, 8, 4], strides = [1, 1, 1]} : vector<10x10x4xf32> to vector<8x8x4xf32>
    %c8 = arith.constant 8 : index
    %c0_40 = arith.constant 0 : index
    %c0_41 = arith.constant 0 : index
    %c0_42 = arith.constant 0 : index
    %76 = vector.load %arg4[%c8, %c0_40, %c0_41, %c0_42] : memref<108x1x1x4xf32, #tpu.memory_space<vmem>>, vector<1x1x1x4xf32>
    %77 = vector.shape_cast %76 : vector<1x1x1x4xf32> to vector<1x1x4xf32>
    %78 = vector.extract_strided_slice %75 {offsets = [0, 0, 0], sizes = [8, 8, 1], strides = [1, 1, 1]} : vector<8x8x4xf32> to vector<8x8x1xf32>
    %79 = vector.broadcast %78 : vector<8x8x1xf32> to vector<8x8x4xf32>
    %80 = vector.broadcast %77 : vector<1x1x4xf32> to vector<8x8x4xf32>
    %81 = arith.mulf %79, %80 : vector<8x8x4xf32>
    %82 = arith.addf %74, %81 : vector<8x8x4xf32>
    %c9 = arith.constant 9 : index
    %c0_43 = arith.constant 0 : index
    %c0_44 = arith.constant 0 : index
    %c0_45 = arith.constant 0 : index
    %83 = vector.load %arg4[%c9, %c0_43, %c0_44, %c0_45] : memref<108x1x1x4xf32, #tpu.memory_space<vmem>>, vector<1x1x1x4xf32>
    %84 = vector.shape_cast %83 : vector<1x1x1x4xf32> to vector<1x1x4xf32>
    %85 = vector.extract_strided_slice %75 {offsets = [0, 0, 1], sizes = [8, 8, 1], strides = [1, 1, 1]} : vector<8x8x4xf32> to vector<8x8x1xf32>
    %86 = vector.broadcast %85 : vector<8x8x1xf32> to vector<8x8x4xf32>
    %87 = vector.broadcast %84 : vector<1x1x4xf32> to vector<8x8x4xf32>
    %88 = arith.mulf %86, %87 : vector<8x8x4xf32>
    %89 = arith.addf %82, %88 : vector<8x8x4xf32>
    %c10 = arith.constant 10 : index
    %c0_46 = arith.constant 0 : index
    %c0_47 = arith.constant 0 : index
    %c0_48 = arith.constant 0 : index
    %90 = vector.load %arg4[%c10, %c0_46, %c0_47, %c0_48] : memref<108x1x1x4xf32, #tpu.memory_space<vmem>>, vector<1x1x1x4xf32>
    %91 = vector.shape_cast %90 : vector<1x1x1x4xf32> to vector<1x1x4xf32>
    %92 = vector.extract_strided_slice %75 {offsets = [0, 0, 2], sizes = [8, 8, 1], strides = [1, 1, 1]} : vector<8x8x4xf32> to vector<8x8x1xf32>
    %93 = vector.broadcast %92 : vector<8x8x1xf32> to vector<8x8x4xf32>
    %94 = vector.broadcast %91 : vector<1x1x4xf32> to vector<8x8x4xf32>
    %95 = arith.mulf %93, %94 : vector<8x8x4xf32>
    %96 = arith.addf %89, %95 : vector<8x8x4xf32>
    %c11 = arith.constant 11 : index
    %c0_49 = arith.constant 0 : index
    %c0_50 = arith.constant 0 : index
    %c0_51 = arith.constant 0 : index
    %97 = vector.load %arg4[%c11, %c0_49, %c0_50, %c0_51] : memref<108x1x1x4xf32, #tpu.memory_space<vmem>>, vector<1x1x1x4xf32>
    %98 = vector.shape_cast %97 : vector<1x1x1x4xf32> to vector<1x1x4xf32>
    %99 = vector.extract_strided_slice %75 {offsets = [0, 0, 3], sizes = [8, 8, 1], strides = [1, 1, 1]} : vector<8x8x4xf32> to vector<8x8x1xf32>
    %100 = vector.broadcast %99 : vector<8x8x1xf32> to vector<8x8x4xf32>
    %101 = vector.broadcast %98 : vector<1x1x4xf32> to vector<8x8x4xf32>
    %102 = arith.mulf %100, %101 : vector<8x8x4xf32>
    %103 = arith.addf %96, %102 : vector<8x8x4xf32>
    %104 = vector.extract_strided_slice %16 {offsets = [1, 0, 0], sizes = [8, 8, 4], strides = [1, 1, 1]} : vector<10x10x4xf32> to vector<8x8x4xf32>
    %c12 = arith.constant 12 : index
    %c0_52 = arith.constant 0 : index
    %c0_53 = arith.constant 0 : index
    %c0_54 = arith.constant 0 : index
    %105 = vector.load %arg4[%c12, %c0_52, %c0_53, %c0_54] : memref<108x1x1x4xf32, #tpu.memory_space<vmem>>, vector<1x1x1x4xf32>
    %106 = vector.shape_cast %105 : vector<1x1x1x4xf32> to vector<1x1x4xf32>
    %107 = vector.extract_strided_slice %104 {offsets = [0, 0, 0], sizes = [8, 8, 1], strides = [1, 1, 1]} : vector<8x8x4xf32> to vector<8x8x1xf32>
    %108 = vector.broadcast %107 : vector<8x8x1xf32> to vector<8x8x4xf32>
    %109 = vector.broadcast %106 : vector<1x1x4xf32> to vector<8x8x4xf32>
    %110 = arith.mulf %108, %109 : vector<8x8x4xf32>
    %111 = arith.addf %103, %110 : vector<8x8x4xf32>
    %c13 = arith.constant 13 : index
    %c0_55 = arith.constant 0 : index
    %c0_56 = arith.constant 0 : index
    %c0_57 = arith.constant 0 : index
    %112 = vector.load %arg4[%c13, %c0_55, %c0_56, %c0_57] : memref<108x1x1x4xf32, #tpu.memory_space<vmem>>, vector<1x1x1x4xf32>
    %113 = vector.shape_cast %112 : vector<1x1x1x4xf32> to vector<1x1x4xf32>
    %114 = vector.extract_strided_slice %104 {offsets = [0, 0, 1], sizes = [8, 8, 1], strides = [1, 1, 1]} : vector<8x8x4xf32> to vector<8x8x1xf32>
    %115 = vector.broadcast %114 : vector<8x8x1xf32> to vector<8x8x4xf32>
    %116 = vector.broadcast %113 : vector<1x1x4xf32> to vector<8x8x4xf32>
    %117 = arith.mulf %115, %116 : vector<8x8x4xf32>
    %118 = arith.addf %111, %117 : vector<8x8x4xf32>
    %c14 = arith.constant 14 : index
    %c0_58 = arith.constant 0 : index
    %c0_59 = arith.constant 0 : index
    %c0_60 = arith.constant 0 : index
    %119 = vector.load %arg4[%c14, %c0_58, %c0_59, %c0_60] : memref<108x1x1x4xf32, #tpu.memory_space<vmem>>, vector<1x1x1x4xf32>
    %120 = vector.shape_cast %119 : vector<1x1x1x4xf32> to vector<1x1x4xf32>
    %121 = vector.extract_strided_slice %104 {offsets = [0, 0, 2], sizes = [8, 8, 1], strides = [1, 1, 1]} : vector<8x8x4xf32> to vector<8x8x1xf32>
    %122 = vector.broadcast %121 : vector<8x8x1xf32> to vector<8x8x4xf32>
    %123 = vector.broadcast %120 : vector<1x1x4xf32> to vector<8x8x4xf32>
    %124 = arith.mulf %122, %123 : vector<8x8x4xf32>
    %125 = arith.addf %118, %124 : vector<8x8x4xf32>
    %c15 = arith.constant 15 : index
    %c0_61 = arith.constant 0 : index
    %c0_62 = arith.constant 0 : index
    %c0_63 = arith.constant 0 : index
    %126 = vector.load %arg4[%c15, %c0_61, %c0_62, %c0_63] : memref<108x1x1x4xf32, #tpu.memory_space<vmem>>, vector<1x1x1x4xf32>
    %127 = vector.shape_cast %126 : vector<1x1x1x4xf32> to vector<1x1x4xf32>
    %128 = vector.extract_strided_slice %104 {offsets = [0, 0, 3], sizes = [8, 8, 1], strides = [1, 1, 1]} : vector<8x8x4xf32> to vector<8x8x1xf32>
    %129 = vector.broadcast %128 : vector<8x8x1xf32> to vector<8x8x4xf32>
    %130 = vector.broadcast %127 : vector<1x1x4xf32> to vector<8x8x4xf32>
    %131 = arith.mulf %129, %130 : vector<8x8x4xf32>
    %132 = arith.addf %125, %131 : vector<8x8x4xf32>
    %133 = vector.extract_strided_slice %16 {offsets = [1, 1, 0], sizes = [8, 8, 4], strides = [1, 1, 1]} : vector<10x10x4xf32> to vector<8x8x4xf32>
    %c16 = arith.constant 16 : index
    %c0_64 = arith.constant 0 : index
    %c0_65 = arith.constant 0 : index
    %c0_66 = arith.constant 0 : index
    %134 = vector.load %arg4[%c16, %c0_64, %c0_65, %c0_66] : memref<108x1x1x4xf32, #tpu.memory_space<vmem>>, vector<1x1x1x4xf32>
    %135 = vector.shape_cast %134 : vector<1x1x1x4xf32> to vector<1x1x4xf32>
    %136 = vector.extract_strided_slice %133 {offsets = [0, 0, 0], sizes = [8, 8, 1], strides = [1, 1, 1]} : vector<8x8x4xf32> to vector<8x8x1xf32>
    %137 = vector.broadcast %136 : vector<8x8x1xf32> to vector<8x8x4xf32>
    %138 = vector.broadcast %135 : vector<1x1x4xf32> to vector<8x8x4xf32>
    %139 = arith.mulf %137, %138 : vector<8x8x4xf32>
    %140 = arith.addf %132, %139 : vector<8x8x4xf32>
    %c17 = arith.constant 17 : index
    %c0_67 = arith.constant 0 : index
    %c0_68 = arith.constant 0 : index
    %c0_69 = arith.constant 0 : index
    %141 = vector.load %arg4[%c17, %c0_67, %c0_68, %c0_69] : memref<108x1x1x4xf32, #tpu.memory_space<vmem>>, vector<1x1x1x4xf32>
    %142 = vector.shape_cast %141 : vector<1x1x1x4xf32> to vector<1x1x4xf32>
    %143 = vector.extract_strided_slice %133 {offsets = [0, 0, 1], sizes = [8, 8, 1], strides = [1, 1, 1]} : vector<8x8x4xf32> to vector<8x8x1xf32>
    %144 = vector.broadcast %143 : vector<8x8x1xf32> to vector<8x8x4xf32>
    %145 = vector.broadcast %142 : vector<1x1x4xf32> to vector<8x8x4xf32>
    %146 = arith.mulf %144, %145 : vector<8x8x4xf32>
    %147 = arith.addf %140, %146 : vector<8x8x4xf32>
    %c18 = arith.constant 18 : index
    %c0_70 = arith.constant 0 : index
    %c0_71 = arith.constant 0 : index
    %c0_72 = arith.constant 0 : index
    %148 = vector.load %arg4[%c18, %c0_70, %c0_71, %c0_72] : memref<108x1x1x4xf32, #tpu.memory_space<vmem>>, vector<1x1x1x4xf32>
    %149 = vector.shape_cast %148 : vector<1x1x1x4xf32> to vector<1x1x4xf32>
    %150 = vector.extract_strided_slice %133 {offsets = [0, 0, 2], sizes = [8, 8, 1], strides = [1, 1, 1]} : vector<8x8x4xf32> to vector<8x8x1xf32>
    %151 = vector.broadcast %150 : vector<8x8x1xf32> to vector<8x8x4xf32>
    %152 = vector.broadcast %149 : vector<1x1x4xf32> to vector<8x8x4xf32>
    %153 = arith.mulf %151, %152 : vector<8x8x4xf32>
    %154 = arith.addf %147, %153 : vector<8x8x4xf32>
    %c19 = arith.constant 19 : index
    %c0_73 = arith.constant 0 : index
    %c0_74 = arith.constant 0 : index
    %c0_75 = arith.constant 0 : index
    %155 = vector.load %arg4[%c19, %c0_73, %c0_74, %c0_75] : memref<108x1x1x4xf32, #tpu.memory_space<vmem>>, vector<1x1x1x4xf32>
    %156 = vector.shape_cast %155 : vector<1x1x1x4xf32> to vector<1x1x4xf32>
    %157 = vector.extract_strided_slice %133 {offsets = [0, 0, 3], sizes = [8, 8, 1], strides = [1, 1, 1]} : vector<8x8x4xf32> to vector<8x8x1xf32>
    %158 = vector.broadcast %157 : vector<8x8x1xf32> to vector<8x8x4xf32>
    %159 = vector.broadcast %156 : vector<1x1x4xf32> to vector<8x8x4xf32>
    %160 = arith.mulf %158, %159 : vector<8x8x4xf32>
    %161 = arith.addf %154, %160 : vector<8x8x4xf32>
    %162 = vector.extract_strided_slice %16 {offsets = [1, 2, 0], sizes = [8, 8, 4], strides = [1, 1, 1]} : vector<10x10x4xf32> to vector<8x8x4xf32>
    %c20 = arith.constant 20 : index
    %c0_76 = arith.constant 0 : index
    %c0_77 = arith.constant 0 : index
    %c0_78 = arith.constant 0 : index
    %163 = vector.load %arg4[%c20, %c0_76, %c0_77, %c0_78] : memref<108x1x1x4xf32, #tpu.memory_space<vmem>>, vector<1x1x1x4xf32>
    %164 = vector.shape_cast %163 : vector<1x1x1x4xf32> to vector<1x1x4xf32>
    %165 = vector.extract_strided_slice %162 {offsets = [0, 0, 0], sizes = [8, 8, 1], strides = [1, 1, 1]} : vector<8x8x4xf32> to vector<8x8x1xf32>
    %166 = vector.broadcast %165 : vector<8x8x1xf32> to vector<8x8x4xf32>
    %167 = vector.broadcast %164 : vector<1x1x4xf32> to vector<8x8x4xf32>
    %168 = arith.mulf %166, %167 : vector<8x8x4xf32>
    %169 = arith.addf %161, %168 : vector<8x8x4xf32>
    %c21 = arith.constant 21 : index
    %c0_79 = arith.constant 0 : index
    %c0_80 = arith.constant 0 : index
    %c0_81 = arith.constant 0 : index
    %170 = vector.load %arg4[%c21, %c0_79, %c0_80, %c0_81] : memref<108x1x1x4xf32, #tpu.memory_space<vmem>>, vector<1x1x1x4xf32>
    %171 = vector.shape_cast %170 : vector<1x1x1x4xf32> to vector<1x1x4xf32>
    %172 = vector.extract_strided_slice %162 {offsets = [0, 0, 1], sizes = [8, 8, 1], strides = [1, 1, 1]} : vector<8x8x4xf32> to vector<8x8x1xf32>
    %173 = vector.broadcast %172 : vector<8x8x1xf32> to vector<8x8x4xf32>
    %174 = vector.broadcast %171 : vector<1x1x4xf32> to vector<8x8x4xf32>
    %175 = arith.mulf %173, %174 : vector<8x8x4xf32>
    %176 = arith.addf %169, %175 : vector<8x8x4xf32>
    %c22 = arith.constant 22 : index
    %c0_82 = arith.constant 0 : index
    %c0_83 = arith.constant 0 : index
    %c0_84 = arith.constant 0 : index
    %177 = vector.load %arg4[%c22, %c0_82, %c0_83, %c0_84] : memref<108x1x1x4xf32, #tpu.memory_space<vmem>>, vector<1x1x1x4xf32>
    %178 = vector.shape_cast %177 : vector<1x1x1x4xf32> to vector<1x1x4xf32>
    %179 = vector.extract_strided_slice %162 {offsets = [0, 0, 2], sizes = [8, 8, 1], strides = [1, 1, 1]} : vector<8x8x4xf32> to vector<8x8x1xf32>
    %180 = vector.broadcast %179 : vector<8x8x1xf32> to vector<8x8x4xf32>
    %181 = vector.broadcast %178 : vector<1x1x4xf32> to vector<8x8x4xf32>
    %182 = arith.mulf %180, %181 : vector<8x8x4xf32>
    %183 = arith.addf %176, %182 : vector<8x8x4xf32>
    %c23 = arith.constant 23 : index
    %c0_85 = arith.constant 0 : index
    %c0_86 = arith.constant 0 : index
    %c0_87 = arith.constant 0 : index
    %184 = vector.load %arg4[%c23, %c0_85, %c0_86, %c0_87] : memref<108x1x1x4xf32, #tpu.memory_space<vmem>>, vector<1x1x1x4xf32>
    %185 = vector.shape_cast %184 : vector<1x1x1x4xf32> to vector<1x1x4xf32>
    %186 = vector.extract_strided_slice %162 {offsets = [0, 0, 3], sizes = [8, 8, 1], strides = [1, 1, 1]} : vector<8x8x4xf32> to vector<8x8x1xf32>
    %187 = vector.broadcast %186 : vector<8x8x1xf32> to vector<8x8x4xf32>
    %188 = vector.broadcast %185 : vector<1x1x4xf32> to vector<8x8x4xf32>
    %189 = arith.mulf %187, %188 : vector<8x8x4xf32>
    %190 = arith.addf %183, %189 : vector<8x8x4xf32>
    %191 = vector.extract_strided_slice %16 {offsets = [2, 0, 0], sizes = [8, 8, 4], strides = [1, 1, 1]} : vector<10x10x4xf32> to vector<8x8x4xf32>
    %c24 = arith.constant 24 : index
    %c0_88 = arith.constant 0 : index
    %c0_89 = arith.constant 0 : index
    %c0_90 = arith.constant 0 : index
    %192 = vector.load %arg4[%c24, %c0_88, %c0_89, %c0_90] : memref<108x1x1x4xf32, #tpu.memory_space<vmem>>, vector<1x1x1x4xf32>
    %193 = vector.shape_cast %192 : vector<1x1x1x4xf32> to vector<1x1x4xf32>
    %194 = vector.extract_strided_slice %191 {offsets = [0, 0, 0], sizes = [8, 8, 1], strides = [1, 1, 1]} : vector<8x8x4xf32> to vector<8x8x1xf32>
    %195 = vector.broadcast %194 : vector<8x8x1xf32> to vector<8x8x4xf32>
    %196 = vector.broadcast %193 : vector<1x1x4xf32> to vector<8x8x4xf32>
    %197 = arith.mulf %195, %196 : vector<8x8x4xf32>
    %198 = arith.addf %190, %197 : vector<8x8x4xf32>
    %c25 = arith.constant 25 : index
    %c0_91 = arith.constant 0 : index
    %c0_92 = arith.constant 0 : index
    %c0_93 = arith.constant 0 : index
    %199 = vector.load %arg4[%c25, %c0_91, %c0_92, %c0_93] : memref<108x1x1x4xf32, #tpu.memory_space<vmem>>, vector<1x1x1x4xf32>
    %200 = vector.shape_cast %199 : vector<1x1x1x4xf32> to vector<1x1x4xf32>
    %201 = vector.extract_strided_slice %191 {offsets = [0, 0, 1], sizes = [8, 8, 1], strides = [1, 1, 1]} : vector<8x8x4xf32> to vector<8x8x1xf32>
    %202 = vector.broadcast %201 : vector<8x8x1xf32> to vector<8x8x4xf32>
    %203 = vector.broadcast %200 : vector<1x1x4xf32> to vector<8x8x4xf32>
    %204 = arith.mulf %202, %203 : vector<8x8x4xf32>
    %205 = arith.addf %198, %204 : vector<8x8x4xf32>
    %c26 = arith.constant 26 : index
    %c0_94 = arith.constant 0 : index
    %c0_95 = arith.constant 0 : index
    %c0_96 = arith.constant 0 : index
    %206 = vector.load %arg4[%c26, %c0_94, %c0_95, %c0_96] : memref<108x1x1x4xf32, #tpu.memory_space<vmem>>, vector<1x1x1x4xf32>
    %207 = vector.shape_cast %206 : vector<1x1x1x4xf32> to vector<1x1x4xf32>
    %208 = vector.extract_strided_slice %191 {offsets = [0, 0, 2], sizes = [8, 8, 1], strides = [1, 1, 1]} : vector<8x8x4xf32> to vector<8x8x1xf32>
    %209 = vector.broadcast %208 : vector<8x8x1xf32> to vector<8x8x4xf32>
    %210 = vector.broadcast %207 : vector<1x1x4xf32> to vector<8x8x4xf32>
    %211 = arith.mulf %209, %210 : vector<8x8x4xf32>
    %212 = arith.addf %205, %211 : vector<8x8x4xf32>
    %c27 = arith.constant 27 : index
    %c0_97 = arith.constant 0 : index
    %c0_98 = arith.constant 0 : index
    %c0_99 = arith.constant 0 : index
    %213 = vector.load %arg4[%c27, %c0_97, %c0_98, %c0_99] : memref<108x1x1x4xf32, #tpu.memory_space<vmem>>, vector<1x1x1x4xf32>
    %214 = vector.shape_cast %213 : vector<1x1x1x4xf32> to vector<1x1x4xf32>
    %215 = vector.extract_strided_slice %191 {offsets = [0, 0, 3], sizes = [8, 8, 1], strides = [1, 1, 1]} : vector<8x8x4xf32> to vector<8x8x1xf32>
    %216 = vector.broadcast %215 : vector<8x8x1xf32> to vector<8x8x4xf32>
    %217 = vector.broadcast %214 : vector<1x1x4xf32> to vector<8x8x4xf32>
    %218 = arith.mulf %216, %217 : vector<8x8x4xf32>
    %219 = arith.addf %212, %218 : vector<8x8x4xf32>
    %220 = vector.extract_strided_slice %16 {offsets = [2, 1, 0], sizes = [8, 8, 4], strides = [1, 1, 1]} : vector<10x10x4xf32> to vector<8x8x4xf32>
    %c28 = arith.constant 28 : index
    %c0_100 = arith.constant 0 : index
    %c0_101 = arith.constant 0 : index
    %c0_102 = arith.constant 0 : index
    %221 = vector.load %arg4[%c28, %c0_100, %c0_101, %c0_102] : memref<108x1x1x4xf32, #tpu.memory_space<vmem>>, vector<1x1x1x4xf32>
    %222 = vector.shape_cast %221 : vector<1x1x1x4xf32> to vector<1x1x4xf32>
    %223 = vector.extract_strided_slice %220 {offsets = [0, 0, 0], sizes = [8, 8, 1], strides = [1, 1, 1]} : vector<8x8x4xf32> to vector<8x8x1xf32>
    %224 = vector.broadcast %223 : vector<8x8x1xf32> to vector<8x8x4xf32>
    %225 = vector.broadcast %222 : vector<1x1x4xf32> to vector<8x8x4xf32>
    %226 = arith.mulf %224, %225 : vector<8x8x4xf32>
    %227 = arith.addf %219, %226 : vector<8x8x4xf32>
    %c29 = arith.constant 29 : index
    %c0_103 = arith.constant 0 : index
    %c0_104 = arith.constant 0 : index
    %c0_105 = arith.constant 0 : index
    %228 = vector.load %arg4[%c29, %c0_103, %c0_104, %c0_105] : memref<108x1x1x4xf32, #tpu.memory_space<vmem>>, vector<1x1x1x4xf32>
    %229 = vector.shape_cast %228 : vector<1x1x1x4xf32> to vector<1x1x4xf32>
    %230 = vector.extract_strided_slice %220 {offsets = [0, 0, 1], sizes = [8, 8, 1], strides = [1, 1, 1]} : vector<8x8x4xf32> to vector<8x8x1xf32>
    %231 = vector.broadcast %230 : vector<8x8x1xf32> to vector<8x8x4xf32>
    %232 = vector.broadcast %229 : vector<1x1x4xf32> to vector<8x8x4xf32>
    %233 = arith.mulf %231, %232 : vector<8x8x4xf32>
    %234 = arith.addf %227, %233 : vector<8x8x4xf32>
    %c30 = arith.constant 30 : index
    %c0_106 = arith.constant 0 : index
    %c0_107 = arith.constant 0 : index
    %c0_108 = arith.constant 0 : index
    %235 = vector.load %arg4[%c30, %c0_106, %c0_107, %c0_108] : memref<108x1x1x4xf32, #tpu.memory_space<vmem>>, vector<1x1x1x4xf32>
    %236 = vector.shape_cast %235 : vector<1x1x1x4xf32> to vector<1x1x4xf32>
    %237 = vector.extract_strided_slice %220 {offsets = [0, 0, 2], sizes = [8, 8, 1], strides = [1, 1, 1]} : vector<8x8x4xf32> to vector<8x8x1xf32>
    %238 = vector.broadcast %237 : vector<8x8x1xf32> to vector<8x8x4xf32>
    %239 = vector.broadcast %236 : vector<1x1x4xf32> to vector<8x8x4xf32>
    %240 = arith.mulf %238, %239 : vector<8x8x4xf32>
    %241 = arith.addf %234, %240 : vector<8x8x4xf32>
    %c31 = arith.constant 31 : index
    %c0_109 = arith.constant 0 : index
    %c0_110 = arith.constant 0 : index
    %c0_111 = arith.constant 0 : index
    %242 = vector.load %arg4[%c31, %c0_109, %c0_110, %c0_111] : memref<108x1x1x4xf32, #tpu.memory_space<vmem>>, vector<1x1x1x4xf32>
    %243 = vector.shape_cast %242 : vector<1x1x1x4xf32> to vector<1x1x4xf32>
    %244 = vector.extract_strided_slice %220 {offsets = [0, 0, 3], sizes = [8, 8, 1], strides = [1, 1, 1]} : vector<8x8x4xf32> to vector<8x8x1xf32>
    %245 = vector.broadcast %244 : vector<8x8x1xf32> to vector<8x8x4xf32>
    %246 = vector.broadcast %243 : vector<1x1x4xf32> to vector<8x8x4xf32>
    %247 = arith.mulf %245, %246 : vector<8x8x4xf32>
    %248 = arith.addf %241, %247 : vector<8x8x4xf32>
    %249 = vector.extract_strided_slice %16 {offsets = [2, 2, 0], sizes = [8, 8, 4], strides = [1, 1, 1]} : vector<10x10x4xf32> to vector<8x8x4xf32>
    %c32 = arith.constant 32 : index
    %c0_112 = arith.constant 0 : index
    %c0_113 = arith.constant 0 : index
    %c0_114 = arith.constant 0 : index
    %250 = vector.load %arg4[%c32, %c0_112, %c0_113, %c0_114] : memref<108x1x1x4xf32, #tpu.memory_space<vmem>>, vector<1x1x1x4xf32>
    %251 = vector.shape_cast %250 : vector<1x1x1x4xf32> to vector<1x1x4xf32>
    %252 = vector.extract_strided_slice %249 {offsets = [0, 0, 0], sizes = [8, 8, 1], strides = [1, 1, 1]} : vector<8x8x4xf32> to vector<8x8x1xf32>
    %253 = vector.broadcast %252 : vector<8x8x1xf32> to vector<8x8x4xf32>
    %254 = vector.broadcast %251 : vector<1x1x4xf32> to vector<8x8x4xf32>
    %255 = arith.mulf %253, %254 : vector<8x8x4xf32>
    %256 = arith.addf %248, %255 : vector<8x8x4xf32>
    %c33 = arith.constant 33 : index
    %c0_115 = arith.constant 0 : index
    %c0_116 = arith.constant 0 : index
    %c0_117 = arith.constant 0 : index
    %257 = vector.load %arg4[%c33, %c0_115, %c0_116, %c0_117] : memref<108x1x1x4xf32, #tpu.memory_space<vmem>>, vector<1x1x1x4xf32>
    %258 = vector.shape_cast %257 : vector<1x1x1x4xf32> to vector<1x1x4xf32>
    %259 = vector.extract_strided_slice %249 {offsets = [0, 0, 1], sizes = [8, 8, 1], strides = [1, 1, 1]} : vector<8x8x4xf32> to vector<8x8x1xf32>
    %260 = vector.broadcast %259 : vector<8x8x1xf32> to vector<8x8x4xf32>
    %261 = vector.broadcast %258 : vector<1x1x4xf32> to vector<8x8x4xf32>
    %262 = arith.mulf %260, %261 : vector<8x8x4xf32>
    %263 = arith.addf %256, %262 : vector<8x8x4xf32>
    %c34 = arith.constant 34 : index
    %c0_118 = arith.constant 0 : index
    %c0_119 = arith.constant 0 : index
    %c0_120 = arith.constant 0 : index
    %264 = vector.load %arg4[%c34, %c0_118, %c0_119, %c0_120] : memref<108x1x1x4xf32, #tpu.memory_space<vmem>>, vector<1x1x1x4xf32>
    %265 = vector.shape_cast %264 : vector<1x1x1x4xf32> to vector<1x1x4xf32>
    %266 = vector.extract_strided_slice %249 {offsets = [0, 0, 2], sizes = [8, 8, 1], strides = [1, 1, 1]} : vector<8x8x4xf32> to vector<8x8x1xf32>
    %267 = vector.broadcast %266 : vector<8x8x1xf32> to vector<8x8x4xf32>
    %268 = vector.broadcast %265 : vector<1x1x4xf32> to vector<8x8x4xf32>
    %269 = arith.mulf %267, %268 : vector<8x8x4xf32>
    %270 = arith.addf %263, %269 : vector<8x8x4xf32>
    %c35 = arith.constant 35 : index
    %c0_121 = arith.constant 0 : index
    %c0_122 = arith.constant 0 : index
    %c0_123 = arith.constant 0 : index
    %271 = vector.load %arg4[%c35, %c0_121, %c0_122, %c0_123] : memref<108x1x1x4xf32, #tpu.memory_space<vmem>>, vector<1x1x1x4xf32>
    %272 = vector.shape_cast %271 : vector<1x1x1x4xf32> to vector<1x1x4xf32>
    %273 = vector.extract_strided_slice %249 {offsets = [0, 0, 3], sizes = [8, 8, 1], strides = [1, 1, 1]} : vector<8x8x4xf32> to vector<8x8x1xf32>
    %274 = vector.broadcast %273 : vector<8x8x1xf32> to vector<8x8x4xf32>
    %275 = vector.broadcast %272 : vector<1x1x4xf32> to vector<8x8x4xf32>
    %276 = arith.mulf %274, %275 : vector<8x8x4xf32>
    %277 = arith.addf %270, %276 : vector<8x8x4xf32>
    %c0_124 = arith.constant 0 : index
    %c0_125 = arith.constant 0 : index
    %c0_126 = arith.constant 0 : index
    %c0_127 = arith.constant 0 : index
    %278 = vector.load %arg7[%c0_124, %c0_125, %c0_126, %c0_127] : memref<1x10x10x4xf32, #tpu.memory_space<vmem>>, vector<1x10x10x4xf32>
    %279 = vector.shape_cast %278 : vector<1x10x10x4xf32> to vector<10x10x4xf32>
    %280 = vector.broadcast %0 : vector<1x1x4xf32> to vector<10x10x4xf32>
    %281 = arith.mulf %279, %280 : vector<10x10x4xf32>
    %282 = vector.broadcast %1 : vector<1x1x4xf32> to vector<10x10x4xf32>
    %283 = arith.addf %281, %282 : vector<10x10x4xf32>
    %cst_128 = arith.constant 0.000000e+00 : f32
    %284 = vector.broadcast %cst_128 : f32 to vector<10x10x4xf32>
    %285 = arith.maximumf %283, %284 : vector<10x10x4xf32>
    %286 = arith.mulf %285, %2 : vector<10x10x4xf32>
    %287 = vector.extract_strided_slice %286 {offsets = [0, 0, 0], sizes = [8, 8, 4], strides = [1, 1, 1]} : vector<10x10x4xf32> to vector<8x8x4xf32>
    %c36 = arith.constant 36 : index
    %c0_129 = arith.constant 0 : index
    %c0_130 = arith.constant 0 : index
    %c0_131 = arith.constant 0 : index
    %288 = vector.load %arg4[%c36, %c0_129, %c0_130, %c0_131] : memref<108x1x1x4xf32, #tpu.memory_space<vmem>>, vector<1x1x1x4xf32>
    %289 = vector.shape_cast %288 : vector<1x1x1x4xf32> to vector<1x1x4xf32>
    %290 = vector.extract_strided_slice %287 {offsets = [0, 0, 0], sizes = [8, 8, 1], strides = [1, 1, 1]} : vector<8x8x4xf32> to vector<8x8x1xf32>
    %291 = vector.broadcast %290 : vector<8x8x1xf32> to vector<8x8x4xf32>
    %292 = vector.broadcast %289 : vector<1x1x4xf32> to vector<8x8x4xf32>
    %293 = arith.mulf %291, %292 : vector<8x8x4xf32>
    %294 = arith.addf %277, %293 : vector<8x8x4xf32>
    %c37 = arith.constant 37 : index
    %c0_132 = arith.constant 0 : index
    %c0_133 = arith.constant 0 : index
    %c0_134 = arith.constant 0 : index
    %295 = vector.load %arg4[%c37, %c0_132, %c0_133, %c0_134] : memref<108x1x1x4xf32, #tpu.memory_space<vmem>>, vector<1x1x1x4xf32>
    %296 = vector.shape_cast %295 : vector<1x1x1x4xf32> to vector<1x1x4xf32>
    %297 = vector.extract_strided_slice %287 {offsets = [0, 0, 1], sizes = [8, 8, 1], strides = [1, 1, 1]} : vector<8x8x4xf32> to vector<8x8x1xf32>
    %298 = vector.broadcast %297 : vector<8x8x1xf32> to vector<8x8x4xf32>
    %299 = vector.broadcast %296 : vector<1x1x4xf32> to vector<8x8x4xf32>
    %300 = arith.mulf %298, %299 : vector<8x8x4xf32>
    %301 = arith.addf %294, %300 : vector<8x8x4xf32>
    %c38 = arith.constant 38 : index
    %c0_135 = arith.constant 0 : index
    %c0_136 = arith.constant 0 : index
    %c0_137 = arith.constant 0 : index
    %302 = vector.load %arg4[%c38, %c0_135, %c0_136, %c0_137] : memref<108x1x1x4xf32, #tpu.memory_space<vmem>>, vector<1x1x1x4xf32>
    %303 = vector.shape_cast %302 : vector<1x1x1x4xf32> to vector<1x1x4xf32>
    %304 = vector.extract_strided_slice %287 {offsets = [0, 0, 2], sizes = [8, 8, 1], strides = [1, 1, 1]} : vector<8x8x4xf32> to vector<8x8x1xf32>
    %305 = vector.broadcast %304 : vector<8x8x1xf32> to vector<8x8x4xf32>
    %306 = vector.broadcast %303 : vector<1x1x4xf32> to vector<8x8x4xf32>
    %307 = arith.mulf %305, %306 : vector<8x8x4xf32>
    %308 = arith.addf %301, %307 : vector<8x8x4xf32>
    %c39 = arith.constant 39 : index
    %c0_138 = arith.constant 0 : index
    %c0_139 = arith.constant 0 : index
    %c0_140 = arith.constant 0 : index
    %309 = vector.load %arg4[%c39, %c0_138, %c0_139, %c0_140] : memref<108x1x1x4xf32, #tpu.memory_space<vmem>>, vector<1x1x1x4xf32>
    %310 = vector.shape_cast %309 : vector<1x1x1x4xf32> to vector<1x1x4xf32>
    %311 = vector.extract_strided_slice %287 {offsets = [0, 0, 3], sizes = [8, 8, 1], strides = [1, 1, 1]} : vector<8x8x4xf32> to vector<8x8x1xf32>
    %312 = vector.broadcast %311 : vector<8x8x1xf32> to vector<8x8x4xf32>
    %313 = vector.broadcast %310 : vector<1x1x4xf32> to vector<8x8x4xf32>
    %314 = arith.mulf %312, %313 : vector<8x8x4xf32>
    %315 = arith.addf %308, %314 : vector<8x8x4xf32>
    %316 = vector.extract_strided_slice %286 {offsets = [0, 1, 0], sizes = [8, 8, 4], strides = [1, 1, 1]} : vector<10x10x4xf32> to vector<8x8x4xf32>
    %c40 = arith.constant 40 : index
    %c0_141 = arith.constant 0 : index
    %c0_142 = arith.constant 0 : index
    %c0_143 = arith.constant 0 : index
    %317 = vector.load %arg4[%c40, %c0_141, %c0_142, %c0_143] : memref<108x1x1x4xf32, #tpu.memory_space<vmem>>, vector<1x1x1x4xf32>
    %318 = vector.shape_cast %317 : vector<1x1x1x4xf32> to vector<1x1x4xf32>
    %319 = vector.extract_strided_slice %316 {offsets = [0, 0, 0], sizes = [8, 8, 1], strides = [1, 1, 1]} : vector<8x8x4xf32> to vector<8x8x1xf32>
    %320 = vector.broadcast %319 : vector<8x8x1xf32> to vector<8x8x4xf32>
    %321 = vector.broadcast %318 : vector<1x1x4xf32> to vector<8x8x4xf32>
    %322 = arith.mulf %320, %321 : vector<8x8x4xf32>
    %323 = arith.addf %315, %322 : vector<8x8x4xf32>
    %c41 = arith.constant 41 : index
    %c0_144 = arith.constant 0 : index
    %c0_145 = arith.constant 0 : index
    %c0_146 = arith.constant 0 : index
    %324 = vector.load %arg4[%c41, %c0_144, %c0_145, %c0_146] : memref<108x1x1x4xf32, #tpu.memory_space<vmem>>, vector<1x1x1x4xf32>
    %325 = vector.shape_cast %324 : vector<1x1x1x4xf32> to vector<1x1x4xf32>
    %326 = vector.extract_strided_slice %316 {offsets = [0, 0, 1], sizes = [8, 8, 1], strides = [1, 1, 1]} : vector<8x8x4xf32> to vector<8x8x1xf32>
    %327 = vector.broadcast %326 : vector<8x8x1xf32> to vector<8x8x4xf32>
    %328 = vector.broadcast %325 : vector<1x1x4xf32> to vector<8x8x4xf32>
    %329 = arith.mulf %327, %328 : vector<8x8x4xf32>
    %330 = arith.addf %323, %329 : vector<8x8x4xf32>
    %c42 = arith.constant 42 : index
    %c0_147 = arith.constant 0 : index
    %c0_148 = arith.constant 0 : index
    %c0_149 = arith.constant 0 : index
    %331 = vector.load %arg4[%c42, %c0_147, %c0_148, %c0_149] : memref<108x1x1x4xf32, #tpu.memory_space<vmem>>, vector<1x1x1x4xf32>
    %332 = vector.shape_cast %331 : vector<1x1x1x4xf32> to vector<1x1x4xf32>
    %333 = vector.extract_strided_slice %316 {offsets = [0, 0, 2], sizes = [8, 8, 1], strides = [1, 1, 1]} : vector<8x8x4xf32> to vector<8x8x1xf32>
    %334 = vector.broadcast %333 : vector<8x8x1xf32> to vector<8x8x4xf32>
    %335 = vector.broadcast %332 : vector<1x1x4xf32> to vector<8x8x4xf32>
    %336 = arith.mulf %334, %335 : vector<8x8x4xf32>
    %337 = arith.addf %330, %336 : vector<8x8x4xf32>
    %c43 = arith.constant 43 : index
    %c0_150 = arith.constant 0 : index
    %c0_151 = arith.constant 0 : index
    %c0_152 = arith.constant 0 : index
    %338 = vector.load %arg4[%c43, %c0_150, %c0_151, %c0_152] : memref<108x1x1x4xf32, #tpu.memory_space<vmem>>, vector<1x1x1x4xf32>
    %339 = vector.shape_cast %338 : vector<1x1x1x4xf32> to vector<1x1x4xf32>
    %340 = vector.extract_strided_slice %316 {offsets = [0, 0, 3], sizes = [8, 8, 1], strides = [1, 1, 1]} : vector<8x8x4xf32> to vector<8x8x1xf32>
    %341 = vector.broadcast %340 : vector<8x8x1xf32> to vector<8x8x4xf32>
    %342 = vector.broadcast %339 : vector<1x1x4xf32> to vector<8x8x4xf32>
    %343 = arith.mulf %341, %342 : vector<8x8x4xf32>
    %344 = arith.addf %337, %343 : vector<8x8x4xf32>
    %345 = vector.extract_strided_slice %286 {offsets = [0, 2, 0], sizes = [8, 8, 4], strides = [1, 1, 1]} : vector<10x10x4xf32> to vector<8x8x4xf32>
    %c44 = arith.constant 44 : index
    %c0_153 = arith.constant 0 : index
    %c0_154 = arith.constant 0 : index
    %c0_155 = arith.constant 0 : index
    %346 = vector.load %arg4[%c44, %c0_153, %c0_154, %c0_155] : memref<108x1x1x4xf32, #tpu.memory_space<vmem>>, vector<1x1x1x4xf32>
    %347 = vector.shape_cast %346 : vector<1x1x1x4xf32> to vector<1x1x4xf32>
    %348 = vector.extract_strided_slice %345 {offsets = [0, 0, 0], sizes = [8, 8, 1], strides = [1, 1, 1]} : vector<8x8x4xf32> to vector<8x8x1xf32>
    %349 = vector.broadcast %348 : vector<8x8x1xf32> to vector<8x8x4xf32>
    %350 = vector.broadcast %347 : vector<1x1x4xf32> to vector<8x8x4xf32>
    %351 = arith.mulf %349, %350 : vector<8x8x4xf32>
    %352 = arith.addf %344, %351 : vector<8x8x4xf32>
    %c45 = arith.constant 45 : index
    %c0_156 = arith.constant 0 : index
    %c0_157 = arith.constant 0 : index
    %c0_158 = arith.constant 0 : index
    %353 = vector.load %arg4[%c45, %c0_156, %c0_157, %c0_158] : memref<108x1x1x4xf32, #tpu.memory_space<vmem>>, vector<1x1x1x4xf32>
    %354 = vector.shape_cast %353 : vector<1x1x1x4xf32> to vector<1x1x4xf32>
    %355 = vector.extract_strided_slice %345 {offsets = [0, 0, 1], sizes = [8, 8, 1], strides = [1, 1, 1]} : vector<8x8x4xf32> to vector<8x8x1xf32>
    %356 = vector.broadcast %355 : vector<8x8x1xf32> to vector<8x8x4xf32>
    %357 = vector.broadcast %354 : vector<1x1x4xf32> to vector<8x8x4xf32>
    %358 = arith.mulf %356, %357 : vector<8x8x4xf32>
    %359 = arith.addf %352, %358 : vector<8x8x4xf32>
    %c46 = arith.constant 46 : index
    %c0_159 = arith.constant 0 : index
    %c0_160 = arith.constant 0 : index
    %c0_161 = arith.constant 0 : index
    %360 = vector.load %arg4[%c46, %c0_159, %c0_160, %c0_161] : memref<108x1x1x4xf32, #tpu.memory_space<vmem>>, vector<1x1x1x4xf32>
    %361 = vector.shape_cast %360 : vector<1x1x1x4xf32> to vector<1x1x4xf32>
    %362 = vector.extract_strided_slice %345 {offsets = [0, 0, 2], sizes = [8, 8, 1], strides = [1, 1, 1]} : vector<8x8x4xf32> to vector<8x8x1xf32>
    %363 = vector.broadcast %362 : vector<8x8x1xf32> to vector<8x8x4xf32>
    %364 = vector.broadcast %361 : vector<1x1x4xf32> to vector<8x8x4xf32>
    %365 = arith.mulf %363, %364 : vector<8x8x4xf32>
    %366 = arith.addf %359, %365 : vector<8x8x4xf32>
    %c47 = arith.constant 47 : index
    %c0_162 = arith.constant 0 : index
    %c0_163 = arith.constant 0 : index
    %c0_164 = arith.constant 0 : index
    %367 = vector.load %arg4[%c47, %c0_162, %c0_163, %c0_164] : memref<108x1x1x4xf32, #tpu.memory_space<vmem>>, vector<1x1x1x4xf32>
    %368 = vector.shape_cast %367 : vector<1x1x1x4xf32> to vector<1x1x4xf32>
    %369 = vector.extract_strided_slice %345 {offsets = [0, 0, 3], sizes = [8, 8, 1], strides = [1, 1, 1]} : vector<8x8x4xf32> to vector<8x8x1xf32>
    %370 = vector.broadcast %369 : vector<8x8x1xf32> to vector<8x8x4xf32>
    %371 = vector.broadcast %368 : vector<1x1x4xf32> to vector<8x8x4xf32>
    %372 = arith.mulf %370, %371 : vector<8x8x4xf32>
    %373 = arith.addf %366, %372 : vector<8x8x4xf32>
    %374 = vector.extract_strided_slice %286 {offsets = [1, 0, 0], sizes = [8, 8, 4], strides = [1, 1, 1]} : vector<10x10x4xf32> to vector<8x8x4xf32>
    %c48 = arith.constant 48 : index
    %c0_165 = arith.constant 0 : index
    %c0_166 = arith.constant 0 : index
    %c0_167 = arith.constant 0 : index
    %375 = vector.load %arg4[%c48, %c0_165, %c0_166, %c0_167] : memref<108x1x1x4xf32, #tpu.memory_space<vmem>>, vector<1x1x1x4xf32>
    %376 = vector.shape_cast %375 : vector<1x1x1x4xf32> to vector<1x1x4xf32>
    %377 = vector.extract_strided_slice %374 {offsets = [0, 0, 0], sizes = [8, 8, 1], strides = [1, 1, 1]} : vector<8x8x4xf32> to vector<8x8x1xf32>
    %378 = vector.broadcast %377 : vector<8x8x1xf32> to vector<8x8x4xf32>
    %379 = vector.broadcast %376 : vector<1x1x4xf32> to vector<8x8x4xf32>
    %380 = arith.mulf %378, %379 : vector<8x8x4xf32>
    %381 = arith.addf %373, %380 : vector<8x8x4xf32>
    %c49 = arith.constant 49 : index
    %c0_168 = arith.constant 0 : index
    %c0_169 = arith.constant 0 : index
    %c0_170 = arith.constant 0 : index
    %382 = vector.load %arg4[%c49, %c0_168, %c0_169, %c0_170] : memref<108x1x1x4xf32, #tpu.memory_space<vmem>>, vector<1x1x1x4xf32>
    %383 = vector.shape_cast %382 : vector<1x1x1x4xf32> to vector<1x1x4xf32>
    %384 = vector.extract_strided_slice %374 {offsets = [0, 0, 1], sizes = [8, 8, 1], strides = [1, 1, 1]} : vector<8x8x4xf32> to vector<8x8x1xf32>
    %385 = vector.broadcast %384 : vector<8x8x1xf32> to vector<8x8x4xf32>
    %386 = vector.broadcast %383 : vector<1x1x4xf32> to vector<8x8x4xf32>
    %387 = arith.mulf %385, %386 : vector<8x8x4xf32>
    %388 = arith.addf %381, %387 : vector<8x8x4xf32>
    %c50 = arith.constant 50 : index
    %c0_171 = arith.constant 0 : index
    %c0_172 = arith.constant 0 : index
    %c0_173 = arith.constant 0 : index
    %389 = vector.load %arg4[%c50, %c0_171, %c0_172, %c0_173] : memref<108x1x1x4xf32, #tpu.memory_space<vmem>>, vector<1x1x1x4xf32>
    %390 = vector.shape_cast %389 : vector<1x1x1x4xf32> to vector<1x1x4xf32>
    %391 = vector.extract_strided_slice %374 {offsets = [0, 0, 2], sizes = [8, 8, 1], strides = [1, 1, 1]} : vector<8x8x4xf32> to vector<8x8x1xf32>
    %392 = vector.broadcast %391 : vector<8x8x1xf32> to vector<8x8x4xf32>
    %393 = vector.broadcast %390 : vector<1x1x4xf32> to vector<8x8x4xf32>
    %394 = arith.mulf %392, %393 : vector<8x8x4xf32>
    %395 = arith.addf %388, %394 : vector<8x8x4xf32>
    %c51 = arith.constant 51 : index
    %c0_174 = arith.constant 0 : index
    %c0_175 = arith.constant 0 : index
    %c0_176 = arith.constant 0 : index
    %396 = vector.load %arg4[%c51, %c0_174, %c0_175, %c0_176] : memref<108x1x1x4xf32, #tpu.memory_space<vmem>>, vector<1x1x1x4xf32>
    %397 = vector.shape_cast %396 : vector<1x1x1x4xf32> to vector<1x1x4xf32>
    %398 = vector.extract_strided_slice %374 {offsets = [0, 0, 3], sizes = [8, 8, 1], strides = [1, 1, 1]} : vector<8x8x4xf32> to vector<8x8x1xf32>
    %399 = vector.broadcast %398 : vector<8x8x1xf32> to vector<8x8x4xf32>
    %400 = vector.broadcast %397 : vector<1x1x4xf32> to vector<8x8x4xf32>
    %401 = arith.mulf %399, %400 : vector<8x8x4xf32>
    %402 = arith.addf %395, %401 : vector<8x8x4xf32>
    %403 = vector.extract_strided_slice %286 {offsets = [1, 1, 0], sizes = [8, 8, 4], strides = [1, 1, 1]} : vector<10x10x4xf32> to vector<8x8x4xf32>
    %c52 = arith.constant 52 : index
    %c0_177 = arith.constant 0 : index
    %c0_178 = arith.constant 0 : index
    %c0_179 = arith.constant 0 : index
    %404 = vector.load %arg4[%c52, %c0_177, %c0_178, %c0_179] : memref<108x1x1x4xf32, #tpu.memory_space<vmem>>, vector<1x1x1x4xf32>
    %405 = vector.shape_cast %404 : vector<1x1x1x4xf32> to vector<1x1x4xf32>
    %406 = vector.extract_strided_slice %403 {offsets = [0, 0, 0], sizes = [8, 8, 1], strides = [1, 1, 1]} : vector<8x8x4xf32> to vector<8x8x1xf32>
    %407 = vector.broadcast %406 : vector<8x8x1xf32> to vector<8x8x4xf32>
    %408 = vector.broadcast %405 : vector<1x1x4xf32> to vector<8x8x4xf32>
    %409 = arith.mulf %407, %408 : vector<8x8x4xf32>
    %410 = arith.addf %402, %409 : vector<8x8x4xf32>
    %c53 = arith.constant 53 : index
    %c0_180 = arith.constant 0 : index
    %c0_181 = arith.constant 0 : index
    %c0_182 = arith.constant 0 : index
    %411 = vector.load %arg4[%c53, %c0_180, %c0_181, %c0_182] : memref<108x1x1x4xf32, #tpu.memory_space<vmem>>, vector<1x1x1x4xf32>
    %412 = vector.shape_cast %411 : vector<1x1x1x4xf32> to vector<1x1x4xf32>
    %413 = vector.extract_strided_slice %403 {offsets = [0, 0, 1], sizes = [8, 8, 1], strides = [1, 1, 1]} : vector<8x8x4xf32> to vector<8x8x1xf32>
    %414 = vector.broadcast %413 : vector<8x8x1xf32> to vector<8x8x4xf32>
    %415 = vector.broadcast %412 : vector<1x1x4xf32> to vector<8x8x4xf32>
    %416 = arith.mulf %414, %415 : vector<8x8x4xf32>
    %417 = arith.addf %410, %416 : vector<8x8x4xf32>
    %c54 = arith.constant 54 : index
    %c0_183 = arith.constant 0 : index
    %c0_184 = arith.constant 0 : index
    %c0_185 = arith.constant 0 : index
    %418 = vector.load %arg4[%c54, %c0_183, %c0_184, %c0_185] : memref<108x1x1x4xf32, #tpu.memory_space<vmem>>, vector<1x1x1x4xf32>
    %419 = vector.shape_cast %418 : vector<1x1x1x4xf32> to vector<1x1x4xf32>
    %420 = vector.extract_strided_slice %403 {offsets = [0, 0, 2], sizes = [8, 8, 1], strides = [1, 1, 1]} : vector<8x8x4xf32> to vector<8x8x1xf32>
    %421 = vector.broadcast %420 : vector<8x8x1xf32> to vector<8x8x4xf32>
    %422 = vector.broadcast %419 : vector<1x1x4xf32> to vector<8x8x4xf32>
    %423 = arith.mulf %421, %422 : vector<8x8x4xf32>
    %424 = arith.addf %417, %423 : vector<8x8x4xf32>
    %c55 = arith.constant 55 : index
    %c0_186 = arith.constant 0 : index
    %c0_187 = arith.constant 0 : index
    %c0_188 = arith.constant 0 : index
    %425 = vector.load %arg4[%c55, %c0_186, %c0_187, %c0_188] : memref<108x1x1x4xf32, #tpu.memory_space<vmem>>, vector<1x1x1x4xf32>
    %426 = vector.shape_cast %425 : vector<1x1x1x4xf32> to vector<1x1x4xf32>
    %427 = vector.extract_strided_slice %403 {offsets = [0, 0, 3], sizes = [8, 8, 1], strides = [1, 1, 1]} : vector<8x8x4xf32> to vector<8x8x1xf32>
    %428 = vector.broadcast %427 : vector<8x8x1xf32> to vector<8x8x4xf32>
    %429 = vector.broadcast %426 : vector<1x1x4xf32> to vector<8x8x4xf32>
    %430 = arith.mulf %428, %429 : vector<8x8x4xf32>
    %431 = arith.addf %424, %430 : vector<8x8x4xf32>
    %432 = vector.extract_strided_slice %286 {offsets = [1, 2, 0], sizes = [8, 8, 4], strides = [1, 1, 1]} : vector<10x10x4xf32> to vector<8x8x4xf32>
    %c56 = arith.constant 56 : index
    %c0_189 = arith.constant 0 : index
    %c0_190 = arith.constant 0 : index
    %c0_191 = arith.constant 0 : index
    %433 = vector.load %arg4[%c56, %c0_189, %c0_190, %c0_191] : memref<108x1x1x4xf32, #tpu.memory_space<vmem>>, vector<1x1x1x4xf32>
    %434 = vector.shape_cast %433 : vector<1x1x1x4xf32> to vector<1x1x4xf32>
    %435 = vector.extract_strided_slice %432 {offsets = [0, 0, 0], sizes = [8, 8, 1], strides = [1, 1, 1]} : vector<8x8x4xf32> to vector<8x8x1xf32>
    %436 = vector.broadcast %435 : vector<8x8x1xf32> to vector<8x8x4xf32>
    %437 = vector.broadcast %434 : vector<1x1x4xf32> to vector<8x8x4xf32>
    %438 = arith.mulf %436, %437 : vector<8x8x4xf32>
    %439 = arith.addf %431, %438 : vector<8x8x4xf32>
    %c57 = arith.constant 57 : index
    %c0_192 = arith.constant 0 : index
    %c0_193 = arith.constant 0 : index
    %c0_194 = arith.constant 0 : index
    %440 = vector.load %arg4[%c57, %c0_192, %c0_193, %c0_194] : memref<108x1x1x4xf32, #tpu.memory_space<vmem>>, vector<1x1x1x4xf32>
    %441 = vector.shape_cast %440 : vector<1x1x1x4xf32> to vector<1x1x4xf32>
    %442 = vector.extract_strided_slice %432 {offsets = [0, 0, 1], sizes = [8, 8, 1], strides = [1, 1, 1]} : vector<8x8x4xf32> to vector<8x8x1xf32>
    %443 = vector.broadcast %442 : vector<8x8x1xf32> to vector<8x8x4xf32>
    %444 = vector.broadcast %441 : vector<1x1x4xf32> to vector<8x8x4xf32>
    %445 = arith.mulf %443, %444 : vector<8x8x4xf32>
    %446 = arith.addf %439, %445 : vector<8x8x4xf32>
    %c58 = arith.constant 58 : index
    %c0_195 = arith.constant 0 : index
    %c0_196 = arith.constant 0 : index
    %c0_197 = arith.constant 0 : index
    %447 = vector.load %arg4[%c58, %c0_195, %c0_196, %c0_197] : memref<108x1x1x4xf32, #tpu.memory_space<vmem>>, vector<1x1x1x4xf32>
    %448 = vector.shape_cast %447 : vector<1x1x1x4xf32> to vector<1x1x4xf32>
    %449 = vector.extract_strided_slice %432 {offsets = [0, 0, 2], sizes = [8, 8, 1], strides = [1, 1, 1]} : vector<8x8x4xf32> to vector<8x8x1xf32>
    %450 = vector.broadcast %449 : vector<8x8x1xf32> to vector<8x8x4xf32>
    %451 = vector.broadcast %448 : vector<1x1x4xf32> to vector<8x8x4xf32>
    %452 = arith.mulf %450, %451 : vector<8x8x4xf32>
    %453 = arith.addf %446, %452 : vector<8x8x4xf32>
    %c59 = arith.constant 59 : index
    %c0_198 = arith.constant 0 : index
    %c0_199 = arith.constant 0 : index
    %c0_200 = arith.constant 0 : index
    %454 = vector.load %arg4[%c59, %c0_198, %c0_199, %c0_200] : memref<108x1x1x4xf32, #tpu.memory_space<vmem>>, vector<1x1x1x4xf32>
    %455 = vector.shape_cast %454 : vector<1x1x1x4xf32> to vector<1x1x4xf32>
    %456 = vector.extract_strided_slice %432 {offsets = [0, 0, 3], sizes = [8, 8, 1], strides = [1, 1, 1]} : vector<8x8x4xf32> to vector<8x8x1xf32>
    %457 = vector.broadcast %456 : vector<8x8x1xf32> to vector<8x8x4xf32>
    %458 = vector.broadcast %455 : vector<1x1x4xf32> to vector<8x8x4xf32>
    %459 = arith.mulf %457, %458 : vector<8x8x4xf32>
    %460 = arith.addf %453, %459 : vector<8x8x4xf32>
    %461 = vector.extract_strided_slice %286 {offsets = [2, 0, 0], sizes = [8, 8, 4], strides = [1, 1, 1]} : vector<10x10x4xf32> to vector<8x8x4xf32>
    %c60 = arith.constant 60 : index
    %c0_201 = arith.constant 0 : index
    %c0_202 = arith.constant 0 : index
    %c0_203 = arith.constant 0 : index
    %462 = vector.load %arg4[%c60, %c0_201, %c0_202, %c0_203] : memref<108x1x1x4xf32, #tpu.memory_space<vmem>>, vector<1x1x1x4xf32>
    %463 = vector.shape_cast %462 : vector<1x1x1x4xf32> to vector<1x1x4xf32>
    %464 = vector.extract_strided_slice %461 {offsets = [0, 0, 0], sizes = [8, 8, 1], strides = [1, 1, 1]} : vector<8x8x4xf32> to vector<8x8x1xf32>
    %465 = vector.broadcast %464 : vector<8x8x1xf32> to vector<8x8x4xf32>
    %466 = vector.broadcast %463 : vector<1x1x4xf32> to vector<8x8x4xf32>
    %467 = arith.mulf %465, %466 : vector<8x8x4xf32>
    %468 = arith.addf %460, %467 : vector<8x8x4xf32>
    %c61 = arith.constant 61 : index
    %c0_204 = arith.constant 0 : index
    %c0_205 = arith.constant 0 : index
    %c0_206 = arith.constant 0 : index
    %469 = vector.load %arg4[%c61, %c0_204, %c0_205, %c0_206] : memref<108x1x1x4xf32, #tpu.memory_space<vmem>>, vector<1x1x1x4xf32>
    %470 = vector.shape_cast %469 : vector<1x1x1x4xf32> to vector<1x1x4xf32>
    %471 = vector.extract_strided_slice %461 {offsets = [0, 0, 1], sizes = [8, 8, 1], strides = [1, 1, 1]} : vector<8x8x4xf32> to vector<8x8x1xf32>
    %472 = vector.broadcast %471 : vector<8x8x1xf32> to vector<8x8x4xf32>
    %473 = vector.broadcast %470 : vector<1x1x4xf32> to vector<8x8x4xf32>
    %474 = arith.mulf %472, %473 : vector<8x8x4xf32>
    %475 = arith.addf %468, %474 : vector<8x8x4xf32>
    %c62 = arith.constant 62 : index
    %c0_207 = arith.constant 0 : index
    %c0_208 = arith.constant 0 : index
    %c0_209 = arith.constant 0 : index
    %476 = vector.load %arg4[%c62, %c0_207, %c0_208, %c0_209] : memref<108x1x1x4xf32, #tpu.memory_space<vmem>>, vector<1x1x1x4xf32>
    %477 = vector.shape_cast %476 : vector<1x1x1x4xf32> to vector<1x1x4xf32>
    %478 = vector.extract_strided_slice %461 {offsets = [0, 0, 2], sizes = [8, 8, 1], strides = [1, 1, 1]} : vector<8x8x4xf32> to vector<8x8x1xf32>
    %479 = vector.broadcast %478 : vector<8x8x1xf32> to vector<8x8x4xf32>
    %480 = vector.broadcast %477 : vector<1x1x4xf32> to vector<8x8x4xf32>
    %481 = arith.mulf %479, %480 : vector<8x8x4xf32>
    %482 = arith.addf %475, %481 : vector<8x8x4xf32>
    %c63 = arith.constant 63 : index
    %c0_210 = arith.constant 0 : index
    %c0_211 = arith.constant 0 : index
    %c0_212 = arith.constant 0 : index
    %483 = vector.load %arg4[%c63, %c0_210, %c0_211, %c0_212] : memref<108x1x1x4xf32, #tpu.memory_space<vmem>>, vector<1x1x1x4xf32>
    %484 = vector.shape_cast %483 : vector<1x1x1x4xf32> to vector<1x1x4xf32>
    %485 = vector.extract_strided_slice %461 {offsets = [0, 0, 3], sizes = [8, 8, 1], strides = [1, 1, 1]} : vector<8x8x4xf32> to vector<8x8x1xf32>
    %486 = vector.broadcast %485 : vector<8x8x1xf32> to vector<8x8x4xf32>
    %487 = vector.broadcast %484 : vector<1x1x4xf32> to vector<8x8x4xf32>
    %488 = arith.mulf %486, %487 : vector<8x8x4xf32>
    %489 = arith.addf %482, %488 : vector<8x8x4xf32>
    %490 = vector.extract_strided_slice %286 {offsets = [2, 1, 0], sizes = [8, 8, 4], strides = [1, 1, 1]} : vector<10x10x4xf32> to vector<8x8x4xf32>
    %c64 = arith.constant 64 : index
    %c0_213 = arith.constant 0 : index
    %c0_214 = arith.constant 0 : index
    %c0_215 = arith.constant 0 : index
    %491 = vector.load %arg4[%c64, %c0_213, %c0_214, %c0_215] : memref<108x1x1x4xf32, #tpu.memory_space<vmem>>, vector<1x1x1x4xf32>
    %492 = vector.shape_cast %491 : vector<1x1x1x4xf32> to vector<1x1x4xf32>
    %493 = vector.extract_strided_slice %490 {offsets = [0, 0, 0], sizes = [8, 8, 1], strides = [1, 1, 1]} : vector<8x8x4xf32> to vector<8x8x1xf32>
    %494 = vector.broadcast %493 : vector<8x8x1xf32> to vector<8x8x4xf32>
    %495 = vector.broadcast %492 : vector<1x1x4xf32> to vector<8x8x4xf32>
    %496 = arith.mulf %494, %495 : vector<8x8x4xf32>
    %497 = arith.addf %489, %496 : vector<8x8x4xf32>
    %c65 = arith.constant 65 : index
    %c0_216 = arith.constant 0 : index
    %c0_217 = arith.constant 0 : index
    %c0_218 = arith.constant 0 : index
    %498 = vector.load %arg4[%c65, %c0_216, %c0_217, %c0_218] : memref<108x1x1x4xf32, #tpu.memory_space<vmem>>, vector<1x1x1x4xf32>
    %499 = vector.shape_cast %498 : vector<1x1x1x4xf32> to vector<1x1x4xf32>
    %500 = vector.extract_strided_slice %490 {offsets = [0, 0, 1], sizes = [8, 8, 1], strides = [1, 1, 1]} : vector<8x8x4xf32> to vector<8x8x1xf32>
    %501 = vector.broadcast %500 : vector<8x8x1xf32> to vector<8x8x4xf32>
    %502 = vector.broadcast %499 : vector<1x1x4xf32> to vector<8x8x4xf32>
    %503 = arith.mulf %501, %502 : vector<8x8x4xf32>
    %504 = arith.addf %497, %503 : vector<8x8x4xf32>
    %c66 = arith.constant 66 : index
    %c0_219 = arith.constant 0 : index
    %c0_220 = arith.constant 0 : index
    %c0_221 = arith.constant 0 : index
    %505 = vector.load %arg4[%c66, %c0_219, %c0_220, %c0_221] : memref<108x1x1x4xf32, #tpu.memory_space<vmem>>, vector<1x1x1x4xf32>
    %506 = vector.shape_cast %505 : vector<1x1x1x4xf32> to vector<1x1x4xf32>
    %507 = vector.extract_strided_slice %490 {offsets = [0, 0, 2], sizes = [8, 8, 1], strides = [1, 1, 1]} : vector<8x8x4xf32> to vector<8x8x1xf32>
    %508 = vector.broadcast %507 : vector<8x8x1xf32> to vector<8x8x4xf32>
    %509 = vector.broadcast %506 : vector<1x1x4xf32> to vector<8x8x4xf32>
    %510 = arith.mulf %508, %509 : vector<8x8x4xf32>
    %511 = arith.addf %504, %510 : vector<8x8x4xf32>
    %c67 = arith.constant 67 : index
    %c0_222 = arith.constant 0 : index
    %c0_223 = arith.constant 0 : index
    %c0_224 = arith.constant 0 : index
    %512 = vector.load %arg4[%c67, %c0_222, %c0_223, %c0_224] : memref<108x1x1x4xf32, #tpu.memory_space<vmem>>, vector<1x1x1x4xf32>
    %513 = vector.shape_cast %512 : vector<1x1x1x4xf32> to vector<1x1x4xf32>
    %514 = vector.extract_strided_slice %490 {offsets = [0, 0, 3], sizes = [8, 8, 1], strides = [1, 1, 1]} : vector<8x8x4xf32> to vector<8x8x1xf32>
    %515 = vector.broadcast %514 : vector<8x8x1xf32> to vector<8x8x4xf32>
    %516 = vector.broadcast %513 : vector<1x1x4xf32> to vector<8x8x4xf32>
    %517 = arith.mulf %515, %516 : vector<8x8x4xf32>
    %518 = arith.addf %511, %517 : vector<8x8x4xf32>
    %519 = vector.extract_strided_slice %286 {offsets = [2, 2, 0], sizes = [8, 8, 4], strides = [1, 1, 1]} : vector<10x10x4xf32> to vector<8x8x4xf32>
    %c68 = arith.constant 68 : index
    %c0_225 = arith.constant 0 : index
    %c0_226 = arith.constant 0 : index
    %c0_227 = arith.constant 0 : index
    %520 = vector.load %arg4[%c68, %c0_225, %c0_226, %c0_227] : memref<108x1x1x4xf32, #tpu.memory_space<vmem>>, vector<1x1x1x4xf32>
    %521 = vector.shape_cast %520 : vector<1x1x1x4xf32> to vector<1x1x4xf32>
    %522 = vector.extract_strided_slice %519 {offsets = [0, 0, 0], sizes = [8, 8, 1], strides = [1, 1, 1]} : vector<8x8x4xf32> to vector<8x8x1xf32>
    %523 = vector.broadcast %522 : vector<8x8x1xf32> to vector<8x8x4xf32>
    %524 = vector.broadcast %521 : vector<1x1x4xf32> to vector<8x8x4xf32>
    %525 = arith.mulf %523, %524 : vector<8x8x4xf32>
    %526 = arith.addf %518, %525 : vector<8x8x4xf32>
    %c69 = arith.constant 69 : index
    %c0_228 = arith.constant 0 : index
    %c0_229 = arith.constant 0 : index
    %c0_230 = arith.constant 0 : index
    %527 = vector.load %arg4[%c69, %c0_228, %c0_229, %c0_230] : memref<108x1x1x4xf32, #tpu.memory_space<vmem>>, vector<1x1x1x4xf32>
    %528 = vector.shape_cast %527 : vector<1x1x1x4xf32> to vector<1x1x4xf32>
    %529 = vector.extract_strided_slice %519 {offsets = [0, 0, 1], sizes = [8, 8, 1], strides = [1, 1, 1]} : vector<8x8x4xf32> to vector<8x8x1xf32>
    %530 = vector.broadcast %529 : vector<8x8x1xf32> to vector<8x8x4xf32>
    %531 = vector.broadcast %528 : vector<1x1x4xf32> to vector<8x8x4xf32>
    %532 = arith.mulf %530, %531 : vector<8x8x4xf32>
    %533 = arith.addf %526, %532 : vector<8x8x4xf32>
    %c70 = arith.constant 70 : index
    %c0_231 = arith.constant 0 : index
    %c0_232 = arith.constant 0 : index
    %c0_233 = arith.constant 0 : index
    %534 = vector.load %arg4[%c70, %c0_231, %c0_232, %c0_233] : memref<108x1x1x4xf32, #tpu.memory_space<vmem>>, vector<1x1x1x4xf32>
    %535 = vector.shape_cast %534 : vector<1x1x1x4xf32> to vector<1x1x4xf32>
    %536 = vector.extract_strided_slice %519 {offsets = [0, 0, 2], sizes = [8, 8, 1], strides = [1, 1, 1]} : vector<8x8x4xf32> to vector<8x8x1xf32>
    %537 = vector.broadcast %536 : vector<8x8x1xf32> to vector<8x8x4xf32>
    %538 = vector.broadcast %535 : vector<1x1x4xf32> to vector<8x8x4xf32>
    %539 = arith.mulf %537, %538 : vector<8x8x4xf32>
    %540 = arith.addf %533, %539 : vector<8x8x4xf32>
    %c71 = arith.constant 71 : index
    %c0_234 = arith.constant 0 : index
    %c0_235 = arith.constant 0 : index
    %c0_236 = arith.constant 0 : index
    %541 = vector.load %arg4[%c71, %c0_234, %c0_235, %c0_236] : memref<108x1x1x4xf32, #tpu.memory_space<vmem>>, vector<1x1x1x4xf32>
    %542 = vector.shape_cast %541 : vector<1x1x1x4xf32> to vector<1x1x4xf32>
    %543 = vector.extract_strided_slice %519 {offsets = [0, 0, 3], sizes = [8, 8, 1], strides = [1, 1, 1]} : vector<8x8x4xf32> to vector<8x8x1xf32>
    %544 = vector.broadcast %543 : vector<8x8x1xf32> to vector<8x8x4xf32>
    %545 = vector.broadcast %542 : vector<1x1x4xf32> to vector<8x8x4xf32>
    %546 = arith.mulf %544, %545 : vector<8x8x4xf32>
    %547 = arith.addf %540, %546 : vector<8x8x4xf32>
    %c0_237 = arith.constant 0 : index
    %c0_238 = arith.constant 0 : index
    %c0_239 = arith.constant 0 : index
    %c0_240 = arith.constant 0 : index
    %548 = vector.load %arg8[%c0_237, %c0_238, %c0_239, %c0_240] : memref<1x10x10x4xf32, #tpu.memory_space<vmem>>, vector<1x10x10x4xf32>
    %549 = vector.shape_cast %548 : vector<1x10x10x4xf32> to vector<10x10x4xf32>
    %550 = vector.broadcast %0 : vector<1x1x4xf32> to vector<10x10x4xf32>
    %551 = arith.mulf %549, %550 : vector<10x10x4xf32>
    %552 = vector.broadcast %1 : vector<1x1x4xf32> to vector<10x10x4xf32>
    %553 = arith.addf %551, %552 : vector<10x10x4xf32>
    %cst_241 = arith.constant 0.000000e+00 : f32
    %554 = vector.broadcast %cst_241 : f32 to vector<10x10x4xf32>
    %555 = arith.maximumf %553, %554 : vector<10x10x4xf32>
    %556 = arith.mulf %555, %2 : vector<10x10x4xf32>
    %c2_i32 = arith.constant 2 : i32
    %557 = arith.cmpi sle, %arg1, %c2_i32 : i32
    %cst_242 = arith.constant 1.000000e+00 : f32
    %cst_243 = arith.constant 0.000000e+00 : f32
    %558 = arith.select %557, %cst_242, %cst_243 : f32
    %559 = vector.broadcast %558 : f32 to vector<10x10x4xf32>
    %560 = arith.mulf %556, %559 : vector<10x10x4xf32>
    %561 = vector.extract_strided_slice %560 {offsets = [0, 0, 0], sizes = [8, 8, 4], strides = [1, 1, 1]} : vector<10x10x4xf32> to vector<8x8x4xf32>
    %c72 = arith.constant 72 : index
    %c0_244 = arith.constant 0 : index
    %c0_245 = arith.constant 0 : index
    %c0_246 = arith.constant 0 : index
    %562 = vector.load %arg4[%c72, %c0_244, %c0_245, %c0_246] : memref<108x1x1x4xf32, #tpu.memory_space<vmem>>, vector<1x1x1x4xf32>
    %563 = vector.shape_cast %562 : vector<1x1x1x4xf32> to vector<1x1x4xf32>
    %564 = vector.extract_strided_slice %561 {offsets = [0, 0, 0], sizes = [8, 8, 1], strides = [1, 1, 1]} : vector<8x8x4xf32> to vector<8x8x1xf32>
    %565 = vector.broadcast %564 : vector<8x8x1xf32> to vector<8x8x4xf32>
    %566 = vector.broadcast %563 : vector<1x1x4xf32> to vector<8x8x4xf32>
    %567 = arith.mulf %565, %566 : vector<8x8x4xf32>
    %568 = arith.addf %547, %567 : vector<8x8x4xf32>
    %c73 = arith.constant 73 : index
    %c0_247 = arith.constant 0 : index
    %c0_248 = arith.constant 0 : index
    %c0_249 = arith.constant 0 : index
    %569 = vector.load %arg4[%c73, %c0_247, %c0_248, %c0_249] : memref<108x1x1x4xf32, #tpu.memory_space<vmem>>, vector<1x1x1x4xf32>
    %570 = vector.shape_cast %569 : vector<1x1x1x4xf32> to vector<1x1x4xf32>
    %571 = vector.extract_strided_slice %561 {offsets = [0, 0, 1], sizes = [8, 8, 1], strides = [1, 1, 1]} : vector<8x8x4xf32> to vector<8x8x1xf32>
    %572 = vector.broadcast %571 : vector<8x8x1xf32> to vector<8x8x4xf32>
    %573 = vector.broadcast %570 : vector<1x1x4xf32> to vector<8x8x4xf32>
    %574 = arith.mulf %572, %573 : vector<8x8x4xf32>
    %575 = arith.addf %568, %574 : vector<8x8x4xf32>
    %c74 = arith.constant 74 : index
    %c0_250 = arith.constant 0 : index
    %c0_251 = arith.constant 0 : index
    %c0_252 = arith.constant 0 : index
    %576 = vector.load %arg4[%c74, %c0_250, %c0_251, %c0_252] : memref<108x1x1x4xf32, #tpu.memory_space<vmem>>, vector<1x1x1x4xf32>
    %577 = vector.shape_cast %576 : vector<1x1x1x4xf32> to vector<1x1x4xf32>
    %578 = vector.extract_strided_slice %561 {offsets = [0, 0, 2], sizes = [8, 8, 1], strides = [1, 1, 1]} : vector<8x8x4xf32> to vector<8x8x1xf32>
    %579 = vector.broadcast %578 : vector<8x8x1xf32> to vector<8x8x4xf32>
    %580 = vector.broadcast %577 : vector<1x1x4xf32> to vector<8x8x4xf32>
    %581 = arith.mulf %579, %580 : vector<8x8x4xf32>
    %582 = arith.addf %575, %581 : vector<8x8x4xf32>
    %c75 = arith.constant 75 : index
    %c0_253 = arith.constant 0 : index
    %c0_254 = arith.constant 0 : index
    %c0_255 = arith.constant 0 : index
    %583 = vector.load %arg4[%c75, %c0_253, %c0_254, %c0_255] : memref<108x1x1x4xf32, #tpu.memory_space<vmem>>, vector<1x1x1x4xf32>
    %584 = vector.shape_cast %583 : vector<1x1x1x4xf32> to vector<1x1x4xf32>
    %585 = vector.extract_strided_slice %561 {offsets = [0, 0, 3], sizes = [8, 8, 1], strides = [1, 1, 1]} : vector<8x8x4xf32> to vector<8x8x1xf32>
    %586 = vector.broadcast %585 : vector<8x8x1xf32> to vector<8x8x4xf32>
    %587 = vector.broadcast %584 : vector<1x1x4xf32> to vector<8x8x4xf32>
    %588 = arith.mulf %586, %587 : vector<8x8x4xf32>
    %589 = arith.addf %582, %588 : vector<8x8x4xf32>
    %590 = vector.extract_strided_slice %560 {offsets = [0, 1, 0], sizes = [8, 8, 4], strides = [1, 1, 1]} : vector<10x10x4xf32> to vector<8x8x4xf32>
    %c76 = arith.constant 76 : index
    %c0_256 = arith.constant 0 : index
    %c0_257 = arith.constant 0 : index
    %c0_258 = arith.constant 0 : index
    %591 = vector.load %arg4[%c76, %c0_256, %c0_257, %c0_258] : memref<108x1x1x4xf32, #tpu.memory_space<vmem>>, vector<1x1x1x4xf32>
    %592 = vector.shape_cast %591 : vector<1x1x1x4xf32> to vector<1x1x4xf32>
    %593 = vector.extract_strided_slice %590 {offsets = [0, 0, 0], sizes = [8, 8, 1], strides = [1, 1, 1]} : vector<8x8x4xf32> to vector<8x8x1xf32>
    %594 = vector.broadcast %593 : vector<8x8x1xf32> to vector<8x8x4xf32>
    %595 = vector.broadcast %592 : vector<1x1x4xf32> to vector<8x8x4xf32>
    %596 = arith.mulf %594, %595 : vector<8x8x4xf32>
    %597 = arith.addf %589, %596 : vector<8x8x4xf32>
    %c77 = arith.constant 77 : index
    %c0_259 = arith.constant 0 : index
    %c0_260 = arith.constant 0 : index
    %c0_261 = arith.constant 0 : index
    %598 = vector.load %arg4[%c77, %c0_259, %c0_260, %c0_261] : memref<108x1x1x4xf32, #tpu.memory_space<vmem>>, vector<1x1x1x4xf32>
    %599 = vector.shape_cast %598 : vector<1x1x1x4xf32> to vector<1x1x4xf32>
    %600 = vector.extract_strided_slice %590 {offsets = [0, 0, 1], sizes = [8, 8, 1], strides = [1, 1, 1]} : vector<8x8x4xf32> to vector<8x8x1xf32>
    %601 = vector.broadcast %600 : vector<8x8x1xf32> to vector<8x8x4xf32>
    %602 = vector.broadcast %599 : vector<1x1x4xf32> to vector<8x8x4xf32>
    %603 = arith.mulf %601, %602 : vector<8x8x4xf32>
    %604 = arith.addf %597, %603 : vector<8x8x4xf32>
    %c78 = arith.constant 78 : index
    %c0_262 = arith.constant 0 : index
    %c0_263 = arith.constant 0 : index
    %c0_264 = arith.constant 0 : index
    %605 = vector.load %arg4[%c78, %c0_262, %c0_263, %c0_264] : memref<108x1x1x4xf32, #tpu.memory_space<vmem>>, vector<1x1x1x4xf32>
    %606 = vector.shape_cast %605 : vector<1x1x1x4xf32> to vector<1x1x4xf32>
    %607 = vector.extract_strided_slice %590 {offsets = [0, 0, 2], sizes = [8, 8, 1], strides = [1, 1, 1]} : vector<8x8x4xf32> to vector<8x8x1xf32>
    %608 = vector.broadcast %607 : vector<8x8x1xf32> to vector<8x8x4xf32>
    %609 = vector.broadcast %606 : vector<1x1x4xf32> to vector<8x8x4xf32>
    %610 = arith.mulf %608, %609 : vector<8x8x4xf32>
    %611 = arith.addf %604, %610 : vector<8x8x4xf32>
    %c79 = arith.constant 79 : index
    %c0_265 = arith.constant 0 : index
    %c0_266 = arith.constant 0 : index
    %c0_267 = arith.constant 0 : index
    %612 = vector.load %arg4[%c79, %c0_265, %c0_266, %c0_267] : memref<108x1x1x4xf32, #tpu.memory_space<vmem>>, vector<1x1x1x4xf32>
    %613 = vector.shape_cast %612 : vector<1x1x1x4xf32> to vector<1x1x4xf32>
    %614 = vector.extract_strided_slice %590 {offsets = [0, 0, 3], sizes = [8, 8, 1], strides = [1, 1, 1]} : vector<8x8x4xf32> to vector<8x8x1xf32>
    %615 = vector.broadcast %614 : vector<8x8x1xf32> to vector<8x8x4xf32>
    %616 = vector.broadcast %613 : vector<1x1x4xf32> to vector<8x8x4xf32>
    %617 = arith.mulf %615, %616 : vector<8x8x4xf32>
    %618 = arith.addf %611, %617 : vector<8x8x4xf32>
    %619 = vector.extract_strided_slice %560 {offsets = [0, 2, 0], sizes = [8, 8, 4], strides = [1, 1, 1]} : vector<10x10x4xf32> to vector<8x8x4xf32>
    %c80 = arith.constant 80 : index
    %c0_268 = arith.constant 0 : index
    %c0_269 = arith.constant 0 : index
    %c0_270 = arith.constant 0 : index
    %620 = vector.load %arg4[%c80, %c0_268, %c0_269, %c0_270] : memref<108x1x1x4xf32, #tpu.memory_space<vmem>>, vector<1x1x1x4xf32>
    %621 = vector.shape_cast %620 : vector<1x1x1x4xf32> to vector<1x1x4xf32>
    %622 = vector.extract_strided_slice %619 {offsets = [0, 0, 0], sizes = [8, 8, 1], strides = [1, 1, 1]} : vector<8x8x4xf32> to vector<8x8x1xf32>
    %623 = vector.broadcast %622 : vector<8x8x1xf32> to vector<8x8x4xf32>
    %624 = vector.broadcast %621 : vector<1x1x4xf32> to vector<8x8x4xf32>
    %625 = arith.mulf %623, %624 : vector<8x8x4xf32>
    %626 = arith.addf %618, %625 : vector<8x8x4xf32>
    %c81 = arith.constant 81 : index
    %c0_271 = arith.constant 0 : index
    %c0_272 = arith.constant 0 : index
    %c0_273 = arith.constant 0 : index
    %627 = vector.load %arg4[%c81, %c0_271, %c0_272, %c0_273] : memref<108x1x1x4xf32, #tpu.memory_space<vmem>>, vector<1x1x1x4xf32>
    %628 = vector.shape_cast %627 : vector<1x1x1x4xf32> to vector<1x1x4xf32>
    %629 = vector.extract_strided_slice %619 {offsets = [0, 0, 1], sizes = [8, 8, 1], strides = [1, 1, 1]} : vector<8x8x4xf32> to vector<8x8x1xf32>
    %630 = vector.broadcast %629 : vector<8x8x1xf32> to vector<8x8x4xf32>
    %631 = vector.broadcast %628 : vector<1x1x4xf32> to vector<8x8x4xf32>
    %632 = arith.mulf %630, %631 : vector<8x8x4xf32>
    %633 = arith.addf %626, %632 : vector<8x8x4xf32>
    %c82 = arith.constant 82 : index
    %c0_274 = arith.constant 0 : index
    %c0_275 = arith.constant 0 : index
    %c0_276 = arith.constant 0 : index
    %634 = vector.load %arg4[%c82, %c0_274, %c0_275, %c0_276] : memref<108x1x1x4xf32, #tpu.memory_space<vmem>>, vector<1x1x1x4xf32>
    %635 = vector.shape_cast %634 : vector<1x1x1x4xf32> to vector<1x1x4xf32>
    %636 = vector.extract_strided_slice %619 {offsets = [0, 0, 2], sizes = [8, 8, 1], strides = [1, 1, 1]} : vector<8x8x4xf32> to vector<8x8x1xf32>
    %637 = vector.broadcast %636 : vector<8x8x1xf32> to vector<8x8x4xf32>
    %638 = vector.broadcast %635 : vector<1x1x4xf32> to vector<8x8x4xf32>
    %639 = arith.mulf %637, %638 : vector<8x8x4xf32>
    %640 = arith.addf %633, %639 : vector<8x8x4xf32>
    %c83 = arith.constant 83 : index
    %c0_277 = arith.constant 0 : index
    %c0_278 = arith.constant 0 : index
    %c0_279 = arith.constant 0 : index
    %641 = vector.load %arg4[%c83, %c0_277, %c0_278, %c0_279] : memref<108x1x1x4xf32, #tpu.memory_space<vmem>>, vector<1x1x1x4xf32>
    %642 = vector.shape_cast %641 : vector<1x1x1x4xf32> to vector<1x1x4xf32>
    %643 = vector.extract_strided_slice %619 {offsets = [0, 0, 3], sizes = [8, 8, 1], strides = [1, 1, 1]} : vector<8x8x4xf32> to vector<8x8x1xf32>
    %644 = vector.broadcast %643 : vector<8x8x1xf32> to vector<8x8x4xf32>
    %645 = vector.broadcast %642 : vector<1x1x4xf32> to vector<8x8x4xf32>
    %646 = arith.mulf %644, %645 : vector<8x8x4xf32>
    %647 = arith.addf %640, %646 : vector<8x8x4xf32>
    %648 = vector.extract_strided_slice %560 {offsets = [1, 0, 0], sizes = [8, 8, 4], strides = [1, 1, 1]} : vector<10x10x4xf32> to vector<8x8x4xf32>
    %c84 = arith.constant 84 : index
    %c0_280 = arith.constant 0 : index
    %c0_281 = arith.constant 0 : index
    %c0_282 = arith.constant 0 : index
    %649 = vector.load %arg4[%c84, %c0_280, %c0_281, %c0_282] : memref<108x1x1x4xf32, #tpu.memory_space<vmem>>, vector<1x1x1x4xf32>
    %650 = vector.shape_cast %649 : vector<1x1x1x4xf32> to vector<1x1x4xf32>
    %651 = vector.extract_strided_slice %648 {offsets = [0, 0, 0], sizes = [8, 8, 1], strides = [1, 1, 1]} : vector<8x8x4xf32> to vector<8x8x1xf32>
    %652 = vector.broadcast %651 : vector<8x8x1xf32> to vector<8x8x4xf32>
    %653 = vector.broadcast %650 : vector<1x1x4xf32> to vector<8x8x4xf32>
    %654 = arith.mulf %652, %653 : vector<8x8x4xf32>
    %655 = arith.addf %647, %654 : vector<8x8x4xf32>
    %c85 = arith.constant 85 : index
    %c0_283 = arith.constant 0 : index
    %c0_284 = arith.constant 0 : index
    %c0_285 = arith.constant 0 : index
    %656 = vector.load %arg4[%c85, %c0_283, %c0_284, %c0_285] : memref<108x1x1x4xf32, #tpu.memory_space<vmem>>, vector<1x1x1x4xf32>
    %657 = vector.shape_cast %656 : vector<1x1x1x4xf32> to vector<1x1x4xf32>
    %658 = vector.extract_strided_slice %648 {offsets = [0, 0, 1], sizes = [8, 8, 1], strides = [1, 1, 1]} : vector<8x8x4xf32> to vector<8x8x1xf32>
    %659 = vector.broadcast %658 : vector<8x8x1xf32> to vector<8x8x4xf32>
    %660 = vector.broadcast %657 : vector<1x1x4xf32> to vector<8x8x4xf32>
    %661 = arith.mulf %659, %660 : vector<8x8x4xf32>
    %662 = arith.addf %655, %661 : vector<8x8x4xf32>
    %c86 = arith.constant 86 : index
    %c0_286 = arith.constant 0 : index
    %c0_287 = arith.constant 0 : index
    %c0_288 = arith.constant 0 : index
    %663 = vector.load %arg4[%c86, %c0_286, %c0_287, %c0_288] : memref<108x1x1x4xf32, #tpu.memory_space<vmem>>, vector<1x1x1x4xf32>
    %664 = vector.shape_cast %663 : vector<1x1x1x4xf32> to vector<1x1x4xf32>
    %665 = vector.extract_strided_slice %648 {offsets = [0, 0, 2], sizes = [8, 8, 1], strides = [1, 1, 1]} : vector<8x8x4xf32> to vector<8x8x1xf32>
    %666 = vector.broadcast %665 : vector<8x8x1xf32> to vector<8x8x4xf32>
    %667 = vector.broadcast %664 : vector<1x1x4xf32> to vector<8x8x4xf32>
    %668 = arith.mulf %666, %667 : vector<8x8x4xf32>
    %669 = arith.addf %662, %668 : vector<8x8x4xf32>
    %c87 = arith.constant 87 : index
    %c0_289 = arith.constant 0 : index
    %c0_290 = arith.constant 0 : index
    %c0_291 = arith.constant 0 : index
    %670 = vector.load %arg4[%c87, %c0_289, %c0_290, %c0_291] : memref<108x1x1x4xf32, #tpu.memory_space<vmem>>, vector<1x1x1x4xf32>
    %671 = vector.shape_cast %670 : vector<1x1x1x4xf32> to vector<1x1x4xf32>
    %672 = vector.extract_strided_slice %648 {offsets = [0, 0, 3], sizes = [8, 8, 1], strides = [1, 1, 1]} : vector<8x8x4xf32> to vector<8x8x1xf32>
    %673 = vector.broadcast %672 : vector<8x8x1xf32> to vector<8x8x4xf32>
    %674 = vector.broadcast %671 : vector<1x1x4xf32> to vector<8x8x4xf32>
    %675 = arith.mulf %673, %674 : vector<8x8x4xf32>
    %676 = arith.addf %669, %675 : vector<8x8x4xf32>
    %677 = vector.extract_strided_slice %560 {offsets = [1, 1, 0], sizes = [8, 8, 4], strides = [1, 1, 1]} : vector<10x10x4xf32> to vector<8x8x4xf32>
    %c88 = arith.constant 88 : index
    %c0_292 = arith.constant 0 : index
    %c0_293 = arith.constant 0 : index
    %c0_294 = arith.constant 0 : index
    %678 = vector.load %arg4[%c88, %c0_292, %c0_293, %c0_294] : memref<108x1x1x4xf32, #tpu.memory_space<vmem>>, vector<1x1x1x4xf32>
    %679 = vector.shape_cast %678 : vector<1x1x1x4xf32> to vector<1x1x4xf32>
    %680 = vector.extract_strided_slice %677 {offsets = [0, 0, 0], sizes = [8, 8, 1], strides = [1, 1, 1]} : vector<8x8x4xf32> to vector<8x8x1xf32>
    %681 = vector.broadcast %680 : vector<8x8x1xf32> to vector<8x8x4xf32>
    %682 = vector.broadcast %679 : vector<1x1x4xf32> to vector<8x8x4xf32>
    %683 = arith.mulf %681, %682 : vector<8x8x4xf32>
    %684 = arith.addf %676, %683 : vector<8x8x4xf32>
    %c89 = arith.constant 89 : index
    %c0_295 = arith.constant 0 : index
    %c0_296 = arith.constant 0 : index
    %c0_297 = arith.constant 0 : index
    %685 = vector.load %arg4[%c89, %c0_295, %c0_296, %c0_297] : memref<108x1x1x4xf32, #tpu.memory_space<vmem>>, vector<1x1x1x4xf32>
    %686 = vector.shape_cast %685 : vector<1x1x1x4xf32> to vector<1x1x4xf32>
    %687 = vector.extract_strided_slice %677 {offsets = [0, 0, 1], sizes = [8, 8, 1], strides = [1, 1, 1]} : vector<8x8x4xf32> to vector<8x8x1xf32>
    %688 = vector.broadcast %687 : vector<8x8x1xf32> to vector<8x8x4xf32>
    %689 = vector.broadcast %686 : vector<1x1x4xf32> to vector<8x8x4xf32>
    %690 = arith.mulf %688, %689 : vector<8x8x4xf32>
    %691 = arith.addf %684, %690 : vector<8x8x4xf32>
    %c90 = arith.constant 90 : index
    %c0_298 = arith.constant 0 : index
    %c0_299 = arith.constant 0 : index
    %c0_300 = arith.constant 0 : index
    %692 = vector.load %arg4[%c90, %c0_298, %c0_299, %c0_300] : memref<108x1x1x4xf32, #tpu.memory_space<vmem>>, vector<1x1x1x4xf32>
    %693 = vector.shape_cast %692 : vector<1x1x1x4xf32> to vector<1x1x4xf32>
    %694 = vector.extract_strided_slice %677 {offsets = [0, 0, 2], sizes = [8, 8, 1], strides = [1, 1, 1]} : vector<8x8x4xf32> to vector<8x8x1xf32>
    %695 = vector.broadcast %694 : vector<8x8x1xf32> to vector<8x8x4xf32>
    %696 = vector.broadcast %693 : vector<1x1x4xf32> to vector<8x8x4xf32>
    %697 = arith.mulf %695, %696 : vector<8x8x4xf32>
    %698 = arith.addf %691, %697 : vector<8x8x4xf32>
    %c91 = arith.constant 91 : index
    %c0_301 = arith.constant 0 : index
    %c0_302 = arith.constant 0 : index
    %c0_303 = arith.constant 0 : index
    %699 = vector.load %arg4[%c91, %c0_301, %c0_302, %c0_303] : memref<108x1x1x4xf32, #tpu.memory_space<vmem>>, vector<1x1x1x4xf32>
    %700 = vector.shape_cast %699 : vector<1x1x1x4xf32> to vector<1x1x4xf32>
    %701 = vector.extract_strided_slice %677 {offsets = [0, 0, 3], sizes = [8, 8, 1], strides = [1, 1, 1]} : vector<8x8x4xf32> to vector<8x8x1xf32>
    %702 = vector.broadcast %701 : vector<8x8x1xf32> to vector<8x8x4xf32>
    %703 = vector.broadcast %700 : vector<1x1x4xf32> to vector<8x8x4xf32>
    %704 = arith.mulf %702, %703 : vector<8x8x4xf32>
    %705 = arith.addf %698, %704 : vector<8x8x4xf32>
    %706 = vector.extract_strided_slice %560 {offsets = [1, 2, 0], sizes = [8, 8, 4], strides = [1, 1, 1]} : vector<10x10x4xf32> to vector<8x8x4xf32>
    %c92 = arith.constant 92 : index
    %c0_304 = arith.constant 0 : index
    %c0_305 = arith.constant 0 : index
    %c0_306 = arith.constant 0 : index
    %707 = vector.load %arg4[%c92, %c0_304, %c0_305, %c0_306] : memref<108x1x1x4xf32, #tpu.memory_space<vmem>>, vector<1x1x1x4xf32>
    %708 = vector.shape_cast %707 : vector<1x1x1x4xf32> to vector<1x1x4xf32>
    %709 = vector.extract_strided_slice %706 {offsets = [0, 0, 0], sizes = [8, 8, 1], strides = [1, 1, 1]} : vector<8x8x4xf32> to vector<8x8x1xf32>
    %710 = vector.broadcast %709 : vector<8x8x1xf32> to vector<8x8x4xf32>
    %711 = vector.broadcast %708 : vector<1x1x4xf32> to vector<8x8x4xf32>
    %712 = arith.mulf %710, %711 : vector<8x8x4xf32>
    %713 = arith.addf %705, %712 : vector<8x8x4xf32>
    %c93 = arith.constant 93 : index
    %c0_307 = arith.constant 0 : index
    %c0_308 = arith.constant 0 : index
    %c0_309 = arith.constant 0 : index
    %714 = vector.load %arg4[%c93, %c0_307, %c0_308, %c0_309] : memref<108x1x1x4xf32, #tpu.memory_space<vmem>>, vector<1x1x1x4xf32>
    %715 = vector.shape_cast %714 : vector<1x1x1x4xf32> to vector<1x1x4xf32>
    %716 = vector.extract_strided_slice %706 {offsets = [0, 0, 1], sizes = [8, 8, 1], strides = [1, 1, 1]} : vector<8x8x4xf32> to vector<8x8x1xf32>
    %717 = vector.broadcast %716 : vector<8x8x1xf32> to vector<8x8x4xf32>
    %718 = vector.broadcast %715 : vector<1x1x4xf32> to vector<8x8x4xf32>
    %719 = arith.mulf %717, %718 : vector<8x8x4xf32>
    %720 = arith.addf %713, %719 : vector<8x8x4xf32>
    %c94 = arith.constant 94 : index
    %c0_310 = arith.constant 0 : index
    %c0_311 = arith.constant 0 : index
    %c0_312 = arith.constant 0 : index
    %721 = vector.load %arg4[%c94, %c0_310, %c0_311, %c0_312] : memref<108x1x1x4xf32, #tpu.memory_space<vmem>>, vector<1x1x1x4xf32>
    %722 = vector.shape_cast %721 : vector<1x1x1x4xf32> to vector<1x1x4xf32>
    %723 = vector.extract_strided_slice %706 {offsets = [0, 0, 2], sizes = [8, 8, 1], strides = [1, 1, 1]} : vector<8x8x4xf32> to vector<8x8x1xf32>
    %724 = vector.broadcast %723 : vector<8x8x1xf32> to vector<8x8x4xf32>
    %725 = vector.broadcast %722 : vector<1x1x4xf32> to vector<8x8x4xf32>
    %726 = arith.mulf %724, %725 : vector<8x8x4xf32>
    %727 = arith.addf %720, %726 : vector<8x8x4xf32>
    %c95 = arith.constant 95 : index
    %c0_313 = arith.constant 0 : index
    %c0_314 = arith.constant 0 : index
    %c0_315 = arith.constant 0 : index
    %728 = vector.load %arg4[%c95, %c0_313, %c0_314, %c0_315] : memref<108x1x1x4xf32, #tpu.memory_space<vmem>>, vector<1x1x1x4xf32>
    %729 = vector.shape_cast %728 : vector<1x1x1x4xf32> to vector<1x1x4xf32>
    %730 = vector.extract_strided_slice %706 {offsets = [0, 0, 3], sizes = [8, 8, 1], strides = [1, 1, 1]} : vector<8x8x4xf32> to vector<8x8x1xf32>
    %731 = vector.broadcast %730 : vector<8x8x1xf32> to vector<8x8x4xf32>
    %732 = vector.broadcast %729 : vector<1x1x4xf32> to vector<8x8x4xf32>
    %733 = arith.mulf %731, %732 : vector<8x8x4xf32>
    %734 = arith.addf %727, %733 : vector<8x8x4xf32>
    %735 = vector.extract_strided_slice %560 {offsets = [2, 0, 0], sizes = [8, 8, 4], strides = [1, 1, 1]} : vector<10x10x4xf32> to vector<8x8x4xf32>
    %c96 = arith.constant 96 : index
    %c0_316 = arith.constant 0 : index
    %c0_317 = arith.constant 0 : index
    %c0_318 = arith.constant 0 : index
    %736 = vector.load %arg4[%c96, %c0_316, %c0_317, %c0_318] : memref<108x1x1x4xf32, #tpu.memory_space<vmem>>, vector<1x1x1x4xf32>
    %737 = vector.shape_cast %736 : vector<1x1x1x4xf32> to vector<1x1x4xf32>
    %738 = vector.extract_strided_slice %735 {offsets = [0, 0, 0], sizes = [8, 8, 1], strides = [1, 1, 1]} : vector<8x8x4xf32> to vector<8x8x1xf32>
    %739 = vector.broadcast %738 : vector<8x8x1xf32> to vector<8x8x4xf32>
    %740 = vector.broadcast %737 : vector<1x1x4xf32> to vector<8x8x4xf32>
    %741 = arith.mulf %739, %740 : vector<8x8x4xf32>
    %742 = arith.addf %734, %741 : vector<8x8x4xf32>
    %c97 = arith.constant 97 : index
    %c0_319 = arith.constant 0 : index
    %c0_320 = arith.constant 0 : index
    %c0_321 = arith.constant 0 : index
    %743 = vector.load %arg4[%c97, %c0_319, %c0_320, %c0_321] : memref<108x1x1x4xf32, #tpu.memory_space<vmem>>, vector<1x1x1x4xf32>
    %744 = vector.shape_cast %743 : vector<1x1x1x4xf32> to vector<1x1x4xf32>
    %745 = vector.extract_strided_slice %735 {offsets = [0, 0, 1], sizes = [8, 8, 1], strides = [1, 1, 1]} : vector<8x8x4xf32> to vector<8x8x1xf32>
    %746 = vector.broadcast %745 : vector<8x8x1xf32> to vector<8x8x4xf32>
    %747 = vector.broadcast %744 : vector<1x1x4xf32> to vector<8x8x4xf32>
    %748 = arith.mulf %746, %747 : vector<8x8x4xf32>
    %749 = arith.addf %742, %748 : vector<8x8x4xf32>
    %c98 = arith.constant 98 : index
    %c0_322 = arith.constant 0 : index
    %c0_323 = arith.constant 0 : index
    %c0_324 = arith.constant 0 : index
    %750 = vector.load %arg4[%c98, %c0_322, %c0_323, %c0_324] : memref<108x1x1x4xf32, #tpu.memory_space<vmem>>, vector<1x1x1x4xf32>
    %751 = vector.shape_cast %750 : vector<1x1x1x4xf32> to vector<1x1x4xf32>
    %752 = vector.extract_strided_slice %735 {offsets = [0, 0, 2], sizes = [8, 8, 1], strides = [1, 1, 1]} : vector<8x8x4xf32> to vector<8x8x1xf32>
    %753 = vector.broadcast %752 : vector<8x8x1xf32> to vector<8x8x4xf32>
    %754 = vector.broadcast %751 : vector<1x1x4xf32> to vector<8x8x4xf32>
    %755 = arith.mulf %753, %754 : vector<8x8x4xf32>
    %756 = arith.addf %749, %755 : vector<8x8x4xf32>
    %c99 = arith.constant 99 : index
    %c0_325 = arith.constant 0 : index
    %c0_326 = arith.constant 0 : index
    %c0_327 = arith.constant 0 : index
    %757 = vector.load %arg4[%c99, %c0_325, %c0_326, %c0_327] : memref<108x1x1x4xf32, #tpu.memory_space<vmem>>, vector<1x1x1x4xf32>
    %758 = vector.shape_cast %757 : vector<1x1x1x4xf32> to vector<1x1x4xf32>
    %759 = vector.extract_strided_slice %735 {offsets = [0, 0, 3], sizes = [8, 8, 1], strides = [1, 1, 1]} : vector<8x8x4xf32> to vector<8x8x1xf32>
    %760 = vector.broadcast %759 : vector<8x8x1xf32> to vector<8x8x4xf32>
    %761 = vector.broadcast %758 : vector<1x1x4xf32> to vector<8x8x4xf32>
    %762 = arith.mulf %760, %761 : vector<8x8x4xf32>
    %763 = arith.addf %756, %762 : vector<8x8x4xf32>
    %764 = vector.extract_strided_slice %560 {offsets = [2, 1, 0], sizes = [8, 8, 4], strides = [1, 1, 1]} : vector<10x10x4xf32> to vector<8x8x4xf32>
    %c100 = arith.constant 100 : index
    %c0_328 = arith.constant 0 : index
    %c0_329 = arith.constant 0 : index
    %c0_330 = arith.constant 0 : index
    %765 = vector.load %arg4[%c100, %c0_328, %c0_329, %c0_330] : memref<108x1x1x4xf32, #tpu.memory_space<vmem>>, vector<1x1x1x4xf32>
    %766 = vector.shape_cast %765 : vector<1x1x1x4xf32> to vector<1x1x4xf32>
    %767 = vector.extract_strided_slice %764 {offsets = [0, 0, 0], sizes = [8, 8, 1], strides = [1, 1, 1]} : vector<8x8x4xf32> to vector<8x8x1xf32>
    %768 = vector.broadcast %767 : vector<8x8x1xf32> to vector<8x8x4xf32>
    %769 = vector.broadcast %766 : vector<1x1x4xf32> to vector<8x8x4xf32>
    %770 = arith.mulf %768, %769 : vector<8x8x4xf32>
    %771 = arith.addf %763, %770 : vector<8x8x4xf32>
    %c101 = arith.constant 101 : index
    %c0_331 = arith.constant 0 : index
    %c0_332 = arith.constant 0 : index
    %c0_333 = arith.constant 0 : index
    %772 = vector.load %arg4[%c101, %c0_331, %c0_332, %c0_333] : memref<108x1x1x4xf32, #tpu.memory_space<vmem>>, vector<1x1x1x4xf32>
    %773 = vector.shape_cast %772 : vector<1x1x1x4xf32> to vector<1x1x4xf32>
    %774 = vector.extract_strided_slice %764 {offsets = [0, 0, 1], sizes = [8, 8, 1], strides = [1, 1, 1]} : vector<8x8x4xf32> to vector<8x8x1xf32>
    %775 = vector.broadcast %774 : vector<8x8x1xf32> to vector<8x8x4xf32>
    %776 = vector.broadcast %773 : vector<1x1x4xf32> to vector<8x8x4xf32>
    %777 = arith.mulf %775, %776 : vector<8x8x4xf32>
    %778 = arith.addf %771, %777 : vector<8x8x4xf32>
    %c102 = arith.constant 102 : index
    %c0_334 = arith.constant 0 : index
    %c0_335 = arith.constant 0 : index
    %c0_336 = arith.constant 0 : index
    %779 = vector.load %arg4[%c102, %c0_334, %c0_335, %c0_336] : memref<108x1x1x4xf32, #tpu.memory_space<vmem>>, vector<1x1x1x4xf32>
    %780 = vector.shape_cast %779 : vector<1x1x1x4xf32> to vector<1x1x4xf32>
    %781 = vector.extract_strided_slice %764 {offsets = [0, 0, 2], sizes = [8, 8, 1], strides = [1, 1, 1]} : vector<8x8x4xf32> to vector<8x8x1xf32>
    %782 = vector.broadcast %781 : vector<8x8x1xf32> to vector<8x8x4xf32>
    %783 = vector.broadcast %780 : vector<1x1x4xf32> to vector<8x8x4xf32>
    %784 = arith.mulf %782, %783 : vector<8x8x4xf32>
    %785 = arith.addf %778, %784 : vector<8x8x4xf32>
    %c103 = arith.constant 103 : index
    %c0_337 = arith.constant 0 : index
    %c0_338 = arith.constant 0 : index
    %c0_339 = arith.constant 0 : index
    %786 = vector.load %arg4[%c103, %c0_337, %c0_338, %c0_339] : memref<108x1x1x4xf32, #tpu.memory_space<vmem>>, vector<1x1x1x4xf32>
    %787 = vector.shape_cast %786 : vector<1x1x1x4xf32> to vector<1x1x4xf32>
    %788 = vector.extract_strided_slice %764 {offsets = [0, 0, 3], sizes = [8, 8, 1], strides = [1, 1, 1]} : vector<8x8x4xf32> to vector<8x8x1xf32>
    %789 = vector.broadcast %788 : vector<8x8x1xf32> to vector<8x8x4xf32>
    %790 = vector.broadcast %787 : vector<1x1x4xf32> to vector<8x8x4xf32>
    %791 = arith.mulf %789, %790 : vector<8x8x4xf32>
    %792 = arith.addf %785, %791 : vector<8x8x4xf32>
    %793 = vector.extract_strided_slice %560 {offsets = [2, 2, 0], sizes = [8, 8, 4], strides = [1, 1, 1]} : vector<10x10x4xf32> to vector<8x8x4xf32>
    %c104 = arith.constant 104 : index
    %c0_340 = arith.constant 0 : index
    %c0_341 = arith.constant 0 : index
    %c0_342 = arith.constant 0 : index
    %794 = vector.load %arg4[%c104, %c0_340, %c0_341, %c0_342] : memref<108x1x1x4xf32, #tpu.memory_space<vmem>>, vector<1x1x1x4xf32>
    %795 = vector.shape_cast %794 : vector<1x1x1x4xf32> to vector<1x1x4xf32>
    %796 = vector.extract_strided_slice %793 {offsets = [0, 0, 0], sizes = [8, 8, 1], strides = [1, 1, 1]} : vector<8x8x4xf32> to vector<8x8x1xf32>
    %797 = vector.broadcast %796 : vector<8x8x1xf32> to vector<8x8x4xf32>
    %798 = vector.broadcast %795 : vector<1x1x4xf32> to vector<8x8x4xf32>
    %799 = arith.mulf %797, %798 : vector<8x8x4xf32>
    %800 = arith.addf %792, %799 : vector<8x8x4xf32>
    %c105 = arith.constant 105 : index
    %c0_343 = arith.constant 0 : index
    %c0_344 = arith.constant 0 : index
    %c0_345 = arith.constant 0 : index
    %801 = vector.load %arg4[%c105, %c0_343, %c0_344, %c0_345] : memref<108x1x1x4xf32, #tpu.memory_space<vmem>>, vector<1x1x1x4xf32>
    %802 = vector.shape_cast %801 : vector<1x1x1x4xf32> to vector<1x1x4xf32>
    %803 = vector.extract_strided_slice %793 {offsets = [0, 0, 1], sizes = [8, 8, 1], strides = [1, 1, 1]} : vector<8x8x4xf32> to vector<8x8x1xf32>
    %804 = vector.broadcast %803 : vector<8x8x1xf32> to vector<8x8x4xf32>
    %805 = vector.broadcast %802 : vector<1x1x4xf32> to vector<8x8x4xf32>
    %806 = arith.mulf %804, %805 : vector<8x8x4xf32>
    %807 = arith.addf %800, %806 : vector<8x8x4xf32>
    %c106 = arith.constant 106 : index
    %c0_346 = arith.constant 0 : index
    %c0_347 = arith.constant 0 : index
    %c0_348 = arith.constant 0 : index
    %808 = vector.load %arg4[%c106, %c0_346, %c0_347, %c0_348] : memref<108x1x1x4xf32, #tpu.memory_space<vmem>>, vector<1x1x1x4xf32>
    %809 = vector.shape_cast %808 : vector<1x1x1x4xf32> to vector<1x1x4xf32>
    %810 = vector.extract_strided_slice %793 {offsets = [0, 0, 2], sizes = [8, 8, 1], strides = [1, 1, 1]} : vector<8x8x4xf32> to vector<8x8x1xf32>
    %811 = vector.broadcast %810 : vector<8x8x1xf32> to vector<8x8x4xf32>
    %812 = vector.broadcast %809 : vector<1x1x4xf32> to vector<8x8x4xf32>
    %813 = arith.mulf %811, %812 : vector<8x8x4xf32>
    %814 = arith.addf %807, %813 : vector<8x8x4xf32>
    %c107 = arith.constant 107 : index
    %c0_349 = arith.constant 0 : index
    %c0_350 = arith.constant 0 : index
    %c0_351 = arith.constant 0 : index
    %815 = vector.load %arg4[%c107, %c0_349, %c0_350, %c0_351] : memref<108x1x1x4xf32, #tpu.memory_space<vmem>>, vector<1x1x1x4xf32>
    %816 = vector.shape_cast %815 : vector<1x1x1x4xf32> to vector<1x1x4xf32>
    %817 = vector.extract_strided_slice %793 {offsets = [0, 0, 3], sizes = [8, 8, 1], strides = [1, 1, 1]} : vector<8x8x4xf32> to vector<8x8x1xf32>
    %818 = vector.broadcast %817 : vector<8x8x1xf32> to vector<8x8x4xf32>
    %819 = vector.broadcast %816 : vector<1x1x4xf32> to vector<8x8x4xf32>
    %820 = arith.mulf %818, %819 : vector<8x8x4xf32>
    %821 = arith.addf %814, %820 : vector<8x8x4xf32>
    %c0_352 = arith.constant 0 : index
    %c0_353 = arith.constant 0 : index
    %c0_354 = arith.constant 0 : index
    %c0_355 = arith.constant 0 : index
    %822 = vector.load %arg9[%c0_352, %c0_353, %c0_354, %c0_355] : memref<1x8x8x4xf32, #tpu.memory_space<vmem>>, vector<1x8x8x4xf32>
    %823 = vector.shape_cast %822 : vector<1x8x8x4xf32> to vector<8x8x4xf32>
    %824 = vector.shape_cast %821 : vector<8x8x4xf32> to vector<1x8x8x4xf32>
    tpu.vector_store %arg9[%c0_352, %c0_353, %c0_354, %c0_355], %824 {strides = array<i32>} : memref<1x8x8x4xf32, #tpu.memory_space<vmem>>, vector<1x8x8x4xf32>,
    %cst_356 = arith.constant dense<0.000000e+00> : vector<8x4xf32>
    %825 = vector.multi_reduction <add>, %821, %cst_356 [0] : vector<8x8x4xf32> to vector<8x4xf32>
    %826 = vector.shape_cast %825 : vector<8x4xf32> to vector<1x8x4xf32>
    %cst_357 = arith.constant dense<0.000000e+00> : vector<1x4xf32>
    %827 = vector.multi_reduction <add>, %826, %cst_357 [1] : vector<1x8x4xf32> to vector<1x4xf32>
    %828 = vector.shape_cast %827 : vector<1x4xf32> to vector<1x1x4xf32>
    %c0_358 = arith.constant 0 : index
    %c0_359 = arith.constant 0 : index
    %c0_360 = arith.constant 0 : index
    %829 = vector.load %arg10[%c0_358, %c0_359, %c0_360] : memref<1x1x4xf32, #tpu.memory_space<vmem>>, vector<1x1x4xf32>
    tpu.vector_store %arg10[%c0_358, %c0_359, %c0_360], %828 {strides = array<i32>} : memref<1x1x4xf32, #tpu.memory_space<vmem>>, vector<1x1x4xf32>,
    %830 = arith.mulf %821, %821 : vector<8x8x4xf32>
    %cst_361 = arith.constant dense<0.000000e+00> : vector<8x4xf32>
    %831 = vector.multi_reduction <add>, %830, %cst_361 [0] : vector<8x8x4xf32> to vector<8x4xf32>
    %832 = vector.shape_cast %831 : vector<8x4xf32> to vector<1x8x4xf32>
    %cst_362 = arith.constant dense<0.000000e+00> : vector<1x4xf32>
    %833 = vector.multi_reduction <add>, %832, %cst_362 [1] : vector<1x8x4xf32> to vector<1x4xf32>
    %834 = vector.shape_cast %833 : vector<1x4xf32> to vector<1x1x4xf32>
    %c0_363 = arith.constant 0 : index
    %c0_364 = arith.constant 0 : index
    %c0_365 = arith.constant 0 : index
    %835 = vector.load %arg11[%c0_363, %c0_364, %c0_365] : memref<1x1x4xf32, #tpu.memory_space<vmem>>, vector<1x1x4xf32>
    tpu.vector_store %arg11[%c0_363, %c0_364, %c0_365], %834 {strides = array<i32>} : memref<1x1x4xf32, #tpu.memory_space<vmem>>, vector<1x1x4xf32>,
    return
  }
  func.func @transform_0(%arg0: i32, %arg1: i32) -> (i32, i32, i32) {
    %c0_i32 = arith.constant 0 : i32
    %c0_i32_0 = arith.constant 0 : i32
    %c0_i32_1 = arith.constant 0 : i32
    %c0_i32_2 = arith.constant 0 : i32
    return %c0_i32, %c0_i32_0, %c0_i32_1 : i32, i32, i32
  }
  func.func @transform_1(%arg0: i32, %arg1: i32) -> (i32, i32, i32) {
    %c0_i32 = arith.constant 0 : i32
    %c0_i32_0 = arith.constant 0 : i32
    %c0_i32_1 = arith.constant 0 : i32
    %c0_i32_2 = arith.constant 0 : i32
    return %c0_i32, %c0_i32_0, %c0_i32_1 : i32, i32, i32
  }
  func.func @transform_2(%arg0: i32, %arg1: i32) -> (i32, i32, i32, i32) {
    %c0_i32 = arith.constant 0 : i32
    %c0_i32_0 = arith.constant 0 : i32
    %c0_i32_1 = arith.constant 0 : i32
    %c0_i32_2 = arith.constant 0 : i32
    %c0_i32_3 = arith.constant 0 : i32
    return %c0_i32, %c0_i32_0, %c0_i32_1, %c0_i32_2 : i32, i32, i32, i32
  }
  func.func @transform_3(%arg0: i32, %arg1: i32) -> (i32, i32, i32) {
    %c0_i32 = arith.constant 0 : i32
    %c0_i32_0 = arith.constant 0 : i32
    %c0_i32_1 = arith.constant 0 : i32
    %c0_i32_2 = arith.constant 0 : i32
    return %c0_i32, %c0_i32_0, %c0_i32_1 : i32, i32, i32
  }
  func.func @transform_4(%arg0: i32, %arg1: i32) -> (i32, i32, i32, i32) {
    %c6_i32 = arith.constant 6 : i32
    %0 = arith.muli %arg0, %c6_i32 : i32
    %1 = arith.addi %0, %arg1 : i32
    %c0_i32 = arith.constant 0 : i32
    %2 = arith.addi %1, %c0_i32 : i32
    %c0_i32_0 = arith.constant 0 : i32
    %c0_i32_1 = arith.constant 0 : i32
    %c0_i32_2 = arith.constant 0 : i32
    %c0_i32_3 = arith.constant 0 : i32
    return %2, %c0_i32_0, %c0_i32_1, %c0_i32_2 : i32, i32, i32, i32
  }
  func.func @transform_5(%arg0: i32, %arg1: i32) -> (i32, i32, i32, i32) {
    %c6_i32 = arith.constant 6 : i32
    %0 = arith.muli %arg0, %c6_i32 : i32
    %1 = arith.addi %0, %arg1 : i32
    %c1_i32 = arith.constant 1 : i32
    %2 = arith.addi %1, %c1_i32 : i32
    %c0_i32 = arith.constant 0 : i32
    %c0_i32_0 = arith.constant 0 : i32
    %c0_i32_1 = arith.constant 0 : i32
    %c0_i32_2 = arith.constant 0 : i32
    return %2, %c0_i32, %c0_i32_0, %c0_i32_1 : i32, i32, i32, i32
  }
  func.func @transform_6(%arg0: i32, %arg1: i32) -> (i32, i32, i32, i32) {
    %c6_i32 = arith.constant 6 : i32
    %0 = arith.muli %arg0, %c6_i32 : i32
    %1 = arith.addi %0, %arg1 : i32
    %c2_i32 = arith.constant 2 : i32
    %2 = arith.addi %1, %c2_i32 : i32
    %c0_i32 = arith.constant 0 : i32
    %c0_i32_0 = arith.constant 0 : i32
    %c0_i32_1 = arith.constant 0 : i32
    %c0_i32_2 = arith.constant 0 : i32
    return %2, %c0_i32, %c0_i32_0, %c0_i32_1 : i32, i32, i32, i32
  }
  func.func @transform_7(%arg0: i32, %arg1: i32) -> (i32, i32, i32, i32) {
    %c4_i32 = arith.constant 4 : i32
    %0 = arith.muli %arg0, %c4_i32 : i32
    %1 = arith.addi %0, %arg1 : i32
    %c0_i32 = arith.constant 0 : i32
    %c0_i32_0 = arith.constant 0 : i32
    %c0_i32_1 = arith.constant 0 : i32
    %c0_i32_2 = arith.constant 0 : i32
    return %1, %c0_i32, %c0_i32_0, %c0_i32_1 : i32, i32, i32, i32
  }
  func.func @transform_8(%arg0: i32, %arg1: i32) -> (i32, i32, i32) {
    %c4_i32 = arith.constant 4 : i32
    %0 = arith.muli %arg0, %c4_i32 : i32
    %1 = arith.addi %0, %arg1 : i32
    %c0_i32 = arith.constant 0 : i32
    %c0_i32_0 = arith.constant 0 : i32
    %c0_i32_1 = arith.constant 0 : i32
    return %1, %c0_i32, %c0_i32_0 : i32, i32, i32
  }
  func.func @transform_9(%arg0: i32, %arg1: i32) -> (i32, i32, i32) {
    %c4_i32 = arith.constant 4 : i32
    %0 = arith.muli %arg0, %c4_i32 : i32
    %1 = arith.addi %0, %arg1 : i32
    %c0_i32 = arith.constant 0 : i32
    %c0_i32_0 = arith.constant 0 : i32
    %c0_i32_1 = arith.constant 0 : i32
    return %1, %c0_i32, %c0_i32_0 : i32, i32, i32
  }
}

module attributes {stable_mosaic.version = 11 : i64} {
  func.func @_final_fused_kernel(%arg0: i32, %arg1: memref<128x4xf32, #tpu.memory_space<vmem>>, %arg2: memref<128x16xf32, #tpu.memory_space<vmem>>, %arg3: memref<1x4xf32, #tpu.memory_space<vmem>>, %arg4: memref<1x4xf32, #tpu.memory_space<vmem>>, %arg5: memref<4x16xf32, #tpu.memory_space<vmem>>, %arg6: memref<1x16xf32, #tpu.memory_space<vmem>>, %arg7: memref<1x16xf32, #tpu.memory_space<vmem>>, %arg8: memref<128x16xf32, #tpu.memory_space<vmem>>) attributes {dimension_semantics = [#tpu.dimension_semantics<parallel>], iteration_bounds = array<i64: 4>, scalar_prefetch = 0 : i64, scratch_operands = 0 : i64, tpu.core_type = #tpu.core_type<tc>, window_params = [{transform_indices = @transform_0, window_bounds = array<i64: 128, 4>}, {transform_indices = @transform_1, window_bounds = array<i64: 128, 16>}, {pipeline_mode = #tpu.pipeline_mode<synchronous>, transform_indices = @transform_2, window_bounds = array<i64: 1, 4>}, {pipeline_mode = #tpu.pipeline_mode<synchronous>, transform_indices = @transform_3, window_bounds = array<i64: 1, 4>}, {pipeline_mode = #tpu.pipeline_mode<synchronous>, transform_indices = @transform_4, window_bounds = array<i64: 4, 16>}, {pipeline_mode = #tpu.pipeline_mode<synchronous>, transform_indices = @transform_5, window_bounds = array<i64: 1, 16>}, {pipeline_mode = #tpu.pipeline_mode<synchronous>, transform_indices = @transform_6, window_bounds = array<i64: 1, 16>}, {transform_indices = @transform_7, window_bounds = array<i64: 128, 16>}]} {
    %c0 = arith.constant 0 : index
    %c0_0 = arith.constant 0 : index
    %0 = vector.load %arg1[%c0, %c0_0] : memref<128x4xf32, #tpu.memory_space<vmem>>, vector<128x4xf32>
    %c0_1 = arith.constant 0 : index
    %c0_2 = arith.constant 0 : index
    %1 = vector.load %arg3[%c0_1, %c0_2] : memref<1x4xf32, #tpu.memory_space<vmem>>, vector<1x4xf32>
    %2 = vector.broadcast %1 : vector<1x4xf32> to vector<128x4xf32>
    %3 = arith.mulf %0, %2 : vector<128x4xf32>
    %c0_3 = arith.constant 0 : index
    %c0_4 = arith.constant 0 : index
    %4 = vector.load %arg4[%c0_3, %c0_4] : memref<1x4xf32, #tpu.memory_space<vmem>>, vector<1x4xf32>
    %5 = vector.broadcast %4 : vector<1x4xf32> to vector<128x4xf32>
    %6 = arith.addf %3, %5 : vector<128x4xf32>
    %cst = arith.constant 0.000000e+00 : f32
    %7 = vector.broadcast %cst : f32 to vector<128x4xf32>
    %8 = arith.maximumf %6, %7 : vector<128x4xf32>
    %c0_5 = arith.constant 0 : index
    %c0_6 = arith.constant 0 : index
    %9 = vector.load %arg5[%c0_5, %c0_6] : memref<4x16xf32, #tpu.memory_space<vmem>>, vector<4x16xf32>
    %cst_7 = arith.constant dense<0.000000e+00> : vector<128x16xf32>
    %10 = tpu.matmul %8, %9, %cst_7 {dimension_numbers = #tpu.dot_dimension_numbers<[1], [0], [0], [1], [0, 0, 1, 1], [], []>} : vector<128x4xf32>, vector<4x16xf32>, vector<128x16xf32> -> vector<128x16xf32>
    %c0_8 = arith.constant 0 : index
    %c0_9 = arith.constant 0 : index
    %11 = vector.load %arg6[%c0_8, %c0_9] : memref<1x16xf32, #tpu.memory_space<vmem>>, vector<1x16xf32>
    %12 = vector.broadcast %11 : vector<1x16xf32> to vector<128x16xf32>
    %13 = arith.mulf %10, %12 : vector<128x16xf32>
    %c0_10 = arith.constant 0 : index
    %c0_11 = arith.constant 0 : index
    %14 = vector.load %arg7[%c0_10, %c0_11] : memref<1x16xf32, #tpu.memory_space<vmem>>, vector<1x16xf32>
    %15 = vector.broadcast %14 : vector<1x16xf32> to vector<128x16xf32>
    %16 = arith.addf %13, %15 : vector<128x16xf32>
    %c0_12 = arith.constant 0 : index
    %c0_13 = arith.constant 0 : index
    %17 = vector.load %arg2[%c0_12, %c0_13] : memref<128x16xf32, #tpu.memory_space<vmem>>, vector<128x16xf32>
    %18 = arith.addf %16, %17 : vector<128x16xf32>
    %cst_14 = arith.constant 0.000000e+00 : f32
    %19 = vector.broadcast %cst_14 : f32 to vector<128x16xf32>
    %20 = arith.maximumf %18, %19 : vector<128x16xf32>
    %c0_15 = arith.constant 0 : index
    %c0_16 = arith.constant 0 : index
    %21 = vector.load %arg8[%c0_15, %c0_16] : memref<128x16xf32, #tpu.memory_space<vmem>>, vector<128x16xf32>
    tpu.vector_store %arg8[%c0_15, %c0_16], %20 {strides = array<i32>} : memref<128x16xf32, #tpu.memory_space<vmem>>, vector<128x16xf32>,
    return
  }
  func.func @transform_0(%arg0: i32) -> (i32, i32) {
    %c0_i32 = arith.constant 0 : i32
    %c0_i32_0 = arith.constant 0 : i32
    return %arg0, %c0_i32 : i32, i32
  }
  func.func @transform_1(%arg0: i32) -> (i32, i32) {
    %c0_i32 = arith.constant 0 : i32
    %c0_i32_0 = arith.constant 0 : i32
    return %arg0, %c0_i32 : i32, i32
  }
  func.func @transform_2(%arg0: i32) -> (i32, i32) {
    %c0_i32 = arith.constant 0 : i32
    %c0_i32_0 = arith.constant 0 : i32
    %c0_i32_1 = arith.constant 0 : i32
    return %c0_i32, %c0_i32_0 : i32, i32
  }
  func.func @transform_3(%arg0: i32) -> (i32, i32) {
    %c0_i32 = arith.constant 0 : i32
    %c0_i32_0 = arith.constant 0 : i32
    %c0_i32_1 = arith.constant 0 : i32
    return %c0_i32, %c0_i32_0 : i32, i32
  }
  func.func @transform_4(%arg0: i32) -> (i32, i32) {
    %c0_i32 = arith.constant 0 : i32
    %c0_i32_0 = arith.constant 0 : i32
    %c0_i32_1 = arith.constant 0 : i32
    return %c0_i32, %c0_i32_0 : i32, i32
  }
  func.func @transform_5(%arg0: i32) -> (i32, i32) {
    %c0_i32 = arith.constant 0 : i32
    %c0_i32_0 = arith.constant 0 : i32
    %c0_i32_1 = arith.constant 0 : i32
    return %c0_i32, %c0_i32_0 : i32, i32
  }
  func.func @transform_6(%arg0: i32) -> (i32, i32) {
    %c0_i32 = arith.constant 0 : i32
    %c0_i32_0 = arith.constant 0 : i32
    %c0_i32_1 = arith.constant 0 : i32
    return %c0_i32, %c0_i32_0 : i32, i32
  }
  func.func @transform_7(%arg0: i32) -> (i32, i32) {
    %c0_i32 = arith.constant 0 : i32
    %c0_i32_0 = arith.constant 0 : i32
    return %arg0, %c0_i32 : i32, i32
  }
}

</mosaic_0001>

<llo_original>
// kernel: bottleneck_forward.4
$region0: #{bottleneck_forward.4}
  #allocation0 [shape = 'u32[]', space=smem, size = 0x4, offset = 0x4, fixed_abs, tag = 'smem constant byte address 0x4 - core index']
  #allocation1 [shape = 'u32[144,128]{1,0:T(1,128)}', space=vmem, size = 0x12000, scoped, tag = 'internal scratch']
  %s0 = inlined_call_operand.hbm [shape: f32[512,16], index: 0, kind: input, shape index: {}]
  %s1 = inlined_call_operand.vmem [shape: f32[16,4], index: 1, kind: input, shape index: {}]
  %s2 = inlined_call_operand.vmem [shape: f32[512,4], index: 2, kind: output, shape index: {0}]
  %s3 = inlined_call_operand.vmem [shape: f32[4,1,4], index: 3, kind: output, shape index: {1}]
  %s4 = inlined_call_operand.vmem [shape: f32[4,1,4], index: 4, kind: output, shape index: {2}]
  %5 = xla_tuple %s2, %s3, %s4
  %s6 = sld [smem:[#allocation0]]
  $region61: #{bottleneck_forward.4} parent=0
    _
  %s8 = ssub.s32 1, %s6
  %s9 = scalar_select 0, %s8, %s6
  $region1: #{bottleneck_forward.4} parent=0
    #allocation2 [shape = 'u8[131072]{0}', space=vmem, size = 0x20000, scoped, tag = 'input window, operand 0']
    #allocation3 [shape = 's32[2]{0}', space=sflag, size = 0x8, scoped, tag = 'scoped memory for bottleneck_forward.4']
    %10 = vsyncpa [#allocation3], 0
    %s11 = scalar_lea.sflag [#allocation3], 1
    %12 = vsyncpa %s11, 0
    loop: start=0, step=1, limit=6
    $region2: #{bottleneck_forward.4} parent=1 // loop_pre_header
      _
    $region3: #{bottleneck_forward.4} parent=1 // loop_header
      %s14 = sphi 0, %s18
      %p15 = scmp.ge.s32.totalorder %s14, 6
      %s24 = sphi 0, %s26
      %s27 = sphi 0, %s24
      %s28 = sphi 0, %s27
      %s44 = sphi 0, %s28
      %s48 = sphi 0, %s48
      %s50 = sphi 0, %s48
      %s51 = sphi 0, %s50
      %s65 = sphi 0, %s51
      %s71 = sphi 0, %s73
      %s74 = sphi 0, %s71
      %s75 = sphi 0, %s74
      %s91 = sphi 0, %s75
      %s97 = sphi 0, %s99
      %s100 = sphi 0, %s97
      %s101 = sphi 0, %s100
      %s117 = sphi 0, %s101
      %s123 = sphi 0, %s125
      %s126 = sphi 0, %s123
      %s127 = sphi 0, %s126
      %s143 = sphi 0, %s127
    $region4: #{bottleneck_forward.4} parent=1 // loop_header_branch
      %17 = sbr.rel (%p15) target = $region8
    $region5: #{bottleneck_forward.4} parent=1 // loop_body
      %s19 = ssub.s32 %s14, 1
      %s20 = ssub.s32 %s14, 2
      %s21 = sadd.s32 %s14, 1
      %s22 = ssub.s32 %s14, %s21
      %p23 = scmp.eq.s32.totalorder %s22, 0
      %s25 = sadd.s32 %s24, 1
      %s26 = scalar_select %p23, %s24, %s25
      %p29 = pneg %p23
      %p30 = scmp.eq.s32.totalorder %s14, 3
      %p31 = por %p29, %p30
      %p32 = scmp.ne.s32.totalorder %s24, %s27
      %p33 = scmp.eq.s32.totalorder %s14, 0
      %p34 = por %p32, %p33
      %p35 = scmp.ne.s32.totalorder %s24, %s27
      %p36 = scmp.eq.s32.totalorder %s19, 3
      %p37 = por %p35, %p36
      %p38 = scmp.ne.s32.totalorder %s27, %s28
      %p39 = scmp.eq.s32.totalorder %s19, 0
      %p40 = por %p38, %p39
      %p41 = scmp.ne.s32.totalorder %s27, %s28
      %p42 = scmp.eq.s32.totalorder %s20, 3
      %p43 = por %p41, %p42
      %p45 = scmp.ne.s32.totalorder %s28, %s44
      %p46 = scmp.eq.s32.totalorder %s20, 0
      %p47 = por %p45, %p46
      %s49 = sadd.s32 %s48, 1
      %p52 = scmp.eq.s32.totalorder %s14, 3
      %p53 = scmp.ne.s32.totalorder %s48, %s50
      %p54 = scmp.eq.s32.totalorder %s14, 0
      %p55 = por %p53, %p54
      %p56 = scmp.ne.s32.totalorder %s48, %s50
      %p57 = scmp.eq.s32.totalorder %s19, 3
      %p58 = por %p56, %p57
      %p59 = scmp.ne.s32.totalorder %s50, %s51
      %p60 = scmp.eq.s32.totalorder %s19, 0
      %p61 = por %p59, %p60
      %p62 = scmp.ne.s32.totalorder %s50, %s51
      %p63 = scmp.eq.s32.totalorder %s20, 3
      %p64 = por %p62, %p63
      %p66 = scmp.ne.s32.totalorder %s51, %s65
      %p67 = scmp.eq.s32.totalorder %s20, 0
      %p68 = por %p66, %p67
      %s69 = ssub.s32 %s14, %s21
      %p70 = scmp.eq.s32.totalorder %s69, 0
      %s72 = sadd.s32 %s71, 1
      %s73 = scalar_select %p70, %s71, %s72
      %p76 = pneg %p70
      %p77 = scmp.eq.s32.totalorder %s14, 3
      %p78 = por %p76, %p77
      %p79 = scmp.ne.s32.totalorder %s71, %s74
      %p80 = scmp.eq.s32.totalorder %s14, 0
      %p81 = por %p79, %p80
      %p82 = scmp.ne.s32.totalorder %s71, %s74
      %p83 = scmp.eq.s32.totalorder %s19, 3
      %p84 = por %p82, %p83
      %p85 = scmp.ne.s32.totalorder %s74, %s75
      %p86 = scmp.eq.s32.totalorder %s19, 0
      %p87 = por %p85, %p86
      %p88 = scmp.ne.s32.totalorder %s74, %s75
      %p89 = scmp.eq.s32.totalorder %s20, 3
      %p90 = por %p88, %p89
      %p92 = scmp.ne.s32.totalorder %s75, %s91
      %p93 = scmp.eq.s32.totalorder %s20, 0
      %p94 = por %p92, %p93
      %s95 = ssub.s32 %s14, %s21
      %p96 = scmp.eq.s32.totalorder %s95, 0
      %s98 = sadd.s32 %s97, 1
      %s99 = scalar_select %p96, %s97, %s98
      %p102 = pneg %p96
      %p103 = scmp.eq.s32.totalorder %s14, 3
      %p104 = por %p102, %p103
      %p105 = scmp.ne.s32.totalorder %s97, %s100
      %p106 = scmp.eq.s32.totalorder %s14, 0
      %p107 = por %p105, %p106
      %p108 = scmp.ne.s32.totalorder %s97, %s100
      %p109 = scmp.eq.s32.totalorder %s19, 3
      %p110 = por %p108, %p109
      %p111 = scmp.ne.s32.totalorder %s100, %s101
      %p112 = scmp.eq.s32.totalorder %s19, 0
      %p113 = por %p111, %p112
      %p114 = scmp.ne.s32.totalorder %s100, %s101
      %p115 = scmp.eq.s32.totalorder %s20, 3
      %p116 = por %p114, %p115
      %p118 = scmp.ne.s32.totalorder %s101, %s117
      %p119 = scmp.eq.s32.totalorder %s20, 0
      %p120 = por %p118, %p119
      %s121 = ssub.s32 %s14, %s21
      %p122 = scmp.eq.s32.totalorder %s121, 0
      %s124 = sadd.s32 %s123, 1
      %s125 = scalar_select %p122, %s123, %s124
      %p128 = pneg %p122
      %p129 = scmp.eq.s32.totalorder %s14, 3
      %p130 = por %p128, %p129
      %p131 = scmp.ne.s32.totalorder %s123, %s126
      %p132 = scmp.eq.s32.totalorder %s14, 0
      %p133 = por %p131, %p132
      %p134 = scmp.ne.s32.totalorder %s123, %s126
      %p135 = scmp.eq.s32.totalorder %s19, 3
      %p136 = por %p134, %p135
      %p137 = scmp.ne.s32.totalorder %s126, %s127
      %p138 = scmp.eq.s32.totalorder %s19, 0
      %p139 = por %p137, %p138
      %p140 = scmp.ne.s32.totalorder %s126, %s127
      %p141 = scmp.eq.s32.totalorder %s20, 3
      %p142 = por %p140, %p141
      %p144 = scmp.ne.s32.totalorder %s127, %s143
      %p145 = scmp.eq.s32.totalorder %s20, 0
      %p146 = por %p144, %p145
      %p147 = scmp.le.s32.totalorder 1, %s14
      %p148 = scmp.lt.s32.totalorder %s14, 5
      %p149 = pnand %p147, %p148
      %p150 = pneg %p149
      // Predicated region
      $region9: #{bottleneck_forward.4} parent=5 // pred_check
        _
      $region10: #{bottleneck_forward.4} parent=5 // pred_check_branch
        %152 = sbr.rel (%p149) target = $region12
      $region11: #{bottleneck_forward.4} parent=5 // pred_region
        %s153 = ssub.s32 %s14, 1
        // Predicated region
        $region13: #{bottleneck_forward.4} parent=11 // pred_check
          %p154 = pneg %p61
        $region14: #{bottleneck_forward.4} parent=11 // pred_check_branch
          %156 = sbr.rel (%p154) target = $region16
        $region15: #{bottleneck_forward.4} parent=11 // pred_region
          _
        $region16: #{bottleneck_forward.4} parent=11 // pred_fallthru
          _
      $region12: #{bottleneck_forward.4} parent=5 // pred_fallthru
        _
      %p157 = scmp.lt.s32.totalorder %s14, 4
      // Predicated region
      $region17: #{bottleneck_forward.4} parent=5 // pred_check
        %p158 = pneg %p157
      $region18: #{bottleneck_forward.4} parent=5 // pred_check_branch
        %160 = sbr.rel (%p158) target = $region20
      $region19: #{bottleneck_forward.4} parent=5 // pred_region
        // Predicated region
        $region21: #{bottleneck_forward.4} parent=19 // pred_check
          %p161 = pneg %p34
        $region22: #{bottleneck_forward.4} parent=19 // pred_check_branch
          %163 = sbr.rel (%p161) target = $region24
        $region23: #{bottleneck_forward.4} parent=19 // pred_region
          %s164 = sand.u32 %s24, 1
          %s165 = scalar_lea.sflag [#allocation3], %s164
          %s166 = sand.u32 %s24, 1
          %s167 = smul.addr %s166, 128
          %s168 = scalar_lea.vmem [#allocation2], %s167
          %s169 = smul.u32 16, %s14
          %s171 = ssub.s32 2048, 2048
          %172 = vsyncadd %s165, %s171
          %s173 = smul.addr %s169, 128
          %s174 = scalar_lea.hbm %s0, %s173
          %s175 = sshll.u32 %s168, 4
          %s176 = int_to_ptr.vmem [resolvable:$true] %s175
          %181 = dma.hbm_to_vmem [thread:$0]  %s174, 2048, %s176, %s165, 128, 128, 8
        $region24: #{bottleneck_forward.4} parent=19 // pred_fallthru
          _
      $region20: #{bottleneck_forward.4} parent=5 // pred_fallthru
        _
      %p182 = scmp.le.s32.totalorder 1, %s14
      %p183 = scmp.lt.s32.totalorder %s14, 5
      %p184 = pnand %p182, %p183
      %p185 = pneg %p184
      // Predicated region
      $region25: #{bottleneck_forward.4} parent=5 // pred_check
        _
      $region26: #{bottleneck_forward.4} parent=5 // pred_check_branch
        %187 = sbr.rel (%p184) target = $region28
      $region27: #{bottleneck_forward.4} parent=5 // pred_region
        %s188 = ssub.s32 %s14, 1
        %s189 = sand.u32 %s27, 1
        %s190 = scalar_lea.sflag [#allocation3], %s189
        %s191 = sand.u32 %s27, 1
        %s192 = smul.addr %s191, 128
        %s193 = scalar_lea.vmem [#allocation2], %s192
        // Predicated region
        $region29: #{bottleneck_forward.4} parent=27 // pred_check
          %p194 = pneg %p40
        $region30: #{bottleneck_forward.4} parent=27 // pred_check_branch
          %196 = sbr.rel (%p194) target = $region32
        $region31: #{bottleneck_forward.4} parent=27 // pred_region
          %197 = dma.done %s190, 2048
        $region32: #{bottleneck_forward.4} parent=27 // pred_fallthru
          _
        %s198 = sand.u32 %s27, 1
        %s199 = scalar_lea.sflag [#allocation3], %s198
        %s200 = sand.u32 %s27, 1
        %s201 = smul.addr %s200, 128
        %s202 = scalar_lea.vmem [#allocation2], %s201
        %p203 = pneg %p40
        %p204 = pneg %p37
        %p205 = pneg %p61
        %p206 = pneg %p58
        %p207 = pneg %p87
        %p208 = pneg %p84
        %s209 = smul.u32 16, %s19
        %p210 = scmp.lt.s32.totalorder %s209, 63
        %s211 = scalar_select %p210, %s209, 63
        %s212 = smul.addr %s211, 8
        %s213 = scalar_lea.vmem %s2, %s212
        %p214 = pneg %p113
        %p215 = pneg %p110
        %p216 = scmp.lt.s32.totalorder %s19, 3
        %s217 = scalar_select %p216, %s19, 3
        %s218 = scalar_lea.vmem %s3, %s217
        %p219 = pneg %p139
        %p220 = pneg %p136
        %p221 = scmp.lt.s32.totalorder %s19, 3
        %s222 = scalar_select %p221, %s19, 3
        %s223 = scalar_lea.vmem %s4, %s222
        %s224 = smul.u32 16, %s19
        %s225 = smul.u32 16, %s19
        %p226 = scmp.lt.s32.totalorder %s225, 63
        %s227 = scalar_select %p226, %s225, 63
        %s228 = smul.addr %s227, 8
        %s229 = scalar_lea.vmem %s2, %s228
        %s230 = smul.u32 16, %s19
        %p231 = scmp.lt.s32.totalorder %s19, 3
        %s232 = scalar_select %p231, %s19, 3
        %s233 = scalar_lea.vmem %s3, %s232
        %p234 = scmp.lt.s32.totalorder %s19, 3
        %s235 = scalar_select %p234, %s19, 3
        %s236 = scalar_lea.vmem %s4, %s235
        %v237 = vld [vmem:[%s193] sm:$0xff]
        %v238 = vld [vmem:[%s193 + $0x8] sm:$0xff]
        %v239 = vld [vmem:[%s193 + $0x10] sm:$0xff]
        %v240 = vld [vmem:[%s193 + $0x18] sm:$0xff]
        %v241 = vld [vmem:[%s193 + $0x20] sm:$0xff]
        %v242 = vld [vmem:[%s193 + $0x28] sm:$0xff]
        %v243 = vld [vmem:[%s193 + $0x30] sm:$0xff]
        %v244 = vld [vmem:[%s193 + $0x38] sm:$0xff]
        %v245 = vld [vmem:[%s193 + $0x40] sm:$0xff]
        %v246 = vld [vmem:[%s193 + $0x48] sm:$0xff]
        %v247 = vld [vmem:[%s193 + $0x50] sm:$0xff]
        %v248 = vld [vmem:[%s193 + $0x58] sm:$0xff]
        %v249 = vld [vmem:[%s193 + $0x60] sm:$0xff]
        %v250 = vld [vmem:[%s193 + $0x68] sm:$0xff]
        %v251 = vld [vmem:[%s193 + $0x70] sm:$0xff]
        %v252 = vld [vmem:[%s193 + $0x78] sm:$0xff]
        %v253 = vld [vmem:[%s1] sm:$0xff]
        %v254 = vld [vmem:[%s1 + $0x8] sm:$0xff]
        %vm255 = vcmask 130048
        %v257 = vsel %vm255, %v237, 0
        %v260 = vsel %vm255, %v238, 0
        %v263 = vsel %vm255, %v239, 0
        %v266 = vsel %vm255, %v240, 0
        %v269 = vsel %vm255, %v241, 0
        %v272 = vsel %vm255, %v242, 0
        %v275 = vsel %vm255, %v243, 0
        %v278 = vsel %vm255, %v244, 0
        %v281 = vsel %vm255, %v245, 0
        %v284 = vsel %vm255, %v246, 0
        %v287 = vsel %vm255, %v247, 0
        %v290 = vsel %vm255, %v248, 0
        %v293 = vsel %vm255, %v249, 0
        %v296 = vsel %vm255, %v250, 0
        %v299 = vsel %vm255, %v251, 0
        %v302 = vsel %vm255, %v252, 0
        %304 = vmatprep.subr.mxu0 0.0
        %305 = vmatpush1.msra.mxu0 %v253
        %306 = vmatprep.subr.mxu0 0.0
        %307 = vmatpush1.msra.mxu0 %v254
        %308 = vmatprep.subr.mxu0 0.0
        %309 = vmatpush1.msra.mxu0 0.0
        %310 = vmatprep.subr.mxu0 0.0
        %311 = vmatpush1.msra.mxu0 0.0
        %312 = vmatprep.subr.mxu0 0.0
        %313 = vmatpush1.msra.mxu0 0.0
        %314 = vmatprep.subr.mxu0 0.0
        %315 = vmatpush1.msra.mxu0 0.0
        %316 = vmatprep.subr.mxu0 0.0
        %317 = vmatpush1.msra.mxu0 0.0
        %318 = vmatprep.subr.mxu0 0.0
        %319 = vmatpush1.msra.mxu0 0.0
        %320 = vmatprep.subr.mxu0 0.0
        %321 = vmatpush1.msra.mxu0 0.0
        %322 = vmatprep.subr.mxu0 0.0
        %323 = vmatpush1.msra.mxu0 0.0
        %324 = vmatprep.subr.mxu0 0.0
        %325 = vmatpush1.msra.mxu0 0.0
        %326 = vmatprep.subr.mxu0 0.0
        %327 = vmatpush1.msra.mxu0 0.0
        %328 = vmatprep.subr.mxu0 0.0
        %329 = vmatpush1.msra.mxu0 0.0
        %330 = vmatprep.subr.mxu0 0.0
        %331 = vmatpush1.msra.mxu0 0.0
        %332 = vmatprep.subr.mxu0 0.0
        %333 = vmatpush1.msra.mxu0 0.0
        %334 = vmatprep.subr.mxu0 0.0
        %335 = vmatpush1.msra.mxu0 0.0
        %336 = vmatprep.subr.mxu0 0.0
        %337 = vmatpush1.msra.mxu0 0.0
        %338 = vmatprep.subr.mxu0 0.0
        %339 = vmatpush1.msra.mxu0 0.0
        %340 = vmatprep.subr.mxu0 0.0
        %341 = vmatpush1.msra.mxu0 0.0
        %342 = vmatprep.subr.mxu0 0.0
        %343 = vmatpush1.msra.mxu0 0.0
        %344 = vmatprep.subr.mxu0 0.0
        %345 = vmatpush1.msra.mxu0 0.0
        %346 = vmatprep.subr.mxu0 0.0
        %347 = vmatpush1.msra.mxu0 0.0
        %348 = vmatprep.subr.mxu0 0.0
        %349 = vmatpush1.msra.mxu0 0.0
        %350 = vmatprep.subr.mxu0 0.0
        %351 = vmatpush1.msra.mxu0 0.0
        %352 = vmatprep.subr.mxu0 0.0
        %353 = vmatpush1.msra.mxu0 0.0
        %354 = vmatprep.subr.mxu0 0.0
        %355 = vmatpush1.msra.mxu0 0.0
        %356 = vmatprep.subr.mxu0 0.0
        %357 = vmatpush1.msra.mxu0 0.0
        %358 = vmatprep.subr.mxu0 0.0
        %359 = vmatpush1.msra.mxu0 0.0
        %360 = vmatprep.subr.mxu0 0.0
        %361 = vmatpush1.msra.mxu0 0.0
        %362 = vmatprep.subr.mxu0 0.0
        %363 = vmatpush1.msra.mxu0 0.0
        %364 = vmatprep.subr.mxu0 0.0
        %365 = vmatpush1.msra.mxu0 0.0
        %366 = vmatprep.subr.mxu0 0.0
        %367 = vmatpush1.msra.mxu0 0.0
        %368 = vmatprep.mubr.f32.mxu0 0.0
        %369 = vmatmul.mubr.f32.gmra.mrb[0].mxu0 %v257
        %v370 = vpop.f32.mrb[0].mxu0
        %v371 = vadd.f32 0.0, %v370
        %v372 = vpop.f32.mrb[0].mxu0
        %373 = vmatprep.mubr.f32.mxu0 0.0
        %374 = vmatmul.mubr.f32.gmra.mrb[0].mxu0 %v260
        %v375 = vpop.f32.mrb[0].mxu0
        %v376 = vadd.f32 0.0, %v375
        %v377 = vpop.f32.mrb[0].mxu0
        %378 = vmatprep.mubr.f32.mxu0 0.0
        %379 = vmatmul.mubr.f32.gmra.mrb[0].mxu0 %v263
        %v380 = vpop.f32.mrb[0].mxu0
        %v381 = vadd.f32 0.0, %v380
        %v382 = vpop.f32.mrb[0].mxu0
        %383 = vmatprep.mubr.f32.mxu0 0.0
        %384 = vmatmul.mubr.f32.gmra.mrb[0].mxu0 %v266
        %v385 = vpop.f32.mrb[0].mxu0
        %v386 = vadd.f32 0.0, %v385
        %v387 = vpop.f32.mrb[0].mxu0
        %388 = vmatprep.mubr.f32.mxu0 0.0
        %389 = vmatmul.mubr.f32.gmra.mrb[0].mxu0 %v269
        %v390 = vpop.f32.mrb[0].mxu0
        %v391 = vadd.f32 0.0, %v390
        %v392 = vpop.f32.mrb[0].mxu0
        %393 = vmatprep.mubr.f32.mxu0 0.0
        %394 = vmatmul.mubr.f32.gmra.mrb[0].mxu0 %v272
        %v395 = vpop.f32.mrb[0].mxu0
        %v396 = vadd.f32 0.0, %v395
        %v397 = vpop.f32.mrb[0].mxu0
        %398 = vmatprep.mubr.f32.mxu0 0.0
        %399 = vmatmul.mubr.f32.gmra.mrb[0].mxu0 %v275
        %v400 = vpop.f32.mrb[0].mxu0
        %v401 = vadd.f32 0.0, %v400
        %v402 = vpop.f32.mrb[0].mxu0
        %403 = vmatprep.mubr.f32.mxu0 0.0
        %404 = vmatmul.mubr.f32.gmra.mrb[0].mxu0 %v278
        %v405 = vpop.f32.mrb[0].mxu0
        %v406 = vadd.f32 0.0, %v405
        %v407 = vpop.f32.mrb[0].mxu0
        %408 = vmatprep.mubr.f32.mxu0 0.0
        %409 = vmatmul.mubr.f32.gmra.mrb[0].mxu0 %v281
        %v410 = vpop.f32.mrb[0].mxu0
        %v411 = vadd.f32 0.0, %v410
        %v412 = vpop.f32.mrb[0].mxu0
        %413 = vmatprep.mubr.f32.mxu0 0.0
        %414 = vmatmul.mubr.f32.gmra.mrb[0].mxu0 %v284
        %v415 = vpop.f32.mrb[0].mxu0
        %v416 = vadd.f32 0.0, %v415
        %v417 = vpop.f32.mrb[0].mxu0
        %418 = vmatprep.mubr.f32.mxu0 0.0
        %419 = vmatmul.mubr.f32.gmra.mrb[0].mxu0 %v287
        %v420 = vpop.f32.mrb[0].mxu0
        %v421 = vadd.f32 0.0, %v420
        %v422 = vpop.f32.mrb[0].mxu0
        %423 = vmatprep.mubr.f32.mxu0 0.0
        %424 = vmatmul.mubr.f32.gmra.mrb[0].mxu0 %v290
        %v425 = vpop.f32.mrb[0].mxu0
        %v426 = vadd.f32 0.0, %v425
        %v427 = vpop.f32.mrb[0].mxu0
        %428 = vmatprep.mubr.f32.mxu0 0.0
        %429 = vmatmul.mubr.f32.gmra.mrb[0].mxu0 %v293
        %v430 = vpop.f32.mrb[0].mxu0
        %v431 = vadd.f32 0.0, %v430
        %v432 = vpop.f32.mrb[0].mxu0
        %433 = vmatprep.mubr.f32.mxu0 0.0
        %434 = vmatmul.mubr.f32.gmra.mrb[0].mxu0 %v296
        %v435 = vpop.f32.mrb[0].mxu0
        %v436 = vadd.f32 0.0, %v435
        %v437 = vpop.f32.mrb[0].mxu0
        %438 = vmatprep.mubr.f32.mxu0 0.0
        %439 = vmatmul.mubr.f32.gmra.mrb[0].mxu0 %v299
        %v440 = vpop.f32.mrb[0].mxu0
        %v441 = vadd.f32 0.0, %v440
        %v442 = vpop.f32.mrb[0].mxu0
        %443 = vmatprep.mubr.f32.mxu0 0.0
        %444 = vmatmul.mubr.f32.gmra.mrb[0].mxu0 %v302
        %v445 = vpop.f32.mrb[0].mxu0
        %v446 = vadd.f32 0.0, %v445
        %v447 = vpop.f32.mrb[0].mxu0
        %448 = vdwg.mxu0
        %vm449 = vcmask 31744
        %450 = vst.msk [vmem:[%s229] sm:$0xff] %vm449, %v371
        %451 = vst.msk [vmem:[%s229 + $0x8] sm:$0xff] %vm449, %v376
        %452 = vst.msk [vmem:[%s229 + $0x10] sm:$0xff] %vm449, %v381
        %453 = vst.msk [vmem:[%s229 + $0x18] sm:$0xff] %vm449, %v386
        %454 = vst.msk [vmem:[%s229 + $0x20] sm:$0xff] %vm449, %v391
        %455 = vst.msk [vmem:[%s229 + $0x28] sm:$0xff] %vm449, %v396
        %456 = vst.msk [vmem:[%s229 + $0x30] sm:$0xff] %vm449, %v401
        %457 = vst.msk [vmem:[%s229 + $0x38] sm:$0xff] %vm449, %v406
        %458 = vst.msk [vmem:[%s229 + $0x40] sm:$0xff] %vm449, %v411
        %459 = vst.msk [vmem:[%s229 + $0x48] sm:$0xff] %vm449, %v416
        %460 = vst.msk [vmem:[%s229 + $0x50] sm:$0xff] %vm449, %v421
        %461 = vst.msk [vmem:[%s229 + $0x58] sm:$0xff] %vm449, %v426
        %462 = vst.msk [vmem:[%s229 + $0x60] sm:$0xff] %vm449, %v431
        %463 = vst.msk [vmem:[%s229 + $0x68] sm:$0xff] %vm449, %v436
        %464 = vst.msk [vmem:[%s229 + $0x70] sm:$0xff] %vm449, %v441
        %465 = vst.msk [vmem:[%s229 + $0x78] sm:$0xff] %vm449, %v446
        %v466 = vsel %vm449, %v371, 0.0
        %v467 = vsel %vm449, %v376, 0.0
        %v468 = vadd.f32 %v466, %v467
        %v469 = vsel %vm449, %v381, 0.0
        %v470 = vadd.f32 %v468, %v469
        %v471 = vsel %vm449, %v386, 0.0
        %v472 = vadd.f32 %v470, %v471
        %v473 = vsel %vm449, %v391, 0.0
        %v474 = vadd.f32 %v472, %v473
        %v475 = vsel %vm449, %v396, 0.0
        %v476 = vadd.f32 %v474, %v475
        %v477 = vsel %vm449, %v401, 0.0
        %v478 = vadd.f32 %v476, %v477
        %v479 = vsel %vm449, %v406, 0.0
        %v480 = vadd.f32 %v478, %v479
        %v481 = vsel %vm449, %v411, 0.0
        %v482 = vadd.f32 %v480, %v481
        %v483 = vsel %vm449, %v416, 0.0
        %v484 = vadd.f32 %v482, %v483
        %v485 = vsel %vm449, %v421, 0.0
        %v486 = vadd.f32 %v484, %v485
        %v487 = vsel %vm449, %v426, 0.0
        %v488 = vadd.f32 %v486, %v487
        %v489 = vsel %vm449, %v431, 0.0
        %v490 = vadd.f32 %v488, %v489
        %v491 = vsel %vm449, %v436, 0.0
        %v492 = vadd.f32 %v490, %v491
        %v493 = vsel %vm449, %v441, 0.0
        %v494 = vadd.f32 %v492, %v493
        %v495 = vsel %vm449, %v446, 0.0
        %v496 = vadd.f32 %v494, %v495
        %v497 = vrot.slane %v496, 4
        %v498 = vadd.f32 %v496, %v497
        %v499 = vrot.slane %v498, 2
        %v500 = vadd.f32 %v498, %v499
        %v501 = vrot.slane %v500, 1
        %v502 = vadd.f32 %v500, %v501
        %vm503 = vcmask 24576
        %504 = vst.msk [vmem:[%s233] sm:$0x1] %vm503, %v502
        %v505 = vmul.f32 %v371, %v371
        %v506 = vmul.f32 %v376, %v376
        %v507 = vmul.f32 %v381, %v381
        %v508 = vmul.f32 %v386, %v386
        %v509 = vmul.f32 %v391, %v391
        %v510 = vmul.f32 %v396, %v396
        %v511 = vmul.f32 %v401, %v401
        %v512 = vmul.f32 %v406, %v406
        %v513 = vmul.f32 %v411, %v411
        %v514 = vmul.f32 %v416, %v416
        %v515 = vmul.f32 %v421, %v421
        %v516 = vmul.f32 %v426, %v426
        %v517 = vmul.f32 %v431, %v431
        %v518 = vmul.f32 %v436, %v436
        %v519 = vmul.f32 %v441, %v441
        %v520 = vmul.f32 %v446, %v446
        %v521 = vsel %vm449, %v505, 0.0
        %v522 = vsel %vm449, %v506, 0.0
        %v523 = vadd.f32 %v521, %v522
        %v524 = vsel %vm449, %v507, 0.0
        %v525 = vadd.f32 %v523, %v524
        %v526 = vsel %vm449, %v508, 0.0
        %v527 = vadd.f32 %v525, %v526
        %v528 = vsel %vm449, %v509, 0.0
        %v529 = vadd.f32 %v527, %v528
        %v530 = vsel %vm449, %v510, 0.0
        %v531 = vadd.f32 %v529, %v530
        %v532 = vsel %vm449, %v511, 0.0
        %v533 = vadd.f32 %v531, %v532
        %v534 = vsel %vm449, %v512, 0.0
        %v535 = vadd.f32 %v533, %v534
        %v536 = vsel %vm449, %v513, 0.0
        %v537 = vadd.f32 %v535, %v536
        %v538 = vsel %vm449, %v514, 0.0
        %v539 = vadd.f32 %v537, %v538
        %v540 = vsel %vm449, %v515, 0.0
        %v541 = vadd.f32 %v539, %v540
        %v542 = vsel %vm449, %v516, 0.0
        %v543 = vadd.f32 %v541, %v542
        %v544 = vsel %vm449, %v517, 0.0
        %v545 = vadd.f32 %v543, %v544
        %v546 = vsel %vm449, %v518, 0.0
        %v547 = vadd.f32 %v545, %v546
        %v548 = vsel %vm449, %v519, 0.0
        %v549 = vadd.f32 %v547, %v548
        %v550 = vsel %vm449, %v520, 0.0
        %v551 = vadd.f32 %v549, %v550
        %v552 = vrot.slane %v551, 4
        %v553 = vadd.f32 %v551, %v552
        %v554 = vrot.slane %v553, 2
        %v555 = vadd.f32 %v553, %v554
        %v556 = vrot.slane %v555, 1
        %v557 = vadd.f32 %v555, %v556
        %558 = vst.msk [vmem:[%s236] sm:$0x1] %vm503, %v557
        %s559 = smul.u32 16, %s19
        %p560 = scmp.lt.s32.totalorder %s559, 63
        %s561 = scalar_select %p560, %s559, 63
        %s562 = smul.addr %s561, 8
        %s563 = scalar_lea.vmem %s2, %s562
        %p564 = scmp.lt.s32.totalorder %s19, 3
        %s565 = scalar_select %p564, %s19, 3
        %s566 = scalar_lea.vmem %s3, %s565
        %p567 = scmp.lt.s32.totalorder %s19, 3
        %s568 = scalar_select %p567, %s19, 3
        %s569 = scalar_lea.vmem %s4, %s568
        // Predicated region
        $region33: #{bottleneck_forward.4} parent=27 // pred_check
          %p570 = pneg %p84
        $region34: #{bottleneck_forward.4} parent=27 // pred_check_branch
          %572 = sbr.rel (%p570) target = $region36
        $region35: #{bottleneck_forward.4} parent=27 // pred_region
          %s573 = smul.u32 16, %s19
        $region36: #{bottleneck_forward.4} parent=27 // pred_fallthru
          _
        // Predicated region
        $region37: #{bottleneck_forward.4} parent=27 // pred_check
          %p574 = pneg %p110
        $region38: #{bottleneck_forward.4} parent=27 // pred_check_branch
          %576 = sbr.rel (%p574) target = $region40
        $region39: #{bottleneck_forward.4} parent=27 // pred_region
          _
        $region40: #{bottleneck_forward.4} parent=27 // pred_fallthru
          _
        // Predicated region
        $region41: #{bottleneck_forward.4} parent=27 // pred_check
          %p577 = pneg %p136
        $region42: #{bottleneck_forward.4} parent=27 // pred_check_branch
          %579 = sbr.rel (%p577) target = $region44
        $region43: #{bottleneck_forward.4} parent=27 // pred_region
          _
        $region44: #{bottleneck_forward.4} parent=27 // pred_fallthru
          _
      $region28: #{bottleneck_forward.4} parent=5 // pred_fallthru
        _
      %p580 = scmp.le.s32.totalorder 2, %s14
      // Predicated region
      $region45: #{bottleneck_forward.4} parent=5 // pred_check
        %p581 = pneg %p580
      $region46: #{bottleneck_forward.4} parent=5 // pred_check_branch
        %583 = sbr.rel (%p581) target = $region48
      $region47: #{bottleneck_forward.4} parent=5 // pred_region
        %s584 = ssub.s32 %s14, 2
        // Predicated region
        $region49: #{bottleneck_forward.4} parent=47 // pred_check
          %p585 = pneg %p90
        $region50: #{bottleneck_forward.4} parent=47 // pred_check_branch
          %587 = sbr.rel (%p585) target = $region52
        $region51: #{bottleneck_forward.4} parent=47 // pred_region
          %s588 = smul.u32 16, %s20
          %p589 = scmp.lt.s32.totalorder %s588, 63
          %s590 = scalar_select %p589, %s588, 63
          %s591 = smul.addr %s590, 8
          %s592 = scalar_lea.vmem %s2, %s591
        $region52: #{bottleneck_forward.4} parent=47 // pred_fallthru
          _
        // Predicated region
        $region53: #{bottleneck_forward.4} parent=47 // pred_check
          %p593 = pneg %p116
        $region54: #{bottleneck_forward.4} parent=47 // pred_check_branch
          %595 = sbr.rel (%p593) target = $region56
        $region55: #{bottleneck_forward.4} parent=47 // pred_region
          %p596 = scmp.lt.s32.totalorder %s20, 3
          %s597 = scalar_select %p596, %s20, 3
          %s598 = scalar_lea.vmem %s3, %s597
        $region56: #{bottleneck_forward.4} parent=47 // pred_fallthru
          _
        // Predicated region
        $region57: #{bottleneck_forward.4} parent=47 // pred_check
          %p599 = pneg %p142
        $region58: #{bottleneck_forward.4} parent=47 // pred_check_branch
          %601 = sbr.rel (%p599) target = $region60
        $region59: #{bottleneck_forward.4} parent=47 // pred_region
          %p602 = scmp.lt.s32.totalorder %s20, 3
          %s603 = scalar_select %p602, %s20, 3
          %s604 = scalar_lea.vmem %s4, %s603
        $region60: #{bottleneck_forward.4} parent=47 // pred_fallthru
          _
      $region48: #{bottleneck_forward.4} parent=5 // pred_fallthru
        _
    $region6: #{bottleneck_forward.4} parent=1 // loop_footer
      %s18 = sadd.s32 1, %s14
    $region7: #{bottleneck_forward.4} parent=1 // loop_footer_branch
      %13 = sbr.rel target = $region3
    $region8: #{bottleneck_forward.4} parent=1 // loop_exit
      _
    %605 = vsyncpa [#allocation3], 1
    %s606 = scalar_lea.sflag [#allocation3], 1
    %607 = vsyncpa %s606, 1

// kernel: bottleneck_forward.6
$region0: #{bottleneck_forward.6}
  #allocation0 [shape = 'u32[]', space=smem, size = 0x4, offset = 0x4, fixed_abs, tag = 'smem constant byte address 0x4 - core index']
  #allocation1 [shape = 'u32[144,128]{1,0:T(1,128)}', space=vmem, size = 0x12000, scoped, tag = 'internal scratch']
  %s0 = inlined_call_operand.vmem [shape: f32[512,4], index: 0, kind: input, shape index: {}]
  %s1 = inlined_call_operand.vmem [shape: f32[1,4], index: 1, kind: input, shape index: {}]
  %s2 = inlined_call_operand.vmem [shape: f32[1,4], index: 2, kind: input, shape index: {}]
  %s3 = inlined_call_operand.vmem [shape: f32[4,16], index: 3, kind: input, shape index: {}]
  %s4 = inlined_call_operand.vmem [shape: f32[4,1,16], index: 4, kind: output, shape index: {0}]
  %s5 = inlined_call_operand.vmem [shape: f32[4,1,16], index: 5, kind: output, shape index: {1}]
  %6 = xla_tuple %s4, %s5
  %s7 = sld [smem:[#allocation0]]
  $region57: #{bottleneck_forward.6} parent=0
    _
  %s9 = ssub.s32 1, %s7
  %s10 = scalar_select 0, %s9, %s7
  loop: start=0, step=1, limit=6
  $region2: #{bottleneck_forward.6} parent=0 // loop_pre_header
    _
  $region3: #{bottleneck_forward.6} parent=0 // loop_header
    %s12 = sphi 0, %s16
    %p13 = scmp.ge.s32.totalorder %s12, 6
    %s22 = sphi 0, %s24
    %s25 = sphi 0, %s22
    %s26 = sphi 0, %s25
    %s42 = sphi 0, %s26
    %s46 = sphi 0, %s46
    %s48 = sphi 0, %s46
    %s49 = sphi 0, %s48
    %s63 = sphi 0, %s49
    %s67 = sphi 0, %s67
    %s69 = sphi 0, %s67
    %s70 = sphi 0, %s69
    %s84 = sphi 0, %s70
    %s88 = sphi 0, %s88
    %s90 = sphi 0, %s88
    %s91 = sphi 0, %s90
    %s105 = sphi 0, %s91
    %s111 = sphi 0, %s113
    %s114 = sphi 0, %s111
    %s115 = sphi 0, %s114
    %s131 = sphi 0, %s115
    %s137 = sphi 0, %s139
    %s140 = sphi 0, %s137
    %s141 = sphi 0, %s140
    %s157 = sphi 0, %s141
  $region4: #{bottleneck_forward.6} parent=0 // loop_header_branch
    %15 = sbr.rel (%p13) target = $region8
  $region5: #{bottleneck_forward.6} parent=0 // loop_body
    %s17 = ssub.s32 %s12, 1
    %s18 = ssub.s32 %s12, 2
    %s19 = sadd.s32 %s12, 1
    %s20 = ssub.s32 %s12, %s19
    %p21 = scmp.eq.s32.totalorder %s20, 0
    %s23 = sadd.s32 %s22, 1
    %s24 = scalar_select %p21, %s22, %s23
    %p27 = pneg %p21
    %p28 = scmp.eq.s32.totalorder %s12, 3
    %p29 = por %p27, %p28
    %p30 = scmp.ne.s32.totalorder %s22, %s25
    %p31 = scmp.eq.s32.totalorder %s12, 0
    %p32 = por %p30, %p31
    %p33 = scmp.ne.s32.totalorder %s22, %s25
    %p34 = scmp.eq.s32.totalorder %s17, 3
    %p35 = por %p33, %p34
    %p36 = scmp.ne.s32.totalorder %s25, %s26
    %p37 = scmp.eq.s32.totalorder %s17, 0
    %p38 = por %p36, %p37
    %p39 = scmp.ne.s32.totalorder %s25, %s26
    %p40 = scmp.eq.s32.totalorder %s18, 3
    %p41 = por %p39, %p40
    %p43 = scmp.ne.s32.totalorder %s26, %s42
    %p44 = scmp.eq.s32.totalorder %s18, 0
    %p45 = por %p43, %p44
    %s47 = sadd.s32 %s46, 1
    %p50 = scmp.eq.s32.totalorder %s12, 3
    %p51 = scmp.ne.s32.totalorder %s46, %s48
    %p52 = scmp.eq.s32.totalorder %s12, 0
    %p53 = por %p51, %p52
    %p54 = scmp.ne.s32.totalorder %s46, %s48
    %p55 = scmp.eq.s32.totalorder %s17, 3
    %p56 = por %p54, %p55
    %p57 = scmp.ne.s32.totalorder %s48, %s49
    %p58 = scmp.eq.s32.totalorder %s17, 0
    %p59 = por %p57, %p58
    %p60 = scmp.ne.s32.totalorder %s48, %s49
    %p61 = scmp.eq.s32.totalorder %s18, 3
    %p62 = por %p60, %p61
    %p64 = scmp.ne.s32.totalorder %s49, %s63
    %p65 = scmp.eq.s32.totalorder %s18, 0
    %p66 = por %p64, %p65
    %s68 = sadd.s32 %s67, 1
    %p71 = scmp.eq.s32.totalorder %s12, 3
    %p72 = scmp.ne.s32.totalorder %s67, %s69
    %p73 = scmp.eq.s32.totalorder %s12, 0
    %p74 = por %p72, %p73
    %p75 = scmp.ne.s32.totalorder %s67, %s69
    %p76 = scmp.eq.s32.totalorder %s17, 3
    %p77 = por %p75, %p76
    %p78 = scmp.ne.s32.totalorder %s69, %s70
    %p79 = scmp.eq.s32.totalorder %s17, 0
    %p80 = por %p78, %p79
    %p81 = scmp.ne.s32.totalorder %s69, %s70
    %p82 = scmp.eq.s32.totalorder %s18, 3
    %p83 = por %p81, %p82
    %p85 = scmp.ne.s32.totalorder %s70, %s84
    %p86 = scmp.eq.s32.totalorder %s18, 0
    %p87 = por %p85, %p86
    %s89 = sadd.s32 %s88, 1
    %p92 = scmp.eq.s32.totalorder %s12, 3
    %p93 = scmp.ne.s32.totalorder %s88, %s90
    %p94 = scmp.eq.s32.totalorder %s12, 0
    %p95 = por %p93, %p94
    %p96 = scmp.ne.s32.totalorder %s88, %s90
    %p97 = scmp.eq.s32.totalorder %s17, 3
    %p98 = por %p96, %p97
    %p99 = scmp.ne.s32.totalorder %s90, %s91
    %p100 = scmp.eq.s32.totalorder %s17, 0
    %p101 = por %p99, %p100
    %p102 = scmp.ne.s32.totalorder %s90, %s91
    %p103 = scmp.eq.s32.totalorder %s18, 3
    %p104 = por %p102, %p103
    %p106 = scmp.ne.s32.totalorder %s91, %s105
    %p107 = scmp.eq.s32.totalorder %s18, 0
    %p108 = por %p106, %p107
    %s109 = ssub.s32 %s12, %s19
    %p110 = scmp.eq.s32.totalorder %s109, 0
    %s112 = sadd.s32 %s111, 1
    %s113 = scalar_select %p110, %s111, %s112
    %p116 = pneg %p110
    %p117 = scmp.eq.s32.totalorder %s12, 3
    %p118 = por %p116, %p117
    %p119 = scmp.ne.s32.totalorder %s111, %s114
    %p120 = scmp.eq.s32.totalorder %s12, 0
    %p121 = por %p119, %p120
    %p122 = scmp.ne.s32.totalorder %s111, %s114
    %p123 = scmp.eq.s32.totalorder %s17, 3
    %p124 = por %p122, %p123
    %p125 = scmp.ne.s32.totalorder %s114, %s115
    %p126 = scmp.eq.s32.totalorder %s17, 0
    %p127 = por %p125, %p126
    %p128 = scmp.ne.s32.totalorder %s114, %s115
    %p129 = scmp.eq.s32.totalorder %s18, 3
    %p130 = por %p128, %p129
    %p132 = scmp.ne.s32.totalorder %s115, %s131
    %p133 = scmp.eq.s32.totalorder %s18, 0
    %p134 = por %p132, %p133
    %s135 = ssub.s32 %s12, %s19
    %p136 = scmp.eq.s32.totalorder %s135, 0
    %s138 = sadd.s32 %s137, 1
    %s139 = scalar_select %p136, %s137, %s138
    %p142 = pneg %p136
    %p143 = scmp.eq.s32.totalorder %s12, 3
    %p144 = por %p142, %p143
    %p145 = scmp.ne.s32.totalorder %s137, %s140
    %p146 = scmp.eq.s32.totalorder %s12, 0
    %p147 = por %p145, %p146
    %p148 = scmp.ne.s32.totalorder %s137, %s140
    %p149 = scmp.eq.s32.totalorder %s17, 3
    %p150 = por %p148, %p149
    %p151 = scmp.ne.s32.totalorder %s140, %s141
    %p152 = scmp.eq.s32.totalorder %s17, 0
    %p153 = por %p151, %p152
    %p154 = scmp.ne.s32.totalorder %s140, %s141
    %p155 = scmp.eq.s32.totalorder %s18, 3
    %p156 = por %p154, %p155
    %p158 = scmp.ne.s32.totalorder %s141, %s157
    %p159 = scmp.eq.s32.totalorder %s18, 0
    %p160 = por %p158, %p159
    %p161 = scmp.le.s32.totalorder 1, %s12
    %p162 = scmp.lt.s32.totalorder %s12, 5
    %p163 = pnand %p161, %p162
    %p164 = pneg %p163
    // Predicated region
    $region9: #{bottleneck_forward.6} parent=5 // pred_check
      _
    $region10: #{bottleneck_forward.6} parent=5 // pred_check_branch
      %166 = sbr.rel (%p163) target = $region12
    $region11: #{bottleneck_forward.6} parent=5 // pred_region
      %s167 = ssub.s32 %s12, 1
      // Predicated region
      $region13: #{bottleneck_forward.6} parent=11 // pred_check
        %p168 = pneg %p59
      $region14: #{bottleneck_forward.6} parent=11 // pred_check_branch
        %170 = sbr.rel (%p168) target = $region16
      $region15: #{bottleneck_forward.6} parent=11 // pred_region
        _
      $region16: #{bottleneck_forward.6} parent=11 // pred_fallthru
        _
      // Predicated region
      $region17: #{bottleneck_forward.6} parent=11 // pred_check
        %p171 = pneg %p80
      $region18: #{bottleneck_forward.6} parent=11 // pred_check_branch
        %173 = sbr.rel (%p171) target = $region20
      $region19: #{bottleneck_forward.6} parent=11 // pred_region
        _
      $region20: #{bottleneck_forward.6} parent=11 // pred_fallthru
        _
      // Predicated region
      $region21: #{bottleneck_forward.6} parent=11 // pred_check
        %p174 = pneg %p101
      $region22: #{bottleneck_forward.6} parent=11 // pred_check_branch
        %176 = sbr.rel (%p174) target = $region24
      $region23: #{bottleneck_forward.6} parent=11 // pred_region
        _
      $region24: #{bottleneck_forward.6} parent=11 // pred_fallthru
        _
    $region12: #{bottleneck_forward.6} parent=5 // pred_fallthru
      _
    %p177 = scmp.lt.s32.totalorder %s12, 4
    // Predicated region
    $region25: #{bottleneck_forward.6} parent=5 // pred_check
      %p178 = pneg %p177
    $region26: #{bottleneck_forward.6} parent=5 // pred_check_branch
      %180 = sbr.rel (%p178) target = $region28
    $region27: #{bottleneck_forward.6} parent=5 // pred_region
      // Predicated region
      $region29: #{bottleneck_forward.6} parent=27 // pred_check
        %p181 = pneg %p32
      $region30: #{bottleneck_forward.6} parent=27 // pred_check_branch
        %183 = sbr.rel (%p181) target = $region32
      $region31: #{bottleneck_forward.6} parent=27 // pred_region
        %s184 = smul.u32 16, %s12
        %p185 = scmp.lt.s32.totalorder %s184, 63
        %s186 = scalar_select %p185, %s184, 63
        %s187 = smul.addr %s186, 8
        %s188 = scalar_lea.vmem %s0, %s187
        %s189 = smul.u32 16, %s12
      $region32: #{bottleneck_forward.6} parent=27 // pred_fallthru
        _
    $region28: #{bottleneck_forward.6} parent=5 // pred_fallthru
      _
    %p190 = scmp.le.s32.totalorder 1, %s12
    %p191 = scmp.lt.s32.totalorder %s12, 5
    %p192 = pnand %p190, %p191
    %p193 = pneg %p192
    // Predicated region
    $region33: #{bottleneck_forward.6} parent=5 // pred_check
      _
    $region34: #{bottleneck_forward.6} parent=5 // pred_check_branch
      %195 = sbr.rel (%p192) target = $region36
    $region35: #{bottleneck_forward.6} parent=5 // pred_region
      %s196 = ssub.s32 %s12, 1
      %s197 = smul.u32 16, %s17
      %p198 = scmp.lt.s32.totalorder %s197, 63
      %s199 = scalar_select %p198, %s197, 63
      %s200 = smul.addr %s199, 8
      %s201 = scalar_lea.vmem %s0, %s200
      %p202 = pneg %p38
      %p203 = pneg %p35
      %p204 = pneg %p59
      %p205 = pneg %p56
      %p206 = pneg %p80
      %p207 = pneg %p77
      %p208 = pneg %p101
      %p209 = pneg %p98
      %p210 = pneg %p127
      %p211 = pneg %p124
      %p212 = scmp.lt.s32.totalorder %s17, 3
      %s213 = scalar_select %p212, %s17, 3
      %s214 = scalar_lea.vmem %s4, %s213
      %p215 = pneg %p153
      %p216 = pneg %p150
      %p217 = scmp.lt.s32.totalorder %s17, 3
      %s218 = scalar_select %p217, %s17, 3
      %s219 = scalar_lea.vmem %s5, %s218
      %s220 = smul.u32 16, %s17
      %p221 = scmp.lt.s32.totalorder %s220, 63
      %s222 = scalar_select %p221, %s220, 63
      %s223 = smul.addr %s222, 8
      %s224 = scalar_lea.vmem %s0, %s223
      %s225 = smul.u32 16, %s17
      %p226 = scmp.lt.s32.totalorder %s17, 3
      %s227 = scalar_select %p226, %s17, 3
      %s228 = scalar_lea.vmem %s4, %s227
      %p229 = scmp.lt.s32.totalorder %s17, 3
      %s230 = scalar_select %p229, %s17, 3
      %s231 = scalar_lea.vmem %s5, %s230
      %v232 = vld [vmem:[%s224] sm:$0xff]
      %v233 = vld [vmem:[%s224 + $0x8] sm:$0xff]
      %v234 = vld [vmem:[%s224 + $0x10] sm:$0xff]
      %v235 = vld [vmem:[%s224 + $0x18] sm:$0xff]
      %v236 = vld [vmem:[%s224 + $0x20] sm:$0xff]
      %v237 = vld [vmem:[%s224 + $0x28] sm:$0xff]
      %v238 = vld [vmem:[%s224 + $0x30] sm:$0xff]
      %v239 = vld [vmem:[%s224 + $0x38] sm:$0xff]
      %v240 = vld [vmem:[%s224 + $0x40] sm:$0xff]
      %v241 = vld [vmem:[%s224 + $0x48] sm:$0xff]
      %v242 = vld [vmem:[%s224 + $0x50] sm:$0xff]
      %v243 = vld [vmem:[%s224 + $0x58] sm:$0xff]
      %v244 = vld [vmem:[%s224 + $0x60] sm:$0xff]
      %v245 = vld [vmem:[%s224 + $0x68] sm:$0xff]
      %v246 = vld [vmem:[%s224 + $0x70] sm:$0xff]
      %v247 = vld [vmem:[%s224 + $0x78] sm:$0xff]
      %v248 = vld [vmem:[%s1] sm:$0x1]
      %v250 = vlaneseq
      %v251 = vshrl.u32 %v250, 7
      %v252 = vsub.s32 0, %v251
      %v253 = vrot.slane %v248, %v252
      %v255 = vmul.f32 %v232, %v253
      %v256 = vmul.f32 %v233, %v253
      %v257 = vmul.f32 %v234, %v253
      %v258 = vmul.f32 %v235, %v253
      %v259 = vmul.f32 %v236, %v253
      %v260 = vmul.f32 %v237, %v253
      %v261 = vmul.f32 %v238, %v253
      %v262 = vmul.f32 %v239, %v253
      %v263 = vmul.f32 %v240, %v253
      %v264 = vmul.f32 %v241, %v253
      %v265 = vmul.f32 %v242, %v253
      %v266 = vmul.f32 %v243, %v253
      %v267 = vmul.f32 %v244, %v253
      %v268 = vmul.f32 %v245, %v253
      %v269 = vmul.f32 %v246, %v253
      %v270 = vmul.f32 %v247, %v253
      %v271 = vld [vmem:[%s2] sm:$0x1]
      %v273 = vlaneseq
      %v274 = vshrl.u32 %v273, 7
      %v275 = vsub.s32 0, %v274
      %v276 = vrot.slane %v271, %v275
      %v278 = vadd.f32 %v255, %v276
      %v279 = vadd.f32 %v256, %v276
      %v280 = vadd.f32 %v257, %v276
      %v281 = vadd.f32 %v258, %v276
      %v282 = vadd.f32 %v259, %v276
      %v283 = vadd.f32 %v260, %v276
      %v284 = vadd.f32 %v261, %v276
      %v285 = vadd.f32 %v262, %v276
      %v286 = vadd.f32 %v263, %v276
      %v287 = vadd.f32 %v264, %v276
      %v288 = vadd.f32 %v265, %v276
      %v289 = vadd.f32 %v266, %v276
      %v290 = vadd.f32 %v267, %v276
      %v291 = vadd.f32 %v268, %v276
      %v292 = vadd.f32 %v269, %v276
      %v293 = vadd.f32 %v270, %v276
      %v294 = vmax.f32 %v278, 0.0
      %v295 = vmax.f32 %v279, 0.0
      %v296 = vmax.f32 %v280, 0.0
      %v297 = vmax.f32 %v281, 0.0
      %v298 = vmax.f32 %v282, 0.0
      %v299 = vmax.f32 %v283, 0.0
      %v300 = vmax.f32 %v284, 0.0
      %v301 = vmax.f32 %v285, 0.0
      %v302 = vmax.f32 %v286, 0.0
      %v303 = vmax.f32 %v287, 0.0
      %v304 = vmax.f32 %v288, 0.0
      %v305 = vmax.f32 %v289, 0.0
      %v306 = vmax.f32 %v290, 0.0
      %v307 = vmax.f32 %v291, 0.0
      %v308 = vmax.f32 %v292, 0.0
      %v309 = vmax.f32 %v293, 0.0
      %v310 = vld [vmem:[%s3] sm:$0xf]
      %vm311 = vcmask 31744
      %v313 = vsel %vm311, %v294, 0
      %v316 = vsel %vm311, %v295, 0
      %v319 = vsel %vm311, %v296, 0
      %v322 = vsel %vm311, %v297, 0
      %v325 = vsel %vm311, %v298, 0
      %v328 = vsel %vm311, %v299, 0
      %v331 = vsel %vm311, %v300, 0
      %v334 = vsel %vm311, %v301, 0
      %v337 = vsel %vm311, %v302, 0
      %v340 = vsel %vm311, %v303, 0
      %v343 = vsel %vm311, %v304, 0
      %v346 = vsel %vm311, %v305, 0
      %v349 = vsel %vm311, %v306, 0
      %v352 = vsel %vm311, %v307, 0
      %v355 = vsel %vm311, %v308, 0
      %v358 = vsel %vm311, %v309, 0
      %vm360 = vcmask 1043456
      %v362 = vsel %vm360, %v310, 0
      %364 = vmatprep.subr.mxu0 0.0
      %365 = vmatpush1.msra.mxu0 %v362
      %366 = vmatprep.subr.mxu0 0.0
      %367 = vmatpush1.msra.mxu0 0.0
      %368 = vmatprep.subr.mxu0 0.0
      %369 = vmatpush1.msra.mxu0 0.0
      %370 = vmatprep.subr.mxu0 0.0
      %371 = vmatpush1.msra.mxu0 0.0
      %372 = vmatprep.subr.mxu0 0.0
      %373 = vmatpush1.msra.mxu0 0.0
      %374 = vmatprep.subr.mxu0 0.0
      %375 = vmatpush1.msra.mxu0 0.0
      %376 = vmatprep.subr.mxu0 0.0
      %377 = vmatpush1.msra.mxu0 0.0
      %378 = vmatprep.subr.mxu0 0.0
      %379 = vmatpush1.msra.mxu0 0.0
      %380 = vmatprep.subr.mxu0 0.0
      %381 = vmatpush1.msra.mxu0 0.0
      %382 = vmatprep.subr.mxu0 0.0
      %383 = vmatpush1.msra.mxu0 0.0
      %384 = vmatprep.subr.mxu0 0.0
      %385 = vmatpush1.msra.mxu0 0.0
      %386 = vmatprep.subr.mxu0 0.0
      %387 = vmatpush1.msra.mxu0 0.0
      %388 = vmatprep.subr.mxu0 0.0
      %389 = vmatpush1.msra.mxu0 0.0
      %390 = vmatprep.subr.mxu0 0.0
      %391 = vmatpush1.msra.mxu0 0.0
      %392 = vmatprep.subr.mxu0 0.0
      %393 = vmatpush1.msra.mxu0 0.0
      %394 = vmatprep.subr.mxu0 0.0
      %395 = vmatpush1.msra.mxu0 0.0
      %396 = vmatprep.subr.mxu0 0.0
      %397 = vmatpush1.msra.mxu0 0.0
      %398 = vmatprep.subr.mxu0 0.0
      %399 = vmatpush1.msra.mxu0 0.0
      %400 = vmatprep.subr.mxu0 0.0
      %401 = vmatpush1.msra.mxu0 0.0
      %402 = vmatprep.subr.mxu0 0.0
      %403 = vmatpush1.msra.mxu0 0.0
      %404 = vmatprep.subr.mxu0 0.0
      %405 = vmatpush1.msra.mxu0 0.0
      %406 = vmatprep.subr.mxu0 0.0
      %407 = vmatpush1.msra.mxu0 0.0
      %408 = vmatprep.subr.mxu0 0.0
      %409 = vmatpush1.msra.mxu0 0.0
      %410 = vmatprep.subr.mxu0 0.0
      %411 = vmatpush1.msra.mxu0 0.0
      %412 = vmatprep.subr.mxu0 0.0
      %413 = vmatpush1.msra.mxu0 0.0
      %414 = vmatprep.subr.mxu0 0.0
      %415 = vmatpush1.msra.mxu0 0.0
      %416 = vmatprep.subr.mxu0 0.0
      %417 = vmatpush1.msra.mxu0 0.0
      %418 = vmatprep.subr.mxu0 0.0
      %419 = vmatpush1.msra.mxu0 0.0
      %420 = vmatprep.subr.mxu0 0.0
      %421 = vmatpush1.msra.mxu0 0.0
      %422 = vmatprep.subr.mxu0 0.0
      %423 = vmatpush1.msra.mxu0 0.0
      %424 = vmatprep.subr.mxu0 0.0
      %425 = vmatpush1.msra.mxu0 0.0
      %426 = vmatprep.subr.mxu0 0.0
      %427 = vmatpush1.msra.mxu0 0.0
      %428 = vmatprep.mubr.f32.mxu0 0.0
      %429 = vmatmul.mubr.f32.gmra.mrb[0].mxu0 %v313
      %v430 = vpop.f32.mrb[0].mxu0
      %v431 = vadd.f32 0.0, %v430
      %v432 = vpop.f32.mrb[0].mxu0
      %433 = vmatprep.mubr.f32.mxu0 0.0
      %434 = vmatmul.mubr.f32.gmra.mrb[0].mxu0 %v316
      %v435 = vpop.f32.mrb[0].mxu0
      %v436 = vadd.f32 0.0, %v435
      %v437 = vpop.f32.mrb[0].mxu0
      %438 = vmatprep.mubr.f32.mxu0 0.0
      %439 = vmatmul.mubr.f32.gmra.mrb[0].mxu0 %v319
      %v440 = vpop.f32.mrb[0].mxu0
      %v441 = vadd.f32 0.0, %v440
      %v442 = vpop.f32.mrb[0].mxu0
      %443 = vmatprep.mubr.f32.mxu0 0.0
      %444 = vmatmul.mubr.f32.gmra.mrb[0].mxu0 %v322
      %v445 = vpop.f32.mrb[0].mxu0
      %v446 = vadd.f32 0.0, %v445
      %v447 = vpop.f32.mrb[0].mxu0
      %448 = vmatprep.mubr.f32.mxu0 0.0
      %449 = vmatmul.mubr.f32.gmra.mrb[0].mxu0 %v325
      %v450 = vpop.f32.mrb[0].mxu0
      %v451 = vadd.f32 0.0, %v450
      %v452 = vpop.f32.mrb[0].mxu0
      %453 = vmatprep.mubr.f32.mxu0 0.0
      %454 = vmatmul.mubr.f32.gmra.mrb[0].mxu0 %v328
      %v455 = vpop.f32.mrb[0].mxu0
      %v456 = vadd.f32 0.0, %v455
      %v457 = vpop.f32.mrb[0].mxu0
      %458 = vmatprep.mubr.f32.mxu0 0.0
      %459 = vmatmul.mubr.f32.gmra.mrb[0].mxu0 %v331
      %v460 = vpop.f32.mrb[0].mxu0
      %v461 = vadd.f32 0.0, %v460
      %v462 = vpop.f32.mrb[0].mxu0
      %463 = vmatprep.mubr.f32.mxu0 0.0
      %464 = vmatmul.mubr.f32.gmra.mrb[0].mxu0 %v334
      %v465 = vpop.f32.mrb[0].mxu0
      %v466 = vadd.f32 0.0, %v465
      %v467 = vpop.f32.mrb[0].mxu0
      %468 = vmatprep.mubr.f32.mxu0 0.0
      %469 = vmatmul.mubr.f32.gmra.mrb[0].mxu0 %v337
      %v470 = vpop.f32.mrb[0].mxu0
      %v471 = vadd.f32 0.0, %v470
      %v472 = vpop.f32.mrb[0].mxu0
      %473 = vmatprep.mubr.f32.mxu0 0.0
      %474 = vmatmul.mubr.f32.gmra.mrb[0].mxu0 %v340
      %v475 = vpop.f32.mrb[0].mxu0
      %v476 = vadd.f32 0.0, %v475
      %v477 = vpop.f32.mrb[0].mxu0
      %478 = vmatprep.mubr.f32.mxu0 0.0
      %479 = vmatmul.mubr.f32.gmra.mrb[0].mxu0 %v343
      %v480 = vpop.f32.mrb[0].mxu0
      %v481 = vadd.f32 0.0, %v480
      %v482 = vpop.f32.mrb[0].mxu0
      %483 = vmatprep.mubr.f32.mxu0 0.0
      %484 = vmatmul.mubr.f32.gmra.mrb[0].mxu0 %v346
      %v485 = vpop.f32.mrb[0].mxu0
      %v486 = vadd.f32 0.0, %v485
      %v487 = vpop.f32.mrb[0].mxu0
      %488 = vmatprep.mubr.f32.mxu0 0.0
      %489 = vmatmul.mubr.f32.gmra.mrb[0].mxu0 %v349
      %v490 = vpop.f32.mrb[0].mxu0
      %v491 = vadd.f32 0.0, %v490
      %v492 = vpop.f32.mrb[0].mxu0
      %493 = vmatprep.mubr.f32.mxu0 0.0
      %494 = vmatmul.mubr.f32.gmra.mrb[0].mxu0 %v352
      %v495 = vpop.f32.mrb[0].mxu0
      %v496 = vadd.f32 0.0, %v495
      %v497 = vpop.f32.mrb[0].mxu0
      %498 = vmatprep.mubr.f32.mxu0 0.0
      %499 = vmatmul.mubr.f32.gmra.mrb[0].mxu0 %v355
      %v500 = vpop.f32.mrb[0].mxu0
      %v501 = vadd.f32 0.0, %v500
      %v502 = vpop.f32.mrb[0].mxu0
      %503 = vmatprep.mubr.f32.mxu0 0.0
      %504 = vmatmul.mubr.f32.gmra.mrb[0].mxu0 %v358
      %v505 = vpop.f32.mrb[0].mxu0
      %v506 = vadd.f32 0.0, %v505
      %v507 = vpop.f32.mrb[0].mxu0
      %508 = vdwg.mxu0
      %vm509 = vcmask 130048
      %v510 = vsel %vm509, %v431, 0.0
      %v511 = vsel %vm509, %v436, 0.0
      %v512 = vadd.f32 %v510, %v511
      %v513 = vsel %vm509, %v441, 0.0
      %v514 = vadd.f32 %v512, %v513
      %v515 = vsel %vm509, %v446, 0.0
      %v516 = vadd.f32 %v514, %v515
      %v517 = vsel %vm509, %v451, 0.0
      %v518 = vadd.f32 %v516, %v517
      %v519 = vsel %vm509, %v456, 0.0
      %v520 = vadd.f32 %v518, %v519
      %v521 = vsel %vm509, %v461, 0.0
      %v522 = vadd.f32 %v520, %v521
      %v523 = vsel %vm509, %v466, 0.0
      %v524 = vadd.f32 %v522, %v523
      %v525 = vsel %vm509, %v471, 0.0
      %v526 = vadd.f32 %v524, %v525
      %v527 = vsel %vm509, %v476, 0.0
      %v528 = vadd.f32 %v526, %v527
      %v529 = vsel %vm509, %v481, 0.0
      %v530 = vadd.f32 %v528, %v529
      %v531 = vsel %vm509, %v486, 0.0
      %v532 = vadd.f32 %v530, %v531
      %v533 = vsel %vm509, %v491, 0.0
      %v534 = vadd.f32 %v532, %v533
      %v535 = vsel %vm509, %v496, 0.0
      %v536 = vadd.f32 %v534, %v535
      %v537 = vsel %vm509, %v501, 0.0
      %v538 = vadd.f32 %v536, %v537
      %v539 = vsel %vm509, %v506, 0.0
      %v540 = vadd.f32 %v538, %v539
      %v541 = vrot.slane %v540, 4
      %v542 = vadd.f32 %v540, %v541
      %v543 = vrot.slane %v542, 2
      %v544 = vadd.f32 %v542, %v543
      %v545 = vrot.slane %v544, 1
      %v546 = vadd.f32 %v544, %v545
      %vm547 = vcmask 122880
      %548 = vst.msk [vmem:[%s228] sm:$0x1] %vm547, %v546
      %v549 = vmul.f32 %v431, %v431
      %v550 = vmul.f32 %v436, %v436
      %v551 = vmul.f32 %v441, %v441
      %v552 = vmul.f32 %v446, %v446
      %v553 = vmul.f32 %v451, %v451
      %v554 = vmul.f32 %v456, %v456
      %v555 = vmul.f32 %v461, %v461
      %v556 = vmul.f32 %v466, %v466
      %v557 = vmul.f32 %v471, %v471
      %v558 = vmul.f32 %v476, %v476
      %v559 = vmul.f32 %v481, %v481
      %v560 = vmul.f32 %v486, %v486
      %v561 = vmul.f32 %v491, %v491
      %v562 = vmul.f32 %v496, %v496
      %v563 = vmul.f32 %v501, %v501
      %v564 = vmul.f32 %v506, %v506
      %v565 = vsel %vm509, %v549, 0.0
      %v566 = vsel %vm509, %v550, 0.0
      %v567 = vadd.f32 %v565, %v566
      %v568 = vsel %vm509, %v551, 0.0
      %v569 = vadd.f32 %v567, %v568
      %v570 = vsel %vm509, %v552, 0.0
      %v571 = vadd.f32 %v569, %v570
      %v572 = vsel %vm509, %v553, 0.0
      %v573 = vadd.f32 %v571, %v572
      %v574 = vsel %vm509, %v554, 0.0
      %v575 = vadd.f32 %v573, %v574
      %v576 = vsel %vm509, %v555, 0.0
      %v577 = vadd.f32 %v575, %v576
      %v578 = vsel %vm509, %v556, 0.0
      %v579 = vadd.f32 %v577, %v578
      %v580 = vsel %vm509, %v557, 0.0
      %v581 = vadd.f32 %v579, %v580
      %v582 = vsel %vm509, %v558, 0.0
      %v583 = vadd.f32 %v581, %v582
      %v584 = vsel %vm509, %v559, 0.0
      %v585 = vadd.f32 %v583, %v584
      %v586 = vsel %vm509, %v560, 0.0
      %v587 = vadd.f32 %v585, %v586
      %v588 = vsel %vm509, %v561, 0.0
      %v589 = vadd.f32 %v587, %v588
      %v590 = vsel %vm509, %v562, 0.0
      %v591 = vadd.f32 %v589, %v590
      %v592 = vsel %vm509, %v563, 0.0
      %v593 = vadd.f32 %v591, %v592
      %v594 = vsel %vm509, %v564, 0.0
      %v595 = vadd.f32 %v593, %v594
      %v596 = vrot.slane %v595, 4
      %v597 = vadd.f32 %v595, %v596
      %v598 = vrot.slane %v597, 2
      %v599 = vadd.f32 %v597, %v598
      %v600 = vrot.slane %v599, 1
      %v601 = vadd.f32 %v599, %v600
      %602 = vst.msk [vmem:[%s231] sm:$0x1] %vm547, %v601
      %p603 = scmp.lt.s32.totalorder %s17, 3
      %s604 = scalar_select %p603, %s17, 3
      %s605 = scalar_lea.vmem %s4, %s604
      %p606 = scmp.lt.s32.totalorder %s17, 3
      %s607 = scalar_select %p606, %s17, 3
      %s608 = scalar_lea.vmem %s5, %s607
      // Predicated region
      $region37: #{bottleneck_forward.6} parent=35 // pred_check
        %p609 = pneg %p124
      $region38: #{bottleneck_forward.6} parent=35 // pred_check_branch
        %611 = sbr.rel (%p609) target = $region40
      $region39: #{bottleneck_forward.6} parent=35 // pred_region
        _
      $region40: #{bottleneck_forward.6} parent=35 // pred_fallthru
        _
      // Predicated region
      $region41: #{bottleneck_forward.6} parent=35 // pred_check
        %p612 = pneg %p150
      $region42: #{bottleneck_forward.6} parent=35 // pred_check_branch
        %614 = sbr.rel (%p612) target = $region44
      $region43: #{bottleneck_forward.6} parent=35 // pred_region
        _
      $region44: #{bottleneck_forward.6} parent=35 // pred_fallthru
        _
    $region36: #{bottleneck_forward.6} parent=5 // pred_fallthru
      _
    %p615 = scmp.le.s32.totalorder 2, %s12
    // Predicated region
    $region45: #{bottleneck_forward.6} parent=5 // pred_check
      %p616 = pneg %p615
    $region46: #{bottleneck_forward.6} parent=5 // pred_check_branch
      %618 = sbr.rel (%p616) target = $region48
    $region47: #{bottleneck_forward.6} parent=5 // pred_region
      %s619 = ssub.s32 %s12, 2
      // Predicated region
      $region49: #{bottleneck_forward.6} parent=47 // pred_check
        %p620 = pneg %p130
      $region50: #{bottleneck_forward.6} parent=47 // pred_check_branch
        %622 = sbr.rel (%p620) target = $region52
      $region51: #{bottleneck_forward.6} parent=47 // pred_region
        %p623 = scmp.lt.s32.totalorder %s18, 3
        %s624 = scalar_select %p623, %s18, 3
        %s625 = scalar_lea.vmem %s4, %s624
      $region52: #{bottleneck_forward.6} parent=47 // pred_fallthru
        _
      // Predicated region
      $region53: #{bottleneck_forward.6} parent=47 // pred_check
        %p626 = pneg %p156
      $region54: #{bottleneck_forward.6} parent=47 // pred_check_branch
        %628 = sbr.rel (%p626) target = $region56
      $region55: #{bottleneck_forward.6} parent=47 // pred_region
        %p629 = scmp.lt.s32.totalorder %s18, 3
        %s630 = scalar_select %p629, %s18, 3
        %s631 = scalar_lea.vmem %s5, %s630
      $region56: #{bottleneck_forward.6} parent=47 // pred_fallthru
        _
    $region48: #{bottleneck_forward.6} parent=5 // pred_fallthru
      _
  $region6: #{bottleneck_forward.6} parent=0 // loop_footer
    %s16 = sadd.s32 1, %s12
  $region7: #{bottleneck_forward.6} parent=0 // loop_footer_branch
    %11 = sbr.rel target = $region3
  $region8: #{bottleneck_forward.6} parent=0 // loop_exit
    _

// kernel: bottleneck_forward.7
$region0: #{bottleneck_forward.7}
  #allocation0 [shape = 'u32[]', space=smem, size = 0x4, offset = 0x4, fixed_abs, tag = 'smem constant byte address 0x4 - core index']
  #allocation1 [shape = 'u32[144,128]{1,0:T(1,128)}', space=vmem, size = 0x12000, scoped, tag = 'internal scratch']
  %s0 = inlined_call_operand.vmem [shape: f32[512,4], index: 0, kind: input, shape index: {}]
  %s1 = inlined_call_operand.vmem [shape: f32[512,16], index: 1, kind: input, shape index: {}]
  %s2 = inlined_call_operand.vmem [shape: f32[1,4], index: 2, kind: input, shape index: {}]
  %s3 = inlined_call_operand.vmem [shape: f32[1,4], index: 3, kind: input, shape index: {}]
  %s4 = inlined_call_operand.vmem [shape: f32[4,16], index: 4, kind: input, shape index: {}]
  %s5 = inlined_call_operand.vmem [shape: f32[1,16], index: 5, kind: input, shape index: {}]
  %s6 = inlined_call_operand.vmem [shape: f32[1,16], index: 6, kind: input, shape index: {}]
  %s7 = inlined_call_operand.hbm [shape: f32[512,16], index: 7, kind: output, shape index: {}]
  %s8 = sld [smem:[#allocation0]]
  $region61: #{bottleneck_forward.7} parent=0
    _
  %s10 = ssub.s32 1, %s8
  %s11 = scalar_select 0, %s10, %s8
  $region1: #{bottleneck_forward.7} parent=0
    #allocation2 [shape = 'u8[131072]{0}', space=vmem, size = 0x20000, scoped, tag = 'output window, operand 0']
    #allocation3 [shape = 's32[2]{0}', space=sflag, size = 0x8, scoped, tag = 'scoped memory for bottleneck_forward.7']
    %12 = vsyncpa [#allocation3], 0
    %s13 = scalar_lea.sflag [#allocation3], 1
    %14 = vsyncpa %s13, 0
    loop: start=0, step=1, limit=6
    $region2: #{bottleneck_forward.7} parent=1 // loop_pre_header
      _
    $region3: #{bottleneck_forward.7} parent=1 // loop_header
      %s16 = sphi 0, %s20
      %p17 = scmp.ge.s32.totalorder %s16, 6
      %s26 = sphi 0, %s28
      %s29 = sphi 0, %s26
      %s30 = sphi 0, %s29
      %s46 = sphi 0, %s30
      %s52 = sphi 0, %s54
      %s55 = sphi 0, %s52
      %s56 = sphi 0, %s55
      %s72 = sphi 0, %s56
      %s76 = sphi 0, %s76
      %s78 = sphi 0, %s76
      %s79 = sphi 0, %s78
      %s93 = sphi 0, %s79
      %s97 = sphi 0, %s97
      %s99 = sphi 0, %s97
      %s100 = sphi 0, %s99
      %s114 = sphi 0, %s100
      %s118 = sphi 0, %s118
      %s120 = sphi 0, %s118
      %s121 = sphi 0, %s120
      %s135 = sphi 0, %s121
      %s139 = sphi 0, %s139
      %s141 = sphi 0, %s139
      %s142 = sphi 0, %s141
      %s156 = sphi 0, %s142
      %s160 = sphi 0, %s160
      %s162 = sphi 0, %s160
      %s163 = sphi 0, %s162
      %s177 = sphi 0, %s163
      %s183 = sphi 0, %s185
      %s186 = sphi 0, %s183
      %s187 = sphi 0, %s186
      %s203 = sphi 0, %s187
    $region4: #{bottleneck_forward.7} parent=1 // loop_header_branch
      %19 = sbr.rel (%p17) target = $region8
    $region5: #{bottleneck_forward.7} parent=1 // loop_body
      %s21 = ssub.s32 %s16, 1
      %s22 = ssub.s32 %s16, 2
      %s23 = sadd.s32 %s16, 1
      %s24 = ssub.s32 %s16, %s23
      %p25 = scmp.eq.s32.totalorder %s24, 0
      %s27 = sadd.s32 %s26, 1
      %s28 = scalar_select %p25, %s26, %s27
      %p31 = pneg %p25
      %p32 = scmp.eq.s32.totalorder %s16, 3
      %p33 = por %p31, %p32
      %p34 = scmp.ne.s32.totalorder %s26, %s29
      %p35 = scmp.eq.s32.totalorder %s16, 0
      %p36 = por %p34, %p35
      %p37 = scmp.ne.s32.totalorder %s26, %s29
      %p38 = scmp.eq.s32.totalorder %s21, 3
      %p39 = por %p37, %p38
      %p40 = scmp.ne.s32.totalorder %s29, %s30
      %p41 = scmp.eq.s32.totalorder %s21, 0
      %p42 = por %p40, %p41
      %p43 = scmp.ne.s32.totalorder %s29, %s30
      %p44 = scmp.eq.s32.totalorder %s22, 3
      %p45 = por %p43, %p44
      %p47 = scmp.ne.s32.totalorder %s30, %s46
      %p48 = scmp.eq.s32.totalorder %s22, 0
      %p49 = por %p47, %p48
      %s50 = ssub.s32 %s16, %s23
      %p51 = scmp.eq.s32.totalorder %s50, 0
      %s53 = sadd.s32 %s52, 1
      %s54 = scalar_select %p51, %s52, %s53
      %p57 = pneg %p51
      %p58 = scmp.eq.s32.totalorder %s16, 3
      %p59 = por %p57, %p58
      %p60 = scmp.ne.s32.totalorder %s52, %s55
      %p61 = scmp.eq.s32.totalorder %s16, 0
      %p62 = por %p60, %p61
      %p63 = scmp.ne.s32.totalorder %s52, %s55
      %p64 = scmp.eq.s32.totalorder %s21, 3
      %p65 = por %p63, %p64
      %p66 = scmp.ne.s32.totalorder %s55, %s56
      %p67 = scmp.eq.s32.totalorder %s21, 0
      %p68 = por %p66, %p67
      %p69 = scmp.ne.s32.totalorder %s55, %s56
      %p70 = scmp.eq.s32.totalorder %s22, 3
      %p71 = por %p69, %p70
      %p73 = scmp.ne.s32.totalorder %s56, %s72
      %p74 = scmp.eq.s32.totalorder %s22, 0
      %p75 = por %p73, %p74
      %s77 = sadd.s32 %s76, 1
      %p80 = scmp.eq.s32.totalorder %s16, 3
      %p81 = scmp.ne.s32.totalorder %s76, %s78
      %p82 = scmp.eq.s32.totalorder %s16, 0
      %p83 = por %p81, %p82
      %p84 = scmp.ne.s32.totalorder %s76, %s78
      %p85 = scmp.eq.s32.totalorder %s21, 3
      %p86 = por %p84, %p85
      %p87 = scmp.ne.s32.totalorder %s78, %s79
      %p88 = scmp.eq.s32.totalorder %s21, 0
      %p89 = por %p87, %p88
      %p90 = scmp.ne.s32.totalorder %s78, %s79
      %p91 = scmp.eq.s32.totalorder %s22, 3
      %p92 = por %p90, %p91
      %p94 = scmp.ne.s32.totalorder %s79, %s93
      %p95 = scmp.eq.s32.totalorder %s22, 0
      %p96 = por %p94, %p95
      %s98 = sadd.s32 %s97, 1
      %p101 = scmp.eq.s32.totalorder %s16, 3
      %p102 = scmp.ne.s32.totalorder %s97, %s99
      %p103 = scmp.eq.s32.totalorder %s16, 0
      %p104 = por %p102, %p103
      %p105 = scmp.ne.s32.totalorder %s97, %s99
      %p106 = scmp.eq.s32.totalorder %s21, 3
      %p107 = por %p105, %p106
      %p108 = scmp.ne.s32.totalorder %s99, %s100
      %p109 = scmp.eq.s32.totalorder %s21, 0
      %p110 = por %p108, %p109
      %p111 = scmp.ne.s32.totalorder %s99, %s100
      %p112 = scmp.eq.s32.totalorder %s22, 3
      %p113 = por %p111, %p112
      %p115 = scmp.ne.s32.totalorder %s100, %s114
      %p116 = scmp.eq.s32.totalorder %s22, 0
      %p117 = por %p115, %p116
      %s119 = sadd.s32 %s118, 1
      %p122 = scmp.eq.s32.totalorder %s16, 3
      %p123 = scmp.ne.s32.totalorder %s118, %s120
      %p124 = scmp.eq.s32.totalorder %s16, 0
      %p125 = por %p123, %p124
      %p126 = scmp.ne.s32.totalorder %s118, %s120
      %p127 = scmp.eq.s32.totalorder %s21, 3
      %p128 = por %p126, %p127
      %p129 = scmp.ne.s32.totalorder %s120, %s121
      %p130 = scmp.eq.s32.totalorder %s21, 0
      %p131 = por %p129, %p130
      %p132 = scmp.ne.s32.totalorder %s120, %s121
      %p133 = scmp.eq.s32.totalorder %s22, 3
      %p134 = por %p132, %p133
      %p136 = scmp.ne.s32.totalorder %s121, %s135
      %p137 = scmp.eq.s32.totalorder %s22, 0
      %p138 = por %p136, %p137
      %s140 = sadd.s32 %s139, 1
      %p143 = scmp.eq.s32.totalorder %s16, 3
      %p144 = scmp.ne.s32.totalorder %s139, %s141
      %p145 = scmp.eq.s32.totalorder %s16, 0
      %p146 = por %p144, %p145
      %p147 = scmp.ne.s32.totalorder %s139, %s141
      %p148 = scmp.eq.s32.totalorder %s21, 3
      %p149 = por %p147, %p148
      %p150 = scmp.ne.s32.totalorder %s141, %s142
      %p151 = scmp.eq.s32.totalorder %s21, 0
      %p152 = por %p150, %p151
      %p153 = scmp.ne.s32.totalorder %s141, %s142
      %p154 = scmp.eq.s32.totalorder %s22, 3
      %p155 = por %p153, %p154
      %p157 = scmp.ne.s32.totalorder %s142, %s156
      %p158 = scmp.eq.s32.totalorder %s22, 0
      %p159 = por %p157, %p158
      %s161 = sadd.s32 %s160, 1
      %p164 = scmp.eq.s32.totalorder %s16, 3
      %p165 = scmp.ne.s32.totalorder %s160, %s162
      %p166 = scmp.eq.s32.totalorder %s16, 0
      %p167 = por %p165, %p166
      %p168 = scmp.ne.s32.totalorder %s160, %s162
      %p169 = scmp.eq.s32.totalorder %s21, 3
      %p170 = por %p168, %p169
      %p171 = scmp.ne.s32.totalorder %s162, %s163
      %p172 = scmp.eq.s32.totalorder %s21, 0
      %p173 = por %p171, %p172
      %p174 = scmp.ne.s32.totalorder %s162, %s163
      %p175 = scmp.eq.s32.totalorder %s22, 3
      %p176 = por %p174, %p175
      %p178 = scmp.ne.s32.totalorder %s163, %s177
      %p179 = scmp.eq.s32.totalorder %s22, 0
      %p180 = por %p178, %p179
      %s181 = ssub.s32 %s16, %s23
      %p182 = scmp.eq.s32.totalorder %s181, 0
      %s184 = sadd.s32 %s183, 1
      %s185 = scalar_select %p182, %s183, %s184
      %p188 = pneg %p182
      %p189 = scmp.eq.s32.totalorder %s16, 3
      %p190 = por %p188, %p189
      %p191 = scmp.ne.s32.totalorder %s183, %s186
      %p192 = scmp.eq.s32.totalorder %s16, 0
      %p193 = por %p191, %p192
      %p194 = scmp.ne.s32.totalorder %s183, %s186
      %p195 = scmp.eq.s32.totalorder %s21, 3
      %p196 = por %p194, %p195
      %p197 = scmp.ne.s32.totalorder %s186, %s187
      %p198 = scmp.eq.s32.totalorder %s21, 0
      %p199 = por %p197, %p198
      %p200 = scmp.ne.s32.totalorder %s186, %s187
      %p201 = scmp.eq.s32.totalorder %s22, 3
      %p202 = por %p200, %p201
      %p204 = scmp.ne.s32.totalorder %s187, %s203
      %p205 = scmp.eq.s32.totalorder %s22, 0
      %p206 = por %p204, %p205
      %p207 = scmp.le.s32.totalorder 1, %s16
      %p208 = scmp.lt.s32.totalorder %s16, 5
      %p209 = pnand %p207, %p208
      %p210 = pneg %p209
      // Predicated region
      $region9: #{bottleneck_forward.7} parent=5 // pred_check
        _
      $region10: #{bottleneck_forward.7} parent=5 // pred_check_branch
        %212 = sbr.rel (%p209) target = $region12
      $region11: #{bottleneck_forward.7} parent=5 // pred_region
        %s213 = ssub.s32 %s16, 1
        // Predicated region
        $region13: #{bottleneck_forward.7} parent=11 // pred_check
          %p214 = pneg %p89
        $region14: #{bottleneck_forward.7} parent=11 // pred_check_branch
          %216 = sbr.rel (%p214) target = $region16
        $region15: #{bottleneck_forward.7} parent=11 // pred_region
          _
        $region16: #{bottleneck_forward.7} parent=11 // pred_fallthru
          _
        // Predicated region
        $region17: #{bottleneck_forward.7} parent=11 // pred_check
          %p217 = pneg %p110
        $region18: #{bottleneck_forward.7} parent=11 // pred_check_branch
          %219 = sbr.rel (%p217) target = $region20
        $region19: #{bottleneck_forward.7} parent=11 // pred_region
          _
        $region20: #{bottleneck_forward.7} parent=11 // pred_fallthru
          _
        // Predicated region
        $region21: #{bottleneck_forward.7} parent=11 // pred_check
          %p220 = pneg %p131
        $region22: #{bottleneck_forward.7} parent=11 // pred_check_branch
          %222 = sbr.rel (%p220) target = $region24
        $region23: #{bottleneck_forward.7} parent=11 // pred_region
          _
        $region24: #{bottleneck_forward.7} parent=11 // pred_fallthru
          _
        // Predicated region
        $region25: #{bottleneck_forward.7} parent=11 // pred_check
          %p223 = pneg %p152
        $region26: #{bottleneck_forward.7} parent=11 // pred_check_branch
          %225 = sbr.rel (%p223) target = $region28
        $region27: #{bottleneck_forward.7} parent=11 // pred_region
          _
        $region28: #{bottleneck_forward.7} parent=11 // pred_fallthru
          _
        // Predicated region
        $region29: #{bottleneck_forward.7} parent=11 // pred_check
          %p226 = pneg %p173
        $region30: #{bottleneck_forward.7} parent=11 // pred_check_branch
          %228 = sbr.rel (%p226) target = $region32
        $region31: #{bottleneck_forward.7} parent=11 // pred_region
          _
        $region32: #{bottleneck_forward.7} parent=11 // pred_fallthru
          _
      $region12: #{bottleneck_forward.7} parent=5 // pred_fallthru
        _
      %p229 = scmp.lt.s32.totalorder %s16, 4
      // Predicated region
      $region33: #{bottleneck_forward.7} parent=5 // pred_check
        %p230 = pneg %p229
      $region34: #{bottleneck_forward.7} parent=5 // pred_check_branch
        %232 = sbr.rel (%p230) target = $region36
      $region35: #{bottleneck_forward.7} parent=5 // pred_region
        // Predicated region
        $region37: #{bottleneck_forward.7} parent=35 // pred_check
          %p233 = pneg %p36
        $region38: #{bottleneck_forward.7} parent=35 // pred_check_branch
          %235 = sbr.rel (%p233) target = $region40
        $region39: #{bottleneck_forward.7} parent=35 // pred_region
          %s236 = smul.u32 16, %s16
          %p237 = scmp.lt.s32.totalorder %s236, 63
          %s238 = scalar_select %p237, %s236, 63
          %s239 = smul.addr %s238, 8
          %s240 = scalar_lea.vmem %s0, %s239
          %s241 = smul.u32 16, %s16
        $region40: #{bottleneck_forward.7} parent=35 // pred_fallthru
          _
        // Predicated region
        $region41: #{bottleneck_forward.7} parent=35 // pred_check
          %p242 = pneg %p62
        $region42: #{bottleneck_forward.7} parent=35 // pred_check_branch
          %244 = sbr.rel (%p242) target = $region44
        $region43: #{bottleneck_forward.7} parent=35 // pred_region
          %s245 = smul.u32 16, %s16
          %p246 = scmp.lt.s32.totalorder %s245, 63
          %s247 = scalar_select %p246, %s245, 63
          %s248 = smul.addr %s247, 8
          %s249 = scalar_lea.vmem %s1, %s248
          %s250 = smul.u32 16, %s16
        $region44: #{bottleneck_forward.7} parent=35 // pred_fallthru
          _
      $region36: #{bottleneck_forward.7} parent=5 // pred_fallthru
        _
      %p251 = scmp.le.s32.totalorder 1, %s16
      %p252 = scmp.lt.s32.totalorder %s16, 5
      %p253 = pnand %p251, %p252
      %p254 = pneg %p253
      // Predicated region
      $region45: #{bottleneck_forward.7} parent=5 // pred_check
        _
      $region46: #{bottleneck_forward.7} parent=5 // pred_check_branch
        %256 = sbr.rel (%p253) target = $region48
      $region47: #{bottleneck_forward.7} parent=5 // pred_region
        %s257 = ssub.s32 %s16, 1
        %s258 = smul.u32 16, %s21
        %p259 = scmp.lt.s32.totalorder %s258, 63
        %s260 = scalar_select %p259, %s258, 63
        %s261 = smul.addr %s260, 8
        %s262 = scalar_lea.vmem %s0, %s261
        %p263 = pneg %p42
        %p264 = pneg %p39
        %s265 = smul.u32 16, %s21
        %p266 = scmp.lt.s32.totalorder %s265, 63
        %s267 = scalar_select %p266, %s265, 63
        %s268 = smul.addr %s267, 8
        %s269 = scalar_lea.vmem %s1, %s268
        %p270 = pneg %p68
        %p271 = pneg %p65
        %p272 = pneg %p89
        %p273 = pneg %p86
        %p274 = pneg %p110
        %p275 = pneg %p107
        %p276 = pneg %p131
        %p277 = pneg %p128
        %p278 = pneg %p152
        %p279 = pneg %p149
        %p280 = pneg %p173
        %p281 = pneg %p170
        %p282 = pneg %p199
        %p283 = pneg %p196
        %s284 = sand.u32 %s186, 1
        %s285 = scalar_lea.sflag [#allocation3], %s284
        %s286 = sand.u32 %s186, 1
        %s287 = smul.addr %s286, 128
        %s288 = scalar_lea.vmem [#allocation2], %s287
        %s289 = smul.u32 16, %s21
        %p290 = scmp.lt.s32.totalorder %s289, 63
        %s291 = scalar_select %p290, %s289, 63
        %s292 = smul.addr %s291, 8
        %s293 = scalar_lea.vmem %s0, %s292
        %s294 = smul.u32 16, %s21
        %s295 = smul.u32 16, %s21
        %p296 = scmp.lt.s32.totalorder %s295, 63
        %s297 = scalar_select %p296, %s295, 63
        %s298 = smul.addr %s297, 8
        %s299 = scalar_lea.vmem %s1, %s298
        %s300 = smul.u32 16, %s21
        %s301 = smul.u32 16, %s21
        %v302 = vld [vmem:[%s293] sm:$0xff]
        %v303 = vld [vmem:[%s293 + $0x8] sm:$0xff]
        %v304 = vld [vmem:[%s293 + $0x10] sm:$0xff]
        %v305 = vld [vmem:[%s293 + $0x18] sm:$0xff]
        %v306 = vld [vmem:[%s293 + $0x20] sm:$0xff]
        %v307 = vld [vmem:[%s293 + $0x28] sm:$0xff]
        %v308 = vld [vmem:[%s293 + $0x30] sm:$0xff]
        %v309 = vld [vmem:[%s293 + $0x38] sm:$0xff]
        %v310 = vld [vmem:[%s293 + $0x40] sm:$0xff]
        %v311 = vld [vmem:[%s293 + $0x48] sm:$0xff]
        %v312 = vld [vmem:[%s293 + $0x50] sm:$0xff]
        %v313 = vld [vmem:[%s293 + $0x58] sm:$0xff]
        %v314 = vld [vmem:[%s293 + $0x60] sm:$0xff]
        %v315 = vld [vmem:[%s293 + $0x68] sm:$0xff]
        %v316 = vld [vmem:[%s293 + $0x70] sm:$0xff]
        %v317 = vld [vmem:[%s293 + $0x78] sm:$0xff]
        %v318 = vld [vmem:[%s2] sm:$0x1]
        %v320 = vlaneseq
        %v321 = vshrl.u32 %v320, 7
        %v322 = vsub.s32 0, %v321
        %v323 = vrot.slane %v318, %v322
        %v325 = vmul.f32 %v302, %v323
        %v326 = vmul.f32 %v303, %v323
        %v327 = vmul.f32 %v304, %v323
        %v328 = vmul.f32 %v305, %v323
        %v329 = vmul.f32 %v306, %v323
        %v330 = vmul.f32 %v307, %v323
        %v331 = vmul.f32 %v308, %v323
        %v332 = vmul.f32 %v309, %v323
        %v333 = vmul.f32 %v310, %v323
        %v334 = vmul.f32 %v311, %v323
        %v335 = vmul.f32 %v312, %v323
        %v336 = vmul.f32 %v313, %v323
        %v337 = vmul.f32 %v314, %v323
        %v338 = vmul.f32 %v315, %v323
        %v339 = vmul.f32 %v316, %v323
        %v340 = vmul.f32 %v317, %v323
        %v341 = vld [vmem:[%s3] sm:$0x1]
        %v343 = vlaneseq
        %v344 = vshrl.u32 %v343, 7
        %v345 = vsub.s32 0, %v344
        %v346 = vrot.slane %v341, %v345
        %v348 = vadd.f32 %v325, %v346
        %v349 = vadd.f32 %v326, %v346
        %v350 = vadd.f32 %v327, %v346
        %v351 = vadd.f32 %v328, %v346
        %v352 = vadd.f32 %v329, %v346
        %v353 = vadd.f32 %v330, %v346
        %v354 = vadd.f32 %v331, %v346
        %v355 = vadd.f32 %v332, %v346
        %v356 = vadd.f32 %v333, %v346
        %v357 = vadd.f32 %v334, %v346
        %v358 = vadd.f32 %v335, %v346
        %v359 = vadd.f32 %v336, %v346
        %v360 = vadd.f32 %v337, %v346
        %v361 = vadd.f32 %v338, %v346
        %v362 = vadd.f32 %v339, %v346
        %v363 = vadd.f32 %v340, %v346
        %v364 = vmax.f32 %v348, 0.0
        %v365 = vmax.f32 %v349, 0.0
        %v366 = vmax.f32 %v350, 0.0
        %v367 = vmax.f32 %v351, 0.0
        %v368 = vmax.f32 %v352, 0.0
        %v369 = vmax.f32 %v353, 0.0
        %v370 = vmax.f32 %v354, 0.0
        %v371 = vmax.f32 %v355, 0.0
        %v372 = vmax.f32 %v356, 0.0
        %v373 = vmax.f32 %v357, 0.0
        %v374 = vmax.f32 %v358, 0.0
        %v375 = vmax.f32 %v359, 0.0
        %v376 = vmax.f32 %v360, 0.0
        %v377 = vmax.f32 %v361, 0.0
        %v378 = vmax.f32 %v362, 0.0
        %v379 = vmax.f32 %v363, 0.0
        %v380 = vld [vmem:[%s4] sm:$0xf]
        %vm381 = vcmask 31744
        %v383 = vsel %vm381, %v364, 0
        %v386 = vsel %vm381, %v365, 0
        %v389 = vsel %vm381, %v366, 0
        %v392 = vsel %vm381, %v367, 0
        %v395 = vsel %vm381, %v368, 0
        %v398 = vsel %vm381, %v369, 0
        %v401 = vsel %vm381, %v370, 0
        %v404 = vsel %vm381, %v371, 0
        %v407 = vsel %vm381, %v372, 0
        %v410 = vsel %vm381, %v373, 0
        %v413 = vsel %vm381, %v374, 0
        %v416 = vsel %vm381, %v375, 0
        %v419 = vsel %vm381, %v376, 0
        %v422 = vsel %vm381, %v377, 0
        %v425 = vsel %vm381, %v378, 0
        %v428 = vsel %vm381, %v379, 0
        %vm430 = vcmask 1043456
        %v432 = vsel %vm430, %v380, 0
        %434 = vmatprep.subr.mxu0 0.0
        %435 = vmatpush1.msra.mxu0 %v432
        %436 = vmatprep.subr.mxu0 0.0
        %437 = vmatpush1.msra.mxu0 0.0
        %438 = vmatprep.subr.mxu0 0.0
        %439 = vmatpush1.msra.mxu0 0.0
        %440 = vmatprep.subr.mxu0 0.0
        %441 = vmatpush1.msra.mxu0 0.0
        %442 = vmatprep.subr.mxu0 0.0
        %443 = vmatpush1.msra.mxu0 0.0
        %444 = vmatprep.subr.mxu0 0.0
        %445 = vmatpush1.msra.mxu0 0.0
        %446 = vmatprep.subr.mxu0 0.0
        %447 = vmatpush1.msra.mxu0 0.0
        %448 = vmatprep.subr.mxu0 0.0
        %449 = vmatpush1.msra.mxu0 0.0
        %450 = vmatprep.subr.mxu0 0.0
        %451 = vmatpush1.msra.mxu0 0.0
        %452 = vmatprep.subr.mxu0 0.0
        %453 = vmatpush1.msra.mxu0 0.0
        %454 = vmatprep.subr.mxu0 0.0
        %455 = vmatpush1.msra.mxu0 0.0
        %456 = vmatprep.subr.mxu0 0.0
        %457 = vmatpush1.msra.mxu0 0.0
        %458 = vmatprep.subr.mxu0 0.0
        %459 = vmatpush1.msra.mxu0 0.0
        %460 = vmatprep.subr.mxu0 0.0
        %461 = vmatpush1.msra.mxu0 0.0
        %462 = vmatprep.subr.mxu0 0.0
        %463 = vmatpush1.msra.mxu0 0.0
        %464 = vmatprep.subr.mxu0 0.0
        %465 = vmatpush1.msra.mxu0 0.0
        %466 = vmatprep.subr.mxu0 0.0
        %467 = vmatpush1.msra.mxu0 0.0
        %468 = vmatprep.subr.mxu0 0.0
        %469 = vmatpush1.msra.mxu0 0.0
        %470 = vmatprep.subr.mxu0 0.0
        %471 = vmatpush1.msra.mxu0 0.0
        %472 = vmatprep.subr.mxu0 0.0
        %473 = vmatpush1.msra.mxu0 0.0
        %474 = vmatprep.subr.mxu0 0.0
        %475 = vmatpush1.msra.mxu0 0.0
        %476 = vmatprep.subr.mxu0 0.0
        %477 = vmatpush1.msra.mxu0 0.0
        %478 = vmatprep.subr.mxu0 0.0
        %479 = vmatpush1.msra.mxu0 0.0
        %480 = vmatprep.subr.mxu0 0.0
        %481 = vmatpush1.msra.mxu0 0.0
        %482 = vmatprep.subr.mxu0 0.0
        %483 = vmatpush1.msra.mxu0 0.0
        %484 = vmatprep.subr.mxu0 0.0
        %485 = vmatpush1.msra.mxu0 0.0
        %486 = vmatprep.subr.mxu0 0.0
        %487 = vmatpush1.msra.mxu0 0.0
        %488 = vmatprep.subr.mxu0 0.0
        %489 = vmatpush1.msra.mxu0 0.0
        %490 = vmatprep.subr.mxu0 0.0
        %491 = vmatpush1.msra.mxu0 0.0
        %492 = vmatprep.subr.mxu0 0.0
        %493 = vmatpush1.msra.mxu0 0.0
        %494 = vmatprep.subr.mxu0 0.0
        %495 = vmatpush1.msra.mxu0 0.0
        %496 = vmatprep.subr.mxu0 0.0
        %497 = vmatpush1.msra.mxu0 0.0
        %498 = vmatprep.mubr.f32.mxu0 0.0
        %499 = vmatmul.mubr.f32.gmra.mrb[0].mxu0 %v383
        %v500 = vpop.f32.mrb[0].mxu0
        %v501 = vadd.f32 0.0, %v500
        %v502 = vpop.f32.mrb[0].mxu0
        %503 = vmatprep.mubr.f32.mxu0 0.0
        %504 = vmatmul.mubr.f32.gmra.mrb[0].mxu0 %v386
        %v505 = vpop.f32.mrb[0].mxu0
        %v506 = vadd.f32 0.0, %v505
        %v507 = vpop.f32.mrb[0].mxu0
        %508 = vmatprep.mubr.f32.mxu0 0.0
        %509 = vmatmul.mubr.f32.gmra.mrb[0].mxu0 %v389
        %v510 = vpop.f32.mrb[0].mxu0
        %v511 = vadd.f32 0.0, %v510
        %v512 = vpop.f32.mrb[0].mxu0
        %513 = vmatprep.mubr.f32.mxu0 0.0
        %514 = vmatmul.mubr.f32.gmra.mrb[0].mxu0 %v392
        %v515 = vpop.f32.mrb[0].mxu0
        %v516 = vadd.f32 0.0, %v515
        %v517 = vpop.f32.mrb[0].mxu0
        %518 = vmatprep.mubr.f32.mxu0 0.0
        %519 = vmatmul.mubr.f32.gmra.mrb[0].mxu0 %v395
        %v520 = vpop.f32.mrb[0].mxu0
        %v521 = vadd.f32 0.0, %v520
        %v522 = vpop.f32.mrb[0].mxu0
        %523 = vmatprep.mubr.f32.mxu0 0.0
        %524 = vmatmul.mubr.f32.gmra.mrb[0].mxu0 %v398
        %v525 = vpop.f32.mrb[0].mxu0
        %v526 = vadd.f32 0.0, %v525
        %v527 = vpop.f32.mrb[0].mxu0
        %528 = vmatprep.mubr.f32.mxu0 0.0
        %529 = vmatmul.mubr.f32.gmra.mrb[0].mxu0 %v401
        %v530 = vpop.f32.mrb[0].mxu0
        %v531 = vadd.f32 0.0, %v530
        %v532 = vpop.f32.mrb[0].mxu0
        %533 = vmatprep.mubr.f32.mxu0 0.0
        %534 = vmatmul.mubr.f32.gmra.mrb[0].mxu0 %v404
        %v535 = vpop.f32.mrb[0].mxu0
        %v536 = vadd.f32 0.0, %v535
        %v537 = vpop.f32.mrb[0].mxu0
        %538 = vmatprep.mubr.f32.mxu0 0.0
        %539 = vmatmul.mubr.f32.gmra.mrb[0].mxu0 %v407
        %v540 = vpop.f32.mrb[0].mxu0
        %v541 = vadd.f32 0.0, %v540
        %v542 = vpop.f32.mrb[0].mxu0
        %543 = vmatprep.mubr.f32.mxu0 0.0
        %544 = vmatmul.mubr.f32.gmra.mrb[0].mxu0 %v410
        %v545 = vpop.f32.mrb[0].mxu0
        %v546 = vadd.f32 0.0, %v545
        %v547 = vpop.f32.mrb[0].mxu0
        %548 = vmatprep.mubr.f32.mxu0 0.0
        %549 = vmatmul.mubr.f32.gmra.mrb[0].mxu0 %v413
        %v550 = vpop.f32.mrb[0].mxu0
        %v551 = vadd.f32 0.0, %v550
        %v552 = vpop.f32.mrb[0].mxu0
        %553 = vmatprep.mubr.f32.mxu0 0.0
        %554 = vmatmul.mubr.f32.gmra.mrb[0].mxu0 %v416
        %v555 = vpop.f32.mrb[0].mxu0
        %v556 = vadd.f32 0.0, %v555
        %v557 = vpop.f32.mrb[0].mxu0
        %558 = vmatprep.mubr.f32.mxu0 0.0
        %559 = vmatmul.mubr.f32.gmra.mrb[0].mxu0 %v419
        %v560 = vpop.f32.mrb[0].mxu0
        %v561 = vadd.f32 0.0, %v560
        %v562 = vpop.f32.mrb[0].mxu0
        %563 = vmatprep.mubr.f32.mxu0 0.0
        %564 = vmatmul.mubr.f32.gmra.mrb[0].mxu0 %v422
        %v565 = vpop.f32.mrb[0].mxu0
        %v566 = vadd.f32 0.0, %v565
        %v567 = vpop.f32.mrb[0].mxu0
        %568 = vmatprep.mubr.f32.mxu0 0.0
        %569 = vmatmul.mubr.f32.gmra.mrb[0].mxu0 %v425
        %v570 = vpop.f32.mrb[0].mxu0
        %v571 = vadd.f32 0.0, %v570
        %v572 = vpop.f32.mrb[0].mxu0
        %573 = vmatprep.mubr.f32.mxu0 0.0
        %574 = vmatmul.mubr.f32.gmra.mrb[0].mxu0 %v428
        %v575 = vpop.f32.mrb[0].mxu0
        %v576 = vadd.f32 0.0, %v575
        %v577 = vpop.f32.mrb[0].mxu0
        %578 = vdwg.mxu0
        %v579 = vld [vmem:[%s5] sm:$0x1]
        %v581 = vlaneseq
        %v582 = vshrl.u32 %v581, 7
        %v583 = vsub.s32 0, %v582
        %v584 = vrot.slane %v579, %v583
        %v586 = vmul.f32 %v501, %v584
        %v587 = vmul.f32 %v506, %v584
        %v588 = vmul.f32 %v511, %v584
        %v589 = vmul.f32 %v516, %v584
        %v590 = vmul.f32 %v521, %v584
        %v591 = vmul.f32 %v526, %v584
        %v592 = vmul.f32 %v531, %v584
        %v593 = vmul.f32 %v536, %v584
        %v594 = vmul.f32 %v541, %v584
        %v595 = vmul.f32 %v546, %v584
        %v596 = vmul.f32 %v551, %v584
        %v597 = vmul.f32 %v556, %v584
        %v598 = vmul.f32 %v561, %v584
        %v599 = vmul.f32 %v566, %v584
        %v600 = vmul.f32 %v571, %v584
        %v601 = vmul.f32 %v576, %v584
        %v602 = vld [vmem:[%s6] sm:$0x1]
        %v604 = vlaneseq
        %v605 = vshrl.u32 %v604, 7
        %v606 = vsub.s32 0, %v605
        %v607 = vrot.slane %v602, %v606
        %v609 = vadd.f32 %v586, %v607
        %v610 = vadd.f32 %v587, %v607
        %v611 = vadd.f32 %v588, %v607
        %v612 = vadd.f32 %v589, %v607
        %v613 = vadd.f32 %v590, %v607
        %v614 = vadd.f32 %v591, %v607
        %v615 = vadd.f32 %v592, %v607
        %v616 = vadd.f32 %v593, %v607
        %v617 = vadd.f32 %v594, %v607
        %v618 = vadd.f32 %v595, %v607
        %v619 = vadd.f32 %v596, %v607
        %v620 = vadd.f32 %v597, %v607
        %v621 = vadd.f32 %v598, %v607
        %v622 = vadd.f32 %v599, %v607
        %v623 = vadd.f32 %v600, %v607
        %v624 = vadd.f32 %v601, %v607
        %v625 = vld [vmem:[%s299] sm:$0xff]
        %v626 = vld [vmem:[%s299 + $0x8] sm:$0xff]
        %v627 = vld [vmem:[%s299 + $0x10] sm:$0xff]
        %v628 = vld [vmem:[%s299 + $0x18] sm:$0xff]
        %v629 = vld [vmem:[%s299 + $0x20] sm:$0xff]
        %v630 = vld [vmem:[%s299 + $0x28] sm:$0xff]
        %v631 = vld [vmem:[%s299 + $0x30] sm:$0xff]
        %v632 = vld [vmem:[%s299 + $0x38] sm:$0xff]
        %v633 = vld [vmem:[%s299 + $0x40] sm:$0xff]
        %v634 = vld [vmem:[%s299 + $0x48] sm:$0xff]
        %v635 = vld [vmem:[%s299 + $0x50] sm:$0xff]
        %v636 = vld [vmem:[%s299 + $0x58] sm:$0xff]
        %v637 = vld [vmem:[%s299 + $0x60] sm:$0xff]
        %v638 = vld [vmem:[%s299 + $0x68] sm:$0xff]
        %v639 = vld [vmem:[%s299 + $0x70] sm:$0xff]
        %v640 = vld [vmem:[%s299 + $0x78] sm:$0xff]
        %v641 = vadd.f32 %v609, %v625
        %v642 = vadd.f32 %v610, %v626
        %v643 = vadd.f32 %v611, %v627
        %v644 = vadd.f32 %v612, %v628
        %v645 = vadd.f32 %v613, %v629
        %v646 = vadd.f32 %v614, %v630
        %v647 = vadd.f32 %v615, %v631
        %v648 = vadd.f32 %v616, %v632
        %v649 = vadd.f32 %v617, %v633
        %v650 = vadd.f32 %v618, %v634
        %v651 = vadd.f32 %v619, %v635
        %v652 = vadd.f32 %v620, %v636
        %v653 = vadd.f32 %v621, %v637
        %v654 = vadd.f32 %v622, %v638
        %v655 = vadd.f32 %v623, %v639
        %v656 = vadd.f32 %v624, %v640
        %v657 = vmax.f32 %v641, 0.0
        %v658 = vmax.f32 %v642, 0.0
        %v659 = vmax.f32 %v643, 0.0
        %v660 = vmax.f32 %v644, 0.0
        %v661 = vmax.f32 %v645, 0.0
        %v662 = vmax.f32 %v646, 0.0
        %v663 = vmax.f32 %v647, 0.0
        %v664 = vmax.f32 %v648, 0.0
        %v665 = vmax.f32 %v649, 0.0
        %v666 = vmax.f32 %v650, 0.0
        %v667 = vmax.f32 %v651, 0.0
        %v668 = vmax.f32 %v652, 0.0
        %v669 = vmax.f32 %v653, 0.0
        %v670 = vmax.f32 %v654, 0.0
        %v671 = vmax.f32 %v655, 0.0
        %v672 = vmax.f32 %v656, 0.0
        %vm673 = vcmask 130048
        %674 = vst.msk [vmem:[%s288] sm:$0xff] %vm673, %v657
        %675 = vst.msk [vmem:[%s288 + $0x8] sm:$0xff] %vm673, %v658
        %676 = vst.msk [vmem:[%s288 + $0x10] sm:$0xff] %vm673, %v659
        %677 = vst.msk [vmem:[%s288 + $0x18] sm:$0xff] %vm673, %v660
        %678 = vst.msk [vmem:[%s288 + $0x20] sm:$0xff] %vm673, %v661
        %679 = vst.msk [vmem:[%s288 + $0x28] sm:$0xff] %vm673, %v662
        %680 = vst.msk [vmem:[%s288 + $0x30] sm:$0xff] %vm673, %v663
        %681 = vst.msk [vmem:[%s288 + $0x38] sm:$0xff] %vm673, %v664
        %682 = vst.msk [vmem:[%s288 + $0x40] sm:$0xff] %vm673, %v665
        %683 = vst.msk [vmem:[%s288 + $0x48] sm:$0xff] %vm673, %v666
        %684 = vst.msk [vmem:[%s288 + $0x50] sm:$0xff] %vm673, %v667
        %685 = vst.msk [vmem:[%s288 + $0x58] sm:$0xff] %vm673, %v668
        %686 = vst.msk [vmem:[%s288 + $0x60] sm:$0xff] %vm673, %v669
        %687 = vst.msk [vmem:[%s288 + $0x68] sm:$0xff] %vm673, %v670
        %688 = vst.msk [vmem:[%s288 + $0x70] sm:$0xff] %vm673, %v671
        %689 = vst.msk [vmem:[%s288 + $0x78] sm:$0xff] %vm673, %v672
        %s690 = sand.u32 %s186, 1
        %s691 = scalar_lea.sflag [#allocation3], %s690
        %s692 = sand.u32 %s186, 1
        %s693 = smul.addr %s692, 128
        %s694 = scalar_lea.vmem [#allocation2], %s693
        // Predicated region
        $region49: #{bottleneck_forward.7} parent=47 // pred_check
          %p695 = pneg %p196
        $region50: #{bottleneck_forward.7} parent=47 // pred_check_branch
          %697 = sbr.rel (%p695) target = $region52
        $region51: #{bottleneck_forward.7} parent=47 // pred_region
          %s698 = smul.u32 16, %s21
          %s700 = ssub.s32 2048, 2048
          %701 = vsyncadd %s691, %s700
          %s702 = smul.addr %s698, 128
          %s703 = scalar_lea.hbm %s7, %s702
          %s704 = sshll.u32 %s694, 4
          %s705 = int_to_ptr.vmem [resolvable:$true] %s704
          %710 = dma.vmem_to_hbm [thread:$0]  %s705, 2048, %s703, %s691, 128, 128, 8
        $region52: #{bottleneck_forward.7} parent=47 // pred_fallthru
          _
      $region48: #{bottleneck_forward.7} parent=5 // pred_fallthru
        _
      %p711 = scmp.le.s32.totalorder 2, %s16
      // Predicated region
      $region53: #{bottleneck_forward.7} parent=5 // pred_check
        %p712 = pneg %p711
      $region54: #{bottleneck_forward.7} parent=5 // pred_check_branch
        %714 = sbr.rel (%p712) target = $region56
      $region55: #{bottleneck_forward.7} parent=5 // pred_region
        %s715 = ssub.s32 %s16, 2
        // Predicated region
        $region57: #{bottleneck_forward.7} parent=55 // pred_check
          %p716 = pneg %p202
        $region58: #{bottleneck_forward.7} parent=55 // pred_check_branch
          %718 = sbr.rel (%p716) target = $region60
        $region59: #{bottleneck_forward.7} parent=55 // pred_region
          %s719 = sand.u32 %s187, 1
          %s720 = scalar_lea.sflag [#allocation3], %s719
          %s721 = sand.u32 %s187, 1
          %s722 = smul.addr %s721, 128
          %s723 = scalar_lea.vmem [#allocation2], %s722
          %724 = dma.done %s720, 2048
        $region60: #{bottleneck_forward.7} parent=55 // pred_fallthru
          _
      $region56: #{bottleneck_forward.7} parent=5 // pred_fallthru
        _
    $region6: #{bottleneck_forward.7} parent=1 // loop_footer
      %s20 = sadd.s32 1, %s16
    $region7: #{bottleneck_forward.7} parent=1 // loop_footer_branch
      %15 = sbr.rel target = $region3
    $region8: #{bottleneck_forward.7} parent=1 // loop_exit
      _
    %725 = vsyncpa [#allocation3], 1
    %s726 = scalar_lea.sflag [#allocation3], 1
    %727 = vsyncpa %s726, 1

// kernel: bottleneck_forward.5
$region0: #{bottleneck_forward.5}
  #allocation0 [shape = 'u32[]', space=smem, size = 0x4, offset = 0x4, fixed_abs, tag = 'smem constant byte address 0x4 - core index']
  #allocation1 [shape = 'u32[144,128]{1,0:T(1,128)}', space=vmem, size = 0x12000, scoped, tag = 'internal scratch']
  %s0 = inlined_call_operand.vmem [shape: f32[1,1,4], index: 0, kind: input, shape index: {}]
  %s1 = inlined_call_operand.vmem [shape: f32[1,1,4], index: 1, kind: input, shape index: {}]
  %s2 = inlined_call_operand.vmem [shape: f32[108,1,1,4], index: 2, kind: input, shape index: {}]
  %s3 = inlined_call_operand.vmem [shape: f32[10,10,4], index: 3, kind: input, shape index: {}]
  %s4 = inlined_call_operand.vmem [shape: f32[12,10,10,4], index: 4, kind: input, shape index: {}, may-alias: {4,5,6}]
  %s5 = inlined_call_operand.vmem [shape: f32[12,10,10,4], index: 5, kind: input, shape index: {}, may-alias: {4,5,6}]
  %s6 = inlined_call_operand.vmem [shape: f32[12,10,10,4], index: 6, kind: input, shape index: {}, may-alias: {4,5,6}]
  %s7 = inlined_call_operand.vmem [shape: f32[8,8,8,4], index: 7, kind: output, shape index: {0}]
  %s8 = inlined_call_operand.vmem [shape: f32[8,1,4], index: 8, kind: output, shape index: {1}]
  %s9 = inlined_call_operand.vmem [shape: f32[8,1,4], index: 9, kind: output, shape index: {2}]
  %10 = xla_tuple %s7, %s8, %s9
  %s11 = sld [smem:[#allocation0]]
  $region77: #{bottleneck_forward.5} parent=0
    _
  %s13 = ssub.s32 1, %s11
  %s14 = scalar_select 0, %s13, %s11
  loop: start=0, step=1, limit=10
  $region2: #{bottleneck_forward.5} parent=0 // loop_pre_header
    _
  $region3: #{bottleneck_forward.5} parent=0 // loop_header
    %s16 = sphi 0, %s20
    %p17 = scmp.ge.s32.totalorder %s16, 10
    %s23 = sphi 0, %s35
    %s24 = sphi 0, %s31
    %s25 = sphi 0, %s23
    %s26 = sphi 0, %s24
    %s27 = sphi 0, %s25
    %s28 = sphi 0, %s26
    %s36 = sphi 0, %s36
    %s38 = sphi 0, %s36
    %s39 = sphi 0, %s38
    %s53 = sphi 0, %s39
    %s57 = sphi 0, %s57
    %s59 = sphi 0, %s57
    %s60 = sphi 0, %s59
    %s74 = sphi 0, %s60
    %s78 = sphi 0, %s78
    %s80 = sphi 0, %s78
    %s81 = sphi 0, %s80
    %s95 = sphi 0, %s81
    %s99 = sphi 0, %s99
    %s101 = sphi 0, %s99
    %s102 = sphi 0, %s101
    %s116 = sphi 0, %s102
    %s126 = sphi 0, %s128
    %s129 = sphi 0, %s126
    %s130 = sphi 0, %s129
    %s146 = sphi 0, %s130
    %s158 = sphi 0, %s160
    %s161 = sphi 0, %s158
    %s162 = sphi 0, %s161
    %s178 = sphi 0, %s162
    %s190 = sphi 0, %s192
    %s193 = sphi 0, %s190
    %s194 = sphi 0, %s193
    %s210 = sphi 0, %s194
    %s220 = sphi 0, %s222
    %s223 = sphi 0, %s220
    %s224 = sphi 0, %s223
    %s240 = sphi 0, %s224
    %s250 = sphi 0, %s252
    %s253 = sphi 0, %s250
    %s254 = sphi 0, %s253
    %s270 = sphi 0, %s254
    %s280 = sphi 0, %s282
    %s283 = sphi 0, %s280
    %s284 = sphi 0, %s283
    %s300 = sphi 0, %s284
  $region4: #{bottleneck_forward.5} parent=0 // loop_header_branch
    %19 = sbr.rel (%p17) target = $region8
  $region5: #{bottleneck_forward.5} parent=0 // loop_body
    %s21 = ssub.s32 %s16, 1
    %s22 = ssub.s32 %s16, 2
    %s29 = sadd.s32 1, %s24
    %p30 = scmp.ge.s32.totalorder %s29, 4
    %s31 = scalar_select %p30, 0, %s29
    %s32 = sadd.s32 1, %s23
    %s33 = scalar_select %p30, %s32, %s23
    %p34 = scmp.ge.s32.totalorder %s33, 2
    %s35 = scalar_select %p34, 0, %s33
    %s37 = sadd.s32 %s36, 1
    %p40 = scmp.eq.s32.totalorder %s16, 7
    %p41 = scmp.ne.s32.totalorder %s36, %s38
    %p42 = scmp.eq.s32.totalorder %s16, 0
    %p43 = por %p41, %p42
    %p44 = scmp.ne.s32.totalorder %s36, %s38
    %p45 = scmp.eq.s32.totalorder %s21, 7
    %p46 = por %p44, %p45
    %p47 = scmp.ne.s32.totalorder %s38, %s39
    %p48 = scmp.eq.s32.totalorder %s21, 0
    %p49 = por %p47, %p48
    %p50 = scmp.ne.s32.totalorder %s38, %s39
    %p51 = scmp.eq.s32.totalorder %s22, 7
    %p52 = por %p50, %p51
    %p54 = scmp.ne.s32.totalorder %s39, %s53
    %p55 = scmp.eq.s32.totalorder %s22, 0
    %p56 = por %p54, %p55
    %s58 = sadd.s32 %s57, 1
    %p61 = scmp.eq.s32.totalorder %s16, 7
    %p62 = scmp.ne.s32.totalorder %s57, %s59
    %p63 = scmp.eq.s32.totalorder %s16, 0
    %p64 = por %p62, %p63
    %p65 = scmp.ne.s32.totalorder %s57, %s59
    %p66 = scmp.eq.s32.totalorder %s21, 7
    %p67 = por %p65, %p66
    %p68 = scmp.ne.s32.totalorder %s59, %s60
    %p69 = scmp.eq.s32.totalorder %s21, 0
    %p70 = por %p68, %p69
    %p71 = scmp.ne.s32.totalorder %s59, %s60
    %p72 = scmp.eq.s32.totalorder %s22, 7
    %p73 = por %p71, %p72
    %p75 = scmp.ne.s32.totalorder %s60, %s74
    %p76 = scmp.eq.s32.totalorder %s22, 0
    %p77 = por %p75, %p76
    %s79 = sadd.s32 %s78, 1
    %p82 = scmp.eq.s32.totalorder %s16, 7
    %p83 = scmp.ne.s32.totalorder %s78, %s80
    %p84 = scmp.eq.s32.totalorder %s16, 0
    %p85 = por %p83, %p84
    %p86 = scmp.ne.s32.totalorder %s78, %s80
    %p87 = scmp.eq.s32.totalorder %s21, 7
    %p88 = por %p86, %p87
    %p89 = scmp.ne.s32.totalorder %s80, %s81
    %p90 = scmp.eq.s32.totalorder %s21, 0
    %p91 = por %p89, %p90
    %p92 = scmp.ne.s32.totalorder %s80, %s81
    %p93 = scmp.eq.s32.totalorder %s22, 7
    %p94 = por %p92, %p93
    %p96 = scmp.ne.s32.totalorder %s81, %s95
    %p97 = scmp.eq.s32.totalorder %s22, 0
    %p98 = por %p96, %p97
    %s100 = sadd.s32 %s99, 1
    %p103 = scmp.eq.s32.totalorder %s16, 7
    %p104 = scmp.ne.s32.totalorder %s99, %s101
    %p105 = scmp.eq.s32.totalorder %s16, 0
    %p106 = por %p104, %p105
    %p107 = scmp.ne.s32.totalorder %s99, %s101
    %p108 = scmp.eq.s32.totalorder %s21, 7
    %p109 = por %p107, %p108
    %p110 = scmp.ne.s32.totalorder %s101, %s102
    %p111 = scmp.eq.s32.totalorder %s21, 0
    %p112 = por %p110, %p111
    %p113 = scmp.ne.s32.totalorder %s101, %s102
    %p114 = scmp.eq.s32.totalorder %s22, 7
    %p115 = por %p113, %p114
    %p117 = scmp.ne.s32.totalorder %s102, %s116
    %p118 = scmp.eq.s32.totalorder %s22, 0
    %p119 = por %p117, %p118
    %s120 = smul.u32 %s23, 6
    %s121 = sadd.s32 %s120, %s24
    %s122 = smul.u32 %s35, 6
    %s123 = sadd.s32 %s122, %s31
    %s124 = ssub.s32 %s121, %s123
    %p125 = scmp.eq.s32.totalorder %s124, 0
    %s127 = sadd.s32 %s126, 1
    %s128 = scalar_select %p125, %s126, %s127
    %p131 = pneg %p125
    %p132 = scmp.eq.s32.totalorder %s16, 7
    %p133 = por %p131, %p132
    %p134 = scmp.ne.s32.totalorder %s126, %s129
    %p135 = scmp.eq.s32.totalorder %s16, 0
    %p136 = por %p134, %p135
    %p137 = scmp.ne.s32.totalorder %s126, %s129
    %p138 = scmp.eq.s32.totalorder %s21, 7
    %p139 = por %p137, %p138
    %p140 = scmp.ne.s32.totalorder %s129, %s130
    %p141 = scmp.eq.s32.totalorder %s21, 0
    %p142 = por %p140, %p141
    %p143 = scmp.ne.s32.totalorder %s129, %s130
    %p144 = scmp.eq.s32.totalorder %s22, 7
    %p145 = por %p143, %p144
    %p147 = scmp.ne.s32.totalorder %s130, %s146
    %p148 = scmp.eq.s32.totalorder %s22, 0
    %p149 = por %p147, %p148
    %s150 = smul.u32 %s23, 6
    %s151 = sadd.s32 %s150, %s24
    %s152 = sadd.s32 %s151, 1
    %s153 = smul.u32 %s35, 6
    %s154 = sadd.s32 %s153, %s31
    %s155 = sadd.s32 %s154, 1
    %s156 = ssub.s32 %s152, %s155
    %p157 = scmp.eq.s32.totalorder %s156, 0
    %s159 = sadd.s32 %s158, 1
    %s160 = scalar_select %p157, %s158, %s159
    %p163 = pneg %p157
    %p164 = scmp.eq.s32.totalorder %s16, 7
    %p165 = por %p163, %p164
    %p166 = scmp.ne.s32.totalorder %s158, %s161
    %p167 = scmp.eq.s32.totalorder %s16, 0
    %p168 = por %p166, %p167
    %p169 = scmp.ne.s32.totalorder %s158, %s161
    %p170 = scmp.eq.s32.totalorder %s21, 7
    %p171 = por %p169, %p170
    %p172 = scmp.ne.s32.totalorder %s161, %s162
    %p173 = scmp.eq.s32.totalorder %s21, 0
    %p174 = por %p172, %p173
    %p175 = scmp.ne.s32.totalorder %s161, %s162
    %p176 = scmp.eq.s32.totalorder %s22, 7
    %p177 = por %p175, %p176
    %p179 = scmp.ne.s32.totalorder %s162, %s178
    %p180 = scmp.eq.s32.totalorder %s22, 0
    %p181 = por %p179, %p180
    %s182 = smul.u32 %s23, 6
    %s183 = sadd.s32 %s182, %s24
    %s184 = sadd.s32 %s183, 2
    %s185 = smul.u32 %s35, 6
    %s186 = sadd.s32 %s185, %s31
    %s187 = sadd.s32 %s186, 2
    %s188 = ssub.s32 %s184, %s187
    %p189 = scmp.eq.s32.totalorder %s188, 0
    %s191 = sadd.s32 %s190, 1
    %s192 = scalar_select %p189, %s190, %s191
    %p195 = pneg %p189
    %p196 = scmp.eq.s32.totalorder %s16, 7
    %p197 = por %p195, %p196
    %p198 = scmp.ne.s32.totalorder %s190, %s193
    %p199 = scmp.eq.s32.totalorder %s16, 0
    %p200 = por %p198, %p199
    %p201 = scmp.ne.s32.totalorder %s190, %s193
    %p202 = scmp.eq.s32.totalorder %s21, 7
    %p203 = por %p201, %p202
    %p204 = scmp.ne.s32.totalorder %s193, %s194
    %p205 = scmp.eq.s32.totalorder %s21, 0
    %p206 = por %p204, %p205
    %p207 = scmp.ne.s32.totalorder %s193, %s194
    %p208 = scmp.eq.s32.totalorder %s22, 7
    %p209 = por %p207, %p208
    %p211 = scmp.ne.s32.totalorder %s194, %s210
    %p212 = scmp.eq.s32.totalorder %s22, 0
    %p213 = por %p211, %p212
    %s214 = smul.u32 %s23, 4
    %s215 = sadd.s32 %s214, %s24
    %s216 = smul.u32 %s35, 4
    %s217 = sadd.s32 %s216, %s31
    %s218 = ssub.s32 %s215, %s217
    %p219 = scmp.eq.s32.totalorder %s218, 0
    %s221 = sadd.s32 %s220, 1
    %s222 = scalar_select %p219, %s220, %s221
    %p225 = pneg %p219
    %p226 = scmp.eq.s32.totalorder %s16, 7
    %p227 = por %p225, %p226
    %p228 = scmp.ne.s32.totalorder %s220, %s223
    %p229 = scmp.eq.s32.totalorder %s16, 0
    %p230 = por %p228, %p229
    %p231 = scmp.ne.s32.totalorder %s220, %s223
    %p232 = scmp.eq.s32.totalorder %s21, 7
    %p233 = por %p231, %p232
    %p234 = scmp.ne.s32.totalorder %s223, %s224
    %p235 = scmp.eq.s32.totalorder %s21, 0
    %p236 = por %p234, %p235
    %p237 = scmp.ne.s32.totalorder %s223, %s224
    %p238 = scmp.eq.s32.totalorder %s22, 7
    %p239 = por %p237, %p238
    %p241 = scmp.ne.s32.totalorder %s224, %s240
    %p242 = scmp.eq.s32.totalorder %s22, 0
    %p243 = por %p241, %p242
    %s244 = smul.u32 %s23, 4
    %s245 = sadd.s32 %s244, %s24
    %s246 = smul.u32 %s35, 4
    %s247 = sadd.s32 %s246, %s31
    %s248 = ssub.s32 %s245, %s247
    %p249 = scmp.eq.s32.totalorder %s248, 0
    %s251 = sadd.s32 %s250, 1
    %s252 = scalar_select %p249, %s250, %s251
    %p255 = pneg %p249
    %p256 = scmp.eq.s32.totalorder %s16, 7
    %p257 = por %p255, %p256
    %p258 = scmp.ne.s32.totalorder %s250, %s253
    %p259 = scmp.eq.s32.totalorder %s16, 0
    %p260 = por %p258, %p259
    %p261 = scmp.ne.s32.totalorder %s250, %s253
    %p262 = scmp.eq.s32.totalorder %s21, 7
    %p263 = por %p261, %p262
    %p264 = scmp.ne.s32.totalorder %s253, %s254
    %p265 = scmp.eq.s32.totalorder %s21, 0
    %p266 = por %p264, %p265
    %p267 = scmp.ne.s32.totalorder %s253, %s254
    %p268 = scmp.eq.s32.totalorder %s22, 7
    %p269 = por %p267, %p268
    %p271 = scmp.ne.s32.totalorder %s254, %s270
    %p272 = scmp.eq.s32.totalorder %s22, 0
    %p273 = por %p271, %p272
    %s274 = smul.u32 %s23, 4
    %s275 = sadd.s32 %s274, %s24
    %s276 = smul.u32 %s35, 4
    %s277 = sadd.s32 %s276, %s31
    %s278 = ssub.s32 %s275, %s277
    %p279 = scmp.eq.s32.totalorder %s278, 0
    %s281 = sadd.s32 %s280, 1
    %s282 = scalar_select %p279, %s280, %s281
    %p285 = pneg %p279
    %p286 = scmp.eq.s32.totalorder %s16, 7
    %p287 = por %p285, %p286
    %p288 = scmp.ne.s32.totalorder %s280, %s283
    %p289 = scmp.eq.s32.totalorder %s16, 0
    %p290 = por %p288, %p289
    %p291 = scmp.ne.s32.totalorder %s280, %s283
    %p292 = scmp.eq.s32.totalorder %s21, 7
    %p293 = por %p291, %p292
    %p294 = scmp.ne.s32.totalorder %s283, %s284
    %p295 = scmp.eq.s32.totalorder %s21, 0
    %p296 = por %p294, %p295
    %p297 = scmp.ne.s32.totalorder %s283, %s284
    %p298 = scmp.eq.s32.totalorder %s22, 7
    %p299 = por %p297, %p298
    %p301 = scmp.ne.s32.totalorder %s284, %s300
    %p302 = scmp.eq.s32.totalorder %s22, 0
    %p303 = por %p301, %p302
    %p304 = scmp.le.s32.totalorder 1, %s16
    %p305 = scmp.lt.s32.totalorder %s16, 9
    %p306 = pnand %p304, %p305
    %p307 = pneg %p306
    // Predicated region
    $region9: #{bottleneck_forward.5} parent=5 // pred_check
      _
    $region10: #{bottleneck_forward.5} parent=5 // pred_check_branch
      %309 = sbr.rel (%p306) target = $region12
    $region11: #{bottleneck_forward.5} parent=5 // pred_region
      %s310 = ssub.s32 %s16, 1
      // Predicated region
      $region13: #{bottleneck_forward.5} parent=11 // pred_check
        %p311 = pneg %p49
      $region14: #{bottleneck_forward.5} parent=11 // pred_check_branch
        %313 = sbr.rel (%p311) target = $region16
      $region15: #{bottleneck_forward.5} parent=11 // pred_region
        _
      $region16: #{bottleneck_forward.5} parent=11 // pred_fallthru
        _
      // Predicated region
      $region17: #{bottleneck_forward.5} parent=11 // pred_check
        %p314 = pneg %p70
      $region18: #{bottleneck_forward.5} parent=11 // pred_check_branch
        %316 = sbr.rel (%p314) target = $region20
      $region19: #{bottleneck_forward.5} parent=11 // pred_region
        _
      $region20: #{bottleneck_forward.5} parent=11 // pred_fallthru
        _
      // Predicated region
      $region21: #{bottleneck_forward.5} parent=11 // pred_check
        %p317 = pneg %p91
      $region22: #{bottleneck_forward.5} parent=11 // pred_check_branch
        %319 = sbr.rel (%p317) target = $region24
      $region23: #{bottleneck_forward.5} parent=11 // pred_region
        _
      $region24: #{bottleneck_forward.5} parent=11 // pred_fallthru
        _
      // Predicated region
      $region25: #{bottleneck_forward.5} parent=11 // pred_check
        %p320 = pneg %p112
      $region26: #{bottleneck_forward.5} parent=11 // pred_check_branch
        %322 = sbr.rel (%p320) target = $region28
      $region27: #{bottleneck_forward.5} parent=11 // pred_region
        _
      $region28: #{bottleneck_forward.5} parent=11 // pred_fallthru
        _
    $region12: #{bottleneck_forward.5} parent=5 // pred_fallthru
      _
    %p323 = scmp.lt.s32.totalorder %s16, 8
    // Predicated region
    $region29: #{bottleneck_forward.5} parent=5 // pred_check
      %p324 = pneg %p323
    $region30: #{bottleneck_forward.5} parent=5 // pred_check_branch
      %326 = sbr.rel (%p324) target = $region32
    $region31: #{bottleneck_forward.5} parent=5 // pred_region
      // Predicated region
      $region33: #{bottleneck_forward.5} parent=31 // pred_check
        %p327 = pneg %p136
      $region34: #{bottleneck_forward.5} parent=31 // pred_check_branch
        %329 = sbr.rel (%p327) target = $region36
      $region35: #{bottleneck_forward.5} parent=31 // pred_region
        %s330 = smul.u32 %s23, 6
        %s331 = sadd.s32 %s330, %s24
        %p332 = scmp.lt.s32.totalorder %s331, 11
        %s333 = scalar_select %p332, %s331, 11
        %s334 = smul.addr %s333, 20
        %s335 = smul.addr %s334, 8
        %s336 = scalar_lea.vmem %s4, %s335
        %s337 = smul.u32 %s23, 6
        %s338 = sadd.s32 %s337, %s24
      $region36: #{bottleneck_forward.5} parent=31 // pred_fallthru
        _
      // Predicated region
      $region37: #{bottleneck_forward.5} parent=31 // pred_check
        %p339 = pneg %p168
      $region38: #{bottleneck_forward.5} parent=31 // pred_check_branch
        %341 = sbr.rel (%p339) target = $region40
      $region39: #{bottleneck_forward.5} parent=31 // pred_region
        %s342 = smul.u32 %s23, 6
        %s343 = sadd.s32 %s342, %s24
        %s344 = sadd.s32 %s343, 1
        %p345 = scmp.lt.s32.totalorder %s344, 11
        %s346 = scalar_select %p345, %s344, 11
        %s347 = smul.addr %s346, 20
        %s348 = smul.addr %s347, 8
        %s349 = scalar_lea.vmem %s5, %s348
        %s350 = smul.u32 %s23, 6
        %s351 = sadd.s32 %s350, %s24
        %s352 = sadd.s32 %s351, 1
      $region40: #{bottleneck_forward.5} parent=31 // pred_fallthru
        _
      // Predicated region
      $region41: #{bottleneck_forward.5} parent=31 // pred_check
        %p353 = pneg %p200
      $region42: #{bottleneck_forward.5} parent=31 // pred_check_branch
        %355 = sbr.rel (%p353) target = $region44
      $region43: #{bottleneck_forward.5} parent=31 // pred_region
        %s356 = smul.u32 %s23, 6
        %s357 = sadd.s32 %s356, %s24
        %s358 = sadd.s32 %s357, 2
        %p359 = scmp.lt.s32.totalorder %s358, 11
        %s360 = scalar_select %p359, %s358, 11
        %s361 = smul.addr %s360, 20
        %s362 = smul.addr %s361, 8
        %s363 = scalar_lea.vmem %s6, %s362
        %s364 = smul.u32 %s23, 6
        %s365 = sadd.s32 %s364, %s24
        %s366 = sadd.s32 %s365, 2
      $region44: #{bottleneck_forward.5} parent=31 // pred_fallthru
        _
    $region32: #{bottleneck_forward.5} parent=5 // pred_fallthru
      _
    %p367 = scmp.le.s32.totalorder 1, %s16
    %p368 = scmp.lt.s32.totalorder %s16, 9
    %p369 = pnand %p367, %p368
    %p370 = pneg %p369
    // Predicated region
    $region45: #{bottleneck_forward.5} parent=5 // pred_check
      _
    $region46: #{bottleneck_forward.5} parent=5 // pred_check_branch
      %372 = sbr.rel (%p369) target = $region48
    $region47: #{bottleneck_forward.5} parent=5 // pred_region
      %s373 = ssub.s32 %s16, 1
      %p374 = pneg %p49
      %p375 = pneg %p46
      %p376 = pneg %p70
      %p377 = pneg %p67
      %p378 = pneg %p91
      %p379 = pneg %p88
      %p380 = pneg %p112
      %p381 = pneg %p109
      %s382 = smul.u32 %s25, 6
      %s383 = sadd.s32 %s382, %s26
      %p384 = scmp.lt.s32.totalorder %s383, 11
      %s385 = scalar_select %p384, %s383, 11
      %s386 = smul.addr %s385, 20
      %s387 = smul.addr %s386, 8
      %s388 = scalar_lea.vmem %s4, %s387
      %p389 = pneg %p142
      %p390 = pneg %p139
      %s391 = smul.u32 %s25, 6
      %s392 = sadd.s32 %s391, %s26
      %s393 = sadd.s32 %s392, 1
      %p394 = scmp.lt.s32.totalorder %s393, 11
      %s395 = scalar_select %p394, %s393, 11
      %s396 = smul.addr %s395, 20
      %s397 = smul.addr %s396, 8
      %s398 = scalar_lea.vmem %s5, %s397
      %p399 = pneg %p174
      %p400 = pneg %p171
      %s401 = smul.u32 %s25, 6
      %s402 = sadd.s32 %s401, %s26
      %s403 = sadd.s32 %s402, 2
      %p404 = scmp.lt.s32.totalorder %s403, 11
      %s405 = scalar_select %p404, %s403, 11
      %s406 = smul.addr %s405, 20
      %s407 = smul.addr %s406, 8
      %s408 = scalar_lea.vmem %s6, %s407
      %p409 = pneg %p206
      %p410 = pneg %p203
      %p411 = pneg %p236
      %p412 = pneg %p233
      %s413 = smul.u32 %s25, 4
      %s414 = sadd.s32 %s413, %s26
      %p415 = scmp.lt.s32.totalorder %s414, 7
      %s416 = scalar_select %p415, %s414, 7
      %s417 = smul.addr %s416, 8
      %s418 = smul.addr %s417, 8
      %s419 = scalar_lea.vmem %s7, %s418
      %p420 = pneg %p266
      %p421 = pneg %p263
      %s422 = smul.u32 %s25, 4
      %s423 = sadd.s32 %s422, %s26
      %p424 = scmp.lt.s32.totalorder %s423, 7
      %s425 = scalar_select %p424, %s423, 7
      %s426 = scalar_lea.vmem %s8, %s425
      %p427 = pneg %p296
      %p428 = pneg %p293
      %s429 = smul.u32 %s25, 4
      %s430 = sadd.s32 %s429, %s26
      %p431 = scmp.lt.s32.totalorder %s430, 7
      %s432 = scalar_select %p431, %s430, 7
      %s433 = scalar_lea.vmem %s9, %s432
      %s434 = smul.u32 %s25, 6
      %s435 = sadd.s32 %s434, %s26
      %p436 = scmp.lt.s32.totalorder %s435, 11
      %s437 = scalar_select %p436, %s435, 11
      %s438 = smul.addr %s437, 20
      %s439 = smul.addr %s438, 8
      %s440 = scalar_lea.vmem %s4, %s439
      %s441 = smul.u32 %s25, 6
      %s442 = sadd.s32 %s441, %s26
      %s443 = smul.u32 %s25, 6
      %s444 = sadd.s32 %s443, %s26
      %s445 = sadd.s32 %s444, 1
      %p446 = scmp.lt.s32.totalorder %s445, 11
      %s447 = scalar_select %p446, %s445, 11
      %s448 = smul.addr %s447, 20
      %s449 = smul.addr %s448, 8
      %s450 = scalar_lea.vmem %s5, %s449
      %s451 = smul.u32 %s25, 6
      %s452 = sadd.s32 %s451, %s26
      %s453 = sadd.s32 %s452, 1
      %s454 = smul.u32 %s25, 6
      %s455 = sadd.s32 %s454, %s26
      %s456 = sadd.s32 %s455, 2
      %p457 = scmp.lt.s32.totalorder %s456, 11
      %s458 = scalar_select %p457, %s456, 11
      %s459 = smul.addr %s458, 20
      %s460 = smul.addr %s459, 8
      %s461 = scalar_lea.vmem %s6, %s460
      %s462 = smul.u32 %s25, 6
      %s463 = sadd.s32 %s462, %s26
      %s464 = sadd.s32 %s463, 2
      %s465 = smul.u32 %s25, 4
      %s466 = sadd.s32 %s465, %s26
      %p467 = scmp.lt.s32.totalorder %s466, 7
      %s468 = scalar_select %p467, %s466, 7
      %s469 = smul.addr %s468, 8
      %s470 = smul.addr %s469, 8
      %s471 = scalar_lea.vmem %s7, %s470
      %s472 = smul.u32 %s25, 4
      %s473 = sadd.s32 %s472, %s26
      %s474 = smul.u32 %s25, 4
      %s475 = sadd.s32 %s474, %s26
      %p476 = scmp.lt.s32.totalorder %s475, 7
      %s477 = scalar_select %p476, %s475, 7
      %s478 = scalar_lea.vmem %s8, %s477
      %s479 = smul.u32 %s25, 4
      %s480 = sadd.s32 %s479, %s26
      %s481 = smul.u32 %s25, 4
      %s482 = sadd.s32 %s481, %s26
      %p483 = scmp.lt.s32.totalorder %s482, 7
      %s484 = scalar_select %p483, %s482, 7
      %s485 = scalar_lea.vmem %s9, %s484
      %s486 = smul.u32 %s25, 4
      %s487 = sadd.s32 %s486, %s26
      %v488 = vld [vmem:[%s0] sm:$0x1]
      %v489 = vld [vmem:[%s1] sm:$0x1]
      %v490 = vld [vmem:[%s3] sm:$0xff]
      %v491 = vld [vmem:[%s3 + $0x8] sm:$0x3]
      %v492 = vld [vmem:[%s3 + $0x10] sm:$0xff]
      %v493 = vld [vmem:[%s3 + $0x18] sm:$0x3]
      %v494 = vld [vmem:[%s3 + $0x20] sm:$0xff]
      %v495 = vld [vmem:[%s3 + $0x28] sm:$0x3]
      %v496 = vld [vmem:[%s3 + $0x30] sm:$0xff]
      %v497 = vld [vmem:[%s3 + $0x38] sm:$0x3]
      %v498 = vld [vmem:[%s3 + $0x40] sm:$0xff]
      %v499 = vld [vmem:[%s3 + $0x48] sm:$0x3]
      %v500 = vld [vmem:[%s3 + $0x50] sm:$0xff]
      %v501 = vld [vmem:[%s3 + $0x58] sm:$0x3]
      %v502 = vld [vmem:[%s3 + $0x60] sm:$0xff]
      %v503 = vld [vmem:[%s3 + $0x68] sm:$0x3]
      %v504 = vld [vmem:[%s3 + $0x70] sm:$0xff]
      %v505 = vld [vmem:[%s3 + $0x78] sm:$0x3]
      %v506 = vld [vmem:[%s3 + $0x80] sm:$0xff]
      %v507 = vld [vmem:[%s3 + $0x88] sm:$0x3]
      %v508 = vld [vmem:[%s3 + $0x90] sm:$0xff]
      %v509 = vld [vmem:[%s3 + $0x98] sm:$0x3]
      %v510 = vld [vmem:[%s440] sm:$0xff]
      %v511 = vld [vmem:[%s440 + $0x8] sm:$0x3]
      %v512 = vld [vmem:[%s440 + $0x10] sm:$0xff]
      %v513 = vld [vmem:[%s440 + $0x18] sm:$0x3]
      %v514 = vld [vmem:[%s440 + $0x20] sm:$0xff]
      %v515 = vld [vmem:[%s440 + $0x28] sm:$0x3]
      %v516 = vld [vmem:[%s440 + $0x30] sm:$0xff]
      %v517 = vld [vmem:[%s440 + $0x38] sm:$0x3]
      %v518 = vld [vmem:[%s440 + $0x40] sm:$0xff]
      %v519 = vld [vmem:[%s440 + $0x48] sm:$0x3]
      %v520 = vld [vmem:[%s440 + $0x50] sm:$0xff]
      %v521 = vld [vmem:[%s440 + $0x58] sm:$0x3]
      %v522 = vld [vmem:[%s440 + $0x60] sm:$0xff]
      %v523 = vld [vmem:[%s440 + $0x68] sm:$0x3]
      %v524 = vld [vmem:[%s440 + $0x70] sm:$0xff]
      %v525 = vld [vmem:[%s440 + $0x78] sm:$0x3]
      %v526 = vld [vmem:[%s440 + $0x80] sm:$0xff]
      %v527 = vld [vmem:[%s440 + $0x88] sm:$0x3]
      %v528 = vld [vmem:[%s440 + $0x90] sm:$0xff]
      %v529 = vld [vmem:[%s440 + $0x98] sm:$0x3]
      %v531 = vlaneseq
      %v532 = vshrl.u32 %v531, 7
      %v533 = vsub.s32 0, %v532
      %v534 = vrot.slane %v488, %v533
      %v536 = vmul.f32 %v510, %v534
      %v537 = vmul.f32 %v511, %v534
      %v538 = vmul.f32 %v512, %v534
      %v539 = vmul.f32 %v513, %v534
      %v540 = vmul.f32 %v514, %v534
      %v541 = vmul.f32 %v515, %v534
      %v542 = vmul.f32 %v516, %v534
      %v543 = vmul.f32 %v517, %v534
      %v544 = vmul.f32 %v518, %v534
      %v545 = vmul.f32 %v519, %v534
      %v546 = vmul.f32 %v520, %v534
      %v547 = vmul.f32 %v521, %v534
      %v548 = vmul.f32 %v522, %v534
      %v549 = vmul.f32 %v523, %v534
      %v550 = vmul.f32 %v524, %v534
      %v551 = vmul.f32 %v525, %v534
      %v552 = vmul.f32 %v526, %v534
      %v553 = vmul.f32 %v527, %v534
      %v554 = vmul.f32 %v528, %v534
      %v555 = vmul.f32 %v529, %v534
      %v557 = vlaneseq
      %v558 = vshrl.u32 %v557, 7
      %v559 = vsub.s32 0, %v558
      %v560 = vrot.slane %v489, %v559
      %v562 = vadd.f32 %v536, %v560
      %v563 = vadd.f32 %v537, %v560
      %v564 = vadd.f32 %v538, %v560
      %v565 = vadd.f32 %v539, %v560
      %v566 = vadd.f32 %v540, %v560
      %v567 = vadd.f32 %v541, %v560
      %v568 = vadd.f32 %v542, %v560
      %v569 = vadd.f32 %v543, %v560
      %v570 = vadd.f32 %v544, %v560
      %v571 = vadd.f32 %v545, %v560
      %v572 = vadd.f32 %v546, %v560
      %v573 = vadd.f32 %v547, %v560
      %v574 = vadd.f32 %v548, %v560
      %v575 = vadd.f32 %v549, %v560
      %v576 = vadd.f32 %v550, %v560
      %v577 = vadd.f32 %v551, %v560
      %v578 = vadd.f32 %v552, %v560
      %v579 = vadd.f32 %v553, %v560
      %v580 = vadd.f32 %v554, %v560
      %v581 = vadd.f32 %v555, %v560
      %v582 = vmax.f32 %v562, 0.0
      %v583 = vmax.f32 %v563, 0.0
      %v584 = vmax.f32 %v564, 0.0
      %v585 = vmax.f32 %v565, 0.0
      %v586 = vmax.f32 %v566, 0.0
      %v587 = vmax.f32 %v567, 0.0
      %v588 = vmax.f32 %v568, 0.0
      %v589 = vmax.f32 %v569, 0.0
      %v590 = vmax.f32 %v570, 0.0
      %v591 = vmax.f32 %v571, 0.0
      %v592 = vmax.f32 %v572, 0.0
      %v593 = vmax.f32 %v573, 0.0
      %v594 = vmax.f32 %v574, 0.0
      %v595 = vmax.f32 %v575, 0.0
      %v596 = vmax.f32 %v576, 0.0
      %v597 = vmax.f32 %v577, 0.0
      %v598 = vmax.f32 %v578, 0.0
      %v599 = vmax.f32 %v579, 0.0
      %v600 = vmax.f32 %v580, 0.0
      %v601 = vmax.f32 %v581, 0.0
      %v602 = vmul.f32 %v582, %v490
      %v603 = vmul.f32 %v583, %v491
      %v604 = vmul.f32 %v584, %v492
      %v605 = vmul.f32 %v585, %v493
      %v606 = vmul.f32 %v586, %v494
      %v607 = vmul.f32 %v587, %v495
      %v608 = vmul.f32 %v588, %v496
      %v609 = vmul.f32 %v589, %v497
      %v610 = vmul.f32 %v590, %v498
      %v611 = vmul.f32 %v591, %v499
      %v612 = vmul.f32 %v592, %v500
      %v613 = vmul.f32 %v593, %v501
      %v614 = vmul.f32 %v594, %v502
      %v615 = vmul.f32 %v595, %v503
      %v616 = vmul.f32 %v596, %v504
      %v617 = vmul.f32 %v597, %v505
      %v618 = vmul.f32 %v598, %v506
      %v619 = vmul.f32 %v599, %v507
      %v620 = vmul.f32 %v600, %v508
      %v621 = vmul.f32 %v601, %v509
      %p622 = scmp.ge.s32.totalorder %s26, 1
      %s623 = scalar_select %p622, 1.0, 0.0
      %v624 = vstv %s623
      %v625 = vmul.f32 %v602, %v624
      %v626 = vmul.f32 %v603, %v624
      %v627 = vmul.f32 %v604, %v624
      %v628 = vmul.f32 %v605, %v624
      %v629 = vmul.f32 %v606, %v624
      %v630 = vmul.f32 %v607, %v624
      %v631 = vmul.f32 %v608, %v624
      %v632 = vmul.f32 %v609, %v624
      %v633 = vmul.f32 %v610, %v624
      %v634 = vmul.f32 %v611, %v624
      %v635 = vmul.f32 %v612, %v624
      %v636 = vmul.f32 %v613, %v624
      %v637 = vmul.f32 %v614, %v624
      %v638 = vmul.f32 %v615, %v624
      %v639 = vmul.f32 %v616, %v624
      %v640 = vmul.f32 %v617, %v624
      %v641 = vmul.f32 %v618, %v624
      %v642 = vmul.f32 %v619, %v624
      %v643 = vmul.f32 %v620, %v624
      %v644 = vmul.f32 %v621, %v624
      %v645 = vld [vmem:[%s2] sm:$0x1]
      %647 = vset.pattern.permute.xlu0 0
      %648 = vperm.xlu0 %647, %v625
      %v649 = vpop.permute.xlu0 %648
      %652 = vset.pattern.permute.xlu0 0
      %653 = vperm.xlu0 %652, %v627
      %v654 = vpop.permute.xlu0 %653
      %657 = vset.pattern.permute.xlu0 0
      %658 = vperm.xlu0 %657, %v629
      %v659 = vpop.permute.xlu0 %658
      %662 = vset.pattern.permute.xlu0 0
      %663 = vperm.xlu0 %662, %v631
      %v664 = vpop.permute.xlu0 %663
      %667 = vset.pattern.permute.xlu0 0
      %668 = vperm.xlu0 %667, %v633
      %v669 = vpop.permute.xlu0 %668
      %672 = vset.pattern.permute.xlu0 0
      %673 = vperm.xlu0 %672, %v635
      %v674 = vpop.permute.xlu0 %673
      %677 = vset.pattern.permute.xlu0 0
      %678 = vperm.xlu0 %677, %v637
      %v679 = vpop.permute.xlu0 %678
      %682 = vset.pattern.permute.xlu0 0
      %683 = vperm.xlu0 %682, %v639
      %v684 = vpop.permute.xlu0 %683
      %v687 = vlaneseq
      %v688 = vshrl.u32 %v687, 7
      %v689 = vsub.s32 0, %v688
      %v690 = vrot.slane %v645, %v689
      %v692 = vmul.f32 %v649, %v690
      %v693 = vmul.f32 %v654, %v690
      %v694 = vmul.f32 %v659, %v690
      %v695 = vmul.f32 %v664, %v690
      %v696 = vmul.f32 %v669, %v690
      %v697 = vmul.f32 %v674, %v690
      %v698 = vmul.f32 %v679, %v690
      %v699 = vmul.f32 %v684, %v690
      %v700 = vadd.f32 %v692, 0.0
      %v701 = vadd.f32 %v693, 0.0
      %v702 = vadd.f32 %v694, 0.0
      %v703 = vadd.f32 %v695, 0.0
      %v704 = vadd.f32 %v696, 0.0
      %v705 = vadd.f32 %v697, 0.0
      %v706 = vadd.f32 %v698, 0.0
      %v707 = vadd.f32 %v699, 0.0
      %s708 = scalar_lea.vmem %s2, 1
      %v709 = vld [vmem:[%s708] sm:$0x1]
      %710 = vset.pattern.permute.xlu0 1
      %711 = vperm.xlu0 %710, %v625
      %v712 = vpop.permute.xlu0 %711
      %714 = vset.pattern.permute.xlu0 1
      %715 = vperm.xlu0 %714, %v627
      %v716 = vpop.permute.xlu0 %715
      %718 = vset.pattern.permute.xlu0 1
      %719 = vperm.xlu0 %718, %v629
      %v720 = vpop.permute.xlu0 %719
      %722 = vset.pattern.permute.xlu0 1
      %723 = vperm.xlu0 %722, %v631
      %v724 = vpop.permute.xlu0 %723
      %726 = vset.pattern.permute.xlu0 1
      %727 = vperm.xlu0 %726, %v633
      %v728 = vpop.permute.xlu0 %727
      %730 = vset.pattern.permute.xlu0 1
      %731 = vperm.xlu0 %730, %v635
      %v732 = vpop.permute.xlu0 %731
      %734 = vset.pattern.permute.xlu0 1
      %735 = vperm.xlu0 %734, %v637
      %v736 = vpop.permute.xlu0 %735
      %738 = vset.pattern.permute.xlu0 1
      %739 = vperm.xlu0 %738, %v639
      %v740 = vpop.permute.xlu0 %739
      %v743 = vlaneseq
      %v744 = vshrl.u32 %v743, 7
      %v745 = vsub.s32 0, %v744
      %v746 = vrot.slane %v709, %v745
      %v748 = vmul.f32 %v712, %v746
      %v749 = vmul.f32 %v716, %v746
      %v750 = vmul.f32 %v720, %v746
      %v751 = vmul.f32 %v724, %v746
      %v752 = vmul.f32 %v728, %v746
      %v753 = vmul.f32 %v732, %v746
      %v754 = vmul.f32 %v736, %v746
      %v755 = vmul.f32 %v740, %v746
      %v756 = vadd.f32 %v700, %v748
      %v757 = vadd.f32 %v701, %v749
      %v758 = vadd.f32 %v702, %v750
      %v759 = vadd.f32 %v703, %v751
      %v760 = vadd.f32 %v704, %v752
      %v761 = vadd.f32 %v705, %v753
      %v762 = vadd.f32 %v706, %v754
      %v763 = vadd.f32 %v707, %v755
      %s764 = scalar_lea.vmem %s2, 2
      %v765 = vld [vmem:[%s764] sm:$0x1]
      %766 = vset.pattern.permute.xlu0 2
      %767 = vperm.xlu0 %766, %v625
      %v768 = vpop.permute.xlu0 %767
      %770 = vset.pattern.permute.xlu0 2
      %771 = vperm.xlu0 %770, %v627
      %v772 = vpop.permute.xlu0 %771
      %774 = vset.pattern.permute.xlu0 2
      %775 = vperm.xlu0 %774, %v629
      %v776 = vpop.permute.xlu0 %775
      %778 = vset.pattern.permute.xlu0 2
      %779 = vperm.xlu0 %778, %v631
      %v780 = vpop.permute.xlu0 %779
      %782 = vset.pattern.permute.xlu0 2
      %783 = vperm.xlu0 %782, %v633
      %v784 = vpop.permute.xlu0 %783
      %786 = vset.pattern.permute.xlu0 2
      %787 = vperm.xlu0 %786, %v635
      %v788 = vpop.permute.xlu0 %787
      %790 = vset.pattern.permute.xlu0 2
      %791 = vperm.xlu0 %790, %v637
      %v792 = vpop.permute.xlu0 %791
      %794 = vset.pattern.permute.xlu0 2
      %795 = vperm.xlu0 %794, %v639
      %v796 = vpop.permute.xlu0 %795
      %v799 = vlaneseq
      %v800 = vshrl.u32 %v799, 7
      %v801 = vsub.s32 0, %v800
      %v802 = vrot.slane %v765, %v801
      %v804 = vmul.f32 %v768, %v802
      %v805 = vmul.f32 %v772, %v802
      %v806 = vmul.f32 %v776, %v802
      %v807 = vmul.f32 %v780, %v802
      %v808 = vmul.f32 %v784, %v802
      %v809 = vmul.f32 %v788, %v802
      %v810 = vmul.f32 %v792, %v802
      %v811 = vmul.f32 %v796, %v802
      %v812 = vadd.f32 %v756, %v804
      %v813 = vadd.f32 %v757, %v805
      %v814 = vadd.f32 %v758, %v806
      %v815 = vadd.f32 %v759, %v807
      %v816 = vadd.f32 %v760, %v808
      %v817 = vadd.f32 %v761, %v809
      %v818 = vadd.f32 %v762, %v810
      %v819 = vadd.f32 %v763, %v811
      %s820 = scalar_lea.vmem %s2, 3
      %v821 = vld [vmem:[%s820] sm:$0x1]
      %822 = vset.pattern.permute.xlu0 3
      %823 = vperm.xlu0 %822, %v625
      %v824 = vpop.permute.xlu0 %823
      %826 = vset.pattern.permute.xlu0 3
      %827 = vperm.xlu0 %826, %v627
      %v828 = vpop.permute.xlu0 %827
      %830 = vset.pattern.permute.xlu0 3
      %831 = vperm.xlu0 %830, %v629
      %v832 = vpop.permute.xlu0 %831
      %834 = vset.pattern.permute.xlu0 3
      %835 = vperm.xlu0 %834, %v631
      %v836 = vpop.permute.xlu0 %835
      %838 = vset.pattern.permute.xlu0 3
      %839 = vperm.xlu0 %838, %v633
      %v840 = vpop.permute.xlu0 %839
      %842 = vset.pattern.permute.xlu0 3
      %843 = vperm.xlu0 %842, %v635
      %v844 = vpop.permute.xlu0 %843
      %846 = vset.pattern.permute.xlu0 3
      %847 = vperm.xlu0 %846, %v637
      %v848 = vpop.permute.xlu0 %847
      %850 = vset.pattern.permute.xlu0 3
      %851 = vperm.xlu0 %850, %v639
      %v852 = vpop.permute.xlu0 %851
      %v855 = vlaneseq
      %v856 = vshrl.u32 %v855, 7
      %v857 = vsub.s32 0, %v856
      %v858 = vrot.slane %v821, %v857
      %v860 = vmul.f32 %v824, %v858
      %v861 = vmul.f32 %v828, %v858
      %v862 = vmul.f32 %v832, %v858
      %v863 = vmul.f32 %v836, %v858
      %v864 = vmul.f32 %v840, %v858
      %v865 = vmul.f32 %v844, %v858
      %v866 = vmul.f32 %v848, %v858
      %v867 = vmul.f32 %v852, %v858
      %v868 = vadd.f32 %v812, %v860
      %v869 = vadd.f32 %v813, %v861
      %v870 = vadd.f32 %v814, %v862
      %v871 = vadd.f32 %v815, %v863
      %v872 = vadd.f32 %v816, %v864
      %v873 = vadd.f32 %v817, %v865
      %v874 = vadd.f32 %v818, %v866
      %v875 = vadd.f32 %v819, %v867
      %s876 = scalar_lea.vmem %s2, 4
      %v877 = vld [vmem:[%s876] sm:$0x1]
      %879 = vset.pattern.permute.xlu0 0
      %880 = vperm.xlu0 %879, %v626
      %v881 = vpop.permute.xlu0 %880
      %884 = vset.pattern.permute.xlu0 0
      %885 = vperm.xlu0 %884, %v628
      %v886 = vpop.permute.xlu0 %885
      %889 = vset.pattern.permute.xlu0 0
      %890 = vperm.xlu0 %889, %v630
      %v891 = vpop.permute.xlu0 %890
      %894 = vset.pattern.permute.xlu0 0
      %895 = vperm.xlu0 %894, %v632
      %v896 = vpop.permute.xlu0 %895
      %899 = vset.pattern.permute.xlu0 0
      %900 = vperm.xlu0 %899, %v634
      %v901 = vpop.permute.xlu0 %900
      %904 = vset.pattern.permute.xlu0 0
      %905 = vperm.xlu0 %904, %v636
      %v906 = vpop.permute.xlu0 %905
      %909 = vset.pattern.permute.xlu0 0
      %910 = vperm.xlu0 %909, %v638
      %v911 = vpop.permute.xlu0 %910
      %914 = vset.pattern.permute.xlu0 0
      %915 = vperm.xlu0 %914, %v640
      %v916 = vpop.permute.xlu0 %915
      %v919 = vlaneseq
      %v920 = vshrl.u32 %v919, 7
      %v921 = vsub.s32 0, %v920
      %v922 = vrot.slane %v877, %v921
      %v924 = vmul.f32 %v649, %v922
      %v925 = vmul.f32 %v881, %v922
      %v926 = vmul.f32 %v654, %v922
      %v927 = vmul.f32 %v886, %v922
      %v928 = vmul.f32 %v659, %v922
      %v929 = vmul.f32 %v891, %v922
      %v930 = vmul.f32 %v664, %v922
      %v931 = vmul.f32 %v896, %v922
      %v932 = vmul.f32 %v669, %v922
      %v933 = vmul.f32 %v901, %v922
      %v934 = vmul.f32 %v674, %v922
      %v935 = vmul.f32 %v906, %v922
      %v936 = vmul.f32 %v679, %v922
      %v937 = vmul.f32 %v911, %v922
      %v938 = vmul.f32 %v684, %v922
      %v939 = vmul.f32 %v916, %v922
      %vm956 = vcmask 1046528
      %v957 = vrot.slane %v924, 1
      %v958 = vrot.slane %v925, 1
      %v959 = vsel %vm956, %v957, %v958
      %v960 = vrot.slane %v926, 1
      %v961 = vrot.slane %v927, 1
      %v962 = vsel %vm956, %v960, %v961
      %v963 = vrot.slane %v928, 1
      %v964 = vrot.slane %v929, 1
      %v965 = vsel %vm956, %v963, %v964
      %v966 = vrot.slane %v930, 1
      %v967 = vrot.slane %v931, 1
      %v968 = vsel %vm956, %v966, %v967
      %v969 = vrot.slane %v932, 1
      %v970 = vrot.slane %v933, 1
      %v971 = vsel %vm956, %v969, %v970
      %v972 = vrot.slane %v934, 1
      %v973 = vrot.slane %v935, 1
      %v974 = vsel %vm956, %v972, %v973
      %v975 = vrot.slane %v936, 1
      %v976 = vrot.slane %v937, 1
      %v977 = vsel %vm956, %v975, %v976
      %v978 = vrot.slane %v938, 1
      %v979 = vrot.slane %v939, 1
      %v980 = vsel %vm956, %v978, %v979
      %v989 = vadd.f32 %v868, %v959
      %v990 = vadd.f32 %v869, %v962
      %v991 = vadd.f32 %v870, %v965
      %v992 = vadd.f32 %v871, %v968
      %v993 = vadd.f32 %v872, %v971
      %v994 = vadd.f32 %v873, %v974
      %v995 = vadd.f32 %v874, %v977
      %v996 = vadd.f32 %v875, %v980
      %s997 = scalar_lea.vmem %s2, 5
      %v998 = vld [vmem:[%s997] sm:$0x1]
      %999 = vset.pattern.permute.xlu0 1
      %1000 = vperm.xlu0 %999, %v626
      %v1001 = vpop.permute.xlu0 %1000
      %1003 = vset.pattern.permute.xlu0 1
      %1004 = vperm.xlu0 %1003, %v628
      %v1005 = vpop.permute.xlu0 %1004
      %1007 = vset.pattern.permute.xlu0 1
      %1008 = vperm.xlu0 %1007, %v630
      %v1009 = vpop.permute.xlu0 %1008
      %1011 = vset.pattern.permute.xlu0 1
      %1012 = vperm.xlu0 %1011, %v632
      %v1013 = vpop.permute.xlu0 %1012
      %1015 = vset.pattern.permute.xlu0 1
      %1016 = vperm.xlu0 %1015, %v634
      %v1017 = vpop.permute.xlu0 %1016
      %1019 = vset.pattern.permute.xlu0 1
      %1020 = vperm.xlu0 %1019, %v636
      %v1021 = vpop.permute.xlu0 %1020
      %1023 = vset.pattern.permute.xlu0 1
      %1024 = vperm.xlu0 %1023, %v638
      %v1025 = vpop.permute.xlu0 %1024
      %1027 = vset.pattern.permute.xlu0 1
      %1028 = vperm.xlu0 %1027, %v640
      %v1029 = vpop.permute.xlu0 %1028
      %v1032 = vlaneseq
      %v1033 = vshrl.u32 %v1032, 7
      %v1034 = vsub.s32 0, %v1033
      %v1035 = vrot.slane %v998, %v1034
      %v1037 = vmul.f32 %v712, %v1035
      %v1038 = vmul.f32 %v1001, %v1035
      %v1039 = vmul.f32 %v716, %v1035
      %v1040 = vmul.f32 %v1005, %v1035
      %v1041 = vmul.f32 %v720, %v1035
      %v1042 = vmul.f32 %v1009, %v1035
      %v1043 = vmul.f32 %v724, %v1035
      %v1044 = vmul.f32 %v1013, %v1035
      %v1045 = vmul.f32 %v728, %v1035
      %v1046 = vmul.f32 %v1017, %v1035
      %v1047 = vmul.f32 %v732, %v1035
      %v1048 = vmul.f32 %v1021, %v1035
      %v1049 = vmul.f32 %v736, %v1035
      %v1050 = vmul.f32 %v1025, %v1035
      %v1051 = vmul.f32 %v740, %v1035
      %v1052 = vmul.f32 %v1029, %v1035
      %v1069 = vrot.slane %v1037, 1
      %v1070 = vrot.slane %v1038, 1
      %v1071 = vsel %vm956, %v1069, %v1070
      %v1072 = vrot.slane %v1039, 1
      %v1073 = vrot.slane %v1040, 1
      %v1074 = vsel %vm956, %v1072, %v1073
      %v1075 = vrot.slane %v1041, 1
      %v1076 = vrot.slane %v1042, 1
      %v1077 = vsel %vm956, %v1075, %v1076
      %v1078 = vrot.slane %v1043, 1
      %v1079 = vrot.slane %v1044, 1
      %v1080 = vsel %vm956, %v1078, %v1079
      %v1081 = vrot.slane %v1045, 1
      %v1082 = vrot.slane %v1046, 1
      %v1083 = vsel %vm956, %v1081, %v1082
      %v1084 = vrot.slane %v1047, 1
      %v1085 = vrot.slane %v1048, 1
      %v1086 = vsel %vm956, %v1084, %v1085
      %v1087 = vrot.slane %v1049, 1
      %v1088 = vrot.slane %v1050, 1
      %v1089 = vsel %vm956, %v1087, %v1088
      %v1090 = vrot.slane %v1051, 1
      %v1091 = vrot.slane %v1052, 1
      %v1092 = vsel %vm956, %v1090, %v1091
      %v1101 = vadd.f32 %v989, %v1071
      %v1102 = vadd.f32 %v990, %v1074
      %v1103 = vadd.f32 %v991, %v1077
      %v1104 = vadd.f32 %v992, %v1080
      %v1105 = vadd.f32 %v993, %v1083
      %v1106 = vadd.f32 %v994, %v1086
      %v1107 = vadd.f32 %v995, %v1089
      %v1108 = vadd.f32 %v996, %v1092
      %s1109 = scalar_lea.vmem %s2, 6
      %v1110 = vld [vmem:[%s1109] sm:$0x1]
      %1111 = vset.pattern.permute.xlu0 2
      %1112 = vperm.xlu0 %1111, %v626
      %v1113 = vpop.permute.xlu0 %1112
      %1115 = vset.pattern.permute.xlu0 2
      %1116 = vperm.xlu0 %1115, %v628
      %v1117 = vpop.permute.xlu0 %1116
      %1119 = vset.pattern.permute.xlu0 2
      %1120 = vperm.xlu0 %1119, %v630
      %v1121 = vpop.permute.xlu0 %1120
      %1123 = vset.pattern.permute.xlu0 2
      %1124 = vperm.xlu0 %1123, %v632
      %v1125 = vpop.permute.xlu0 %1124
      %1127 = vset.pattern.permute.xlu0 2
      %1128 = vperm.xlu0 %1127, %v634
      %v1129 = vpop.permute.xlu0 %1128
      %1131 = vset.pattern.permute.xlu0 2
      %1132 = vperm.xlu0 %1131, %v636
      %v1133 = vpop.permute.xlu0 %1132
      %1135 = vset.pattern.permute.xlu0 2
      %1136 = vperm.xlu0 %1135, %v638
      %v1137 = vpop.permute.xlu0 %1136
      %1139 = vset.pattern.permute.xlu0 2
      %1140 = vperm.xlu0 %1139, %v640
      %v1141 = vpop.permute.xlu0 %1140
      %v1144 = vlaneseq
      %v1145 = vshrl.u32 %v1144, 7
      %v1146 = vsub.s32 0, %v1145
      %v1147 = vrot.slane %v1110, %v1146
      %v1149 = vmul.f32 %v768, %v1147
      %v1150 = vmul.f32 %v1113, %v1147
      %v1151 = vmul.f32 %v772, %v1147
      %v1152 = vmul.f32 %v1117, %v1147
      %v1153 = vmul.f32 %v776, %v1147
      %v1154 = vmul.f32 %v1121, %v1147
      %v1155 = vmul.f32 %v780, %v1147
      %v1156 = vmul.f32 %v1125, %v1147
      %v1157 = vmul.f32 %v784, %v1147
      %v1158 = vmul.f32 %v1129, %v1147
      %v1159 = vmul.f32 %v788, %v1147
      %v1160 = vmul.f32 %v1133, %v1147
      %v1161 = vmul.f32 %v792, %v1147
      %v1162 = vmul.f32 %v1137, %v1147
      %v1163 = vmul.f32 %v796, %v1147
      %v1164 = vmul.f32 %v1141, %v1147
      %v1181 = vrot.slane %v1149, 1
      %v1182 = vrot.slane %v1150, 1
      %v1183 = vsel %vm956, %v1181, %v1182
      %v1184 = vrot.slane %v1151, 1
      %v1185 = vrot.slane %v1152, 1
      %v1186 = vsel %vm956, %v1184, %v1185
      %v1187 = vrot.slane %v1153, 1
      %v1188 = vrot.slane %v1154, 1
      %v1189 = vsel %vm956, %v1187, %v1188
      %v1190 = vrot.slane %v1155, 1
      %v1191 = vrot.slane %v1156, 1
      %v1192 = vsel %vm956, %v1190, %v1191
      %v1193 = vrot.slane %v1157, 1
      %v1194 = vrot.slane %v1158, 1
      %v1195 = vsel %vm956, %v1193, %v1194
      %v1196 = vrot.slane %v1159, 1
      %v1197 = vrot.slane %v1160, 1
      %v1198 = vsel %vm956, %v1196, %v1197
      %v1199 = vrot.slane %v1161, 1
      %v1200 = vrot.slane %v1162, 1
      %v1201 = vsel %vm956, %v1199, %v1200
      %v1202 = vrot.slane %v1163, 1
      %v1203 = vrot.slane %v1164, 1
      %v1204 = vsel %vm956, %v1202, %v1203
      %v1213 = vadd.f32 %v1101, %v1183
      %v1214 = vadd.f32 %v1102, %v1186
      %v1215 = vadd.f32 %v1103, %v1189
      %v1216 = vadd.f32 %v1104, %v1192
      %v1217 = vadd.f32 %v1105, %v1195
      %v1218 = vadd.f32 %v1106, %v1198
      %v1219 = vadd.f32 %v1107, %v1201
      %v1220 = vadd.f32 %v1108, %v1204
      %s1221 = scalar_lea.vmem %s2, 7
      %v1222 = vld [vmem:[%s1221] sm:$0x1]
      %1223 = vset.pattern.permute.xlu0 3
      %1224 = vperm.xlu0 %1223, %v626
      %v1225 = vpop.permute.xlu0 %1224
      %1227 = vset.pattern.permute.xlu0 3
      %1228 = vperm.xlu0 %1227, %v628
      %v1229 = vpop.permute.xlu0 %1228
      %1231 = vset.pattern.permute.xlu0 3
      %1232 = vperm.xlu0 %1231, %v630
      %v1233 = vpop.permute.xlu0 %1232
      %1235 = vset.pattern.permute.xlu0 3
      %1236 = vperm.xlu0 %1235, %v632
      %v1237 = vpop.permute.xlu0 %1236
      %1239 = vset.pattern.permute.xlu0 3
      %1240 = vperm.xlu0 %1239, %v634
      %v1241 = vpop.permute.xlu0 %1240
      %1243 = vset.pattern.permute.xlu0 3
      %1244 = vperm.xlu0 %1243, %v636
      %v1245 = vpop.permute.xlu0 %1244
      %1247 = vset.pattern.permute.xlu0 3
      %1248 = vperm.xlu0 %1247, %v638
      %v1249 = vpop.permute.xlu0 %1248
      %1251 = vset.pattern.permute.xlu0 3
      %1252 = vperm.xlu0 %1251, %v640
      %v1253 = vpop.permute.xlu0 %1252
      %v1256 = vlaneseq
      %v1257 = vshrl.u32 %v1256, 7
      %v1258 = vsub.s32 0, %v1257
      %v1259 = vrot.slane %v1222, %v1258
      %v1261 = vmul.f32 %v824, %v1259
      %v1262 = vmul.f32 %v1225, %v1259
      %v1263 = vmul.f32 %v828, %v1259
      %v1264 = vmul.f32 %v1229, %v1259
      %v1265 = vmul.f32 %v832, %v1259
      %v1266 = vmul.f32 %v1233, %v1259
      %v1267 = vmul.f32 %v836, %v1259
      %v1268 = vmul.f32 %v1237, %v1259
      %v1269 = vmul.f32 %v840, %v1259
      %v1270 = vmul.f32 %v1241, %v1259
      %v1271 = vmul.f32 %v844, %v1259
      %v1272 = vmul.f32 %v1245, %v1259
      %v1273 = vmul.f32 %v848, %v1259
      %v1274 = vmul.f32 %v1249, %v1259
      %v1275 = vmul.f32 %v852, %v1259
      %v1276 = vmul.f32 %v1253, %v1259
      %v1293 = vrot.slane %v1261, 1
      %v1294 = vrot.slane %v1262, 1
      %v1295 = vsel %vm956, %v1293, %v1294
      %v1296 = vrot.slane %v1263, 1
      %v1297 = vrot.slane %v1264, 1
      %v1298 = vsel %vm956, %v1296, %v1297
      %v1299 = vrot.slane %v1265, 1
      %v1300 = vrot.slane %v1266, 1
      %v1301 = vsel %vm956, %v1299, %v1300
      %v1302 = vrot.slane %v1267, 1
      %v1303 = vrot.slane %v1268, 1
      %v1304 = vsel %vm956, %v1302, %v1303
      %v1305 = vrot.slane %v1269, 1
      %v1306 = vrot.slane %v1270, 1
      %v1307 = vsel %vm956, %v1305, %v1306
      %v1308 = vrot.slane %v1271, 1
      %v1309 = vrot.slane %v1272, 1
      %v1310 = vsel %vm956, %v1308, %v1309
      %v1311 = vrot.slane %v1273, 1
      %v1312 = vrot.slane %v1274, 1
      %v1313 = vsel %vm956, %v1311, %v1312
      %v1314 = vrot.slane %v1275, 1
      %v1315 = vrot.slane %v1276, 1
      %v1316 = vsel %vm956, %v1314, %v1315
      %v1325 = vadd.f32 %v1213, %v1295
      %v1326 = vadd.f32 %v1214, %v1298
      %v1327 = vadd.f32 %v1215, %v1301
      %v1328 = vadd.f32 %v1216, %v1304
      %v1329 = vadd.f32 %v1217, %v1307
      %v1330 = vadd.f32 %v1218, %v1310
      %v1331 = vadd.f32 %v1219, %v1313
      %v1332 = vadd.f32 %v1220, %v1316
      %s1333 = scalar_lea.vmem %s2, 8
      %v1334 = vld [vmem:[%s1333] sm:$0x1]
      %v1336 = vlaneseq
      %v1337 = vshrl.u32 %v1336, 7
      %v1338 = vsub.s32 0, %v1337
      %v1339 = vrot.slane %v1334, %v1338
      %v1341 = vmul.f32 %v649, %v1339
      %v1342 = vmul.f32 %v881, %v1339
      %v1343 = vmul.f32 %v654, %v1339
      %v1344 = vmul.f32 %v886, %v1339
      %v1345 = vmul.f32 %v659, %v1339
      %v1346 = vmul.f32 %v891, %v1339
      %v1347 = vmul.f32 %v664, %v1339
      %v1348 = vmul.f32 %v896, %v1339
      %v1349 = vmul.f32 %v669, %v1339
      %v1350 = vmul.f32 %v901, %v1339
      %v1351 = vmul.f32 %v674, %v1339
      %v1352 = vmul.f32 %v906, %v1339
      %v1353 = vmul.f32 %v679, %v1339
      %v1354 = vmul.f32 %v911, %v1339
      %v1355 = vmul.f32 %v684, %v1339
      %v1356 = vmul.f32 %v916, %v1339
      %vm1373 = vcmask 1045504
      %v1374 = vrot.slane %v1341, 2
      %v1375 = vrot.slane %v1342, 2
      %v1376 = vsel %vm1373, %v1374, %v1375
      %v1377 = vrot.slane %v1343, 2
      %v1378 = vrot.slane %v1344, 2
      %v1379 = vsel %vm1373, %v1377, %v1378
      %v1380 = vrot.slane %v1345, 2
      %v1381 = vrot.slane %v1346, 2
      %v1382 = vsel %vm1373, %v1380, %v1381
      %v1383 = vrot.slane %v1347, 2
      %v1384 = vrot.slane %v1348, 2
      %v1385 = vsel %vm1373, %v1383, %v1384
      %v1386 = vrot.slane %v1349, 2
      %v1387 = vrot.slane %v1350, 2
      %v1388 = vsel %vm1373, %v1386, %v1387
      %v1389 = vrot.slane %v1351, 2
      %v1390 = vrot.slane %v1352, 2
      %v1391 = vsel %vm1373, %v1389, %v1390
      %v1392 = vrot.slane %v1353, 2
      %v1393 = vrot.slane %v1354, 2
      %v1394 = vsel %vm1373, %v1392, %v1393
      %v1395 = vrot.slane %v1355, 2
      %v1396 = vrot.slane %v1356, 2
      %v1397 = vsel %vm1373, %v1395, %v1396
      %v1406 = vadd.f32 %v1325, %v1376
      %v1407 = vadd.f32 %v1326, %v1379
      %v1408 = vadd.f32 %v1327, %v1382
      %v1409 = vadd.f32 %v1328, %v1385
      %v1410 = vadd.f32 %v1329, %v1388
      %v1411 = vadd.f32 %v1330, %v1391
      %v1412 = vadd.f32 %v1331, %v1394
      %v1413 = vadd.f32 %v1332, %v1397
      %s1414 = scalar_lea.vmem %s2, 9
      %v1415 = vld [vmem:[%s1414] sm:$0x1]
      %v1417 = vlaneseq
      %v1418 = vshrl.u32 %v1417, 7
      %v1419 = vsub.s32 0, %v1418
      %v1420 = vrot.slane %v1415, %v1419
      %v1422 = vmul.f32 %v712, %v1420
      %v1423 = vmul.f32 %v1001, %v1420
      %v1424 = vmul.f32 %v716, %v1420
      %v1425 = vmul.f32 %v1005, %v1420
      %v1426 = vmul.f32 %v720, %v1420
      %v1427 = vmul.f32 %v1009, %v1420
      %v1428 = vmul.f32 %v724, %v1420
      %v1429 = vmul.f32 %v1013, %v1420
      %v1430 = vmul.f32 %v728, %v1420
      %v1431 = vmul.f32 %v1017, %v1420
      %v1432 = vmul.f32 %v732, %v1420
      %v1433 = vmul.f32 %v1021, %v1420
      %v1434 = vmul.f32 %v736, %v1420
      %v1435 = vmul.f32 %v1025, %v1420
      %v1436 = vmul.f32 %v740, %v1420
      %v1437 = vmul.f32 %v1029, %v1420
      %v1454 = vrot.slane %v1422, 2
      %v1455 = vrot.slane %v1423, 2
      %v1456 = vsel %vm1373, %v1454, %v1455
      %v1457 = vrot.slane %v1424, 2
      %v1458 = vrot.slane %v1425, 2
      %v1459 = vsel %vm1373, %v1457, %v1458
      %v1460 = vrot.slane %v1426, 2
      %v1461 = vrot.slane %v1427, 2
      %v1462 = vsel %vm1373, %v1460, %v1461
      %v1463 = vrot.slane %v1428, 2
      %v1464 = vrot.slane %v1429, 2
      %v1465 = vsel %vm1373, %v1463, %v1464
      %v1466 = vrot.slane %v1430, 2
      %v1467 = vrot.slane %v1431, 2
      %v1468 = vsel %vm1373, %v1466, %v1467
      %v1469 = vrot.slane %v1432, 2
      %v1470 = vrot.slane %v1433, 2
      %v1471 = vsel %vm1373, %v1469, %v1470
      %v1472 = vrot.slane %v1434, 2
      %v1473 = vrot.slane %v1435, 2
      %v1474 = vsel %vm1373, %v1472, %v1473
      %v1475 = vrot.slane %v1436, 2
      %v1476 = vrot.slane %v1437, 2
      %v1477 = vsel %vm1373, %v1475, %v1476
      %v1486 = vadd.f32 %v1406, %v1456
      %v1487 = vadd.f32 %v1407, %v1459
      %v1488 = vadd.f32 %v1408, %v1462
      %v1489 = vadd.f32 %v1409, %v1465
      %v1490 = vadd.f32 %v1410, %v1468
      %v1491 = vadd.f32 %v1411, %v1471
      %v1492 = vadd.f32 %v1412, %v1474
      %v1493 = vadd.f32 %v1413, %v1477
      %s1494 = scalar_lea.vmem %s2, 10
      %v1495 = vld [vmem:[%s1494] sm:$0x1]
      %v1497 = vlaneseq
      %v1498 = vshrl.u32 %v1497, 7
      %v1499 = vsub.s32 0, %v1498
      %v1500 = vrot.slane %v1495, %v1499
      %v1502 = vmul.f32 %v768, %v1500
      %v1503 = vmul.f32 %v1113, %v1500
      %v1504 = vmul.f32 %v772, %v1500
      %v1505 = vmul.f32 %v1117, %v1500
      %v1506 = vmul.f32 %v776, %v1500
      %v1507 = vmul.f32 %v1121, %v1500
      %v1508 = vmul.f32 %v780, %v1500
      %v1509 = vmul.f32 %v1125, %v1500
      %v1510 = vmul.f32 %v784, %v1500
      %v1511 = vmul.f32 %v1129, %v1500
      %v1512 = vmul.f32 %v788, %v1500
      %v1513 = vmul.f32 %v1133, %v1500
      %v1514 = vmul.f32 %v792, %v1500
      %v1515 = vmul.f32 %v1137, %v1500
      %v1516 = vmul.f32 %v796, %v1500
      %v1517 = vmul.f32 %v1141, %v1500
      %v1534 = vrot.slane %v1502, 2
      %v1535 = vrot.slane %v1503, 2
      %v1536 = vsel %vm1373, %v1534, %v1535
      %v1537 = vrot.slane %v1504, 2
      %v1538 = vrot.slane %v1505, 2
      %v1539 = vsel %vm1373, %v1537, %v1538
      %v1540 = vrot.slane %v1506, 2
      %v1541 = vrot.slane %v1507, 2
      %v1542 = vsel %vm1373, %v1540, %v1541
      %v1543 = vrot.slane %v1508, 2
      %v1544 = vrot.slane %v1509, 2
      %v1545 = vsel %vm1373, %v1543, %v1544
      %v1546 = vrot.slane %v1510, 2
      %v1547 = vrot.slane %v1511, 2
      %v1548 = vsel %vm1373, %v1546, %v1547
      %v1549 = vrot.slane %v1512, 2
      %v1550 = vrot.slane %v1513, 2
      %v1551 = vsel %vm1373, %v1549, %v1550
      %v1552 = vrot.slane %v1514, 2
      %v1553 = vrot.slane %v1515, 2
      %v1554 = vsel %vm1373, %v1552, %v1553
      %v1555 = vrot.slane %v1516, 2
      %v1556 = vrot.slane %v1517, 2
      %v1557 = vsel %vm1373, %v1555, %v1556
      %v1566 = vadd.f32 %v1486, %v1536
      %v1567 = vadd.f32 %v1487, %v1539
      %v1568 = vadd.f32 %v1488, %v1542
      %v1569 = vadd.f32 %v1489, %v1545
      %v1570 = vadd.f32 %v1490, %v1548
      %v1571 = vadd.f32 %v1491, %v1551
      %v1572 = vadd.f32 %v1492, %v1554
      %v1573 = vadd.f32 %v1493, %v1557
      %s1574 = scalar_lea.vmem %s2, 11
      %v1575 = vld [vmem:[%s1574] sm:$0x1]
      %v1577 = vlaneseq
      %v1578 = vshrl.u32 %v1577, 7
      %v1579 = vsub.s32 0, %v1578
      %v1580 = vrot.slane %v1575, %v1579
      %v1582 = vmul.f32 %v824, %v1580
      %v1583 = vmul.f32 %v1225, %v1580
      %v1584 = vmul.f32 %v828, %v1580
      %v1585 = vmul.f32 %v1229, %v1580
      %v1586 = vmul.f32 %v832, %v1580
      %v1587 = vmul.f32 %v1233, %v1580
      %v1588 = vmul.f32 %v836, %v1580
      %v1589 = vmul.f32 %v1237, %v1580
      %v1590 = vmul.f32 %v840, %v1580
      %v1591 = vmul.f32 %v1241, %v1580
      %v1592 = vmul.f32 %v844, %v1580
      %v1593 = vmul.f32 %v1245, %v1580
      %v1594 = vmul.f32 %v848, %v1580
      %v1595 = vmul.f32 %v1249, %v1580
      %v1596 = vmul.f32 %v852, %v1580
      %v1597 = vmul.f32 %v1253, %v1580
      %v1614 = vrot.slane %v1582, 2
      %v1615 = vrot.slane %v1583, 2
      %v1616 = vsel %vm1373, %v1614, %v1615
      %v1617 = vrot.slane %v1584, 2
      %v1618 = vrot.slane %v1585, 2
      %v1619 = vsel %vm1373, %v1617, %v1618
      %v1620 = vrot.slane %v1586, 2
      %v1621 = vrot.slane %v1587, 2
      %v1622 = vsel %vm1373, %v1620, %v1621
      %v1623 = vrot.slane %v1588, 2
      %v1624 = vrot.slane %v1589, 2
      %v1625 = vsel %vm1373, %v1623, %v1624
      %v1626 = vrot.slane %v1590, 2
      %v1627 = vrot.slane %v1591, 2
      %v1628 = vsel %vm1373, %v1626, %v1627
      %v1629 = vrot.slane %v1592, 2
      %v1630 = vrot.slane %v1593, 2
      %v1631 = vsel %vm1373, %v1629, %v1630
      %v1632 = vrot.slane %v1594, 2
      %v1633 = vrot.slane %v1595, 2
      %v1634 = vsel %vm1373, %v1632, %v1633
      %v1635 = vrot.slane %v1596, 2
      %v1636 = vrot.slane %v1597, 2
      %v1637 = vsel %vm1373, %v1635, %v1636
      %v1646 = vadd.f32 %v1566, %v1616
      %v1647 = vadd.f32 %v1567, %v1619
      %v1648 = vadd.f32 %v1568, %v1622
      %v1649 = vadd.f32 %v1569, %v1625
      %v1650 = vadd.f32 %v1570, %v1628
      %v1651 = vadd.f32 %v1571, %v1631
      %v1652 = vadd.f32 %v1572, %v1634
      %v1653 = vadd.f32 %v1573, %v1637
      %s1654 = scalar_lea.vmem %s2, 12
      %v1655 = vld [vmem:[%s1654] sm:$0x1]
      %1657 = vset.pattern.permute.xlu0 0
      %1658 = vperm.xlu0 %1657, %v641
      %v1659 = vpop.permute.xlu0 %1658
      %v1662 = vlaneseq
      %v1663 = vshrl.u32 %v1662, 7
      %v1664 = vsub.s32 0, %v1663
      %v1665 = vrot.slane %v1655, %v1664
      %v1667 = vmul.f32 %v654, %v1665
      %v1668 = vmul.f32 %v659, %v1665
      %v1669 = vmul.f32 %v664, %v1665
      %v1670 = vmul.f32 %v669, %v1665
      %v1671 = vmul.f32 %v674, %v1665
      %v1672 = vmul.f32 %v679, %v1665
      %v1673 = vmul.f32 %v684, %v1665
      %v1674 = vmul.f32 %v1659, %v1665
      %v1675 = vadd.f32 %v1646, %v1667
      %v1676 = vadd.f32 %v1647, %v1668
      %v1677 = vadd.f32 %v1648, %v1669
      %v1678 = vadd.f32 %v1649, %v1670
      %v1679 = vadd.f32 %v1650, %v1671
      %v1680 = vadd.f32 %v1651, %v1672
      %v1681 = vadd.f32 %v1652, %v1673
      %v1682 = vadd.f32 %v1653, %v1674
      %s1683 = scalar_lea.vmem %s2, 13
      %v1684 = vld [vmem:[%s1683] sm:$0x1]
      %1685 = vset.pattern.permute.xlu0 1
      %1686 = vperm.xlu0 %1685, %v641
      %v1687 = vpop.permute.xlu0 %1686
      %v1690 = vlaneseq
      %v1691 = vshrl.u32 %v1690, 7
      %v1692 = vsub.s32 0, %v1691
      %v1693 = vrot.slane %v1684, %v1692
      %v1695 = vmul.f32 %v716, %v1693
      %v1696 = vmul.f32 %v720, %v1693
      %v1697 = vmul.f32 %v724, %v1693
      %v1698 = vmul.f32 %v728, %v1693
      %v1699 = vmul.f32 %v732, %v1693
      %v1700 = vmul.f32 %v736, %v1693
      %v1701 = vmul.f32 %v740, %v1693
      %v1702 = vmul.f32 %v1687, %v1693
      %v1703 = vadd.f32 %v1675, %v1695
      %v1704 = vadd.f32 %v1676, %v1696
      %v1705 = vadd.f32 %v1677, %v1697
      %v1706 = vadd.f32 %v1678, %v1698
      %v1707 = vadd.f32 %v1679, %v1699
      %v1708 = vadd.f32 %v1680, %v1700
      %v1709 = vadd.f32 %v1681, %v1701
      %v1710 = vadd.f32 %v1682, %v1702
      %s1711 = scalar_lea.vmem %s2, 14
      %v1712 = vld [vmem:[%s1711] sm:$0x1]
      %1713 = vset.pattern.permute.xlu0 2
      %1714 = vperm.xlu0 %1713, %v641
      %v1715 = vpop.permute.xlu0 %1714
      %v1718 = vlaneseq
      %v1719 = vshrl.u32 %v1718, 7
      %v1720 = vsub.s32 0, %v1719
      %v1721 = vrot.slane %v1712, %v1720
      %v1723 = vmul.f32 %v772, %v1721
      %v1724 = vmul.f32 %v776, %v1721
      %v1725 = vmul.f32 %v780, %v1721
      %v1726 = vmul.f32 %v784, %v1721
      %v1727 = vmul.f32 %v788, %v1721
      %v1728 = vmul.f32 %v792, %v1721
      %v1729 = vmul.f32 %v796, %v1721
      %v1730 = vmul.f32 %v1715, %v1721
      %v1731 = vadd.f32 %v1703, %v1723
      %v1732 = vadd.f32 %v1704, %v1724
      %v1733 = vadd.f32 %v1705, %v1725
      %v1734 = vadd.f32 %v1706, %v1726
      %v1735 = vadd.f32 %v1707, %v1727
      %v1736 = vadd.f32 %v1708, %v1728
      %v1737 = vadd.f32 %v1709, %v1729
      %v1738 = vadd.f32 %v1710, %v1730
      %s1739 = scalar_lea.vmem %s2, 15
      %v1740 = vld [vmem:[%s1739] sm:$0x1]
      %1741 = vset.pattern.permute.xlu0 3
      %1742 = vperm.xlu0 %1741, %v641
      %v1743 = vpop.permute.xlu0 %1742
      %v1746 = vlaneseq
      %v1747 = vshrl.u32 %v1746, 7
      %v1748 = vsub.s32 0, %v1747
      %v1749 = vrot.slane %v1740, %v1748
      %v1751 = vmul.f32 %v828, %v1749
      %v1752 = vmul.f32 %v832, %v1749
      %v1753 = vmul.f32 %v836, %v1749
      %v1754 = vmul.f32 %v840, %v1749
      %v1755 = vmul.f32 %v844, %v1749
      %v1756 = vmul.f32 %v848, %v1749
      %v1757 = vmul.f32 %v852, %v1749
      %v1758 = vmul.f32 %v1743, %v1749
      %v1759 = vadd.f32 %v1731, %v1751
      %v1760 = vadd.f32 %v1732, %v1752
      %v1761 = vadd.f32 %v1733, %v1753
      %v1762 = vadd.f32 %v1734, %v1754
      %v1763 = vadd.f32 %v1735, %v1755
      %v1764 = vadd.f32 %v1736, %v1756
      %v1765 = vadd.f32 %v1737, %v1757
      %v1766 = vadd.f32 %v1738, %v1758
      %s1767 = scalar_lea.vmem %s2, 16
      %v1768 = vld [vmem:[%s1767] sm:$0x1]
      %1770 = vset.pattern.permute.xlu0 0
      %1771 = vperm.xlu0 %1770, %v642
      %v1772 = vpop.permute.xlu0 %1771
      %v1775 = vlaneseq
      %v1776 = vshrl.u32 %v1775, 7
      %v1777 = vsub.s32 0, %v1776
      %v1778 = vrot.slane %v1768, %v1777
      %v1780 = vmul.f32 %v654, %v1778
      %v1781 = vmul.f32 %v886, %v1778
      %v1782 = vmul.f32 %v659, %v1778
      %v1783 = vmul.f32 %v891, %v1778
      %v1784 = vmul.f32 %v664, %v1778
      %v1785 = vmul.f32 %v896, %v1778
      %v1786 = vmul.f32 %v669, %v1778
      %v1787 = vmul.f32 %v901, %v1778
      %v1788 = vmul.f32 %v674, %v1778
      %v1789 = vmul.f32 %v906, %v1778
      %v1790 = vmul.f32 %v679, %v1778
      %v1791 = vmul.f32 %v911, %v1778
      %v1792 = vmul.f32 %v684, %v1778
      %v1793 = vmul.f32 %v916, %v1778
      %v1794 = vmul.f32 %v1659, %v1778
      %v1795 = vmul.f32 %v1772, %v1778
      %v1812 = vrot.slane %v1780, 1
      %v1813 = vrot.slane %v1781, 1
      %v1814 = vsel %vm956, %v1812, %v1813
      %v1815 = vrot.slane %v1782, 1
      %v1816 = vrot.slane %v1783, 1
      %v1817 = vsel %vm956, %v1815, %v1816
      %v1818 = vrot.slane %v1784, 1
      %v1819 = vrot.slane %v1785, 1
      %v1820 = vsel %vm956, %v1818, %v1819
      %v1821 = vrot.slane %v1786, 1
      %v1822 = vrot.slane %v1787, 1
      %v1823 = vsel %vm956, %v1821, %v1822
      %v1824 = vrot.slane %v1788, 1
      %v1825 = vrot.slane %v1789, 1
      %v1826 = vsel %vm956, %v1824, %v1825
      %v1827 = vrot.slane %v1790, 1
      %v1828 = vrot.slane %v1791, 1
      %v1829 = vsel %vm956, %v1827, %v1828
      %v1830 = vrot.slane %v1792, 1
      %v1831 = vrot.slane %v1793, 1
      %v1832 = vsel %vm956, %v1830, %v1831
      %v1833 = vrot.slane %v1794, 1
      %v1834 = vrot.slane %v1795, 1
      %v1835 = vsel %vm956, %v1833, %v1834
      %v1844 = vadd.f32 %v1759, %v1814
      %v1845 = vadd.f32 %v1760, %v1817
      %v1846 = vadd.f32 %v1761, %v1820
      %v1847 = vadd.f32 %v1762, %v1823
      %v1848 = vadd.f32 %v1763, %v1826
      %v1849 = vadd.f32 %v1764, %v1829
      %v1850 = vadd.f32 %v1765, %v1832
      %v1851 = vadd.f32 %v1766, %v1835
      %s1852 = scalar_lea.vmem %s2, 17
      %v1853 = vld [vmem:[%s1852] sm:$0x1]
      %1854 = vset.pattern.permute.xlu0 1
      %1855 = vperm.xlu0 %1854, %v642
      %v1856 = vpop.permute.xlu0 %1855
      %v1859 = vlaneseq
      %v1860 = vshrl.u32 %v1859, 7
      %v1861 = vsub.s32 0, %v1860
      %v1862 = vrot.slane %v1853, %v1861
      %v1864 = vmul.f32 %v716, %v1862
      %v1865 = vmul.f32 %v1005, %v1862
      %v1866 = vmul.f32 %v720, %v1862
      %v1867 = vmul.f32 %v1009, %v1862
      %v1868 = vmul.f32 %v724, %v1862
      %v1869 = vmul.f32 %v1013, %v1862
      %v1870 = vmul.f32 %v728, %v1862
      %v1871 = vmul.f32 %v1017, %v1862
      %v1872 = vmul.f32 %v732, %v1862
      %v1873 = vmul.f32 %v1021, %v1862
      %v1874 = vmul.f32 %v736, %v1862
      %v1875 = vmul.f32 %v1025, %v1862
      %v1876 = vmul.f32 %v740, %v1862
      %v1877 = vmul.f32 %v1029, %v1862
      %v1878 = vmul.f32 %v1687, %v1862
      %v1879 = vmul.f32 %v1856, %v1862
      %v1896 = vrot.slane %v1864, 1
      %v1897 = vrot.slane %v1865, 1
      %v1898 = vsel %vm956, %v1896, %v1897
      %v1899 = vrot.slane %v1866, 1
      %v1900 = vrot.slane %v1867, 1
      %v1901 = vsel %vm956, %v1899, %v1900
      %v1902 = vrot.slane %v1868, 1
      %v1903 = vrot.slane %v1869, 1
      %v1904 = vsel %vm956, %v1902, %v1903
      %v1905 = vrot.slane %v1870, 1
      %v1906 = vrot.slane %v1871, 1
      %v1907 = vsel %vm956, %v1905, %v1906
      %v1908 = vrot.slane %v1872, 1
      %v1909 = vrot.slane %v1873, 1
      %v1910 = vsel %vm956, %v1908, %v1909
      %v1911 = vrot.slane %v1874, 1
      %v1912 = vrot.slane %v1875, 1
      %v1913 = vsel %vm956, %v1911, %v1912
      %v1914 = vrot.slane %v1876, 1
      %v1915 = vrot.slane %v1877, 1
      %v1916 = vsel %vm956, %v1914, %v1915
      %v1917 = vrot.slane %v1878, 1
      %v1918 = vrot.slane %v1879, 1
      %v1919 = vsel %vm956, %v1917, %v1918
      %v1928 = vadd.f32 %v1844, %v1898
      %v1929 = vadd.f32 %v1845, %v1901
      %v1930 = vadd.f32 %v1846, %v1904
      %v1931 = vadd.f32 %v1847, %v1907
      %v1932 = vadd.f32 %v1848, %v1910
      %v1933 = vadd.f32 %v1849, %v1913
      %v1934 = vadd.f32 %v1850, %v1916
      %v1935 = vadd.f32 %v1851, %v1919
      %s1936 = scalar_lea.vmem %s2, 18
      %v1937 = vld [vmem:[%s1936] sm:$0x1]
      %1938 = vset.pattern.permute.xlu0 2
      %1939 = vperm.xlu0 %1938, %v642
      %v1940 = vpop.permute.xlu0 %1939
      %v1943 = vlaneseq
      %v1944 = vshrl.u32 %v1943, 7
      %v1945 = vsub.s32 0, %v1944
      %v1946 = vrot.slane %v1937, %v1945
      %v1948 = vmul.f32 %v772, %v1946
      %v1949 = vmul.f32 %v1117, %v1946
      %v1950 = vmul.f32 %v776, %v1946
      %v1951 = vmul.f32 %v1121, %v1946
      %v1952 = vmul.f32 %v780, %v1946
      %v1953 = vmul.f32 %v1125, %v1946
      %v1954 = vmul.f32 %v784, %v1946
      %v1955 = vmul.f32 %v1129, %v1946
      %v1956 = vmul.f32 %v788, %v1946
      %v1957 = vmul.f32 %v1133, %v1946
      %v1958 = vmul.f32 %v792, %v1946
      %v1959 = vmul.f32 %v1137, %v1946
      %v1960 = vmul.f32 %v796, %v1946
      %v1961 = vmul.f32 %v1141, %v1946
      %v1962 = vmul.f32 %v1715, %v1946
      %v1963 = vmul.f32 %v1940, %v1946
      %v1980 = vrot.slane %v1948, 1
      %v1981 = vrot.slane %v1949, 1
      %v1982 = vsel %vm956, %v1980, %v1981
      %v1983 = vrot.slane %v1950, 1
      %v1984 = vrot.slane %v1951, 1
      %v1985 = vsel %vm956, %v1983, %v1984
      %v1986 = vrot.slane %v1952, 1
      %v1987 = vrot.slane %v1953, 1
      %v1988 = vsel %vm956, %v1986, %v1987
      %v1989 = vrot.slane %v1954, 1
      %v1990 = vrot.slane %v1955, 1
      %v1991 = vsel %vm956, %v1989, %v1990
      %v1992 = vrot.slane %v1956, 1
      %v1993 = vrot.slane %v1957, 1
      %v1994 = vsel %vm956, %v1992, %v1993
      %v1995 = vrot.slane %v1958, 1
      %v1996 = vrot.slane %v1959, 1
      %v1997 = vsel %vm956, %v1995, %v1996
      %v1998 = vrot.slane %v1960, 1
      %v1999 = vrot.slane %v1961, 1
      %v2000 = vsel %vm956, %v1998, %v1999
      %v2001 = vrot.slane %v1962, 1
      %v2002 = vrot.slane %v1963, 1
      %v2003 = vsel %vm956, %v2001, %v2002
      %v2012 = vadd.f32 %v1928, %v1982
      %v2013 = vadd.f32 %v1929, %v1985
      %v2014 = vadd.f32 %v1930, %v1988
      %v2015 = vadd.f32 %v1931, %v1991
      %v2016 = vadd.f32 %v1932, %v1994
      %v2017 = vadd.f32 %v1933, %v1997
      %v2018 = vadd.f32 %v1934, %v2000
      %v2019 = vadd.f32 %v1935, %v2003
      %s2020 = scalar_lea.vmem %s2, 19
      %v2021 = vld [vmem:[%s2020] sm:$0x1]
      %2022 = vset.pattern.permute.xlu0 3
      %2023 = vperm.xlu0 %2022, %v642
      %v2024 = vpop.permute.xlu0 %2023
      %v2027 = vlaneseq
      %v2028 = vshrl.u32 %v2027, 7
      %v2029 = vsub.s32 0, %v2028
      %v2030 = vrot.slane %v2021, %v2029
      %v2032 = vmul.f32 %v828, %v2030
      %v2033 = vmul.f32 %v1229, %v2030
      %v2034 = vmul.f32 %v832, %v2030
      %v2035 = vmul.f32 %v1233, %v2030
      %v2036 = vmul.f32 %v836, %v2030
      %v2037 = vmul.f32 %v1237, %v2030
      %v2038 = vmul.f32 %v840, %v2030
      %v2039 = vmul.f32 %v1241, %v2030
      %v2040 = vmul.f32 %v844, %v2030
      %v2041 = vmul.f32 %v1245, %v2030
      %v2042 = vmul.f32 %v848, %v2030
      %v2043 = vmul.f32 %v1249, %v2030
      %v2044 = vmul.f32 %v852, %v2030
      %v2045 = vmul.f32 %v1253, %v2030
      %v2046 = vmul.f32 %v1743, %v2030
      %v2047 = vmul.f32 %v2024, %v2030
      %v2064 = vrot.slane %v2032, 1
      %v2065 = vrot.slane %v2033, 1
      %v2066 = vsel %vm956, %v2064, %v2065
      %v2067 = vrot.slane %v2034, 1
      %v2068 = vrot.slane %v2035, 1
      %v2069 = vsel %vm956, %v2067, %v2068
      %v2070 = vrot.slane %v2036, 1
      %v2071 = vrot.slane %v2037, 1
      %v2072 = vsel %vm956, %v2070, %v2071
      %v2073 = vrot.slane %v2038, 1
      %v2074 = vrot.slane %v2039, 1
      %v2075 = vsel %vm956, %v2073, %v2074
      %v2076 = vrot.slane %v2040, 1
      %v2077 = vrot.slane %v2041, 1
      %v2078 = vsel %vm956, %v2076, %v2077
      %v2079 = vrot.slane %v2042, 1
      %v2080 = vrot.slane %v2043, 1
      %v2081 = vsel %vm956, %v2079, %v2080
      %v2082 = vrot.slane %v2044, 1
      %v2083 = vrot.slane %v2045, 1
      %v2084 = vsel %vm956, %v2082, %v2083
      %v2085 = vrot.slane %v2046, 1
      %v2086 = vrot.slane %v2047, 1
      %v2087 = vsel %vm956, %v2085, %v2086
      %v2096 = vadd.f32 %v2012, %v2066
      %v2097 = vadd.f32 %v2013, %v2069
      %v2098 = vadd.f32 %v2014, %v2072
      %v2099 = vadd.f32 %v2015, %v2075
      %v2100 = vadd.f32 %v2016, %v2078
      %v2101 = vadd.f32 %v2017, %v2081
      %v2102 = vadd.f32 %v2018, %v2084
      %v2103 = vadd.f32 %v2019, %v2087
      %s2104 = scalar_lea.vmem %s2, 20
      %v2105 = vld [vmem:[%s2104] sm:$0x1]
      %v2107 = vlaneseq
      %v2108 = vshrl.u32 %v2107, 7
      %v2109 = vsub.s32 0, %v2108
      %v2110 = vrot.slane %v2105, %v2109
      %v2112 = vmul.f32 %v654, %v2110
      %v2113 = vmul.f32 %v886, %v2110
      %v2114 = vmul.f32 %v659, %v2110
      %v2115 = vmul.f32 %v891, %v2110
      %v2116 = vmul.f32 %v664, %v2110
      %v2117 = vmul.f32 %v896, %v2110
      %v2118 = vmul.f32 %v669, %v2110
      %v2119 = vmul.f32 %v901, %v2110
      %v2120 = vmul.f32 %v674, %v2110
      %v2121 = vmul.f32 %v906, %v2110
      %v2122 = vmul.f32 %v679, %v2110
      %v2123 = vmul.f32 %v911, %v2110
      %v2124 = vmul.f32 %v684, %v2110
      %v2125 = vmul.f32 %v916, %v2110
      %v2126 = vmul.f32 %v1659, %v2110
      %v2127 = vmul.f32 %v1772, %v2110
      %v2144 = vrot.slane %v2112, 2
      %v2145 = vrot.slane %v2113, 2
      %v2146 = vsel %vm1373, %v2144, %v2145
      %v2147 = vrot.slane %v2114, 2
      %v2148 = vrot.slane %v2115, 2
      %v2149 = vsel %vm1373, %v2147, %v2148
      %v2150 = vrot.slane %v2116, 2
      %v2151 = vrot.slane %v2117, 2
      %v2152 = vsel %vm1373, %v2150, %v2151
      %v2153 = vrot.slane %v2118, 2
      %v2154 = vrot.slane %v2119, 2
      %v2155 = vsel %vm1373, %v2153, %v2154
      %v2156 = vrot.slane %v2120, 2
      %v2157 = vrot.slane %v2121, 2
      %v2158 = vsel %vm1373, %v2156, %v2157
      %v2159 = vrot.slane %v2122, 2
      %v2160 = vrot.slane %v2123, 2
      %v2161 = vsel %vm1373, %v2159, %v2160
      %v2162 = vrot.slane %v2124, 2
      %v2163 = vrot.slane %v2125, 2
      %v2164 = vsel %vm1373, %v2162, %v2163
      %v2165 = vrot.slane %v2126, 2
      %v2166 = vrot.slane %v2127, 2
      %v2167 = vsel %vm1373, %v2165, %v2166
      %v2176 = vadd.f32 %v2096, %v2146
      %v2177 = vadd.f32 %v2097, %v2149
      %v2178 = vadd.f32 %v2098, %v2152
      %v2179 = vadd.f32 %v2099, %v2155
      %v2180 = vadd.f32 %v2100, %v2158
      %v2181 = vadd.f32 %v2101, %v2161
      %v2182 = vadd.f32 %v2102, %v2164
      %v2183 = vadd.f32 %v2103, %v2167
      %s2184 = scalar_lea.vmem %s2, 21
      %v2185 = vld [vmem:[%s2184] sm:$0x1]
      %v2187 = vlaneseq
      %v2188 = vshrl.u32 %v2187, 7
      %v2189 = vsub.s32 0, %v2188
      %v2190 = vrot.slane %v2185, %v2189
      %v2192 = vmul.f32 %v716, %v2190
      %v2193 = vmul.f32 %v1005, %v2190
      %v2194 = vmul.f32 %v720, %v2190
      %v2195 = vmul.f32 %v1009, %v2190
      %v2196 = vmul.f32 %v724, %v2190
      %v2197 = vmul.f32 %v1013, %v2190
      %v2198 = vmul.f32 %v728, %v2190
      %v2199 = vmul.f32 %v1017, %v2190
      %v2200 = vmul.f32 %v732, %v2190
      %v2201 = vmul.f32 %v1021, %v2190
      %v2202 = vmul.f32 %v736, %v2190
      %v2203 = vmul.f32 %v1025, %v2190
      %v2204 = vmul.f32 %v740, %v2190
      %v2205 = vmul.f32 %v1029, %v2190
      %v2206 = vmul.f32 %v1687, %v2190
      %v2207 = vmul.f32 %v1856, %v2190
      %v2224 = vrot.slane %v2192, 2
      %v2225 = vrot.slane %v2193, 2
      %v2226 = vsel %vm1373, %v2224, %v2225
      %v2227 = vrot.slane %v2194, 2
      %v2228 = vrot.slane %v2195, 2
      %v2229 = vsel %vm1373, %v2227, %v2228
      %v2230 = vrot.slane %v2196, 2
      %v2231 = vrot.slane %v2197, 2
      %v2232 = vsel %vm1373, %v2230, %v2231
      %v2233 = vrot.slane %v2198, 2
      %v2234 = vrot.slane %v2199, 2
      %v2235 = vsel %vm1373, %v2233, %v2234
      %v2236 = vrot.slane %v2200, 2
      %v2237 = vrot.slane %v2201, 2
      %v2238 = vsel %vm1373, %v2236, %v2237
      %v2239 = vrot.slane %v2202, 2
      %v2240 = vrot.slane %v2203, 2
      %v2241 = vsel %vm1373, %v2239, %v2240
      %v2242 = vrot.slane %v2204, 2
      %v2243 = vrot.slane %v2205, 2
      %v2244 = vsel %vm1373, %v2242, %v2243
      %v2245 = vrot.slane %v2206, 2
      %v2246 = vrot.slane %v2207, 2
      %v2247 = vsel %vm1373, %v2245, %v2246
      %v2256 = vadd.f32 %v2176, %v2226
      %v2257 = vadd.f32 %v2177, %v2229
      %v2258 = vadd.f32 %v2178, %v2232
      %v2259 = vadd.f32 %v2179, %v2235
      %v2260 = vadd.f32 %v2180, %v2238
      %v2261 = vadd.f32 %v2181, %v2241
      %v2262 = vadd.f32 %v2182, %v2244
      %v2263 = vadd.f32 %v2183, %v2247
      %s2264 = scalar_lea.vmem %s2, 22
      %v2265 = vld [vmem:[%s2264] sm:$0x1]
      %v2267 = vlaneseq
      %v2268 = vshrl.u32 %v2267, 7
      %v2269 = vsub.s32 0, %v2268
      %v2270 = vrot.slane %v2265, %v2269
      %v2272 = vmul.f32 %v772, %v2270
      %v2273 = vmul.f32 %v1117, %v2270
      %v2274 = vmul.f32 %v776, %v2270
      %v2275 = vmul.f32 %v1121, %v2270
      %v2276 = vmul.f32 %v780, %v2270
      %v2277 = vmul.f32 %v1125, %v2270
      %v2278 = vmul.f32 %v784, %v2270
      %v2279 = vmul.f32 %v1129, %v2270
      %v2280 = vmul.f32 %v788, %v2270
      %v2281 = vmul.f32 %v1133, %v2270
      %v2282 = vmul.f32 %v792, %v2270
      %v2283 = vmul.f32 %v1137, %v2270
      %v2284 = vmul.f32 %v796, %v2270
      %v2285 = vmul.f32 %v1141, %v2270
      %v2286 = vmul.f32 %v1715, %v2270
      %v2287 = vmul.f32 %v1940, %v2270
      %v2304 = vrot.slane %v2272, 2
      %v2305 = vrot.slane %v2273, 2
      %v2306 = vsel %vm1373, %v2304, %v2305
      %v2307 = vrot.slane %v2274, 2
      %v2308 = vrot.slane %v2275, 2
      %v2309 = vsel %vm1373, %v2307, %v2308
      %v2310 = vrot.slane %v2276, 2
      %v2311 = vrot.slane %v2277, 2
      %v2312 = vsel %vm1373, %v2310, %v2311
      %v2313 = vrot.slane %v2278, 2
      %v2314 = vrot.slane %v2279, 2
      %v2315 = vsel %vm1373, %v2313, %v2314
      %v2316 = vrot.slane %v2280, 2
      %v2317 = vrot.slane %v2281, 2
      %v2318 = vsel %vm1373, %v2316, %v2317
      %v2319 = vrot.slane %v2282, 2
      %v2320 = vrot.slane %v2283, 2
      %v2321 = vsel %vm1373, %v2319, %v2320
      %v2322 = vrot.slane %v2284, 2
      %v2323 = vrot.slane %v2285, 2
      %v2324 = vsel %vm1373, %v2322, %v2323
      %v2325 = vrot.slane %v2286, 2
      %v2326 = vrot.slane %v2287, 2
      %v2327 = vsel %vm1373, %v2325, %v2326
      %v2336 = vadd.f32 %v2256, %v2306
      %v2337 = vadd.f32 %v2257, %v2309
      %v2338 = vadd.f32 %v2258, %v2312
      %v2339 = vadd.f32 %v2259, %v2315
      %v2340 = vadd.f32 %v2260, %v2318
      %v2341 = vadd.f32 %v2261, %v2321
      %v2342 = vadd.f32 %v2262, %v2324
      %v2343 = vadd.f32 %v2263, %v2327
      %s2344 = scalar_lea.vmem %s2, 23
      %v2345 = vld [vmem:[%s2344] sm:$0x1]
      %v2347 = vlaneseq
      %v2348 = vshrl.u32 %v2347, 7
      %v2349 = vsub.s32 0, %v2348
      %v2350 = vrot.slane %v2345, %v2349
      %v2352 = vmul.f32 %v828, %v2350
      %v2353 = vmul.f32 %v1229, %v2350
      %v2354 = vmul.f32 %v832, %v2350
      %v2355 = vmul.f32 %v1233, %v2350
      %v2356 = vmul.f32 %v836, %v2350
      %v2357 = vmul.f32 %v1237, %v2350
      %v2358 = vmul.f32 %v840, %v2350
      %v2359 = vmul.f32 %v1241, %v2350
      %v2360 = vmul.f32 %v844, %v2350
      %v2361 = vmul.f32 %v1245, %v2350
      %v2362 = vmul.f32 %v848, %v2350
      %v2363 = vmul.f32 %v1249, %v2350
      %v2364 = vmul.f32 %v852, %v2350
      %v2365 = vmul.f32 %v1253, %v2350
      %v2366 = vmul.f32 %v1743, %v2350
      %v2367 = vmul.f32 %v2024, %v2350
      %v2384 = vrot.slane %v2352, 2
      %v2385 = vrot.slane %v2353, 2
      %v2386 = vsel %vm1373, %v2384, %v2385
      %v2387 = vrot.slane %v2354, 2
      %v2388 = vrot.slane %v2355, 2
      %v2389 = vsel %vm1373, %v2387, %v2388
      %v2390 = vrot.slane %v2356, 2
      %v2391 = vrot.slane %v2357, 2
      %v2392 = vsel %vm1373, %v2390, %v2391
      %v2393 = vrot.slane %v2358, 2
      %v2394 = vrot.slane %v2359, 2
      %v2395 = vsel %vm1373, %v2393, %v2394
      %v2396 = vrot.slane %v2360, 2
      %v2397 = vrot.slane %v2361, 2
      %v2398 = vsel %vm1373, %v2396, %v2397
      %v2399 = vrot.slane %v2362, 2
      %v2400 = vrot.slane %v2363, 2
      %v2401 = vsel %vm1373, %v2399, %v2400
      %v2402 = vrot.slane %v2364, 2
      %v2403 = vrot.slane %v2365, 2
      %v2404 = vsel %vm1373, %v2402, %v2403
      %v2405 = vrot.slane %v2366, 2
      %v2406 = vrot.slane %v2367, 2
      %v2407 = vsel %vm1373, %v2405, %v2406
      %v2416 = vadd.f32 %v2336, %v2386
      %v2417 = vadd.f32 %v2337, %v2389
      %v2418 = vadd.f32 %v2338, %v2392
      %v2419 = vadd.f32 %v2339, %v2395
      %v2420 = vadd.f32 %v2340, %v2398
      %v2421 = vadd.f32 %v2341, %v2401
      %v2422 = vadd.f32 %v2342, %v2404
      %v2423 = vadd.f32 %v2343, %v2407
      %s2424 = scalar_lea.vmem %s2, 24
      %v2425 = vld [vmem:[%s2424] sm:$0x1]
      %2427 = vset.pattern.permute.xlu0 0
      %2428 = vperm.xlu0 %2427, %v643
      %v2429 = vpop.permute.xlu0 %2428
      %v2432 = vlaneseq
      %v2433 = vshrl.u32 %v2432, 7
      %v2434 = vsub.s32 0, %v2433
      %v2435 = vrot.slane %v2425, %v2434
      %v2437 = vmul.f32 %v659, %v2435
      %v2438 = vmul.f32 %v664, %v2435
      %v2439 = vmul.f32 %v669, %v2435
      %v2440 = vmul.f32 %v674, %v2435
      %v2441 = vmul.f32 %v679, %v2435
      %v2442 = vmul.f32 %v684, %v2435
      %v2443 = vmul.f32 %v1659, %v2435
      %v2444 = vmul.f32 %v2429, %v2435
      %v2445 = vadd.f32 %v2416, %v2437
      %v2446 = vadd.f32 %v2417, %v2438
      %v2447 = vadd.f32 %v2418, %v2439
      %v2448 = vadd.f32 %v2419, %v2440
      %v2449 = vadd.f32 %v2420, %v2441
      %v2450 = vadd.f32 %v2421, %v2442
      %v2451 = vadd.f32 %v2422, %v2443
      %v2452 = vadd.f32 %v2423, %v2444
      %s2453 = scalar_lea.vmem %s2, 25
      %v2454 = vld [vmem:[%s2453] sm:$0x1]
      %2455 = vset.pattern.permute.xlu0 1
      %2456 = vperm.xlu0 %2455, %v643
      %v2457 = vpop.permute.xlu0 %2456
      %v2460 = vlaneseq
      %v2461 = vshrl.u32 %v2460, 7
      %v2462 = vsub.s32 0, %v2461
      %v2463 = vrot.slane %v2454, %v2462
      %v2465 = vmul.f32 %v720, %v2463
      %v2466 = vmul.f32 %v724, %v2463
      %v2467 = vmul.f32 %v728, %v2463
      %v2468 = vmul.f32 %v732, %v2463
      %v2469 = vmul.f32 %v736, %v2463
      %v2470 = vmul.f32 %v740, %v2463
      %v2471 = vmul.f32 %v1687, %v2463
      %v2472 = vmul.f32 %v2457, %v2463
      %v2473 = vadd.f32 %v2445, %v2465
      %v2474 = vadd.f32 %v2446, %v2466
      %v2475 = vadd.f32 %v2447, %v2467
      %v2476 = vadd.f32 %v2448, %v2468
      %v2477 = vadd.f32 %v2449, %v2469
      %v2478 = vadd.f32 %v2450, %v2470
      %v2479 = vadd.f32 %v2451, %v2471
      %v2480 = vadd.f32 %v2452, %v2472
      %s2481 = scalar_lea.vmem %s2, 26
      %v2482 = vld [vmem:[%s2481] sm:$0x1]
      %2483 = vset.pattern.permute.xlu0 2
      %2484 = vperm.xlu0 %2483, %v643
      %v2485 = vpop.permute.xlu0 %2484
      %v2488 = vlaneseq
      %v2489 = vshrl.u32 %v2488, 7
      %v2490 = vsub.s32 0, %v2489
      %v2491 = vrot.slane %v2482, %v2490
      %v2493 = vmul.f32 %v776, %v2491
      %v2494 = vmul.f32 %v780, %v2491
      %v2495 = vmul.f32 %v784, %v2491
      %v2496 = vmul.f32 %v788, %v2491
      %v2497 = vmul.f32 %v792, %v2491
      %v2498 = vmul.f32 %v796, %v2491
      %v2499 = vmul.f32 %v1715, %v2491
      %v2500 = vmul.f32 %v2485, %v2491
      %v2501 = vadd.f32 %v2473, %v2493
      %v2502 = vadd.f32 %v2474, %v2494
      %v2503 = vadd.f32 %v2475, %v2495
      %v2504 = vadd.f32 %v2476, %v2496
      %v2505 = vadd.f32 %v2477, %v2497
      %v2506 = vadd.f32 %v2478, %v2498
      %v2507 = vadd.f32 %v2479, %v2499
      %v2508 = vadd.f32 %v2480, %v2500
      %s2509 = scalar_lea.vmem %s2, 27
      %v2510 = vld [vmem:[%s2509] sm:$0x1]
      %2511 = vset.pattern.permute.xlu0 3
      %2512 = vperm.xlu0 %2511, %v643
      %v2513 = vpop.permute.xlu0 %2512
      %v2516 = vlaneseq
      %v2517 = vshrl.u32 %v2516, 7
      %v2518 = vsub.s32 0, %v2517
      %v2519 = vrot.slane %v2510, %v2518
      %v2521 = vmul.f32 %v832, %v2519
      %v2522 = vmul.f32 %v836, %v2519
      %v2523 = vmul.f32 %v840, %v2519
      %v2524 = vmul.f32 %v844, %v2519
      %v2525 = vmul.f32 %v848, %v2519
      %v2526 = vmul.f32 %v852, %v2519
      %v2527 = vmul.f32 %v1743, %v2519
      %v2528 = vmul.f32 %v2513, %v2519
      %v2529 = vadd.f32 %v2501, %v2521
      %v2530 = vadd.f32 %v2502, %v2522
      %v2531 = vadd.f32 %v2503, %v2523
      %v2532 = vadd.f32 %v2504, %v2524
      %v2533 = vadd.f32 %v2505, %v2525
      %v2534 = vadd.f32 %v2506, %v2526
      %v2535 = vadd.f32 %v2507, %v2527
      %v2536 = vadd.f32 %v2508, %v2528
      %s2537 = scalar_lea.vmem %s2, 28
      %v2538 = vld [vmem:[%s2537] sm:$0x1]
      %2540 = vset.pattern.permute.xlu0 0
      %2541 = vperm.xlu0 %2540, %v644
      %v2542 = vpop.permute.xlu0 %2541
      %v2545 = vlaneseq
      %v2546 = vshrl.u32 %v2545, 7
      %v2547 = vsub.s32 0, %v2546
      %v2548 = vrot.slane %v2538, %v2547
      %v2550 = vmul.f32 %v659, %v2548
      %v2551 = vmul.f32 %v891, %v2548
      %v2552 = vmul.f32 %v664, %v2548
      %v2553 = vmul.f32 %v896, %v2548
      %v2554 = vmul.f32 %v669, %v2548
      %v2555 = vmul.f32 %v901, %v2548
      %v2556 = vmul.f32 %v674, %v2548
      %v2557 = vmul.f32 %v906, %v2548
      %v2558 = vmul.f32 %v679, %v2548
      %v2559 = vmul.f32 %v911, %v2548
      %v2560 = vmul.f32 %v684, %v2548
      %v2561 = vmul.f32 %v916, %v2548
      %v2562 = vmul.f32 %v1659, %v2548
      %v2563 = vmul.f32 %v1772, %v2548
      %v2564 = vmul.f32 %v2429, %v2548
      %v2565 = vmul.f32 %v2542, %v2548
      %v2582 = vrot.slane %v2550, 1
      %v2583 = vrot.slane %v2551, 1
      %v2584 = vsel %vm956, %v2582, %v2583
      %v2585 = vrot.slane %v2552, 1
      %v2586 = vrot.slane %v2553, 1
      %v2587 = vsel %vm956, %v2585, %v2586
      %v2588 = vrot.slane %v2554, 1
      %v2589 = vrot.slane %v2555, 1
      %v2590 = vsel %vm956, %v2588, %v2589
      %v2591 = vrot.slane %v2556, 1
      %v2592 = vrot.slane %v2557, 1
      %v2593 = vsel %vm956, %v2591, %v2592
      %v2594 = vrot.slane %v2558, 1
      %v2595 = vrot.slane %v2559, 1
      %v2596 = vsel %vm956, %v2594, %v2595
      %v2597 = vrot.slane %v2560, 1
      %v2598 = vrot.slane %v2561, 1
      %v2599 = vsel %vm956, %v2597, %v2598
      %v2600 = vrot.slane %v2562, 1
      %v2601 = vrot.slane %v2563, 1
      %v2602 = vsel %vm956, %v2600, %v2601
      %v2603 = vrot.slane %v2564, 1
      %v2604 = vrot.slane %v2565, 1
      %v2605 = vsel %vm956, %v2603, %v2604
      %v2614 = vadd.f32 %v2529, %v2584
      %v2615 = vadd.f32 %v2530, %v2587
      %v2616 = vadd.f32 %v2531, %v2590
      %v2617 = vadd.f32 %v2532, %v2593
      %v2618 = vadd.f32 %v2533, %v2596
      %v2619 = vadd.f32 %v2534, %v2599
      %v2620 = vadd.f32 %v2535, %v2602
      %v2621 = vadd.f32 %v2536, %v2605
      %s2622 = scalar_lea.vmem %s2, 29
      %v2623 = vld [vmem:[%s2622] sm:$0x1]
      %2624 = vset.pattern.permute.xlu0 1
      %2625 = vperm.xlu0 %2624, %v644
      %v2626 = vpop.permute.xlu0 %2625
      %v2629 = vlaneseq
      %v2630 = vshrl.u32 %v2629, 7
      %v2631 = vsub.s32 0, %v2630
      %v2632 = vrot.slane %v2623, %v2631
      %v2634 = vmul.f32 %v720, %v2632
      %v2635 = vmul.f32 %v1009, %v2632
      %v2636 = vmul.f32 %v724, %v2632
      %v2637 = vmul.f32 %v1013, %v2632
      %v2638 = vmul.f32 %v728, %v2632
      %v2639 = vmul.f32 %v1017, %v2632
      %v2640 = vmul.f32 %v732, %v2632
      %v2641 = vmul.f32 %v1021, %v2632
      %v2642 = vmul.f32 %v736, %v2632
      %v2643 = vmul.f32 %v1025, %v2632
      %v2644 = vmul.f32 %v740, %v2632
      %v2645 = vmul.f32 %v1029, %v2632
      %v2646 = vmul.f32 %v1687, %v2632
      %v2647 = vmul.f32 %v1856, %v2632
      %v2648 = vmul.f32 %v2457, %v2632
      %v2649 = vmul.f32 %v2626, %v2632
      %v2666 = vrot.slane %v2634, 1
      %v2667 = vrot.slane %v2635, 1
      %v2668 = vsel %vm956, %v2666, %v2667
      %v2669 = vrot.slane %v2636, 1
      %v2670 = vrot.slane %v2637, 1
      %v2671 = vsel %vm956, %v2669, %v2670
      %v2672 = vrot.slane %v2638, 1
      %v2673 = vrot.slane %v2639, 1
      %v2674 = vsel %vm956, %v2672, %v2673
      %v2675 = vrot.slane %v2640, 1
      %v2676 = vrot.slane %v2641, 1
      %v2677 = vsel %vm956, %v2675, %v2676
      %v2678 = vrot.slane %v2642, 1
      %v2679 = vrot.slane %v2643, 1
      %v2680 = vsel %vm956, %v2678, %v2679
      %v2681 = vrot.slane %v2644, 1
      %v2682 = vrot.slane %v2645, 1
      %v2683 = vsel %vm956, %v2681, %v2682
      %v2684 = vrot.slane %v2646, 1
      %v2685 = vrot.slane %v2647, 1
      %v2686 = vsel %vm956, %v2684, %v2685
      %v2687 = vrot.slane %v2648, 1
      %v2688 = vrot.slane %v2649, 1
      %v2689 = vsel %vm956, %v2687, %v2688
      %v2698 = vadd.f32 %v2614, %v2668
      %v2699 = vadd.f32 %v2615, %v2671
      %v2700 = vadd.f32 %v2616, %v2674
      %v2701 = vadd.f32 %v2617, %v2677
      %v2702 = vadd.f32 %v2618, %v2680
      %v2703 = vadd.f32 %v2619, %v2683
      %v2704 = vadd.f32 %v2620, %v2686
      %v2705 = vadd.f32 %v2621, %v2689
      %s2706 = scalar_lea.vmem %s2, 30
      %v2707 = vld [vmem:[%s2706] sm:$0x1]
      %2708 = vset.pattern.permute.xlu0 2
      %2709 = vperm.xlu0 %2708, %v644
      %v2710 = vpop.permute.xlu0 %2709
      %v2713 = vlaneseq
      %v2714 = vshrl.u32 %v2713, 7
      %v2715 = vsub.s32 0, %v2714
      %v2716 = vrot.slane %v2707, %v2715
      %v2718 = vmul.f32 %v776, %v2716
      %v2719 = vmul.f32 %v1121, %v2716
      %v2720 = vmul.f32 %v780, %v2716
      %v2721 = vmul.f32 %v1125, %v2716
      %v2722 = vmul.f32 %v784, %v2716
      %v2723 = vmul.f32 %v1129, %v2716
      %v2724 = vmul.f32 %v788, %v2716
      %v2725 = vmul.f32 %v1133, %v2716
      %v2726 = vmul.f32 %v792, %v2716
      %v2727 = vmul.f32 %v1137, %v2716
      %v2728 = vmul.f32 %v796, %v2716
      %v2729 = vmul.f32 %v1141, %v2716
      %v2730 = vmul.f32 %v1715, %v2716
      %v2731 = vmul.f32 %v1940, %v2716
      %v2732 = vmul.f32 %v2485, %v2716
      %v2733 = vmul.f32 %v2710, %v2716
      %v2750 = vrot.slane %v2718, 1
      %v2751 = vrot.slane %v2719, 1
      %v2752 = vsel %vm956, %v2750, %v2751
      %v2753 = vrot.slane %v2720, 1
      %v2754 = vrot.slane %v2721, 1
      %v2755 = vsel %vm956, %v2753, %v2754
      %v2756 = vrot.slane %v2722, 1
      %v2757 = vrot.slane %v2723, 1
      %v2758 = vsel %vm956, %v2756, %v2757
      %v2759 = vrot.slane %v2724, 1
      %v2760 = vrot.slane %v2725, 1
      %v2761 = vsel %vm956, %v2759, %v2760
      %v2762 = vrot.slane %v2726, 1
      %v2763 = vrot.slane %v2727, 1
      %v2764 = vsel %vm956, %v2762, %v2763
      %v2765 = vrot.slane %v2728, 1
      %v2766 = vrot.slane %v2729, 1
      %v2767 = vsel %vm956, %v2765, %v2766
      %v2768 = vrot.slane %v2730, 1
      %v2769 = vrot.slane %v2731, 1
      %v2770 = vsel %vm956, %v2768, %v2769
      %v2771 = vrot.slane %v2732, 1
      %v2772 = vrot.slane %v2733, 1
      %v2773 = vsel %vm956, %v2771, %v2772
      %v2782 = vadd.f32 %v2698, %v2752
      %v2783 = vadd.f32 %v2699, %v2755
      %v2784 = vadd.f32 %v2700, %v2758
      %v2785 = vadd.f32 %v2701, %v2761
      %v2786 = vadd.f32 %v2702, %v2764
      %v2787 = vadd.f32 %v2703, %v2767
      %v2788 = vadd.f32 %v2704, %v2770
      %v2789 = vadd.f32 %v2705, %v2773
      %s2790 = scalar_lea.vmem %s2, 31
      %v2791 = vld [vmem:[%s2790] sm:$0x1]
      %2792 = vset.pattern.permute.xlu0 3
      %2793 = vperm.xlu0 %2792, %v644
      %v2794 = vpop.permute.xlu0 %2793
      %v2797 = vlaneseq
      %v2798 = vshrl.u32 %v2797, 7
      %v2799 = vsub.s32 0, %v2798
      %v2800 = vrot.slane %v2791, %v2799
      %v2802 = vmul.f32 %v832, %v2800
      %v2803 = vmul.f32 %v1233, %v2800
      %v2804 = vmul.f32 %v836, %v2800
      %v2805 = vmul.f32 %v1237, %v2800
      %v2806 = vmul.f32 %v840, %v2800
      %v2807 = vmul.f32 %v1241, %v2800
      %v2808 = vmul.f32 %v844, %v2800
      %v2809 = vmul.f32 %v1245, %v2800
      %v2810 = vmul.f32 %v848, %v2800
      %v2811 = vmul.f32 %v1249, %v2800
      %v2812 = vmul.f32 %v852, %v2800
      %v2813 = vmul.f32 %v1253, %v2800
      %v2814 = vmul.f32 %v1743, %v2800
      %v2815 = vmul.f32 %v2024, %v2800
      %v2816 = vmul.f32 %v2513, %v2800
      %v2817 = vmul.f32 %v2794, %v2800
      %v2834 = vrot.slane %v2802, 1
      %v2835 = vrot.slane %v2803, 1
      %v2836 = vsel %vm956, %v2834, %v2835
      %v2837 = vrot.slane %v2804, 1
      %v2838 = vrot.slane %v2805, 1
      %v2839 = vsel %vm956, %v2837, %v2838
      %v2840 = vrot.slane %v2806, 1
      %v2841 = vrot.slane %v2807, 1
      %v2842 = vsel %vm956, %v2840, %v2841
      %v2843 = vrot.slane %v2808, 1
      %v2844 = vrot.slane %v2809, 1
      %v2845 = vsel %vm956, %v2843, %v2844
      %v2846 = vrot.slane %v2810, 1
      %v2847 = vrot.slane %v2811, 1
      %v2848 = vsel %vm956, %v2846, %v2847
      %v2849 = vrot.slane %v2812, 1
      %v2850 = vrot.slane %v2813, 1
      %v2851 = vsel %vm956, %v2849, %v2850
      %v2852 = vrot.slane %v2814, 1
      %v2853 = vrot.slane %v2815, 1
      %v2854 = vsel %vm956, %v2852, %v2853
      %v2855 = vrot.slane %v2816, 1
      %v2856 = vrot.slane %v2817, 1
      %v2857 = vsel %vm956, %v2855, %v2856
      %v2866 = vadd.f32 %v2782, %v2836
      %v2867 = vadd.f32 %v2783, %v2839
      %v2868 = vadd.f32 %v2784, %v2842
      %v2869 = vadd.f32 %v2785, %v2845
      %v2870 = vadd.f32 %v2786, %v2848
      %v2871 = vadd.f32 %v2787, %v2851
      %v2872 = vadd.f32 %v2788, %v2854
      %v2873 = vadd.f32 %v2789, %v2857
      %s2874 = scalar_lea.vmem %s2, 32
      %v2875 = vld [vmem:[%s2874] sm:$0x1]
      %v2877 = vlaneseq
      %v2878 = vshrl.u32 %v2877, 7
      %v2879 = vsub.s32 0, %v2878
      %v2880 = vrot.slane %v2875, %v2879
      %v2882 = vmul.f32 %v659, %v2880
      %v2883 = vmul.f32 %v891, %v2880
      %v2884 = vmul.f32 %v664, %v2880
      %v2885 = vmul.f32 %v896, %v2880
      %v2886 = vmul.f32 %v669, %v2880
      %v2887 = vmul.f32 %v901, %v2880
      %v2888 = vmul.f32 %v674, %v2880
      %v2889 = vmul.f32 %v906, %v2880
      %v2890 = vmul.f32 %v679, %v2880
      %v2891 = vmul.f32 %v911, %v2880
      %v2892 = vmul.f32 %v684, %v2880
      %v2893 = vmul.f32 %v916, %v2880
      %v2894 = vmul.f32 %v1659, %v2880
      %v2895 = vmul.f32 %v1772, %v2880
      %v2896 = vmul.f32 %v2429, %v2880
      %v2897 = vmul.f32 %v2542, %v2880
      %v2914 = vrot.slane %v2882, 2
      %v2915 = vrot.slane %v2883, 2
      %v2916 = vsel %vm1373, %v2914, %v2915
      %v2917 = vrot.slane %v2884, 2
      %v2918 = vrot.slane %v2885, 2
      %v2919 = vsel %vm1373, %v2917, %v2918
      %v2920 = vrot.slane %v2886, 2
      %v2921 = vrot.slane %v2887, 2
      %v2922 = vsel %vm1373, %v2920, %v2921
      %v2923 = vrot.slane %v2888, 2
      %v2924 = vrot.slane %v2889, 2
      %v2925 = vsel %vm1373, %v2923, %v2924
      %v2926 = vrot.slane %v2890, 2
      %v2927 = vrot.slane %v2891, 2
      %v2928 = vsel %vm1373, %v2926, %v2927
      %v2929 = vrot.slane %v2892, 2
      %v2930 = vrot.slane %v2893, 2
      %v2931 = vsel %vm1373, %v2929, %v2930
      %v2932 = vrot.slane %v2894, 2
      %v2933 = vrot.slane %v2895, 2
      %v2934 = vsel %vm1373, %v2932, %v2933
      %v2935 = vrot.slane %v2896, 2
      %v2936 = vrot.slane %v2897, 2
      %v2937 = vsel %vm1373, %v2935, %v2936
      %v2946 = vadd.f32 %v2866, %v2916
      %v2947 = vadd.f32 %v2867, %v2919
      %v2948 = vadd.f32 %v2868, %v2922
      %v2949 = vadd.f32 %v2869, %v2925
      %v2950 = vadd.f32 %v2870, %v2928
      %v2951 = vadd.f32 %v2871, %v2931
      %v2952 = vadd.f32 %v2872, %v2934
      %v2953 = vadd.f32 %v2873, %v2937
      %s2954 = scalar_lea.vmem %s2, 33
      %v2955 = vld [vmem:[%s2954] sm:$0x1]
      %v2957 = vlaneseq
      %v2958 = vshrl.u32 %v2957, 7
      %v2959 = vsub.s32 0, %v2958
      %v2960 = vrot.slane %v2955, %v2959
      %v2962 = vmul.f32 %v720, %v2960
      %v2963 = vmul.f32 %v1009, %v2960
      %v2964 = vmul.f32 %v724, %v2960
      %v2965 = vmul.f32 %v1013, %v2960
      %v2966 = vmul.f32 %v728, %v2960
      %v2967 = vmul.f32 %v1017, %v2960
      %v2968 = vmul.f32 %v732, %v2960
      %v2969 = vmul.f32 %v1021, %v2960
      %v2970 = vmul.f32 %v736, %v2960
      %v2971 = vmul.f32 %v1025, %v2960
      %v2972 = vmul.f32 %v740, %v2960
      %v2973 = vmul.f32 %v1029, %v2960
      %v2974 = vmul.f32 %v1687, %v2960
      %v2975 = vmul.f32 %v1856, %v2960
      %v2976 = vmul.f32 %v2457, %v2960
      %v2977 = vmul.f32 %v2626, %v2960
      %v2994 = vrot.slane %v2962, 2
      %v2995 = vrot.slane %v2963, 2
      %v2996 = vsel %vm1373, %v2994, %v2995
      %v2997 = vrot.slane %v2964, 2
      %v2998 = vrot.slane %v2965, 2
      %v2999 = vsel %vm1373, %v2997, %v2998
      %v3000 = vrot.slane %v2966, 2
      %v3001 = vrot.slane %v2967, 2
      %v3002 = vsel %vm1373, %v3000, %v3001
      %v3003 = vrot.slane %v2968, 2
      %v3004 = vrot.slane %v2969, 2
      %v3005 = vsel %vm1373, %v3003, %v3004
      %v3006 = vrot.slane %v2970, 2
      %v3007 = vrot.slane %v2971, 2
      %v3008 = vsel %vm1373, %v3006, %v3007
      %v3009 = vrot.slane %v2972, 2
      %v3010 = vrot.slane %v2973, 2
      %v3011 = vsel %vm1373, %v3009, %v3010
      %v3012 = vrot.slane %v2974, 2
      %v3013 = vrot.slane %v2975, 2
      %v3014 = vsel %vm1373, %v3012, %v3013
      %v3015 = vrot.slane %v2976, 2
      %v3016 = vrot.slane %v2977, 2
      %v3017 = vsel %vm1373, %v3015, %v3016
      %v3026 = vadd.f32 %v2946, %v2996
      %v3027 = vadd.f32 %v2947, %v2999
      %v3028 = vadd.f32 %v2948, %v3002
      %v3029 = vadd.f32 %v2949, %v3005
      %v3030 = vadd.f32 %v2950, %v3008
      %v3031 = vadd.f32 %v2951, %v3011
      %v3032 = vadd.f32 %v2952, %v3014
      %v3033 = vadd.f32 %v2953, %v3017
      %s3034 = scalar_lea.vmem %s2, 34
      %v3035 = vld [vmem:[%s3034] sm:$0x1]
      %v3037 = vlaneseq
      %v3038 = vshrl.u32 %v3037, 7
      %v3039 = vsub.s32 0, %v3038
      %v3040 = vrot.slane %v3035, %v3039
      %v3042 = vmul.f32 %v776, %v3040
      %v3043 = vmul.f32 %v1121, %v3040
      %v3044 = vmul.f32 %v780, %v3040
      %v3045 = vmul.f32 %v1125, %v3040
      %v3046 = vmul.f32 %v784, %v3040
      %v3047 = vmul.f32 %v1129, %v3040
      %v3048 = vmul.f32 %v788, %v3040
      %v3049 = vmul.f32 %v1133, %v3040
      %v3050 = vmul.f32 %v792, %v3040
      %v3051 = vmul.f32 %v1137, %v3040
      %v3052 = vmul.f32 %v796, %v3040
      %v3053 = vmul.f32 %v1141, %v3040
      %v3054 = vmul.f32 %v1715, %v3040
      %v3055 = vmul.f32 %v1940, %v3040
      %v3056 = vmul.f32 %v2485, %v3040
      %v3057 = vmul.f32 %v2710, %v3040
      %v3074 = vrot.slane %v3042, 2
      %v3075 = vrot.slane %v3043, 2
      %v3076 = vsel %vm1373, %v3074, %v3075
      %v3077 = vrot.slane %v3044, 2
      %v3078 = vrot.slane %v3045, 2
      %v3079 = vsel %vm1373, %v3077, %v3078
      %v3080 = vrot.slane %v3046, 2
      %v3081 = vrot.slane %v3047, 2
      %v3082 = vsel %vm1373, %v3080, %v3081
      %v3083 = vrot.slane %v3048, 2
      %v3084 = vrot.slane %v3049, 2
      %v3085 = vsel %vm1373, %v3083, %v3084
      %v3086 = vrot.slane %v3050, 2
      %v3087 = vrot.slane %v3051, 2
      %v3088 = vsel %vm1373, %v3086, %v3087
      %v3089 = vrot.slane %v3052, 2
      %v3090 = vrot.slane %v3053, 2
      %v3091 = vsel %vm1373, %v3089, %v3090
      %v3092 = vrot.slane %v3054, 2
      %v3093 = vrot.slane %v3055, 2
      %v3094 = vsel %vm1373, %v3092, %v3093
      %v3095 = vrot.slane %v3056, 2
      %v3096 = vrot.slane %v3057, 2
      %v3097 = vsel %vm1373, %v3095, %v3096
      %v3106 = vadd.f32 %v3026, %v3076
      %v3107 = vadd.f32 %v3027, %v3079
      %v3108 = vadd.f32 %v3028, %v3082
      %v3109 = vadd.f32 %v3029, %v3085
      %v3110 = vadd.f32 %v3030, %v3088
      %v3111 = vadd.f32 %v3031, %v3091
      %v3112 = vadd.f32 %v3032, %v3094
      %v3113 = vadd.f32 %v3033, %v3097
      %s3114 = scalar_lea.vmem %s2, 35
      %v3115 = vld [vmem:[%s3114] sm:$0x1]
      %v3117 = vlaneseq
      %v3118 = vshrl.u32 %v3117, 7
      %v3119 = vsub.s32 0, %v3118
      %v3120 = vrot.slane %v3115, %v3119
      %v3122 = vmul.f32 %v832, %v3120
      %v3123 = vmul.f32 %v1233, %v3120
      %v3124 = vmul.f32 %v836, %v3120
      %v3125 = vmul.f32 %v1237, %v3120
      %v3126 = vmul.f32 %v840, %v3120
      %v3127 = vmul.f32 %v1241, %v3120
      %v3128 = vmul.f32 %v844, %v3120
      %v3129 = vmul.f32 %v1245, %v3120
      %v3130 = vmul.f32 %v848, %v3120
      %v3131 = vmul.f32 %v1249, %v3120
      %v3132 = vmul.f32 %v852, %v3120
      %v3133 = vmul.f32 %v1253, %v3120
      %v3134 = vmul.f32 %v1743, %v3120
      %v3135 = vmul.f32 %v2024, %v3120
      %v3136 = vmul.f32 %v2513, %v3120
      %v3137 = vmul.f32 %v2794, %v3120
      %v3154 = vrot.slane %v3122, 2
      %v3155 = vrot.slane %v3123, 2
      %v3156 = vsel %vm1373, %v3154, %v3155
      %v3157 = vrot.slane %v3124, 2
      %v3158 = vrot.slane %v3125, 2
      %v3159 = vsel %vm1373, %v3157, %v3158
      %v3160 = vrot.slane %v3126, 2
      %v3161 = vrot.slane %v3127, 2
      %v3162 = vsel %vm1373, %v3160, %v3161
      %v3163 = vrot.slane %v3128, 2
      %v3164 = vrot.slane %v3129, 2
      %v3165 = vsel %vm1373, %v3163, %v3164
      %v3166 = vrot.slane %v3130, 2
      %v3167 = vrot.slane %v3131, 2
      %v3168 = vsel %vm1373, %v3166, %v3167
      %v3169 = vrot.slane %v3132, 2
      %v3170 = vrot.slane %v3133, 2
      %v3171 = vsel %vm1373, %v3169, %v3170
      %v3172 = vrot.slane %v3134, 2
      %v3173 = vrot.slane %v3135, 2
      %v3174 = vsel %vm1373, %v3172, %v3173
      %v3175 = vrot.slane %v3136, 2
      %v3176 = vrot.slane %v3137, 2
      %v3177 = vsel %vm1373, %v3175, %v3176
      %v3186 = vadd.f32 %v3106, %v3156
      %v3187 = vadd.f32 %v3107, %v3159
      %v3188 = vadd.f32 %v3108, %v3162
      %v3189 = vadd.f32 %v3109, %v3165
      %v3190 = vadd.f32 %v3110, %v3168
      %v3191 = vadd.f32 %v3111, %v3171
      %v3192 = vadd.f32 %v3112, %v3174
      %v3193 = vadd.f32 %v3113, %v3177
      %v3194 = vld [vmem:[%s450] sm:$0xff]
      %v3195 = vld [vmem:[%s450 + $0x8] sm:$0x3]
      %v3196 = vld [vmem:[%s450 + $0x10] sm:$0xff]
      %v3197 = vld [vmem:[%s450 + $0x18] sm:$0x3]
      %v3198 = vld [vmem:[%s450 + $0x20] sm:$0xff]
      %v3199 = vld [vmem:[%s450 + $0x28] sm:$0x3]
      %v3200 = vld [vmem:[%s450 + $0x30] sm:$0xff]
      %v3201 = vld [vmem:[%s450 + $0x38] sm:$0x3]
      %v3202 = vld [vmem:[%s450 + $0x40] sm:$0xff]
      %v3203 = vld [vmem:[%s450 + $0x48] sm:$0x3]
      %v3204 = vld [vmem:[%s450 + $0x50] sm:$0xff]
      %v3205 = vld [vmem:[%s450 + $0x58] sm:$0x3]
      %v3206 = vld [vmem:[%s450 + $0x60] sm:$0xff]
      %v3207 = vld [vmem:[%s450 + $0x68] sm:$0x3]
      %v3208 = vld [vmem:[%s450 + $0x70] sm:$0xff]
      %v3209 = vld [vmem:[%s450 + $0x78] sm:$0x3]
      %v3210 = vld [vmem:[%s450 + $0x80] sm:$0xff]
      %v3211 = vld [vmem:[%s450 + $0x88] sm:$0x3]
      %v3212 = vld [vmem:[%s450 + $0x90] sm:$0xff]
      %v3213 = vld [vmem:[%s450 + $0x98] sm:$0x3]
      %v3214 = vmul.f32 %v3194, %v534
      %v3215 = vmul.f32 %v3195, %v534
      %v3216 = vmul.f32 %v3196, %v534
      %v3217 = vmul.f32 %v3197, %v534
      %v3218 = vmul.f32 %v3198, %v534
      %v3219 = vmul.f32 %v3199, %v534
      %v3220 = vmul.f32 %v3200, %v534
      %v3221 = vmul.f32 %v3201, %v534
      %v3222 = vmul.f32 %v3202, %v534
      %v3223 = vmul.f32 %v3203, %v534
      %v3224 = vmul.f32 %v3204, %v534
      %v3225 = vmul.f32 %v3205, %v534
      %v3226 = vmul.f32 %v3206, %v534
      %v3227 = vmul.f32 %v3207, %v534
      %v3228 = vmul.f32 %v3208, %v534
      %v3229 = vmul.f32 %v3209, %v534
      %v3230 = vmul.f32 %v3210, %v534
      %v3231 = vmul.f32 %v3211, %v534
      %v3232 = vmul.f32 %v3212, %v534
      %v3233 = vmul.f32 %v3213, %v534
      %v3234 = vadd.f32 %v3214, %v560
      %v3235 = vadd.f32 %v3215, %v560
      %v3236 = vadd.f32 %v3216, %v560
      %v3237 = vadd.f32 %v3217, %v560
      %v3238 = vadd.f32 %v3218, %v560
      %v3239 = vadd.f32 %v3219, %v560
      %v3240 = vadd.f32 %v3220, %v560
      %v3241 = vadd.f32 %v3221, %v560
      %v3242 = vadd.f32 %v3222, %v560
      %v3243 = vadd.f32 %v3223, %v560
      %v3244 = vadd.f32 %v3224, %v560
      %v3245 = vadd.f32 %v3225, %v560
      %v3246 = vadd.f32 %v3226, %v560
      %v3247 = vadd.f32 %v3227, %v560
      %v3248 = vadd.f32 %v3228, %v560
      %v3249 = vadd.f32 %v3229, %v560
      %v3250 = vadd.f32 %v3230, %v560
      %v3251 = vadd.f32 %v3231, %v560
      %v3252 = vadd.f32 %v3232, %v560
      %v3253 = vadd.f32 %v3233, %v560
      %v3254 = vmax.f32 %v3234, 0.0
      %v3255 = vmax.f32 %v3235, 0.0
      %v3256 = vmax.f32 %v3236, 0.0
      %v3257 = vmax.f32 %v3237, 0.0
      %v3258 = vmax.f32 %v3238, 0.0
      %v3259 = vmax.f32 %v3239, 0.0
      %v3260 = vmax.f32 %v3240, 0.0
      %v3261 = vmax.f32 %v3241, 0.0
      %v3262 = vmax.f32 %v3242, 0.0
      %v3263 = vmax.f32 %v3243, 0.0
      %v3264 = vmax.f32 %v3244, 0.0
      %v3265 = vmax.f32 %v3245, 0.0
      %v3266 = vmax.f32 %v3246, 0.0
      %v3267 = vmax.f32 %v3247, 0.0
      %v3268 = vmax.f32 %v3248, 0.0
      %v3269 = vmax.f32 %v3249, 0.0
      %v3270 = vmax.f32 %v3250, 0.0
      %v3271 = vmax.f32 %v3251, 0.0
      %v3272 = vmax.f32 %v3252, 0.0
      %v3273 = vmax.f32 %v3253, 0.0
      %v3274 = vmul.f32 %v3254, %v490
      %v3275 = vmul.f32 %v3255, %v491
      %v3276 = vmul.f32 %v3256, %v492
      %v3277 = vmul.f32 %v3257, %v493
      %v3278 = vmul.f32 %v3258, %v494
      %v3279 = vmul.f32 %v3259, %v495
      %v3280 = vmul.f32 %v3260, %v496
      %v3281 = vmul.f32 %v3261, %v497
      %v3282 = vmul.f32 %v3262, %v498
      %v3283 = vmul.f32 %v3263, %v499
      %v3284 = vmul.f32 %v3264, %v500
      %v3285 = vmul.f32 %v3265, %v501
      %v3286 = vmul.f32 %v3266, %v502
      %v3287 = vmul.f32 %v3267, %v503
      %v3288 = vmul.f32 %v3268, %v504
      %v3289 = vmul.f32 %v3269, %v505
      %v3290 = vmul.f32 %v3270, %v506
      %v3291 = vmul.f32 %v3271, %v507
      %v3292 = vmul.f32 %v3272, %v508
      %v3293 = vmul.f32 %v3273, %v509
      %s3294 = scalar_lea.vmem %s2, 36
      %v3295 = vld [vmem:[%s3294] sm:$0x1]
      %3297 = vset.pattern.permute.xlu0 0
      %3298 = vperm.xlu0 %3297, %v3274
      %v3299 = vpop.permute.xlu0 %3298
      %3302 = vset.pattern.permute.xlu0 0
      %3303 = vperm.xlu0 %3302, %v3276
      %v3304 = vpop.permute.xlu0 %3303
      %3307 = vset.pattern.permute.xlu0 0
      %3308 = vperm.xlu0 %3307, %v3278
      %v3309 = vpop.permute.xlu0 %3308
      %3312 = vset.pattern.permute.xlu0 0
      %3313 = vperm.xlu0 %3312, %v3280
      %v3314 = vpop.permute.xlu0 %3313
      %3317 = vset.pattern.permute.xlu0 0
      %3318 = vperm.xlu0 %3317, %v3282
      %v3319 = vpop.permute.xlu0 %3318
      %3322 = vset.pattern.permute.xlu0 0
      %3323 = vperm.xlu0 %3322, %v3284
      %v3324 = vpop.permute.xlu0 %3323
      %3327 = vset.pattern.permute.xlu0 0
      %3328 = vperm.xlu0 %3327, %v3286
      %v3329 = vpop.permute.xlu0 %3328
      %3332 = vset.pattern.permute.xlu0 0
      %3333 = vperm.xlu0 %3332, %v3288
      %v3334 = vpop.permute.xlu0 %3333
      %v3337 = vlaneseq
      %v3338 = vshrl.u32 %v3337, 7
      %v3339 = vsub.s32 0, %v3338
      %v3340 = vrot.slane %v3295, %v3339
      %v3342 = vmul.f32 %v3299, %v3340
      %v3343 = vmul.f32 %v3304, %v3340
      %v3344 = vmul.f32 %v3309, %v3340
      %v3345 = vmul.f32 %v3314, %v3340
      %v3346 = vmul.f32 %v3319, %v3340
      %v3347 = vmul.f32 %v3324, %v3340
      %v3348 = vmul.f32 %v3329, %v3340
      %v3349 = vmul.f32 %v3334, %v3340
      %v3350 = vadd.f32 %v3186, %v3342
      %v3351 = vadd.f32 %v3187, %v3343
      %v3352 = vadd.f32 %v3188, %v3344
      %v3353 = vadd.f32 %v3189, %v3345
      %v3354 = vadd.f32 %v3190, %v3346
      %v3355 = vadd.f32 %v3191, %v3347
      %v3356 = vadd.f32 %v3192, %v3348
      %v3357 = vadd.f32 %v3193, %v3349
      %s3358 = scalar_lea.vmem %s2, 37
      %v3359 = vld [vmem:[%s3358] sm:$0x1]
      %3360 = vset.pattern.permute.xlu0 1
      %3361 = vperm.xlu0 %3360, %v3274
      %v3362 = vpop.permute.xlu0 %3361
      %3364 = vset.pattern.permute.xlu0 1
      %3365 = vperm.xlu0 %3364, %v3276
      %v3366 = vpop.permute.xlu0 %3365
      %3368 = vset.pattern.permute.xlu0 1
      %3369 = vperm.xlu0 %3368, %v3278
      %v3370 = vpop.permute.xlu0 %3369
      %3372 = vset.pattern.permute.xlu0 1
      %3373 = vperm.xlu0 %3372, %v3280
      %v3374 = vpop.permute.xlu0 %3373
      %3376 = vset.pattern.permute.xlu0 1
      %3377 = vperm.xlu0 %3376, %v3282
      %v3378 = vpop.permute.xlu0 %3377
      %3380 = vset.pattern.permute.xlu0 1
      %3381 = vperm.xlu0 %3380, %v3284
      %v3382 = vpop.permute.xlu0 %3381
      %3384 = vset.pattern.permute.xlu0 1
      %3385 = vperm.xlu0 %3384, %v3286
      %v3386 = vpop.permute.xlu0 %3385
      %3388 = vset.pattern.permute.xlu0 1
      %3389 = vperm.xlu0 %3388, %v3288
      %v3390 = vpop.permute.xlu0 %3389
      %v3393 = vlaneseq
      %v3394 = vshrl.u32 %v3393, 7
      %v3395 = vsub.s32 0, %v3394
      %v3396 = vrot.slane %v3359, %v3395
      %v3398 = vmul.f32 %v3362, %v3396
      %v3399 = vmul.f32 %v3366, %v3396
      %v3400 = vmul.f32 %v3370, %v3396
      %v3401 = vmul.f32 %v3374, %v3396
      %v3402 = vmul.f32 %v3378, %v3396
      %v3403 = vmul.f32 %v3382, %v3396
      %v3404 = vmul.f32 %v3386, %v3396
      %v3405 = vmul.f32 %v3390, %v3396
      %v3406 = vadd.f32 %v3350, %v3398
      %v3407 = vadd.f32 %v3351, %v3399
      %v3408 = vadd.f32 %v3352, %v3400
      %v3409 = vadd.f32 %v3353, %v3401
      %v3410 = vadd.f32 %v3354, %v3402
      %v3411 = vadd.f32 %v3355, %v3403
      %v3412 = vadd.f32 %v3356, %v3404
      %v3413 = vadd.f32 %v3357, %v3405
      %s3414 = scalar_lea.vmem %s2, 38
      %v3415 = vld [vmem:[%s3414] sm:$0x1]
      %3416 = vset.pattern.permute.xlu0 2
      %3417 = vperm.xlu0 %3416, %v3274
      %v3418 = vpop.permute.xlu0 %3417
      %3420 = vset.pattern.permute.xlu0 2
      %3421 = vperm.xlu0 %3420, %v3276
      %v3422 = vpop.permute.xlu0 %3421
      %3424 = vset.pattern.permute.xlu0 2
      %3425 = vperm.xlu0 %3424, %v3278
      %v3426 = vpop.permute.xlu0 %3425
      %3428 = vset.pattern.permute.xlu0 2
      %3429 = vperm.xlu0 %3428, %v3280
      %v3430 = vpop.permute.xlu0 %3429
      %3432 = vset.pattern.permute.xlu0 2
      %3433 = vperm.xlu0 %3432, %v3282
      %v3434 = vpop.permute.xlu0 %3433
      %3436 = vset.pattern.permute.xlu0 2
      %3437 = vperm.xlu0 %3436, %v3284
      %v3438 = vpop.permute.xlu0 %3437
      %3440 = vset.pattern.permute.xlu0 2
      %3441 = vperm.xlu0 %3440, %v3286
      %v3442 = vpop.permute.xlu0 %3441
      %3444 = vset.pattern.permute.xlu0 2
      %3445 = vperm.xlu0 %3444, %v3288
      %v3446 = vpop.permute.xlu0 %3445
      %v3449 = vlaneseq
      %v3450 = vshrl.u32 %v3449, 7
      %v3451 = vsub.s32 0, %v3450
      %v3452 = vrot.slane %v3415, %v3451
      %v3454 = vmul.f32 %v3418, %v3452
      %v3455 = vmul.f32 %v3422, %v3452
      %v3456 = vmul.f32 %v3426, %v3452
      %v3457 = vmul.f32 %v3430, %v3452
      %v3458 = vmul.f32 %v3434, %v3452
      %v3459 = vmul.f32 %v3438, %v3452
      %v3460 = vmul.f32 %v3442, %v3452
      %v3461 = vmul.f32 %v3446, %v3452
      %v3462 = vadd.f32 %v3406, %v3454
      %v3463 = vadd.f32 %v3407, %v3455
      %v3464 = vadd.f32 %v3408, %v3456
      %v3465 = vadd.f32 %v3409, %v3457
      %v3466 = vadd.f32 %v3410, %v3458
      %v3467 = vadd.f32 %v3411, %v3459
      %v3468 = vadd.f32 %v3412, %v3460
      %v3469 = vadd.f32 %v3413, %v3461
      %s3470 = scalar_lea.vmem %s2, 39
      %v3471 = vld [vmem:[%s3470] sm:$0x1]
      %3472 = vset.pattern.permute.xlu0 3
      %3473 = vperm.xlu0 %3472, %v3274
      %v3474 = vpop.permute.xlu0 %3473
      %3476 = vset.pattern.permute.xlu0 3
      %3477 = vperm.xlu0 %3476, %v3276
      %v3478 = vpop.permute.xlu0 %3477
      %3480 = vset.pattern.permute.xlu0 3
      %3481 = vperm.xlu0 %3480, %v3278
      %v3482 = vpop.permute.xlu0 %3481
      %3484 = vset.pattern.permute.xlu0 3
      %3485 = vperm.xlu0 %3484, %v3280
      %v3486 = vpop.permute.xlu0 %3485
      %3488 = vset.pattern.permute.xlu0 3
      %3489 = vperm.xlu0 %3488, %v3282
      %v3490 = vpop.permute.xlu0 %3489
      %3492 = vset.pattern.permute.xlu0 3
      %3493 = vperm.xlu0 %3492, %v3284
      %v3494 = vpop.permute.xlu0 %3493
      %3496 = vset.pattern.permute.xlu0 3
      %3497 = vperm.xlu0 %3496, %v3286
      %v3498 = vpop.permute.xlu0 %3497
      %3500 = vset.pattern.permute.xlu0 3
      %3501 = vperm.xlu0 %3500, %v3288
      %v3502 = vpop.permute.xlu0 %3501
      %v3505 = vlaneseq
      %v3506 = vshrl.u32 %v3505, 7
      %v3507 = vsub.s32 0, %v3506
      %v3508 = vrot.slane %v3471, %v3507
      %v3510 = vmul.f32 %v3474, %v3508
      %v3511 = vmul.f32 %v3478, %v3508
      %v3512 = vmul.f32 %v3482, %v3508
      %v3513 = vmul.f32 %v3486, %v3508
      %v3514 = vmul.f32 %v3490, %v3508
      %v3515 = vmul.f32 %v3494, %v3508
      %v3516 = vmul.f32 %v3498, %v3508
      %v3517 = vmul.f32 %v3502, %v3508
      %v3518 = vadd.f32 %v3462, %v3510
      %v3519 = vadd.f32 %v3463, %v3511
      %v3520 = vadd.f32 %v3464, %v3512
      %v3521 = vadd.f32 %v3465, %v3513
      %v3522 = vadd.f32 %v3466, %v3514
      %v3523 = vadd.f32 %v3467, %v3515
      %v3524 = vadd.f32 %v3468, %v3516
      %v3525 = vadd.f32 %v3469, %v3517
      %s3526 = scalar_lea.vmem %s2, 40
      %v3527 = vld [vmem:[%s3526] sm:$0x1]
      %3529 = vset.pattern.permute.xlu0 0
      %3530 = vperm.xlu0 %3529, %v3275
      %v3531 = vpop.permute.xlu0 %3530
      %3534 = vset.pattern.permute.xlu0 0
      %3535 = vperm.xlu0 %3534, %v3277
      %v3536 = vpop.permute.xlu0 %3535
      %3539 = vset.pattern.permute.xlu0 0
      %3540 = vperm.xlu0 %3539, %v3279
      %v3541 = vpop.permute.xlu0 %3540
      %3544 = vset.pattern.permute.xlu0 0
      %3545 = vperm.xlu0 %3544, %v3281
      %v3546 = vpop.permute.xlu0 %3545
      %3549 = vset.pattern.permute.xlu0 0
      %3550 = vperm.xlu0 %3549, %v3283
      %v3551 = vpop.permute.xlu0 %3550
      %3554 = vset.pattern.permute.xlu0 0
      %3555 = vperm.xlu0 %3554, %v3285
      %v3556 = vpop.permute.xlu0 %3555
      %3559 = vset.pattern.permute.xlu0 0
      %3560 = vperm.xlu0 %3559, %v3287
      %v3561 = vpop.permute.xlu0 %3560
      %3564 = vset.pattern.permute.xlu0 0
      %3565 = vperm.xlu0 %3564, %v3289
      %v3566 = vpop.permute.xlu0 %3565
      %v3569 = vlaneseq
      %v3570 = vshrl.u32 %v3569, 7
      %v3571 = vsub.s32 0, %v3570
      %v3572 = vrot.slane %v3527, %v3571
      %v3574 = vmul.f32 %v3299, %v3572
      %v3575 = vmul.f32 %v3531, %v3572
      %v3576 = vmul.f32 %v3304, %v3572
      %v3577 = vmul.f32 %v3536, %v3572
      %v3578 = vmul.f32 %v3309, %v3572
      %v3579 = vmul.f32 %v3541, %v3572
      %v3580 = vmul.f32 %v3314, %v3572
      %v3581 = vmul.f32 %v3546, %v3572
      %v3582 = vmul.f32 %v3319, %v3572
      %v3583 = vmul.f32 %v3551, %v3572
      %v3584 = vmul.f32 %v3324, %v3572
      %v3585 = vmul.f32 %v3556, %v3572
      %v3586 = vmul.f32 %v3329, %v3572
      %v3587 = vmul.f32 %v3561, %v3572
      %v3588 = vmul.f32 %v3334, %v3572
      %v3589 = vmul.f32 %v3566, %v3572
      %v3606 = vrot.slane %v3574, 1
      %v3607 = vrot.slane %v3575, 1
      %v3608 = vsel %vm956, %v3606, %v3607
      %v3609 = vrot.slane %v3576, 1
      %v3610 = vrot.slane %v3577, 1
      %v3611 = vsel %vm956, %v3609, %v3610
      %v3612 = vrot.slane %v3578, 1
      %v3613 = vrot.slane %v3579, 1
      %v3614 = vsel %vm956, %v3612, %v3613
      %v3615 = vrot.slane %v3580, 1
      %v3616 = vrot.slane %v3581, 1
      %v3617 = vsel %vm956, %v3615, %v3616
      %v3618 = vrot.slane %v3582, 1
      %v3619 = vrot.slane %v3583, 1
      %v3620 = vsel %vm956, %v3618, %v3619
      %v3621 = vrot.slane %v3584, 1
      %v3622 = vrot.slane %v3585, 1
      %v3623 = vsel %vm956, %v3621, %v3622
      %v3624 = vrot.slane %v3586, 1
      %v3625 = vrot.slane %v3587, 1
      %v3626 = vsel %vm956, %v3624, %v3625
      %v3627 = vrot.slane %v3588, 1
      %v3628 = vrot.slane %v3589, 1
      %v3629 = vsel %vm956, %v3627, %v3628
      %v3638 = vadd.f32 %v3518, %v3608
      %v3639 = vadd.f32 %v3519, %v3611
      %v3640 = vadd.f32 %v3520, %v3614
      %v3641 = vadd.f32 %v3521, %v3617
      %v3642 = vadd.f32 %v3522, %v3620
      %v3643 = vadd.f32 %v3523, %v3623
      %v3644 = vadd.f32 %v3524, %v3626
      %v3645 = vadd.f32 %v3525, %v3629
      %s3646 = scalar_lea.vmem %s2, 41
      %v3647 = vld [vmem:[%s3646] sm:$0x1]
      %3648 = vset.pattern.permute.xlu0 1
      %3649 = vperm.xlu0 %3648, %v3275
      %v3650 = vpop.permute.xlu0 %3649
      %3652 = vset.pattern.permute.xlu0 1
      %3653 = vperm.xlu0 %3652, %v3277
      %v3654 = vpop.permute.xlu0 %3653
      %3656 = vset.pattern.permute.xlu0 1
      %3657 = vperm.xlu0 %3656, %v3279
      %v3658 = vpop.permute.xlu0 %3657
      %3660 = vset.pattern.permute.xlu0 1
      %3661 = vperm.xlu0 %3660, %v3281
      %v3662 = vpop.permute.xlu0 %3661
      %3664 = vset.pattern.permute.xlu0 1
      %3665 = vperm.xlu0 %3664, %v3283
      %v3666 = vpop.permute.xlu0 %3665
      %3668 = vset.pattern.permute.xlu0 1
      %3669 = vperm.xlu0 %3668, %v3285
      %v3670 = vpop.permute.xlu0 %3669
      %3672 = vset.pattern.permute.xlu0 1
      %3673 = vperm.xlu0 %3672, %v3287
      %v3674 = vpop.permute.xlu0 %3673
      %3676 = vset.pattern.permute.xlu0 1
      %3677 = vperm.xlu0 %3676, %v3289
      %v3678 = vpop.permute.xlu0 %3677
      %v3681 = vlaneseq
      %v3682 = vshrl.u32 %v3681, 7
      %v3683 = vsub.s32 0, %v3682
      %v3684 = vrot.slane %v3647, %v3683
      %v3686 = vmul.f32 %v3362, %v3684
      %v3687 = vmul.f32 %v3650, %v3684
      %v3688 = vmul.f32 %v3366, %v3684
      %v3689 = vmul.f32 %v3654, %v3684
      %v3690 = vmul.f32 %v3370, %v3684
      %v3691 = vmul.f32 %v3658, %v3684
      %v3692 = vmul.f32 %v3374, %v3684
      %v3693 = vmul.f32 %v3662, %v3684
      %v3694 = vmul.f32 %v3378, %v3684
      %v3695 = vmul.f32 %v3666, %v3684
      %v3696 = vmul.f32 %v3382, %v3684
      %v3697 = vmul.f32 %v3670, %v3684
      %v3698 = vmul.f32 %v3386, %v3684
      %v3699 = vmul.f32 %v3674, %v3684
      %v3700 = vmul.f32 %v3390, %v3684
      %v3701 = vmul.f32 %v3678, %v3684
      %v3718 = vrot.slane %v3686, 1
      %v3719 = vrot.slane %v3687, 1
      %v3720 = vsel %vm956, %v3718, %v3719
      %v3721 = vrot.slane %v3688, 1
      %v3722 = vrot.slane %v3689, 1
      %v3723 = vsel %vm956, %v3721, %v3722
      %v3724 = vrot.slane %v3690, 1
      %v3725 = vrot.slane %v3691, 1
      %v3726 = vsel %vm956, %v3724, %v3725
      %v3727 = vrot.slane %v3692, 1
      %v3728 = vrot.slane %v3693, 1
      %v3729 = vsel %vm956, %v3727, %v3728
      %v3730 = vrot.slane %v3694, 1
      %v3731 = vrot.slane %v3695, 1
      %v3732 = vsel %vm956, %v3730, %v3731
      %v3733 = vrot.slane %v3696, 1
      %v3734 = vrot.slane %v3697, 1
      %v3735 = vsel %vm956, %v3733, %v3734
      %v3736 = vrot.slane %v3698, 1
      %v3737 = vrot.slane %v3699, 1
      %v3738 = vsel %vm956, %v3736, %v3737
      %v3739 = vrot.slane %v3700, 1
      %v3740 = vrot.slane %v3701, 1
      %v3741 = vsel %vm956, %v3739, %v3740
      %v3750 = vadd.f32 %v3638, %v3720
      %v3751 = vadd.f32 %v3639, %v3723
      %v3752 = vadd.f32 %v3640, %v3726
      %v3753 = vadd.f32 %v3641, %v3729
      %v3754 = vadd.f32 %v3642, %v3732
      %v3755 = vadd.f32 %v3643, %v3735
      %v3756 = vadd.f32 %v3644, %v3738
      %v3757 = vadd.f32 %v3645, %v3741
      %s3758 = scalar_lea.vmem %s2, 42
      %v3759 = vld [vmem:[%s3758] sm:$0x1]
      %3760 = vset.pattern.permute.xlu0 2
      %3761 = vperm.xlu0 %3760, %v3275
      %v3762 = vpop.permute.xlu0 %3761
      %3764 = vset.pattern.permute.xlu0 2
      %3765 = vperm.xlu0 %3764, %v3277
      %v3766 = vpop.permute.xlu0 %3765
      %3768 = vset.pattern.permute.xlu0 2
      %3769 = vperm.xlu0 %3768, %v3279
      %v3770 = vpop.permute.xlu0 %3769
      %3772 = vset.pattern.permute.xlu0 2
      %3773 = vperm.xlu0 %3772, %v3281
      %v3774 = vpop.permute.xlu0 %3773
      %3776 = vset.pattern.permute.xlu0 2
      %3777 = vperm.xlu0 %3776, %v3283
      %v3778 = vpop.permute.xlu0 %3777
      %3780 = vset.pattern.permute.xlu0 2
      %3781 = vperm.xlu0 %3780, %v3285
      %v3782 = vpop.permute.xlu0 %3781
      %3784 = vset.pattern.permute.xlu0 2
      %3785 = vperm.xlu0 %3784, %v3287
      %v3786 = vpop.permute.xlu0 %3785
      %3788 = vset.pattern.permute.xlu0 2
      %3789 = vperm.xlu0 %3788, %v3289
      %v3790 = vpop.permute.xlu0 %3789
      %v3793 = vlaneseq
      %v3794 = vshrl.u32 %v3793, 7
      %v3795 = vsub.s32 0, %v3794
      %v3796 = vrot.slane %v3759, %v3795
      %v3798 = vmul.f32 %v3418, %v3796
      %v3799 = vmul.f32 %v3762, %v3796
      %v3800 = vmul.f32 %v3422, %v3796
      %v3801 = vmul.f32 %v3766, %v3796
      %v3802 = vmul.f32 %v3426, %v3796
      %v3803 = vmul.f32 %v3770, %v3796
      %v3804 = vmul.f32 %v3430, %v3796
      %v3805 = vmul.f32 %v3774, %v3796
      %v3806 = vmul.f32 %v3434, %v3796
      %v3807 = vmul.f32 %v3778, %v3796
      %v3808 = vmul.f32 %v3438, %v3796
      %v3809 = vmul.f32 %v3782, %v3796
      %v3810 = vmul.f32 %v3442, %v3796
      %v3811 = vmul.f32 %v3786, %v3796
      %v3812 = vmul.f32 %v3446, %v3796
      %v3813 = vmul.f32 %v3790, %v3796
      %v3830 = vrot.slane %v3798, 1
      %v3831 = vrot.slane %v3799, 1
      %v3832 = vsel %vm956, %v3830, %v3831
      %v3833 = vrot.slane %v3800, 1
      %v3834 = vrot.slane %v3801, 1
      %v3835 = vsel %vm956, %v3833, %v3834
      %v3836 = vrot.slane %v3802, 1
      %v3837 = vrot.slane %v3803, 1
      %v3838 = vsel %vm956, %v3836, %v3837
      %v3839 = vrot.slane %v3804, 1
      %v3840 = vrot.slane %v3805, 1
      %v3841 = vsel %vm956, %v3839, %v3840
      %v3842 = vrot.slane %v3806, 1
      %v3843 = vrot.slane %v3807, 1
      %v3844 = vsel %vm956, %v3842, %v3843
      %v3845 = vrot.slane %v3808, 1
      %v3846 = vrot.slane %v3809, 1
      %v3847 = vsel %vm956, %v3845, %v3846
      %v3848 = vrot.slane %v3810, 1
      %v3849 = vrot.slane %v3811, 1
      %v3850 = vsel %vm956, %v3848, %v3849
      %v3851 = vrot.slane %v3812, 1
      %v3852 = vrot.slane %v3813, 1
      %v3853 = vsel %vm956, %v3851, %v3852
      %v3862 = vadd.f32 %v3750, %v3832
      %v3863 = vadd.f32 %v3751, %v3835
      %v3864 = vadd.f32 %v3752, %v3838
      %v3865 = vadd.f32 %v3753, %v3841
      %v3866 = vadd.f32 %v3754, %v3844
      %v3867 = vadd.f32 %v3755, %v3847
      %v3868 = vadd.f32 %v3756, %v3850
      %v3869 = vadd.f32 %v3757, %v3853
      %s3870 = scalar_lea.vmem %s2, 43
      %v3871 = vld [vmem:[%s3870] sm:$0x1]
      %3872 = vset.pattern.permute.xlu0 3
      %3873 = vperm.xlu0 %3872, %v3275
      %v3874 = vpop.permute.xlu0 %3873
      %3876 = vset.pattern.permute.xlu0 3
      %3877 = vperm.xlu0 %3876, %v3277
      %v3878 = vpop.permute.xlu0 %3877
      %3880 = vset.pattern.permute.xlu0 3
      %3881 = vperm.xlu0 %3880, %v3279
      %v3882 = vpop.permute.xlu0 %3881
      %3884 = vset.pattern.permute.xlu0 3
      %3885 = vperm.xlu0 %3884, %v3281
      %v3886 = vpop.permute.xlu0 %3885
      %3888 = vset.pattern.permute.xlu0 3
      %3889 = vperm.xlu0 %3888, %v3283
      %v3890 = vpop.permute.xlu0 %3889
      %3892 = vset.pattern.permute.xlu0 3
      %3893 = vperm.xlu0 %3892, %v3285
      %v3894 = vpop.permute.xlu0 %3893
      %3896 = vset.pattern.permute.xlu0 3
      %3897 = vperm.xlu0 %3896, %v3287
      %v3898 = vpop.permute.xlu0 %3897
      %3900 = vset.pattern.permute.xlu0 3
      %3901 = vperm.xlu0 %3900, %v3289
      %v3902 = vpop.permute.xlu0 %3901
      %v3905 = vlaneseq
      %v3906 = vshrl.u32 %v3905, 7
      %v3907 = vsub.s32 0, %v3906
      %v3908 = vrot.slane %v3871, %v3907
      %v3910 = vmul.f32 %v3474, %v3908
      %v3911 = vmul.f32 %v3874, %v3908
      %v3912 = vmul.f32 %v3478, %v3908
      %v3913 = vmul.f32 %v3878, %v3908
      %v3914 = vmul.f32 %v3482, %v3908
      %v3915 = vmul.f32 %v3882, %v3908
      %v3916 = vmul.f32 %v3486, %v3908
      %v3917 = vmul.f32 %v3886, %v3908
      %v3918 = vmul.f32 %v3490, %v3908
      %v3919 = vmul.f32 %v3890, %v3908
      %v3920 = vmul.f32 %v3494, %v3908
      %v3921 = vmul.f32 %v3894, %v3908
      %v3922 = vmul.f32 %v3498, %v3908
      %v3923 = vmul.f32 %v3898, %v3908
      %v3924 = vmul.f32 %v3502, %v3908
      %v3925 = vmul.f32 %v3902, %v3908
      %v3942 = vrot.slane %v3910, 1
      %v3943 = vrot.slane %v3911, 1
      %v3944 = vsel %vm956, %v3942, %v3943
      %v3945 = vrot.slane %v3912, 1
      %v3946 = vrot.slane %v3913, 1
      %v3947 = vsel %vm956, %v3945, %v3946
      %v3948 = vrot.slane %v3914, 1
      %v3949 = vrot.slane %v3915, 1
      %v3950 = vsel %vm956, %v3948, %v3949
      %v3951 = vrot.slane %v3916, 1
      %v3952 = vrot.slane %v3917, 1
      %v3953 = vsel %vm956, %v3951, %v3952
      %v3954 = vrot.slane %v3918, 1
      %v3955 = vrot.slane %v3919, 1
      %v3956 = vsel %vm956, %v3954, %v3955
      %v3957 = vrot.slane %v3920, 1
      %v3958 = vrot.slane %v3921, 1
      %v3959 = vsel %vm956, %v3957, %v3958
      %v3960 = vrot.slane %v3922, 1
      %v3961 = vrot.slane %v3923, 1
      %v3962 = vsel %vm956, %v3960, %v3961
      %v3963 = vrot.slane %v3924, 1
      %v3964 = vrot.slane %v3925, 1
      %v3965 = vsel %vm956, %v3963, %v3964
      %v3974 = vadd.f32 %v3862, %v3944
      %v3975 = vadd.f32 %v3863, %v3947
      %v3976 = vadd.f32 %v3864, %v3950
      %v3977 = vadd.f32 %v3865, %v3953
      %v3978 = vadd.f32 %v3866, %v3956
      %v3979 = vadd.f32 %v3867, %v3959
      %v3980 = vadd.f32 %v3868, %v3962
      %v3981 = vadd.f32 %v3869, %v3965
      %s3982 = scalar_lea.vmem %s2, 44
      %v3983 = vld [vmem:[%s3982] sm:$0x1]
      %v3985 = vlaneseq
      %v3986 = vshrl.u32 %v3985, 7
      %v3987 = vsub.s32 0, %v3986
      %v3988 = vrot.slane %v3983, %v3987
      %v3990 = vmul.f32 %v3299, %v3988
      %v3991 = vmul.f32 %v3531, %v3988
      %v3992 = vmul.f32 %v3304, %v3988
      %v3993 = vmul.f32 %v3536, %v3988
      %v3994 = vmul.f32 %v3309, %v3988
      %v3995 = vmul.f32 %v3541, %v3988
      %v3996 = vmul.f32 %v3314, %v3988
      %v3997 = vmul.f32 %v3546, %v3988
      %v3998 = vmul.f32 %v3319, %v3988
      %v3999 = vmul.f32 %v3551, %v3988
      %v4000 = vmul.f32 %v3324, %v3988
      %v4001 = vmul.f32 %v3556, %v3988
      %v4002 = vmul.f32 %v3329, %v3988
      %v4003 = vmul.f32 %v3561, %v3988
      %v4004 = vmul.f32 %v3334, %v3988
      %v4005 = vmul.f32 %v3566, %v3988
      %v4022 = vrot.slane %v3990, 2
      %v4023 = vrot.slane %v3991, 2
      %v4024 = vsel %vm1373, %v4022, %v4023
      %v4025 = vrot.slane %v3992, 2
      %v4026 = vrot.slane %v3993, 2
      %v4027 = vsel %vm1373, %v4025, %v4026
      %v4028 = vrot.slane %v3994, 2
      %v4029 = vrot.slane %v3995, 2
      %v4030 = vsel %vm1373, %v4028, %v4029
      %v4031 = vrot.slane %v3996, 2
      %v4032 = vrot.slane %v3997, 2
      %v4033 = vsel %vm1373, %v4031, %v4032
      %v4034 = vrot.slane %v3998, 2
      %v4035 = vrot.slane %v3999, 2
      %v4036 = vsel %vm1373, %v4034, %v4035
      %v4037 = vrot.slane %v4000, 2
      %v4038 = vrot.slane %v4001, 2
      %v4039 = vsel %vm1373, %v4037, %v4038
      %v4040 = vrot.slane %v4002, 2
      %v4041 = vrot.slane %v4003, 2
      %v4042 = vsel %vm1373, %v4040, %v4041
      %v4043 = vrot.slane %v4004, 2
      %v4044 = vrot.slane %v4005, 2
      %v4045 = vsel %vm1373, %v4043, %v4044
      %v4054 = vadd.f32 %v3974, %v4024
      %v4055 = vadd.f32 %v3975, %v4027
      %v4056 = vadd.f32 %v3976, %v4030
      %v4057 = vadd.f32 %v3977, %v4033
      %v4058 = vadd.f32 %v3978, %v4036
      %v4059 = vadd.f32 %v3979, %v4039
      %v4060 = vadd.f32 %v3980, %v4042
      %v4061 = vadd.f32 %v3981, %v4045
      %s4062 = scalar_lea.vmem %s2, 45
      %v4063 = vld [vmem:[%s4062] sm:$0x1]
      %v4065 = vlaneseq
      %v4066 = vshrl.u32 %v4065, 7
      %v4067 = vsub.s32 0, %v4066
      %v4068 = vrot.slane %v4063, %v4067
      %v4070 = vmul.f32 %v3362, %v4068
      %v4071 = vmul.f32 %v3650, %v4068
      %v4072 = vmul.f32 %v3366, %v4068
      %v4073 = vmul.f32 %v3654, %v4068
      %v4074 = vmul.f32 %v3370, %v4068
      %v4075 = vmul.f32 %v3658, %v4068
      %v4076 = vmul.f32 %v3374, %v4068
      %v4077 = vmul.f32 %v3662, %v4068
      %v4078 = vmul.f32 %v3378, %v4068
      %v4079 = vmul.f32 %v3666, %v4068
      %v4080 = vmul.f32 %v3382, %v4068
      %v4081 = vmul.f32 %v3670, %v4068
      %v4082 = vmul.f32 %v3386, %v4068
      %v4083 = vmul.f32 %v3674, %v4068
      %v4084 = vmul.f32 %v3390, %v4068
      %v4085 = vmul.f32 %v3678, %v4068
      %v4102 = vrot.slane %v4070, 2
      %v4103 = vrot.slane %v4071, 2
      %v4104 = vsel %vm1373, %v4102, %v4103
      %v4105 = vrot.slane %v4072, 2
      %v4106 = vrot.slane %v4073, 2
      %v4107 = vsel %vm1373, %v4105, %v4106
      %v4108 = vrot.slane %v4074, 2
      %v4109 = vrot.slane %v4075, 2
      %v4110 = vsel %vm1373, %v4108, %v4109
      %v4111 = vrot.slane %v4076, 2
      %v4112 = vrot.slane %v4077, 2
      %v4113 = vsel %vm1373, %v4111, %v4112
      %v4114 = vrot.slane %v4078, 2
      %v4115 = vrot.slane %v4079, 2
      %v4116 = vsel %vm1373, %v4114, %v4115
      %v4117 = vrot.slane %v4080, 2
      %v4118 = vrot.slane %v4081, 2
      %v4119 = vsel %vm1373, %v4117, %v4118
      %v4120 = vrot.slane %v4082, 2
      %v4121 = vrot.slane %v4083, 2
      %v4122 = vsel %vm1373, %v4120, %v4121
      %v4123 = vrot.slane %v4084, 2
      %v4124 = vrot.slane %v4085, 2
      %v4125 = vsel %vm1373, %v4123, %v4124
      %v4134 = vadd.f32 %v4054, %v4104
      %v4135 = vadd.f32 %v4055, %v4107
      %v4136 = vadd.f32 %v4056, %v4110
      %v4137 = vadd.f32 %v4057, %v4113
      %v4138 = vadd.f32 %v4058, %v4116
      %v4139 = vadd.f32 %v4059, %v4119
      %v4140 = vadd.f32 %v4060, %v4122
      %v4141 = vadd.f32 %v4061, %v4125
      %s4142 = scalar_lea.vmem %s2, 46
      %v4143 = vld [vmem:[%s4142] sm:$0x1]
      %v4145 = vlaneseq
      %v4146 = vshrl.u32 %v4145, 7
      %v4147 = vsub.s32 0, %v4146
      %v4148 = vrot.slane %v4143, %v4147
      %v4150 = vmul.f32 %v3418, %v4148
      %v4151 = vmul.f32 %v3762, %v4148
      %v4152 = vmul.f32 %v3422, %v4148
      %v4153 = vmul.f32 %v3766, %v4148
      %v4154 = vmul.f32 %v3426, %v4148
      %v4155 = vmul.f32 %v3770, %v4148
      %v4156 = vmul.f32 %v3430, %v4148
      %v4157 = vmul.f32 %v3774, %v4148
      %v4158 = vmul.f32 %v3434, %v4148
      %v4159 = vmul.f32 %v3778, %v4148
      %v4160 = vmul.f32 %v3438, %v4148
      %v4161 = vmul.f32 %v3782, %v4148
      %v4162 = vmul.f32 %v3442, %v4148
      %v4163 = vmul.f32 %v3786, %v4148
      %v4164 = vmul.f32 %v3446, %v4148
      %v4165 = vmul.f32 %v3790, %v4148
      %v4182 = vrot.slane %v4150, 2
      %v4183 = vrot.slane %v4151, 2
      %v4184 = vsel %vm1373, %v4182, %v4183
      %v4185 = vrot.slane %v4152, 2
      %v4186 = vrot.slane %v4153, 2
      %v4187 = vsel %vm1373, %v4185, %v4186
      %v4188 = vrot.slane %v4154, 2
      %v4189 = vrot.slane %v4155, 2
      %v4190 = vsel %vm1373, %v4188, %v4189
      %v4191 = vrot.slane %v4156, 2
      %v4192 = vrot.slane %v4157, 2
      %v4193 = vsel %vm1373, %v4191, %v4192
      %v4194 = vrot.slane %v4158, 2
      %v4195 = vrot.slane %v4159, 2
      %v4196 = vsel %vm1373, %v4194, %v4195
      %v4197 = vrot.slane %v4160, 2
      %v4198 = vrot.slane %v4161, 2
      %v4199 = vsel %vm1373, %v4197, %v4198
      %v4200 = vrot.slane %v4162, 2
      %v4201 = vrot.slane %v4163, 2
      %v4202 = vsel %vm1373, %v4200, %v4201
      %v4203 = vrot.slane %v4164, 2
      %v4204 = vrot.slane %v4165, 2
      %v4205 = vsel %vm1373, %v4203, %v4204
      %v4214 = vadd.f32 %v4134, %v4184
      %v4215 = vadd.f32 %v4135, %v4187
      %v4216 = vadd.f32 %v4136, %v4190
      %v4217 = vadd.f32 %v4137, %v4193
      %v4218 = vadd.f32 %v4138, %v4196
      %v4219 = vadd.f32 %v4139, %v4199
      %v4220 = vadd.f32 %v4140, %v4202
      %v4221 = vadd.f32 %v4141, %v4205
      %s4222 = scalar_lea.vmem %s2, 47
      %v4223 = vld [vmem:[%s4222] sm:$0x1]
      %v4225 = vlaneseq
      %v4226 = vshrl.u32 %v4225, 7
      %v4227 = vsub.s32 0, %v4226
      %v4228 = vrot.slane %v4223, %v4227
      %v4230 = vmul.f32 %v3474, %v4228
      %v4231 = vmul.f32 %v3874, %v4228
      %v4232 = vmul.f32 %v3478, %v4228
      %v4233 = vmul.f32 %v3878, %v4228
      %v4234 = vmul.f32 %v3482, %v4228
      %v4235 = vmul.f32 %v3882, %v4228
      %v4236 = vmul.f32 %v3486, %v4228
      %v4237 = vmul.f32 %v3886, %v4228
      %v4238 = vmul.f32 %v3490, %v4228
      %v4239 = vmul.f32 %v3890, %v4228
      %v4240 = vmul.f32 %v3494, %v4228
      %v4241 = vmul.f32 %v3894, %v4228
      %v4242 = vmul.f32 %v3498, %v4228
      %v4243 = vmul.f32 %v3898, %v4228
      %v4244 = vmul.f32 %v3502, %v4228
      %v4245 = vmul.f32 %v3902, %v4228
      %v4262 = vrot.slane %v4230, 2
      %v4263 = vrot.slane %v4231, 2
      %v4264 = vsel %vm1373, %v4262, %v4263
      %v4265 = vrot.slane %v4232, 2
      %v4266 = vrot.slane %v4233, 2
      %v4267 = vsel %vm1373, %v4265, %v4266
      %v4268 = vrot.slane %v4234, 2
      %v4269 = vrot.slane %v4235, 2
      %v4270 = vsel %vm1373, %v4268, %v4269
      %v4271 = vrot.slane %v4236, 2
      %v4272 = vrot.slane %v4237, 2
      %v4273 = vsel %vm1373, %v4271, %v4272
      %v4274 = vrot.slane %v4238, 2
      %v4275 = vrot.slane %v4239, 2
      %v4276 = vsel %vm1373, %v4274, %v4275
      %v4277 = vrot.slane %v4240, 2
      %v4278 = vrot.slane %v4241, 2
      %v4279 = vsel %vm1373, %v4277, %v4278
      %v4280 = vrot.slane %v4242, 2
      %v4281 = vrot.slane %v4243, 2
      %v4282 = vsel %vm1373, %v4280, %v4281
      %v4283 = vrot.slane %v4244, 2
      %v4284 = vrot.slane %v4245, 2
      %v4285 = vsel %vm1373, %v4283, %v4284
      %v4294 = vadd.f32 %v4214, %v4264
      %v4295 = vadd.f32 %v4215, %v4267
      %v4296 = vadd.f32 %v4216, %v4270
      %v4297 = vadd.f32 %v4217, %v4273
      %v4298 = vadd.f32 %v4218, %v4276
      %v4299 = vadd.f32 %v4219, %v4279
      %v4300 = vadd.f32 %v4220, %v4282
      %v4301 = vadd.f32 %v4221, %v4285
      %s4302 = scalar_lea.vmem %s2, 48
      %v4303 = vld [vmem:[%s4302] sm:$0x1]
      %4305 = vset.pattern.permute.xlu0 0
      %4306 = vperm.xlu0 %4305, %v3290
      %v4307 = vpop.permute.xlu0 %4306
      %v4310 = vlaneseq
      %v4311 = vshrl.u32 %v4310, 7
      %v4312 = vsub.s32 0, %v4311
      %v4313 = vrot.slane %v4303, %v4312
      %v4315 = vmul.f32 %v3304, %v4313
      %v4316 = vmul.f32 %v3309, %v4313
      %v4317 = vmul.f32 %v3314, %v4313
      %v4318 = vmul.f32 %v3319, %v4313
      %v4319 = vmul.f32 %v3324, %v4313
      %v4320 = vmul.f32 %v3329, %v4313
      %v4321 = vmul.f32 %v3334, %v4313
      %v4322 = vmul.f32 %v4307, %v4313
      %v4323 = vadd.f32 %v4294, %v4315
      %v4324 = vadd.f32 %v4295, %v4316
      %v4325 = vadd.f32 %v4296, %v4317
      %v4326 = vadd.f32 %v4297, %v4318
      %v4327 = vadd.f32 %v4298, %v4319
      %v4328 = vadd.f32 %v4299, %v4320
      %v4329 = vadd.f32 %v4300, %v4321
      %v4330 = vadd.f32 %v4301, %v4322
      %s4331 = scalar_lea.vmem %s2, 49
      %v4332 = vld [vmem:[%s4331] sm:$0x1]
      %4333 = vset.pattern.permute.xlu0 1
      %4334 = vperm.xlu0 %4333, %v3290
      %v4335 = vpop.permute.xlu0 %4334
      %v4338 = vlaneseq
      %v4339 = vshrl.u32 %v4338, 7
      %v4340 = vsub.s32 0, %v4339
      %v4341 = vrot.slane %v4332, %v4340
      %v4343 = vmul.f32 %v3366, %v4341
      %v4344 = vmul.f32 %v3370, %v4341
      %v4345 = vmul.f32 %v3374, %v4341
      %v4346 = vmul.f32 %v3378, %v4341
      %v4347 = vmul.f32 %v3382, %v4341
      %v4348 = vmul.f32 %v3386, %v4341
      %v4349 = vmul.f32 %v3390, %v4341
      %v4350 = vmul.f32 %v4335, %v4341
      %v4351 = vadd.f32 %v4323, %v4343
      %v4352 = vadd.f32 %v4324, %v4344
      %v4353 = vadd.f32 %v4325, %v4345
      %v4354 = vadd.f32 %v4326, %v4346
      %v4355 = vadd.f32 %v4327, %v4347
      %v4356 = vadd.f32 %v4328, %v4348
      %v4357 = vadd.f32 %v4329, %v4349
      %v4358 = vadd.f32 %v4330, %v4350
      %s4359 = scalar_lea.vmem %s2, 50
      %v4360 = vld [vmem:[%s4359] sm:$0x1]
      %4361 = vset.pattern.permute.xlu0 2
      %4362 = vperm.xlu0 %4361, %v3290
      %v4363 = vpop.permute.xlu0 %4362
      %v4366 = vlaneseq
      %v4367 = vshrl.u32 %v4366, 7
      %v4368 = vsub.s32 0, %v4367
      %v4369 = vrot.slane %v4360, %v4368
      %v4371 = vmul.f32 %v3422, %v4369
      %v4372 = vmul.f32 %v3426, %v4369
      %v4373 = vmul.f32 %v3430, %v4369
      %v4374 = vmul.f32 %v3434, %v4369
      %v4375 = vmul.f32 %v3438, %v4369
      %v4376 = vmul.f32 %v3442, %v4369
      %v4377 = vmul.f32 %v3446, %v4369
      %v4378 = vmul.f32 %v4363, %v4369
      %v4379 = vadd.f32 %v4351, %v4371
      %v4380 = vadd.f32 %v4352, %v4372
      %v4381 = vadd.f32 %v4353, %v4373
      %v4382 = vadd.f32 %v4354, %v4374
      %v4383 = vadd.f32 %v4355, %v4375
      %v4384 = vadd.f32 %v4356, %v4376
      %v4385 = vadd.f32 %v4357, %v4377
      %v4386 = vadd.f32 %v4358, %v4378
      %s4387 = scalar_lea.vmem %s2, 51
      %v4388 = vld [vmem:[%s4387] sm:$0x1]
      %4389 = vset.pattern.permute.xlu0 3
      %4390 = vperm.xlu0 %4389, %v3290
      %v4391 = vpop.permute.xlu0 %4390
      %v4394 = vlaneseq
      %v4395 = vshrl.u32 %v4394, 7
      %v4396 = vsub.s32 0, %v4395
      %v4397 = vrot.slane %v4388, %v4396
      %v4399 = vmul.f32 %v3478, %v4397
      %v4400 = vmul.f32 %v3482, %v4397
      %v4401 = vmul.f32 %v3486, %v4397
      %v4402 = vmul.f32 %v3490, %v4397
      %v4403 = vmul.f32 %v3494, %v4397
      %v4404 = vmul.f32 %v3498, %v4397
      %v4405 = vmul.f32 %v3502, %v4397
      %v4406 = vmul.f32 %v4391, %v4397
      %v4407 = vadd.f32 %v4379, %v4399
      %v4408 = vadd.f32 %v4380, %v4400
      %v4409 = vadd.f32 %v4381, %v4401
      %v4410 = vadd.f32 %v4382, %v4402
      %v4411 = vadd.f32 %v4383, %v4403
      %v4412 = vadd.f32 %v4384, %v4404
      %v4413 = vadd.f32 %v4385, %v4405
      %v4414 = vadd.f32 %v4386, %v4406
      %s4415 = scalar_lea.vmem %s2, 52
      %v4416 = vld [vmem:[%s4415] sm:$0x1]
      %4418 = vset.pattern.permute.xlu0 0
      %4419 = vperm.xlu0 %4418, %v3291
      %v4420 = vpop.permute.xlu0 %4419
      %v4423 = vlaneseq
      %v4424 = vshrl.u32 %v4423, 7
      %v4425 = vsub.s32 0, %v4424
      %v4426 = vrot.slane %v4416, %v4425
      %v4428 = vmul.f32 %v3304, %v4426
      %v4429 = vmul.f32 %v3536, %v4426
      %v4430 = vmul.f32 %v3309, %v4426
      %v4431 = vmul.f32 %v3541, %v4426
      %v4432 = vmul.f32 %v3314, %v4426
      %v4433 = vmul.f32 %v3546, %v4426
      %v4434 = vmul.f32 %v3319, %v4426
      %v4435 = vmul.f32 %v3551, %v4426
      %v4436 = vmul.f32 %v3324, %v4426
      %v4437 = vmul.f32 %v3556, %v4426
      %v4438 = vmul.f32 %v3329, %v4426
      %v4439 = vmul.f32 %v3561, %v4426
      %v4440 = vmul.f32 %v3334, %v4426
      %v4441 = vmul.f32 %v3566, %v4426
      %v4442 = vmul.f32 %v4307, %v4426
      %v4443 = vmul.f32 %v4420, %v4426
      %v4460 = vrot.slane %v4428, 1
      %v4461 = vrot.slane %v4429, 1
      %v4462 = vsel %vm956, %v4460, %v4461
      %v4463 = vrot.slane %v4430, 1
      %v4464 = vrot.slane %v4431, 1
      %v4465 = vsel %vm956, %v4463, %v4464
      %v4466 = vrot.slane %v4432, 1
      %v4467 = vrot.slane %v4433, 1
      %v4468 = vsel %vm956, %v4466, %v4467
      %v4469 = vrot.slane %v4434, 1
      %v4470 = vrot.slane %v4435, 1
      %v4471 = vsel %vm956, %v4469, %v4470
      %v4472 = vrot.slane %v4436, 1
      %v4473 = vrot.slane %v4437, 1
      %v4474 = vsel %vm956, %v4472, %v4473
      %v4475 = vrot.slane %v4438, 1
      %v4476 = vrot.slane %v4439, 1
      %v4477 = vsel %vm956, %v4475, %v4476
      %v4478 = vrot.slane %v4440, 1
      %v4479 = vrot.slane %v4441, 1
      %v4480 = vsel %vm956, %v4478, %v4479
      %v4481 = vrot.slane %v4442, 1
      %v4482 = vrot.slane %v4443, 1
      %v4483 = vsel %vm956, %v4481, %v4482
      %v4492 = vadd.f32 %v4407, %v4462
      %v4493 = vadd.f32 %v4408, %v4465
      %v4494 = vadd.f32 %v4409, %v4468
      %v4495 = vadd.f32 %v4410, %v4471
      %v4496 = vadd.f32 %v4411, %v4474
      %v4497 = vadd.f32 %v4412, %v4477
      %v4498 = vadd.f32 %v4413, %v4480
      %v4499 = vadd.f32 %v4414, %v4483
      %s4500 = scalar_lea.vmem %s2, 53
      %v4501 = vld [vmem:[%s4500] sm:$0x1]
      %4502 = vset.pattern.permute.xlu0 1
      %4503 = vperm.xlu0 %4502, %v3291
      %v4504 = vpop.permute.xlu0 %4503
      %v4507 = vlaneseq
      %v4508 = vshrl.u32 %v4507, 7
      %v4509 = vsub.s32 0, %v4508
      %v4510 = vrot.slane %v4501, %v4509
      %v4512 = vmul.f32 %v3366, %v4510
      %v4513 = vmul.f32 %v3654, %v4510
      %v4514 = vmul.f32 %v3370, %v4510
      %v4515 = vmul.f32 %v3658, %v4510
      %v4516 = vmul.f32 %v3374, %v4510
      %v4517 = vmul.f32 %v3662, %v4510
      %v4518 = vmul.f32 %v3378, %v4510
      %v4519 = vmul.f32 %v3666, %v4510
      %v4520 = vmul.f32 %v3382, %v4510
      %v4521 = vmul.f32 %v3670, %v4510
      %v4522 = vmul.f32 %v3386, %v4510
      %v4523 = vmul.f32 %v3674, %v4510
      %v4524 = vmul.f32 %v3390, %v4510
      %v4525 = vmul.f32 %v3678, %v4510
      %v4526 = vmul.f32 %v4335, %v4510
      %v4527 = vmul.f32 %v4504, %v4510
      %v4544 = vrot.slane %v4512, 1
      %v4545 = vrot.slane %v4513, 1
      %v4546 = vsel %vm956, %v4544, %v4545
      %v4547 = vrot.slane %v4514, 1
      %v4548 = vrot.slane %v4515, 1
      %v4549 = vsel %vm956, %v4547, %v4548
      %v4550 = vrot.slane %v4516, 1
      %v4551 = vrot.slane %v4517, 1
      %v4552 = vsel %vm956, %v4550, %v4551
      %v4553 = vrot.slane %v4518, 1
      %v4554 = vrot.slane %v4519, 1
      %v4555 = vsel %vm956, %v4553, %v4554
      %v4556 = vrot.slane %v4520, 1
      %v4557 = vrot.slane %v4521, 1
      %v4558 = vsel %vm956, %v4556, %v4557
      %v4559 = vrot.slane %v4522, 1
      %v4560 = vrot.slane %v4523, 1
      %v4561 = vsel %vm956, %v4559, %v4560
      %v4562 = vrot.slane %v4524, 1
      %v4563 = vrot.slane %v4525, 1
      %v4564 = vsel %vm956, %v4562, %v4563
      %v4565 = vrot.slane %v4526, 1
      %v4566 = vrot.slane %v4527, 1
      %v4567 = vsel %vm956, %v4565, %v4566
      %v4576 = vadd.f32 %v4492, %v4546
      %v4577 = vadd.f32 %v4493, %v4549
      %v4578 = vadd.f32 %v4494, %v4552
      %v4579 = vadd.f32 %v4495, %v4555
      %v4580 = vadd.f32 %v4496, %v4558
      %v4581 = vadd.f32 %v4497, %v4561
      %v4582 = vadd.f32 %v4498, %v4564
      %v4583 = vadd.f32 %v4499, %v4567
      %s4584 = scalar_lea.vmem %s2, 54
      %v4585 = vld [vmem:[%s4584] sm:$0x1]
      %4586 = vset.pattern.permute.xlu0 2
      %4587 = vperm.xlu0 %4586, %v3291
      %v4588 = vpop.permute.xlu0 %4587
      %v4591 = vlaneseq
      %v4592 = vshrl.u32 %v4591, 7
      %v4593 = vsub.s32 0, %v4592
      %v4594 = vrot.slane %v4585, %v4593
      %v4596 = vmul.f32 %v3422, %v4594
      %v4597 = vmul.f32 %v3766, %v4594
      %v4598 = vmul.f32 %v3426, %v4594
      %v4599 = vmul.f32 %v3770, %v4594
      %v4600 = vmul.f32 %v3430, %v4594
      %v4601 = vmul.f32 %v3774, %v4594
      %v4602 = vmul.f32 %v3434, %v4594
      %v4603 = vmul.f32 %v3778, %v4594
      %v4604 = vmul.f32 %v3438, %v4594
      %v4605 = vmul.f32 %v3782, %v4594
      %v4606 = vmul.f32 %v3442, %v4594
      %v4607 = vmul.f32 %v3786, %v4594
      %v4608 = vmul.f32 %v3446, %v4594
      %v4609 = vmul.f32 %v3790, %v4594
      %v4610 = vmul.f32 %v4363, %v4594
      %v4611 = vmul.f32 %v4588, %v4594
      %v4628 = vrot.slane %v4596, 1
      %v4629 = vrot.slane %v4597, 1
      %v4630 = vsel %vm956, %v4628, %v4629
      %v4631 = vrot.slane %v4598, 1
      %v4632 = vrot.slane %v4599, 1
      %v4633 = vsel %vm956, %v4631, %v4632
      %v4634 = vrot.slane %v4600, 1
      %v4635 = vrot.slane %v4601, 1
      %v4636 = vsel %vm956, %v4634, %v4635
      %v4637 = vrot.slane %v4602, 1
      %v4638 = vrot.slane %v4603, 1
      %v4639 = vsel %vm956, %v4637, %v4638
      %v4640 = vrot.slane %v4604, 1
      %v4641 = vrot.slane %v4605, 1
      %v4642 = vsel %vm956, %v4640, %v4641
      %v4643 = vrot.slane %v4606, 1
      %v4644 = vrot.slane %v4607, 1
      %v4645 = vsel %vm956, %v4643, %v4644
      %v4646 = vrot.slane %v4608, 1
      %v4647 = vrot.slane %v4609, 1
      %v4648 = vsel %vm956, %v4646, %v4647
      %v4649 = vrot.slane %v4610, 1
      %v4650 = vrot.slane %v4611, 1
      %v4651 = vsel %vm956, %v4649, %v4650
      %v4660 = vadd.f32 %v4576, %v4630
      %v4661 = vadd.f32 %v4577, %v4633
      %v4662 = vadd.f32 %v4578, %v4636
      %v4663 = vadd.f32 %v4579, %v4639
      %v4664 = vadd.f32 %v4580, %v4642
      %v4665 = vadd.f32 %v4581, %v4645
      %v4666 = vadd.f32 %v4582, %v4648
      %v4667 = vadd.f32 %v4583, %v4651
      %s4668 = scalar_lea.vmem %s2, 55
      %v4669 = vld [vmem:[%s4668] sm:$0x1]
      %4670 = vset.pattern.permute.xlu0 3
      %4671 = vperm.xlu0 %4670, %v3291
      %v4672 = vpop.permute.xlu0 %4671
      %v4675 = vlaneseq
      %v4676 = vshrl.u32 %v4675, 7
      %v4677 = vsub.s32 0, %v4676
      %v4678 = vrot.slane %v4669, %v4677
      %v4680 = vmul.f32 %v3478, %v4678
      %v4681 = vmul.f32 %v3878, %v4678
      %v4682 = vmul.f32 %v3482, %v4678
      %v4683 = vmul.f32 %v3882, %v4678
      %v4684 = vmul.f32 %v3486, %v4678
      %v4685 = vmul.f32 %v3886, %v4678
      %v4686 = vmul.f32 %v3490, %v4678
      %v4687 = vmul.f32 %v3890, %v4678
      %v4688 = vmul.f32 %v3494, %v4678
      %v4689 = vmul.f32 %v3894, %v4678
      %v4690 = vmul.f32 %v3498, %v4678
      %v4691 = vmul.f32 %v3898, %v4678
      %v4692 = vmul.f32 %v3502, %v4678
      %v4693 = vmul.f32 %v3902, %v4678
      %v4694 = vmul.f32 %v4391, %v4678
      %v4695 = vmul.f32 %v4672, %v4678
      %v4712 = vrot.slane %v4680, 1
      %v4713 = vrot.slane %v4681, 1
      %v4714 = vsel %vm956, %v4712, %v4713
      %v4715 = vrot.slane %v4682, 1
      %v4716 = vrot.slane %v4683, 1
      %v4717 = vsel %vm956, %v4715, %v4716
      %v4718 = vrot.slane %v4684, 1
      %v4719 = vrot.slane %v4685, 1
      %v4720 = vsel %vm956, %v4718, %v4719
      %v4721 = vrot.slane %v4686, 1
      %v4722 = vrot.slane %v4687, 1
      %v4723 = vsel %vm956, %v4721, %v4722
      %v4724 = vrot.slane %v4688, 1
      %v4725 = vrot.slane %v4689, 1
      %v4726 = vsel %vm956, %v4724, %v4725
      %v4727 = vrot.slane %v4690, 1
      %v4728 = vrot.slane %v4691, 1
      %v4729 = vsel %vm956, %v4727, %v4728
      %v4730 = vrot.slane %v4692, 1
      %v4731 = vrot.slane %v4693, 1
      %v4732 = vsel %vm956, %v4730, %v4731
      %v4733 = vrot.slane %v4694, 1
      %v4734 = vrot.slane %v4695, 1
      %v4735 = vsel %vm956, %v4733, %v4734
      %v4744 = vadd.f32 %v4660, %v4714
      %v4745 = vadd.f32 %v4661, %v4717
      %v4746 = vadd.f32 %v4662, %v4720
      %v4747 = vadd.f32 %v4663, %v4723
      %v4748 = vadd.f32 %v4664, %v4726
      %v4749 = vadd.f32 %v4665, %v4729
      %v4750 = vadd.f32 %v4666, %v4732
      %v4751 = vadd.f32 %v4667, %v4735
      %s4752 = scalar_lea.vmem %s2, 56
      %v4753 = vld [vmem:[%s4752] sm:$0x1]
      %v4755 = vlaneseq
      %v4756 = vshrl.u32 %v4755, 7
      %v4757 = vsub.s32 0, %v4756
      %v4758 = vrot.slane %v4753, %v4757
      %v4760 = vmul.f32 %v3304, %v4758
      %v4761 = vmul.f32 %v3536, %v4758
      %v4762 = vmul.f32 %v3309, %v4758
      %v4763 = vmul.f32 %v3541, %v4758
      %v4764 = vmul.f32 %v3314, %v4758
      %v4765 = vmul.f32 %v3546, %v4758
      %v4766 = vmul.f32 %v3319, %v4758
      %v4767 = vmul.f32 %v3551, %v4758
      %v4768 = vmul.f32 %v3324, %v4758
      %v4769 = vmul.f32 %v3556, %v4758
      %v4770 = vmul.f32 %v3329, %v4758
      %v4771 = vmul.f32 %v3561, %v4758
      %v4772 = vmul.f32 %v3334, %v4758
      %v4773 = vmul.f32 %v3566, %v4758
      %v4774 = vmul.f32 %v4307, %v4758
      %v4775 = vmul.f32 %v4420, %v4758
      %v4792 = vrot.slane %v4760, 2
      %v4793 = vrot.slane %v4761, 2
      %v4794 = vsel %vm1373, %v4792, %v4793
      %v4795 = vrot.slane %v4762, 2
      %v4796 = vrot.slane %v4763, 2
      %v4797 = vsel %vm1373, %v4795, %v4796
      %v4798 = vrot.slane %v4764, 2
      %v4799 = vrot.slane %v4765, 2
      %v4800 = vsel %vm1373, %v4798, %v4799
      %v4801 = vrot.slane %v4766, 2
      %v4802 = vrot.slane %v4767, 2
      %v4803 = vsel %vm1373, %v4801, %v4802
      %v4804 = vrot.slane %v4768, 2
      %v4805 = vrot.slane %v4769, 2
      %v4806 = vsel %vm1373, %v4804, %v4805
      %v4807 = vrot.slane %v4770, 2
      %v4808 = vrot.slane %v4771, 2
      %v4809 = vsel %vm1373, %v4807, %v4808
      %v4810 = vrot.slane %v4772, 2
      %v4811 = vrot.slane %v4773, 2
      %v4812 = vsel %vm1373, %v4810, %v4811
      %v4813 = vrot.slane %v4774, 2
      %v4814 = vrot.slane %v4775, 2
      %v4815 = vsel %vm1373, %v4813, %v4814
      %v4824 = vadd.f32 %v4744, %v4794
      %v4825 = vadd.f32 %v4745, %v4797
      %v4826 = vadd.f32 %v4746, %v4800
      %v4827 = vadd.f32 %v4747, %v4803
      %v4828 = vadd.f32 %v4748, %v4806
      %v4829 = vadd.f32 %v4749, %v4809
      %v4830 = vadd.f32 %v4750, %v4812
      %v4831 = vadd.f32 %v4751, %v4815
      %s4832 = scalar_lea.vmem %s2, 57
      %v4833 = vld [vmem:[%s4832] sm:$0x1]
      %v4835 = vlaneseq
      %v4836 = vshrl.u32 %v4835, 7
      %v4837 = vsub.s32 0, %v4836
      %v4838 = vrot.slane %v4833, %v4837
      %v4840 = vmul.f32 %v3366, %v4838
      %v4841 = vmul.f32 %v3654, %v4838
      %v4842 = vmul.f32 %v3370, %v4838
      %v4843 = vmul.f32 %v3658, %v4838
      %v4844 = vmul.f32 %v3374, %v4838
      %v4845 = vmul.f32 %v3662, %v4838
      %v4846 = vmul.f32 %v3378, %v4838
      %v4847 = vmul.f32 %v3666, %v4838
      %v4848 = vmul.f32 %v3382, %v4838
      %v4849 = vmul.f32 %v3670, %v4838
      %v4850 = vmul.f32 %v3386, %v4838
      %v4851 = vmul.f32 %v3674, %v4838
      %v4852 = vmul.f32 %v3390, %v4838
      %v4853 = vmul.f32 %v3678, %v4838
      %v4854 = vmul.f32 %v4335, %v4838
      %v4855 = vmul.f32 %v4504, %v4838
      %v4872 = vrot.slane %v4840, 2
      %v4873 = vrot.slane %v4841, 2
      %v4874 = vsel %vm1373, %v4872, %v4873
      %v4875 = vrot.slane %v4842, 2
      %v4876 = vrot.slane %v4843, 2
      %v4877 = vsel %vm1373, %v4875, %v4876
      %v4878 = vrot.slane %v4844, 2
      %v4879 = vrot.slane %v4845, 2
      %v4880 = vsel %vm1373, %v4878, %v4879
      %v4881 = vrot.slane %v4846, 2
      %v4882 = vrot.slane %v4847, 2
      %v4883 = vsel %vm1373, %v4881, %v4882
      %v4884 = vrot.slane %v4848, 2
      %v4885 = vrot.slane %v4849, 2
      %v4886 = vsel %vm1373, %v4884, %v4885
      %v4887 = vrot.slane %v4850, 2
      %v4888 = vrot.slane %v4851, 2
      %v4889 = vsel %vm1373, %v4887, %v4888
      %v4890 = vrot.slane %v4852, 2
      %v4891 = vrot.slane %v4853, 2
      %v4892 = vsel %vm1373, %v4890, %v4891
      %v4893 = vrot.slane %v4854, 2
      %v4894 = vrot.slane %v4855, 2
      %v4895 = vsel %vm1373, %v4893, %v4894
      %v4904 = vadd.f32 %v4824, %v4874
      %v4905 = vadd.f32 %v4825, %v4877
      %v4906 = vadd.f32 %v4826, %v4880
      %v4907 = vadd.f32 %v4827, %v4883
      %v4908 = vadd.f32 %v4828, %v4886
      %v4909 = vadd.f32 %v4829, %v4889
      %v4910 = vadd.f32 %v4830, %v4892
      %v4911 = vadd.f32 %v4831, %v4895
      %s4912 = scalar_lea.vmem %s2, 58
      %v4913 = vld [vmem:[%s4912] sm:$0x1]
      %v4915 = vlaneseq
      %v4916 = vshrl.u32 %v4915, 7
      %v4917 = vsub.s32 0, %v4916
      %v4918 = vrot.slane %v4913, %v4917
      %v4920 = vmul.f32 %v3422, %v4918
      %v4921 = vmul.f32 %v3766, %v4918
      %v4922 = vmul.f32 %v3426, %v4918
      %v4923 = vmul.f32 %v3770, %v4918
      %v4924 = vmul.f32 %v3430, %v4918
      %v4925 = vmul.f32 %v3774, %v4918
      %v4926 = vmul.f32 %v3434, %v4918
      %v4927 = vmul.f32 %v3778, %v4918
      %v4928 = vmul.f32 %v3438, %v4918
      %v4929 = vmul.f32 %v3782, %v4918
      %v4930 = vmul.f32 %v3442, %v4918
      %v4931 = vmul.f32 %v3786, %v4918
      %v4932 = vmul.f32 %v3446, %v4918
      %v4933 = vmul.f32 %v3790, %v4918
      %v4934 = vmul.f32 %v4363, %v4918
      %v4935 = vmul.f32 %v4588, %v4918
      %v4952 = vrot.slane %v4920, 2
      %v4953 = vrot.slane %v4921, 2
      %v4954 = vsel %vm1373, %v4952, %v4953
      %v4955 = vrot.slane %v4922, 2
      %v4956 = vrot.slane %v4923, 2
      %v4957 = vsel %vm1373, %v4955, %v4956
      %v4958 = vrot.slane %v4924, 2
      %v4959 = vrot.slane %v4925, 2
      %v4960 = vsel %vm1373, %v4958, %v4959
      %v4961 = vrot.slane %v4926, 2
      %v4962 = vrot.slane %v4927, 2
      %v4963 = vsel %vm1373, %v4961, %v4962
      %v4964 = vrot.slane %v4928, 2
      %v4965 = vrot.slane %v4929, 2
      %v4966 = vsel %vm1373, %v4964, %v4965
      %v4967 = vrot.slane %v4930, 2
      %v4968 = vrot.slane %v4931, 2
      %v4969 = vsel %vm1373, %v4967, %v4968
      %v4970 = vrot.slane %v4932, 2
      %v4971 = vrot.slane %v4933, 2
      %v4972 = vsel %vm1373, %v4970, %v4971
      %v4973 = vrot.slane %v4934, 2
      %v4974 = vrot.slane %v4935, 2
      %v4975 = vsel %vm1373, %v4973, %v4974
      %v4984 = vadd.f32 %v4904, %v4954
      %v4985 = vadd.f32 %v4905, %v4957
      %v4986 = vadd.f32 %v4906, %v4960
      %v4987 = vadd.f32 %v4907, %v4963
      %v4988 = vadd.f32 %v4908, %v4966
      %v4989 = vadd.f32 %v4909, %v4969
      %v4990 = vadd.f32 %v4910, %v4972
      %v4991 = vadd.f32 %v4911, %v4975
      %s4992 = scalar_lea.vmem %s2, 59
      %v4993 = vld [vmem:[%s4992] sm:$0x1]
      %v4995 = vlaneseq
      %v4996 = vshrl.u32 %v4995, 7
      %v4997 = vsub.s32 0, %v4996
      %v4998 = vrot.slane %v4993, %v4997
      %v5000 = vmul.f32 %v3478, %v4998
      %v5001 = vmul.f32 %v3878, %v4998
      %v5002 = vmul.f32 %v3482, %v4998
      %v5003 = vmul.f32 %v3882, %v4998
      %v5004 = vmul.f32 %v3486, %v4998
      %v5005 = vmul.f32 %v3886, %v4998
      %v5006 = vmul.f32 %v3490, %v4998
      %v5007 = vmul.f32 %v3890, %v4998
      %v5008 = vmul.f32 %v3494, %v4998
      %v5009 = vmul.f32 %v3894, %v4998
      %v5010 = vmul.f32 %v3498, %v4998
      %v5011 = vmul.f32 %v3898, %v4998
      %v5012 = vmul.f32 %v3502, %v4998
      %v5013 = vmul.f32 %v3902, %v4998
      %v5014 = vmul.f32 %v4391, %v4998
      %v5015 = vmul.f32 %v4672, %v4998
      %v5032 = vrot.slane %v5000, 2
      %v5033 = vrot.slane %v5001, 2
      %v5034 = vsel %vm1373, %v5032, %v5033
      %v5035 = vrot.slane %v5002, 2
      %v5036 = vrot.slane %v5003, 2
      %v5037 = vsel %vm1373, %v5035, %v5036
      %v5038 = vrot.slane %v5004, 2
      %v5039 = vrot.slane %v5005, 2
      %v5040 = vsel %vm1373, %v5038, %v5039
      %v5041 = vrot.slane %v5006, 2
      %v5042 = vrot.slane %v5007, 2
      %v5043 = vsel %vm1373, %v5041, %v5042
      %v5044 = vrot.slane %v5008, 2
      %v5045 = vrot.slane %v5009, 2
      %v5046 = vsel %vm1373, %v5044, %v5045
      %v5047 = vrot.slane %v5010, 2
      %v5048 = vrot.slane %v5011, 2
      %v5049 = vsel %vm1373, %v5047, %v5048
      %v5050 = vrot.slane %v5012, 2
      %v5051 = vrot.slane %v5013, 2
      %v5052 = vsel %vm1373, %v5050, %v5051
      %v5053 = vrot.slane %v5014, 2
      %v5054 = vrot.slane %v5015, 2
      %v5055 = vsel %vm1373, %v5053, %v5054
      %v5064 = vadd.f32 %v4984, %v5034
      %v5065 = vadd.f32 %v4985, %v5037
      %v5066 = vadd.f32 %v4986, %v5040
      %v5067 = vadd.f32 %v4987, %v5043
      %v5068 = vadd.f32 %v4988, %v5046
      %v5069 = vadd.f32 %v4989, %v5049
      %v5070 = vadd.f32 %v4990, %v5052
      %v5071 = vadd.f32 %v4991, %v5055
      %s5072 = scalar_lea.vmem %s2, 60
      %v5073 = vld [vmem:[%s5072] sm:$0x1]
      %5075 = vset.pattern.permute.xlu0 0
      %5076 = vperm.xlu0 %5075, %v3292
      %v5077 = vpop.permute.xlu0 %5076
      %v5080 = vlaneseq
      %v5081 = vshrl.u32 %v5080, 7
      %v5082 = vsub.s32 0, %v5081
      %v5083 = vrot.slane %v5073, %v5082
      %v5085 = vmul.f32 %v3309, %v5083
      %v5086 = vmul.f32 %v3314, %v5083
      %v5087 = vmul.f32 %v3319, %v5083
      %v5088 = vmul.f32 %v3324, %v5083
      %v5089 = vmul.f32 %v3329, %v5083
      %v5090 = vmul.f32 %v3334, %v5083
      %v5091 = vmul.f32 %v4307, %v5083
      %v5092 = vmul.f32 %v5077, %v5083
      %v5093 = vadd.f32 %v5064, %v5085
      %v5094 = vadd.f32 %v5065, %v5086
      %v5095 = vadd.f32 %v5066, %v5087
      %v5096 = vadd.f32 %v5067, %v5088
      %v5097 = vadd.f32 %v5068, %v5089
      %v5098 = vadd.f32 %v5069, %v5090
      %v5099 = vadd.f32 %v5070, %v5091
      %v5100 = vadd.f32 %v5071, %v5092
      %s5101 = scalar_lea.vmem %s2, 61
      %v5102 = vld [vmem:[%s5101] sm:$0x1]
      %5103 = vset.pattern.permute.xlu0 1
      %5104 = vperm.xlu0 %5103, %v3292
      %v5105 = vpop.permute.xlu0 %5104
      %v5108 = vlaneseq
      %v5109 = vshrl.u32 %v5108, 7
      %v5110 = vsub.s32 0, %v5109
      %v5111 = vrot.slane %v5102, %v5110
      %v5113 = vmul.f32 %v3370, %v5111
      %v5114 = vmul.f32 %v3374, %v5111
      %v5115 = vmul.f32 %v3378, %v5111
      %v5116 = vmul.f32 %v3382, %v5111
      %v5117 = vmul.f32 %v3386, %v5111
      %v5118 = vmul.f32 %v3390, %v5111
      %v5119 = vmul.f32 %v4335, %v5111
      %v5120 = vmul.f32 %v5105, %v5111
      %v5121 = vadd.f32 %v5093, %v5113
      %v5122 = vadd.f32 %v5094, %v5114
      %v5123 = vadd.f32 %v5095, %v5115
      %v5124 = vadd.f32 %v5096, %v5116
      %v5125 = vadd.f32 %v5097, %v5117
      %v5126 = vadd.f32 %v5098, %v5118
      %v5127 = vadd.f32 %v5099, %v5119
      %v5128 = vadd.f32 %v5100, %v5120
      %s5129 = scalar_lea.vmem %s2, 62
      %v5130 = vld [vmem:[%s5129] sm:$0x1]
      %5131 = vset.pattern.permute.xlu0 2
      %5132 = vperm.xlu0 %5131, %v3292
      %v5133 = vpop.permute.xlu0 %5132
      %v5136 = vlaneseq
      %v5137 = vshrl.u32 %v5136, 7
      %v5138 = vsub.s32 0, %v5137
      %v5139 = vrot.slane %v5130, %v5138
      %v5141 = vmul.f32 %v3426, %v5139
      %v5142 = vmul.f32 %v3430, %v5139
      %v5143 = vmul.f32 %v3434, %v5139
      %v5144 = vmul.f32 %v3438, %v5139
      %v5145 = vmul.f32 %v3442, %v5139
      %v5146 = vmul.f32 %v3446, %v5139
      %v5147 = vmul.f32 %v4363, %v5139
      %v5148 = vmul.f32 %v5133, %v5139
      %v5149 = vadd.f32 %v5121, %v5141
      %v5150 = vadd.f32 %v5122, %v5142
      %v5151 = vadd.f32 %v5123, %v5143
      %v5152 = vadd.f32 %v5124, %v5144
      %v5153 = vadd.f32 %v5125, %v5145
      %v5154 = vadd.f32 %v5126, %v5146
      %v5155 = vadd.f32 %v5127, %v5147
      %v5156 = vadd.f32 %v5128, %v5148
      %s5157 = scalar_lea.vmem %s2, 63
      %v5158 = vld [vmem:[%s5157] sm:$0x1]
      %5159 = vset.pattern.permute.xlu0 3
      %5160 = vperm.xlu0 %5159, %v3292
      %v5161 = vpop.permute.xlu0 %5160
      %v5164 = vlaneseq
      %v5165 = vshrl.u32 %v5164, 7
      %v5166 = vsub.s32 0, %v5165
      %v5167 = vrot.slane %v5158, %v5166
      %v5169 = vmul.f32 %v3482, %v5167
      %v5170 = vmul.f32 %v3486, %v5167
      %v5171 = vmul.f32 %v3490, %v5167
      %v5172 = vmul.f32 %v3494, %v5167
      %v5173 = vmul.f32 %v3498, %v5167
      %v5174 = vmul.f32 %v3502, %v5167
      %v5175 = vmul.f32 %v4391, %v5167
      %v5176 = vmul.f32 %v5161, %v5167
      %v5177 = vadd.f32 %v5149, %v5169
      %v5178 = vadd.f32 %v5150, %v5170
      %v5179 = vadd.f32 %v5151, %v5171
      %v5180 = vadd.f32 %v5152, %v5172
      %v5181 = vadd.f32 %v5153, %v5173
      %v5182 = vadd.f32 %v5154, %v5174
      %v5183 = vadd.f32 %v5155, %v5175
      %v5184 = vadd.f32 %v5156, %v5176
      %s5185 = scalar_lea.vmem %s2, 64
      %v5186 = vld [vmem:[%s5185] sm:$0x1]
      %5188 = vset.pattern.permute.xlu0 0
      %5189 = vperm.xlu0 %5188, %v3293
      %v5190 = vpop.permute.xlu0 %5189
      %v5193 = vlaneseq
      %v5194 = vshrl.u32 %v5193, 7
      %v5195 = vsub.s32 0, %v5194
      %v5196 = vrot.slane %v5186, %v5195
      %v5198 = vmul.f32 %v3309, %v5196
      %v5199 = vmul.f32 %v3541, %v5196
      %v5200 = vmul.f32 %v3314, %v5196
      %v5201 = vmul.f32 %v3546, %v5196
      %v5202 = vmul.f32 %v3319, %v5196
      %v5203 = vmul.f32 %v3551, %v5196
      %v5204 = vmul.f32 %v3324, %v5196
      %v5205 = vmul.f32 %v3556, %v5196
      %v5206 = vmul.f32 %v3329, %v5196
      %v5207 = vmul.f32 %v3561, %v5196
      %v5208 = vmul.f32 %v3334, %v5196
      %v5209 = vmul.f32 %v3566, %v5196
      %v5210 = vmul.f32 %v4307, %v5196
      %v5211 = vmul.f32 %v4420, %v5196
      %v5212 = vmul.f32 %v5077, %v5196
      %v5213 = vmul.f32 %v5190, %v5196
      %v5230 = vrot.slane %v5198, 1
      %v5231 = vrot.slane %v5199, 1
      %v5232 = vsel %vm956, %v5230, %v5231
      %v5233 = vrot.slane %v5200, 1
      %v5234 = vrot.slane %v5201, 1
      %v5235 = vsel %vm956, %v5233, %v5234
      %v5236 = vrot.slane %v5202, 1
      %v5237 = vrot.slane %v5203, 1
      %v5238 = vsel %vm956, %v5236, %v5237
      %v5239 = vrot.slane %v5204, 1
      %v5240 = vrot.slane %v5205, 1
      %v5241 = vsel %vm956, %v5239, %v5240
      %v5242 = vrot.slane %v5206, 1
      %v5243 = vrot.slane %v5207, 1
      %v5244 = vsel %vm956, %v5242, %v5243
      %v5245 = vrot.slane %v5208, 1
      %v5246 = vrot.slane %v5209, 1
      %v5247 = vsel %vm956, %v5245, %v5246
      %v5248 = vrot.slane %v5210, 1
      %v5249 = vrot.slane %v5211, 1
      %v5250 = vsel %vm956, %v5248, %v5249
      %v5251 = vrot.slane %v5212, 1
      %v5252 = vrot.slane %v5213, 1
      %v5253 = vsel %vm956, %v5251, %v5252
      %v5262 = vadd.f32 %v5177, %v5232
      %v5263 = vadd.f32 %v5178, %v5235
      %v5264 = vadd.f32 %v5179, %v5238
      %v5265 = vadd.f32 %v5180, %v5241
      %v5266 = vadd.f32 %v5181, %v5244
      %v5267 = vadd.f32 %v5182, %v5247
      %v5268 = vadd.f32 %v5183, %v5250
      %v5269 = vadd.f32 %v5184, %v5253
      %s5270 = scalar_lea.vmem %s2, 65
      %v5271 = vld [vmem:[%s5270] sm:$0x1]
      %5272 = vset.pattern.permute.xlu0 1
      %5273 = vperm.xlu0 %5272, %v3293
      %v5274 = vpop.permute.xlu0 %5273
      %v5277 = vlaneseq
      %v5278 = vshrl.u32 %v5277, 7
      %v5279 = vsub.s32 0, %v5278
      %v5280 = vrot.slane %v5271, %v5279
      %v5282 = vmul.f32 %v3370, %v5280
      %v5283 = vmul.f32 %v3658, %v5280
      %v5284 = vmul.f32 %v3374, %v5280
      %v5285 = vmul.f32 %v3662, %v5280
      %v5286 = vmul.f32 %v3378, %v5280
      %v5287 = vmul.f32 %v3666, %v5280
      %v5288 = vmul.f32 %v3382, %v5280
      %v5289 = vmul.f32 %v3670, %v5280
      %v5290 = vmul.f32 %v3386, %v5280
      %v5291 = vmul.f32 %v3674, %v5280
      %v5292 = vmul.f32 %v3390, %v5280
      %v5293 = vmul.f32 %v3678, %v5280
      %v5294 = vmul.f32 %v4335, %v5280
      %v5295 = vmul.f32 %v4504, %v5280
      %v5296 = vmul.f32 %v5105, %v5280
      %v5297 = vmul.f32 %v5274, %v5280
      %v5314 = vrot.slane %v5282, 1
      %v5315 = vrot.slane %v5283, 1
      %v5316 = vsel %vm956, %v5314, %v5315
      %v5317 = vrot.slane %v5284, 1
      %v5318 = vrot.slane %v5285, 1
      %v5319 = vsel %vm956, %v5317, %v5318
      %v5320 = vrot.slane %v5286, 1
      %v5321 = vrot.slane %v5287, 1
      %v5322 = vsel %vm956, %v5320, %v5321
      %v5323 = vrot.slane %v5288, 1
      %v5324 = vrot.slane %v5289, 1
      %v5325 = vsel %vm956, %v5323, %v5324
      %v5326 = vrot.slane %v5290, 1
      %v5327 = vrot.slane %v5291, 1
      %v5328 = vsel %vm956, %v5326, %v5327
      %v5329 = vrot.slane %v5292, 1
      %v5330 = vrot.slane %v5293, 1
      %v5331 = vsel %vm956, %v5329, %v5330
      %v5332 = vrot.slane %v5294, 1
      %v5333 = vrot.slane %v5295, 1
      %v5334 = vsel %vm956, %v5332, %v5333
      %v5335 = vrot.slane %v5296, 1
      %v5336 = vrot.slane %v5297, 1
      %v5337 = vsel %vm956, %v5335, %v5336
      %v5346 = vadd.f32 %v5262, %v5316
      %v5347 = vadd.f32 %v5263, %v5319
      %v5348 = vadd.f32 %v5264, %v5322
      %v5349 = vadd.f32 %v5265, %v5325
      %v5350 = vadd.f32 %v5266, %v5328
      %v5351 = vadd.f32 %v5267, %v5331
      %v5352 = vadd.f32 %v5268, %v5334
      %v5353 = vadd.f32 %v5269, %v5337
      %s5354 = scalar_lea.vmem %s2, 66
      %v5355 = vld [vmem:[%s5354] sm:$0x1]
      %5356 = vset.pattern.permute.xlu0 2
      %5357 = vperm.xlu0 %5356, %v3293
      %v5358 = vpop.permute.xlu0 %5357
      %v5361 = vlaneseq
      %v5362 = vshrl.u32 %v5361, 7
      %v5363 = vsub.s32 0, %v5362
      %v5364 = vrot.slane %v5355, %v5363
      %v5366 = vmul.f32 %v3426, %v5364
      %v5367 = vmul.f32 %v3770, %v5364
      %v5368 = vmul.f32 %v3430, %v5364
      %v5369 = vmul.f32 %v3774, %v5364
      %v5370 = vmul.f32 %v3434, %v5364
      %v5371 = vmul.f32 %v3778, %v5364
      %v5372 = vmul.f32 %v3438, %v5364
      %v5373 = vmul.f32 %v3782, %v5364
      %v5374 = vmul.f32 %v3442, %v5364
      %v5375 = vmul.f32 %v3786, %v5364
      %v5376 = vmul.f32 %v3446, %v5364
      %v5377 = vmul.f32 %v3790, %v5364
      %v5378 = vmul.f32 %v4363, %v5364
      %v5379 = vmul.f32 %v4588, %v5364
      %v5380 = vmul.f32 %v5133, %v5364
      %v5381 = vmul.f32 %v5358, %v5364
      %v5398 = vrot.slane %v5366, 1
      %v5399 = vrot.slane %v5367, 1
      %v5400 = vsel %vm956, %v5398, %v5399
      %v5401 = vrot.slane %v5368, 1
      %v5402 = vrot.slane %v5369, 1
      %v5403 = vsel %vm956, %v5401, %v5402
      %v5404 = vrot.slane %v5370, 1
      %v5405 = vrot.slane %v5371, 1
      %v5406 = vsel %vm956, %v5404, %v5405
      %v5407 = vrot.slane %v5372, 1
      %v5408 = vrot.slane %v5373, 1
      %v5409 = vsel %vm956, %v5407, %v5408
      %v5410 = vrot.slane %v5374, 1
      %v5411 = vrot.slane %v5375, 1
      %v5412 = vsel %vm956, %v5410, %v5411
      %v5413 = vrot.slane %v5376, 1
      %v5414 = vrot.slane %v5377, 1
      %v5415 = vsel %vm956, %v5413, %v5414
      %v5416 = vrot.slane %v5378, 1
      %v5417 = vrot.slane %v5379, 1
      %v5418 = vsel %vm956, %v5416, %v5417
      %v5419 = vrot.slane %v5380, 1
      %v5420 = vrot.slane %v5381, 1
      %v5421 = vsel %vm956, %v5419, %v5420
      %v5430 = vadd.f32 %v5346, %v5400
      %v5431 = vadd.f32 %v5347, %v5403
      %v5432 = vadd.f32 %v5348, %v5406
      %v5433 = vadd.f32 %v5349, %v5409
      %v5434 = vadd.f32 %v5350, %v5412
      %v5435 = vadd.f32 %v5351, %v5415
      %v5436 = vadd.f32 %v5352, %v5418
      %v5437 = vadd.f32 %v5353, %v5421
      %s5438 = scalar_lea.vmem %s2, 67
      %v5439 = vld [vmem:[%s5438] sm:$0x1]
      %5440 = vset.pattern.permute.xlu0 3
      %5441 = vperm.xlu0 %5440, %v3293
      %v5442 = vpop.permute.xlu0 %5441
      %v5445 = vlaneseq
      %v5446 = vshrl.u32 %v5445, 7
      %v5447 = vsub.s32 0, %v5446
      %v5448 = vrot.slane %v5439, %v5447
      %v5450 = vmul.f32 %v3482, %v5448
      %v5451 = vmul.f32 %v3882, %v5448
      %v5452 = vmul.f32 %v3486, %v5448
      %v5453 = vmul.f32 %v3886, %v5448
      %v5454 = vmul.f32 %v3490, %v5448
      %v5455 = vmul.f32 %v3890, %v5448
      %v5456 = vmul.f32 %v3494, %v5448
      %v5457 = vmul.f32 %v3894, %v5448
      %v5458 = vmul.f32 %v3498, %v5448
      %v5459 = vmul.f32 %v3898, %v5448
      %v5460 = vmul.f32 %v3502, %v5448
      %v5461 = vmul.f32 %v3902, %v5448
      %v5462 = vmul.f32 %v4391, %v5448
      %v5463 = vmul.f32 %v4672, %v5448
      %v5464 = vmul.f32 %v5161, %v5448
      %v5465 = vmul.f32 %v5442, %v5448
      %v5482 = vrot.slane %v5450, 1
      %v5483 = vrot.slane %v5451, 1
      %v5484 = vsel %vm956, %v5482, %v5483
      %v5485 = vrot.slane %v5452, 1
      %v5486 = vrot.slane %v5453, 1
      %v5487 = vsel %vm956, %v5485, %v5486
      %v5488 = vrot.slane %v5454, 1
      %v5489 = vrot.slane %v5455, 1
      %v5490 = vsel %vm956, %v5488, %v5489
      %v5491 = vrot.slane %v5456, 1
      %v5492 = vrot.slane %v5457, 1
      %v5493 = vsel %vm956, %v5491, %v5492
      %v5494 = vrot.slane %v5458, 1
      %v5495 = vrot.slane %v5459, 1
      %v5496 = vsel %vm956, %v5494, %v5495
      %v5497 = vrot.slane %v5460, 1
      %v5498 = vrot.slane %v5461, 1
      %v5499 = vsel %vm956, %v5497, %v5498
      %v5500 = vrot.slane %v5462, 1
      %v5501 = vrot.slane %v5463, 1
      %v5502 = vsel %vm956, %v5500, %v5501
      %v5503 = vrot.slane %v5464, 1
      %v5504 = vrot.slane %v5465, 1
      %v5505 = vsel %vm956, %v5503, %v5504
      %v5514 = vadd.f32 %v5430, %v5484
      %v5515 = vadd.f32 %v5431, %v5487
      %v5516 = vadd.f32 %v5432, %v5490
      %v5517 = vadd.f32 %v5433, %v5493
      %v5518 = vadd.f32 %v5434, %v5496
      %v5519 = vadd.f32 %v5435, %v5499
      %v5520 = vadd.f32 %v5436, %v5502
      %v5521 = vadd.f32 %v5437, %v5505
      %s5522 = scalar_lea.vmem %s2, 68
      %v5523 = vld [vmem:[%s5522] sm:$0x1]
      %v5525 = vlaneseq
      %v5526 = vshrl.u32 %v5525, 7
      %v5527 = vsub.s32 0, %v5526
      %v5528 = vrot.slane %v5523, %v5527
      %v5530 = vmul.f32 %v3309, %v5528
      %v5531 = vmul.f32 %v3541, %v5528
      %v5532 = vmul.f32 %v3314, %v5528
      %v5533 = vmul.f32 %v3546, %v5528
      %v5534 = vmul.f32 %v3319, %v5528
      %v5535 = vmul.f32 %v3551, %v5528
      %v5536 = vmul.f32 %v3324, %v5528
      %v5537 = vmul.f32 %v3556, %v5528
      %v5538 = vmul.f32 %v3329, %v5528
      %v5539 = vmul.f32 %v3561, %v5528
      %v5540 = vmul.f32 %v3334, %v5528
      %v5541 = vmul.f32 %v3566, %v5528
      %v5542 = vmul.f32 %v4307, %v5528
      %v5543 = vmul.f32 %v4420, %v5528
      %v5544 = vmul.f32 %v5077, %v5528
      %v5545 = vmul.f32 %v5190, %v5528
      %v5562 = vrot.slane %v5530, 2
      %v5563 = vrot.slane %v5531, 2
      %v5564 = vsel %vm1373, %v5562, %v5563
      %v5565 = vrot.slane %v5532, 2
      %v5566 = vrot.slane %v5533, 2
      %v5567 = vsel %vm1373, %v5565, %v5566
      %v5568 = vrot.slane %v5534, 2
      %v5569 = vrot.slane %v5535, 2
      %v5570 = vsel %vm1373, %v5568, %v5569
      %v5571 = vrot.slane %v5536, 2
      %v5572 = vrot.slane %v5537, 2
      %v5573 = vsel %vm1373, %v5571, %v5572
      %v5574 = vrot.slane %v5538, 2
      %v5575 = vrot.slane %v5539, 2
      %v5576 = vsel %vm1373, %v5574, %v5575
      %v5577 = vrot.slane %v5540, 2
      %v5578 = vrot.slane %v5541, 2
      %v5579 = vsel %vm1373, %v5577, %v5578
      %v5580 = vrot.slane %v5542, 2
      %v5581 = vrot.slane %v5543, 2
      %v5582 = vsel %vm1373, %v5580, %v5581
      %v5583 = vrot.slane %v5544, 2
      %v5584 = vrot.slane %v5545, 2
      %v5585 = vsel %vm1373, %v5583, %v5584
      %v5594 = vadd.f32 %v5514, %v5564
      %v5595 = vadd.f32 %v5515, %v5567
      %v5596 = vadd.f32 %v5516, %v5570
      %v5597 = vadd.f32 %v5517, %v5573
      %v5598 = vadd.f32 %v5518, %v5576
      %v5599 = vadd.f32 %v5519, %v5579
      %v5600 = vadd.f32 %v5520, %v5582
      %v5601 = vadd.f32 %v5521, %v5585
      %s5602 = scalar_lea.vmem %s2, 69
      %v5603 = vld [vmem:[%s5602] sm:$0x1]
      %v5605 = vlaneseq
      %v5606 = vshrl.u32 %v5605, 7
      %v5607 = vsub.s32 0, %v5606
      %v5608 = vrot.slane %v5603, %v5607
      %v5610 = vmul.f32 %v3370, %v5608
      %v5611 = vmul.f32 %v3658, %v5608
      %v5612 = vmul.f32 %v3374, %v5608
      %v5613 = vmul.f32 %v3662, %v5608
      %v5614 = vmul.f32 %v3378, %v5608
      %v5615 = vmul.f32 %v3666, %v5608
      %v5616 = vmul.f32 %v3382, %v5608
      %v5617 = vmul.f32 %v3670, %v5608
      %v5618 = vmul.f32 %v3386, %v5608
      %v5619 = vmul.f32 %v3674, %v5608
      %v5620 = vmul.f32 %v3390, %v5608
      %v5621 = vmul.f32 %v3678, %v5608
      %v5622 = vmul.f32 %v4335, %v5608
      %v5623 = vmul.f32 %v4504, %v5608
      %v5624 = vmul.f32 %v5105, %v5608
      %v5625 = vmul.f32 %v5274, %v5608
      %v5642 = vrot.slane %v5610, 2
      %v5643 = vrot.slane %v5611, 2
      %v5644 = vsel %vm1373, %v5642, %v5643
      %v5645 = vrot.slane %v5612, 2
      %v5646 = vrot.slane %v5613, 2
      %v5647 = vsel %vm1373, %v5645, %v5646
      %v5648 = vrot.slane %v5614, 2
      %v5649 = vrot.slane %v5615, 2
      %v5650 = vsel %vm1373, %v5648, %v5649
      %v5651 = vrot.slane %v5616, 2
      %v5652 = vrot.slane %v5617, 2
      %v5653 = vsel %vm1373, %v5651, %v5652
      %v5654 = vrot.slane %v5618, 2
      %v5655 = vrot.slane %v5619, 2
      %v5656 = vsel %vm1373, %v5654, %v5655
      %v5657 = vrot.slane %v5620, 2
      %v5658 = vrot.slane %v5621, 2
      %v5659 = vsel %vm1373, %v5657, %v5658
      %v5660 = vrot.slane %v5622, 2
      %v5661 = vrot.slane %v5623, 2
      %v5662 = vsel %vm1373, %v5660, %v5661
      %v5663 = vrot.slane %v5624, 2
      %v5664 = vrot.slane %v5625, 2
      %v5665 = vsel %vm1373, %v5663, %v5664
      %v5674 = vadd.f32 %v5594, %v5644
      %v5675 = vadd.f32 %v5595, %v5647
      %v5676 = vadd.f32 %v5596, %v5650
      %v5677 = vadd.f32 %v5597, %v5653
      %v5678 = vadd.f32 %v5598, %v5656
      %v5679 = vadd.f32 %v5599, %v5659
      %v5680 = vadd.f32 %v5600, %v5662
      %v5681 = vadd.f32 %v5601, %v5665
      %s5682 = scalar_lea.vmem %s2, 70
      %v5683 = vld [vmem:[%s5682] sm:$0x1]
      %v5685 = vlaneseq
      %v5686 = vshrl.u32 %v5685, 7
      %v5687 = vsub.s32 0, %v5686
      %v5688 = vrot.slane %v5683, %v5687
      %v5690 = vmul.f32 %v3426, %v5688
      %v5691 = vmul.f32 %v3770, %v5688
      %v5692 = vmul.f32 %v3430, %v5688
      %v5693 = vmul.f32 %v3774, %v5688
      %v5694 = vmul.f32 %v3434, %v5688
      %v5695 = vmul.f32 %v3778, %v5688
      %v5696 = vmul.f32 %v3438, %v5688
      %v5697 = vmul.f32 %v3782, %v5688
      %v5698 = vmul.f32 %v3442, %v5688
      %v5699 = vmul.f32 %v3786, %v5688
      %v5700 = vmul.f32 %v3446, %v5688
      %v5701 = vmul.f32 %v3790, %v5688
      %v5702 = vmul.f32 %v4363, %v5688
      %v5703 = vmul.f32 %v4588, %v5688
      %v5704 = vmul.f32 %v5133, %v5688
      %v5705 = vmul.f32 %v5358, %v5688
      %v5722 = vrot.slane %v5690, 2
      %v5723 = vrot.slane %v5691, 2
      %v5724 = vsel %vm1373, %v5722, %v5723
      %v5725 = vrot.slane %v5692, 2
      %v5726 = vrot.slane %v5693, 2
      %v5727 = vsel %vm1373, %v5725, %v5726
      %v5728 = vrot.slane %v5694, 2
      %v5729 = vrot.slane %v5695, 2
      %v5730 = vsel %vm1373, %v5728, %v5729
      %v5731 = vrot.slane %v5696, 2
      %v5732 = vrot.slane %v5697, 2
      %v5733 = vsel %vm1373, %v5731, %v5732
      %v5734 = vrot.slane %v5698, 2
      %v5735 = vrot.slane %v5699, 2
      %v5736 = vsel %vm1373, %v5734, %v5735
      %v5737 = vrot.slane %v5700, 2
      %v5738 = vrot.slane %v5701, 2
      %v5739 = vsel %vm1373, %v5737, %v5738
      %v5740 = vrot.slane %v5702, 2
      %v5741 = vrot.slane %v5703, 2
      %v5742 = vsel %vm1373, %v5740, %v5741
      %v5743 = vrot.slane %v5704, 2
      %v5744 = vrot.slane %v5705, 2
      %v5745 = vsel %vm1373, %v5743, %v5744
      %v5754 = vadd.f32 %v5674, %v5724
      %v5755 = vadd.f32 %v5675, %v5727
      %v5756 = vadd.f32 %v5676, %v5730
      %v5757 = vadd.f32 %v5677, %v5733
      %v5758 = vadd.f32 %v5678, %v5736
      %v5759 = vadd.f32 %v5679, %v5739
      %v5760 = vadd.f32 %v5680, %v5742
      %v5761 = vadd.f32 %v5681, %v5745
      %s5762 = scalar_lea.vmem %s2, 71
      %v5763 = vld [vmem:[%s5762] sm:$0x1]
      %v5765 = vlaneseq
      %v5766 = vshrl.u32 %v5765, 7
      %v5767 = vsub.s32 0, %v5766
      %v5768 = vrot.slane %v5763, %v5767
      %v5770 = vmul.f32 %v3482, %v5768
      %v5771 = vmul.f32 %v3882, %v5768
      %v5772 = vmul.f32 %v3486, %v5768
      %v5773 = vmul.f32 %v3886, %v5768
      %v5774 = vmul.f32 %v3490, %v5768
      %v5775 = vmul.f32 %v3890, %v5768
      %v5776 = vmul.f32 %v3494, %v5768
      %v5777 = vmul.f32 %v3894, %v5768
      %v5778 = vmul.f32 %v3498, %v5768
      %v5779 = vmul.f32 %v3898, %v5768
      %v5780 = vmul.f32 %v3502, %v5768
      %v5781 = vmul.f32 %v3902, %v5768
      %v5782 = vmul.f32 %v4391, %v5768
      %v5783 = vmul.f32 %v4672, %v5768
      %v5784 = vmul.f32 %v5161, %v5768
      %v5785 = vmul.f32 %v5442, %v5768
      %v5802 = vrot.slane %v5770, 2
      %v5803 = vrot.slane %v5771, 2
      %v5804 = vsel %vm1373, %v5802, %v5803
      %v5805 = vrot.slane %v5772, 2
      %v5806 = vrot.slane %v5773, 2
      %v5807 = vsel %vm1373, %v5805, %v5806
      %v5808 = vrot.slane %v5774, 2
      %v5809 = vrot.slane %v5775, 2
      %v5810 = vsel %vm1373, %v5808, %v5809
      %v5811 = vrot.slane %v5776, 2
      %v5812 = vrot.slane %v5777, 2
      %v5813 = vsel %vm1373, %v5811, %v5812
      %v5814 = vrot.slane %v5778, 2
      %v5815 = vrot.slane %v5779, 2
      %v5816 = vsel %vm1373, %v5814, %v5815
      %v5817 = vrot.slane %v5780, 2
      %v5818 = vrot.slane %v5781, 2
      %v5819 = vsel %vm1373, %v5817, %v5818
      %v5820 = vrot.slane %v5782, 2
      %v5821 = vrot.slane %v5783, 2
      %v5822 = vsel %vm1373, %v5820, %v5821
      %v5823 = vrot.slane %v5784, 2
      %v5824 = vrot.slane %v5785, 2
      %v5825 = vsel %vm1373, %v5823, %v5824
      %v5834 = vadd.f32 %v5754, %v5804
      %v5835 = vadd.f32 %v5755, %v5807
      %v5836 = vadd.f32 %v5756, %v5810
      %v5837 = vadd.f32 %v5757, %v5813
      %v5838 = vadd.f32 %v5758, %v5816
      %v5839 = vadd.f32 %v5759, %v5819
      %v5840 = vadd.f32 %v5760, %v5822
      %v5841 = vadd.f32 %v5761, %v5825
      %v5842 = vld [vmem:[%s461] sm:$0xff]
      %v5843 = vld [vmem:[%s461 + $0x8] sm:$0x3]
      %v5844 = vld [vmem:[%s461 + $0x10] sm:$0xff]
      %v5845 = vld [vmem:[%s461 + $0x18] sm:$0x3]
      %v5846 = vld [vmem:[%s461 + $0x20] sm:$0xff]
      %v5847 = vld [vmem:[%s461 + $0x28] sm:$0x3]
      %v5848 = vld [vmem:[%s461 + $0x30] sm:$0xff]
      %v5849 = vld [vmem:[%s461 + $0x38] sm:$0x3]
      %v5850 = vld [vmem:[%s461 + $0x40] sm:$0xff]
      %v5851 = vld [vmem:[%s461 + $0x48] sm:$0x3]
      %v5852 = vld [vmem:[%s461 + $0x50] sm:$0xff]
      %v5853 = vld [vmem:[%s461 + $0x58] sm:$0x3]
      %v5854 = vld [vmem:[%s461 + $0x60] sm:$0xff]
      %v5855 = vld [vmem:[%s461 + $0x68] sm:$0x3]
      %v5856 = vld [vmem:[%s461 + $0x70] sm:$0xff]
      %v5857 = vld [vmem:[%s461 + $0x78] sm:$0x3]
      %v5858 = vld [vmem:[%s461 + $0x80] sm:$0xff]
      %v5859 = vld [vmem:[%s461 + $0x88] sm:$0x3]
      %v5860 = vld [vmem:[%s461 + $0x90] sm:$0xff]
      %v5861 = vld [vmem:[%s461 + $0x98] sm:$0x3]
      %v5862 = vmul.f32 %v5842, %v534
      %v5863 = vmul.f32 %v5843, %v534
      %v5864 = vmul.f32 %v5844, %v534
      %v5865 = vmul.f32 %v5845, %v534
      %v5866 = vmul.f32 %v5846, %v534
      %v5867 = vmul.f32 %v5847, %v534
      %v5868 = vmul.f32 %v5848, %v534
      %v5869 = vmul.f32 %v5849, %v534
      %v5870 = vmul.f32 %v5850, %v534
      %v5871 = vmul.f32 %v5851, %v534
      %v5872 = vmul.f32 %v5852, %v534
      %v5873 = vmul.f32 %v5853, %v534
      %v5874 = vmul.f32 %v5854, %v534
      %v5875 = vmul.f32 %v5855, %v534
      %v5876 = vmul.f32 %v5856, %v534
      %v5877 = vmul.f32 %v5857, %v534
      %v5878 = vmul.f32 %v5858, %v534
      %v5879 = vmul.f32 %v5859, %v534
      %v5880 = vmul.f32 %v5860, %v534
      %v5881 = vmul.f32 %v5861, %v534
      %v5882 = vadd.f32 %v5862, %v560
      %v5883 = vadd.f32 %v5863, %v560
      %v5884 = vadd.f32 %v5864, %v560
      %v5885 = vadd.f32 %v5865, %v560
      %v5886 = vadd.f32 %v5866, %v560
      %v5887 = vadd.f32 %v5867, %v560
      %v5888 = vadd.f32 %v5868, %v560
      %v5889 = vadd.f32 %v5869, %v560
      %v5890 = vadd.f32 %v5870, %v560
      %v5891 = vadd.f32 %v5871, %v560
      %v5892 = vadd.f32 %v5872, %v560
      %v5893 = vadd.f32 %v5873, %v560
      %v5894 = vadd.f32 %v5874, %v560
      %v5895 = vadd.f32 %v5875, %v560
      %v5896 = vadd.f32 %v5876, %v560
      %v5897 = vadd.f32 %v5877, %v560
      %v5898 = vadd.f32 %v5878, %v560
      %v5899 = vadd.f32 %v5879, %v560
      %v5900 = vadd.f32 %v5880, %v560
      %v5901 = vadd.f32 %v5881, %v560
      %v5902 = vmax.f32 %v5882, 0.0
      %v5903 = vmax.f32 %v5883, 0.0
      %v5904 = vmax.f32 %v5884, 0.0
      %v5905 = vmax.f32 %v5885, 0.0
      %v5906 = vmax.f32 %v5886, 0.0
      %v5907 = vmax.f32 %v5887, 0.0
      %v5908 = vmax.f32 %v5888, 0.0
      %v5909 = vmax.f32 %v5889, 0.0
      %v5910 = vmax.f32 %v5890, 0.0
      %v5911 = vmax.f32 %v5891, 0.0
      %v5912 = vmax.f32 %v5892, 0.0
      %v5913 = vmax.f32 %v5893, 0.0
      %v5914 = vmax.f32 %v5894, 0.0
      %v5915 = vmax.f32 %v5895, 0.0
      %v5916 = vmax.f32 %v5896, 0.0
      %v5917 = vmax.f32 %v5897, 0.0
      %v5918 = vmax.f32 %v5898, 0.0
      %v5919 = vmax.f32 %v5899, 0.0
      %v5920 = vmax.f32 %v5900, 0.0
      %v5921 = vmax.f32 %v5901, 0.0
      %v5922 = vmul.f32 %v5902, %v490
      %v5923 = vmul.f32 %v5903, %v491
      %v5924 = vmul.f32 %v5904, %v492
      %v5925 = vmul.f32 %v5905, %v493
      %v5926 = vmul.f32 %v5906, %v494
      %v5927 = vmul.f32 %v5907, %v495
      %v5928 = vmul.f32 %v5908, %v496
      %v5929 = vmul.f32 %v5909, %v497
      %v5930 = vmul.f32 %v5910, %v498
      %v5931 = vmul.f32 %v5911, %v499
      %v5932 = vmul.f32 %v5912, %v500
      %v5933 = vmul.f32 %v5913, %v501
      %v5934 = vmul.f32 %v5914, %v502
      %v5935 = vmul.f32 %v5915, %v503
      %v5936 = vmul.f32 %v5916, %v504
      %v5937 = vmul.f32 %v5917, %v505
      %v5938 = vmul.f32 %v5918, %v506
      %v5939 = vmul.f32 %v5919, %v507
      %v5940 = vmul.f32 %v5920, %v508
      %v5941 = vmul.f32 %v5921, %v509
      %p5942 = scmp.le.s32.totalorder %s26, 2
      %s5943 = scalar_select %p5942, 1.0, 0.0
      %v5944 = vstv %s5943
      %v5945 = vmul.f32 %v5922, %v5944
      %v5946 = vmul.f32 %v5923, %v5944
      %v5947 = vmul.f32 %v5924, %v5944
      %v5948 = vmul.f32 %v5925, %v5944
      %v5949 = vmul.f32 %v5926, %v5944
      %v5950 = vmul.f32 %v5927, %v5944
      %v5951 = vmul.f32 %v5928, %v5944
      %v5952 = vmul.f32 %v5929, %v5944
      %v5953 = vmul.f32 %v5930, %v5944
      %v5954 = vmul.f32 %v5931, %v5944
      %v5955 = vmul.f32 %v5932, %v5944
      %v5956 = vmul.f32 %v5933, %v5944
      %v5957 = vmul.f32 %v5934, %v5944
      %v5958 = vmul.f32 %v5935, %v5944
      %v5959 = vmul.f32 %v5936, %v5944
      %v5960 = vmul.f32 %v5937, %v5944
      %v5961 = vmul.f32 %v5938, %v5944
      %v5962 = vmul.f32 %v5939, %v5944
      %v5963 = vmul.f32 %v5940, %v5944
      %v5964 = vmul.f32 %v5941, %v5944
      %s5965 = scalar_lea.vmem %s2, 72
      %v5966 = vld [vmem:[%s5965] sm:$0x1]
      %5968 = vset.pattern.permute.xlu0 0
      %5969 = vperm.xlu0 %5968, %v5945
      %v5970 = vpop.permute.xlu0 %5969
      %5973 = vset.pattern.permute.xlu0 0
      %5974 = vperm.xlu0 %5973, %v5947
      %v5975 = vpop.permute.xlu0 %5974
      %5978 = vset.pattern.permute.xlu0 0
      %5979 = vperm.xlu0 %5978, %v5949
      %v5980 = vpop.permute.xlu0 %5979
      %5983 = vset.pattern.permute.xlu0 0
      %5984 = vperm.xlu0 %5983, %v5951
      %v5985 = vpop.permute.xlu0 %5984
      %5988 = vset.pattern.permute.xlu0 0
      %5989 = vperm.xlu0 %5988, %v5953
      %v5990 = vpop.permute.xlu0 %5989
      %5993 = vset.pattern.permute.xlu0 0
      %5994 = vperm.xlu0 %5993, %v5955
      %v5995 = vpop.permute.xlu0 %5994
      %5998 = vset.pattern.permute.xlu0 0
      %5999 = vperm.xlu0 %5998, %v5957
      %v6000 = vpop.permute.xlu0 %5999
      %6003 = vset.pattern.permute.xlu0 0
      %6004 = vperm.xlu0 %6003, %v5959
      %v6005 = vpop.permute.xlu0 %6004
      %v6008 = vlaneseq
      %v6009 = vshrl.u32 %v6008, 7
      %v6010 = vsub.s32 0, %v6009
      %v6011 = vrot.slane %v5966, %v6010
      %v6013 = vmul.f32 %v5970, %v6011
      %v6014 = vmul.f32 %v5975, %v6011
      %v6015 = vmul.f32 %v5980, %v6011
      %v6016 = vmul.f32 %v5985, %v6011
      %v6017 = vmul.f32 %v5990, %v6011
      %v6018 = vmul.f32 %v5995, %v6011
      %v6019 = vmul.f32 %v6000, %v6011
      %v6020 = vmul.f32 %v6005, %v6011
      %v6021 = vadd.f32 %v5834, %v6013
      %v6022 = vadd.f32 %v5835, %v6014
      %v6023 = vadd.f32 %v5836, %v6015
      %v6024 = vadd.f32 %v5837, %v6016
      %v6025 = vadd.f32 %v5838, %v6017
      %v6026 = vadd.f32 %v5839, %v6018
      %v6027 = vadd.f32 %v5840, %v6019
      %v6028 = vadd.f32 %v5841, %v6020
      %s6029 = scalar_lea.vmem %s2, 73
      %v6030 = vld [vmem:[%s6029] sm:$0x1]
      %6031 = vset.pattern.permute.xlu0 1
      %6032 = vperm.xlu0 %6031, %v5945
      %v6033 = vpop.permute.xlu0 %6032
      %6035 = vset.pattern.permute.xlu0 1
      %6036 = vperm.xlu0 %6035, %v5947
      %v6037 = vpop.permute.xlu0 %6036
      %6039 = vset.pattern.permute.xlu0 1
      %6040 = vperm.xlu0 %6039, %v5949
      %v6041 = vpop.permute.xlu0 %6040
      %6043 = vset.pattern.permute.xlu0 1
      %6044 = vperm.xlu0 %6043, %v5951
      %v6045 = vpop.permute.xlu0 %6044
      %6047 = vset.pattern.permute.xlu0 1
      %6048 = vperm.xlu0 %6047, %v5953
      %v6049 = vpop.permute.xlu0 %6048
      %6051 = vset.pattern.permute.xlu0 1
      %6052 = vperm.xlu0 %6051, %v5955
      %v6053 = vpop.permute.xlu0 %6052
      %6055 = vset.pattern.permute.xlu0 1
      %6056 = vperm.xlu0 %6055, %v5957
      %v6057 = vpop.permute.xlu0 %6056
      %6059 = vset.pattern.permute.xlu0 1
      %6060 = vperm.xlu0 %6059, %v5959
      %v6061 = vpop.permute.xlu0 %6060
      %v6064 = vlaneseq
      %v6065 = vshrl.u32 %v6064, 7
      %v6066 = vsub.s32 0, %v6065
      %v6067 = vrot.slane %v6030, %v6066
      %v6069 = vmul.f32 %v6033, %v6067
      %v6070 = vmul.f32 %v6037, %v6067
      %v6071 = vmul.f32 %v6041, %v6067
      %v6072 = vmul.f32 %v6045, %v6067
      %v6073 = vmul.f32 %v6049, %v6067
      %v6074 = vmul.f32 %v6053, %v6067
      %v6075 = vmul.f32 %v6057, %v6067
      %v6076 = vmul.f32 %v6061, %v6067
      %v6077 = vadd.f32 %v6021, %v6069
      %v6078 = vadd.f32 %v6022, %v6070
      %v6079 = vadd.f32 %v6023, %v6071
      %v6080 = vadd.f32 %v6024, %v6072
      %v6081 = vadd.f32 %v6025, %v6073
      %v6082 = vadd.f32 %v6026, %v6074
      %v6083 = vadd.f32 %v6027, %v6075
      %v6084 = vadd.f32 %v6028, %v6076
      %s6085 = scalar_lea.vmem %s2, 74
      %v6086 = vld [vmem:[%s6085] sm:$0x1]
      %6087 = vset.pattern.permute.xlu0 2
      %6088 = vperm.xlu0 %6087, %v5945
      %v6089 = vpop.permute.xlu0 %6088
      %6091 = vset.pattern.permute.xlu0 2
      %6092 = vperm.xlu0 %6091, %v5947
      %v6093 = vpop.permute.xlu0 %6092
      %6095 = vset.pattern.permute.xlu0 2
      %6096 = vperm.xlu0 %6095, %v5949
      %v6097 = vpop.permute.xlu0 %6096
      %6099 = vset.pattern.permute.xlu0 2
      %6100 = vperm.xlu0 %6099, %v5951
      %v6101 = vpop.permute.xlu0 %6100
      %6103 = vset.pattern.permute.xlu0 2
      %6104 = vperm.xlu0 %6103, %v5953
      %v6105 = vpop.permute.xlu0 %6104
      %6107 = vset.pattern.permute.xlu0 2
      %6108 = vperm.xlu0 %6107, %v5955
      %v6109 = vpop.permute.xlu0 %6108
      %6111 = vset.pattern.permute.xlu0 2
      %6112 = vperm.xlu0 %6111, %v5957
      %v6113 = vpop.permute.xlu0 %6112
      %6115 = vset.pattern.permute.xlu0 2
      %6116 = vperm.xlu0 %6115, %v5959
      %v6117 = vpop.permute.xlu0 %6116
      %v6120 = vlaneseq
      %v6121 = vshrl.u32 %v6120, 7
      %v6122 = vsub.s32 0, %v6121
      %v6123 = vrot.slane %v6086, %v6122
      %v6125 = vmul.f32 %v6089, %v6123
      %v6126 = vmul.f32 %v6093, %v6123
      %v6127 = vmul.f32 %v6097, %v6123
      %v6128 = vmul.f32 %v6101, %v6123
      %v6129 = vmul.f32 %v6105, %v6123
      %v6130 = vmul.f32 %v6109, %v6123
      %v6131 = vmul.f32 %v6113, %v6123
      %v6132 = vmul.f32 %v6117, %v6123
      %v6133 = vadd.f32 %v6077, %v6125
      %v6134 = vadd.f32 %v6078, %v6126
      %v6135 = vadd.f32 %v6079, %v6127
      %v6136 = vadd.f32 %v6080, %v6128
      %v6137 = vadd.f32 %v6081, %v6129
      %v6138 = vadd.f32 %v6082, %v6130
      %v6139 = vadd.f32 %v6083, %v6131
      %v6140 = vadd.f32 %v6084, %v6132
      %s6141 = scalar_lea.vmem %s2, 75
      %v6142 = vld [vmem:[%s6141] sm:$0x1]
      %6143 = vset.pattern.permute.xlu0 3
      %6144 = vperm.xlu0 %6143, %v5945
      %v6145 = vpop.permute.xlu0 %6144
      %6147 = vset.pattern.permute.xlu0 3
      %6148 = vperm.xlu0 %6147, %v5947
      %v6149 = vpop.permute.xlu0 %6148
      %6151 = vset.pattern.permute.xlu0 3
      %6152 = vperm.xlu0 %6151, %v5949
      %v6153 = vpop.permute.xlu0 %6152
      %6155 = vset.pattern.permute.xlu0 3
      %6156 = vperm.xlu0 %6155, %v5951
      %v6157 = vpop.permute.xlu0 %6156
      %6159 = vset.pattern.permute.xlu0 3
      %6160 = vperm.xlu0 %6159, %v5953
      %v6161 = vpop.permute.xlu0 %6160
      %6163 = vset.pattern.permute.xlu0 3
      %6164 = vperm.xlu0 %6163, %v5955
      %v6165 = vpop.permute.xlu0 %6164
      %6167 = vset.pattern.permute.xlu0 3
      %6168 = vperm.xlu0 %6167, %v5957
      %v6169 = vpop.permute.xlu0 %6168
      %6171 = vset.pattern.permute.xlu0 3
      %6172 = vperm.xlu0 %6171, %v5959
      %v6173 = vpop.permute.xlu0 %6172
      %v6176 = vlaneseq
      %v6177 = vshrl.u32 %v6176, 7
      %v6178 = vsub.s32 0, %v6177
      %v6179 = vrot.slane %v6142, %v6178
      %v6181 = vmul.f32 %v6145, %v6179
      %v6182 = vmul.f32 %v6149, %v6179
      %v6183 = vmul.f32 %v6153, %v6179
      %v6184 = vmul.f32 %v6157, %v6179
      %v6185 = vmul.f32 %v6161, %v6179
      %v6186 = vmul.f32 %v6165, %v6179
      %v6187 = vmul.f32 %v6169, %v6179
      %v6188 = vmul.f32 %v6173, %v6179
      %v6189 = vadd.f32 %v6133, %v6181
      %v6190 = vadd.f32 %v6134, %v6182
      %v6191 = vadd.f32 %v6135, %v6183
      %v6192 = vadd.f32 %v6136, %v6184
      %v6193 = vadd.f32 %v6137, %v6185
      %v6194 = vadd.f32 %v6138, %v6186
      %v6195 = vadd.f32 %v6139, %v6187
      %v6196 = vadd.f32 %v6140, %v6188
      %s6197 = scalar_lea.vmem %s2, 76
      %v6198 = vld [vmem:[%s6197] sm:$0x1]
      %6200 = vset.pattern.permute.xlu0 0
      %6201 = vperm.xlu0 %6200, %v5946
      %v6202 = vpop.permute.xlu0 %6201
      %6205 = vset.pattern.permute.xlu0 0
      %6206 = vperm.xlu0 %6205, %v5948
      %v6207 = vpop.permute.xlu0 %6206
      %6210 = vset.pattern.permute.xlu0 0
      %6211 = vperm.xlu0 %6210, %v5950
      %v6212 = vpop.permute.xlu0 %6211
      %6215 = vset.pattern.permute.xlu0 0
      %6216 = vperm.xlu0 %6215, %v5952
      %v6217 = vpop.permute.xlu0 %6216
      %6220 = vset.pattern.permute.xlu0 0
      %6221 = vperm.xlu0 %6220, %v5954
      %v6222 = vpop.permute.xlu0 %6221
      %6225 = vset.pattern.permute.xlu0 0
      %6226 = vperm.xlu0 %6225, %v5956
      %v6227 = vpop.permute.xlu0 %6226
      %6230 = vset.pattern.permute.xlu0 0
      %6231 = vperm.xlu0 %6230, %v5958
      %v6232 = vpop.permute.xlu0 %6231
      %6235 = vset.pattern.permute.xlu0 0
      %6236 = vperm.xlu0 %6235, %v5960
      %v6237 = vpop.permute.xlu0 %6236
      %v6240 = vlaneseq
      %v6241 = vshrl.u32 %v6240, 7
      %v6242 = vsub.s32 0, %v6241
      %v6243 = vrot.slane %v6198, %v6242
      %v6245 = vmul.f32 %v5970, %v6243
      %v6246 = vmul.f32 %v6202, %v6243
      %v6247 = vmul.f32 %v5975, %v6243
      %v6248 = vmul.f32 %v6207, %v6243
      %v6249 = vmul.f32 %v5980, %v6243
      %v6250 = vmul.f32 %v6212, %v6243
      %v6251 = vmul.f32 %v5985, %v6243
      %v6252 = vmul.f32 %v6217, %v6243
      %v6253 = vmul.f32 %v5990, %v6243
      %v6254 = vmul.f32 %v6222, %v6243
      %v6255 = vmul.f32 %v5995, %v6243
      %v6256 = vmul.f32 %v6227, %v6243
      %v6257 = vmul.f32 %v6000, %v6243
      %v6258 = vmul.f32 %v6232, %v6243
      %v6259 = vmul.f32 %v6005, %v6243
      %v6260 = vmul.f32 %v6237, %v6243
      %v6277 = vrot.slane %v6245, 1
      %v6278 = vrot.slane %v6246, 1
      %v6279 = vsel %vm956, %v6277, %v6278
      %v6280 = vrot.slane %v6247, 1
      %v6281 = vrot.slane %v6248, 1
      %v6282 = vsel %vm956, %v6280, %v6281
      %v6283 = vrot.slane %v6249, 1
      %v6284 = vrot.slane %v6250, 1
      %v6285 = vsel %vm956, %v6283, %v6284
      %v6286 = vrot.slane %v6251, 1
      %v6287 = vrot.slane %v6252, 1
      %v6288 = vsel %vm956, %v6286, %v6287
      %v6289 = vrot.slane %v6253, 1
      %v6290 = vrot.slane %v6254, 1
      %v6291 = vsel %vm956, %v6289, %v6290
      %v6292 = vrot.slane %v6255, 1
      %v6293 = vrot.slane %v6256, 1
      %v6294 = vsel %vm956, %v6292, %v6293
      %v6295 = vrot.slane %v6257, 1
      %v6296 = vrot.slane %v6258, 1
      %v6297 = vsel %vm956, %v6295, %v6296
      %v6298 = vrot.slane %v6259, 1
      %v6299 = vrot.slane %v6260, 1
      %v6300 = vsel %vm956, %v6298, %v6299
      %v6309 = vadd.f32 %v6189, %v6279
      %v6310 = vadd.f32 %v6190, %v6282
      %v6311 = vadd.f32 %v6191, %v6285
      %v6312 = vadd.f32 %v6192, %v6288
      %v6313 = vadd.f32 %v6193, %v6291
      %v6314 = vadd.f32 %v6194, %v6294
      %v6315 = vadd.f32 %v6195, %v6297
      %v6316 = vadd.f32 %v6196, %v6300
      %s6317 = scalar_lea.vmem %s2, 77
      %v6318 = vld [vmem:[%s6317] sm:$0x1]
      %6319 = vset.pattern.permute.xlu0 1
      %6320 = vperm.xlu0 %6319, %v5946
      %v6321 = vpop.permute.xlu0 %6320
      %6323 = vset.pattern.permute.xlu0 1
      %6324 = vperm.xlu0 %6323, %v5948
      %v6325 = vpop.permute.xlu0 %6324
      %6327 = vset.pattern.permute.xlu0 1
      %6328 = vperm.xlu0 %6327, %v5950
      %v6329 = vpop.permute.xlu0 %6328
      %6331 = vset.pattern.permute.xlu0 1
      %6332 = vperm.xlu0 %6331, %v5952
      %v6333 = vpop.permute.xlu0 %6332
      %6335 = vset.pattern.permute.xlu0 1
      %6336 = vperm.xlu0 %6335, %v5954
      %v6337 = vpop.permute.xlu0 %6336
      %6339 = vset.pattern.permute.xlu0 1
      %6340 = vperm.xlu0 %6339, %v5956
      %v6341 = vpop.permute.xlu0 %6340
      %6343 = vset.pattern.permute.xlu0 1
      %6344 = vperm.xlu0 %6343, %v5958
      %v6345 = vpop.permute.xlu0 %6344
      %6347 = vset.pattern.permute.xlu0 1
      %6348 = vperm.xlu0 %6347, %v5960
      %v6349 = vpop.permute.xlu0 %6348
      %v6352 = vlaneseq
      %v6353 = vshrl.u32 %v6352, 7
      %v6354 = vsub.s32 0, %v6353
      %v6355 = vrot.slane %v6318, %v6354
      %v6357 = vmul.f32 %v6033, %v6355
      %v6358 = vmul.f32 %v6321, %v6355
      %v6359 = vmul.f32 %v6037, %v6355
      %v6360 = vmul.f32 %v6325, %v6355
      %v6361 = vmul.f32 %v6041, %v6355
      %v6362 = vmul.f32 %v6329, %v6355
      %v6363 = vmul.f32 %v6045, %v6355
      %v6364 = vmul.f32 %v6333, %v6355
      %v6365 = vmul.f32 %v6049, %v6355
      %v6366 = vmul.f32 %v6337, %v6355
      %v6367 = vmul.f32 %v6053, %v6355
      %v6368 = vmul.f32 %v6341, %v6355
      %v6369 = vmul.f32 %v6057, %v6355
      %v6370 = vmul.f32 %v6345, %v6355
      %v6371 = vmul.f32 %v6061, %v6355
      %v6372 = vmul.f32 %v6349, %v6355
      %v6389 = vrot.slane %v6357, 1
      %v6390 = vrot.slane %v6358, 1
      %v6391 = vsel %vm956, %v6389, %v6390
      %v6392 = vrot.slane %v6359, 1
      %v6393 = vrot.slane %v6360, 1
      %v6394 = vsel %vm956, %v6392, %v6393
      %v6395 = vrot.slane %v6361, 1
      %v6396 = vrot.slane %v6362, 1
      %v6397 = vsel %vm956, %v6395, %v6396
      %v6398 = vrot.slane %v6363, 1
      %v6399 = vrot.slane %v6364, 1
      %v6400 = vsel %vm956, %v6398, %v6399
      %v6401 = vrot.slane %v6365, 1
      %v6402 = vrot.slane %v6366, 1
      %v6403 = vsel %vm956, %v6401, %v6402
      %v6404 = vrot.slane %v6367, 1
      %v6405 = vrot.slane %v6368, 1
      %v6406 = vsel %vm956, %v6404, %v6405
      %v6407 = vrot.slane %v6369, 1
      %v6408 = vrot.slane %v6370, 1
      %v6409 = vsel %vm956, %v6407, %v6408
      %v6410 = vrot.slane %v6371, 1
      %v6411 = vrot.slane %v6372, 1
      %v6412 = vsel %vm956, %v6410, %v6411
      %v6421 = vadd.f32 %v6309, %v6391
      %v6422 = vadd.f32 %v6310, %v6394
      %v6423 = vadd.f32 %v6311, %v6397
      %v6424 = vadd.f32 %v6312, %v6400
      %v6425 = vadd.f32 %v6313, %v6403
      %v6426 = vadd.f32 %v6314, %v6406
      %v6427 = vadd.f32 %v6315, %v6409
      %v6428 = vadd.f32 %v6316, %v6412
      %s6429 = scalar_lea.vmem %s2, 78
      %v6430 = vld [vmem:[%s6429] sm:$0x1]
      %6431 = vset.pattern.permute.xlu0 2
      %6432 = vperm.xlu0 %6431, %v5946
      %v6433 = vpop.permute.xlu0 %6432
      %6435 = vset.pattern.permute.xlu0 2
      %6436 = vperm.xlu0 %6435, %v5948
      %v6437 = vpop.permute.xlu0 %6436
      %6439 = vset.pattern.permute.xlu0 2
      %6440 = vperm.xlu0 %6439, %v5950
      %v6441 = vpop.permute.xlu0 %6440
      %6443 = vset.pattern.permute.xlu0 2
      %6444 = vperm.xlu0 %6443, %v5952
      %v6445 = vpop.permute.xlu0 %6444
      %6447 = vset.pattern.permute.xlu0 2
      %6448 = vperm.xlu0 %6447, %v5954
      %v6449 = vpop.permute.xlu0 %6448
      %6451 = vset.pattern.permute.xlu0 2
      %6452 = vperm.xlu0 %6451, %v5956
      %v6453 = vpop.permute.xlu0 %6452
      %6455 = vset.pattern.permute.xlu0 2
      %6456 = vperm.xlu0 %6455, %v5958
      %v6457 = vpop.permute.xlu0 %6456
      %6459 = vset.pattern.permute.xlu0 2
      %6460 = vperm.xlu0 %6459, %v5960
      %v6461 = vpop.permute.xlu0 %6460
      %v6464 = vlaneseq
      %v6465 = vshrl.u32 %v6464, 7
      %v6466 = vsub.s32 0, %v6465
      %v6467 = vrot.slane %v6430, %v6466
      %v6469 = vmul.f32 %v6089, %v6467
      %v6470 = vmul.f32 %v6433, %v6467
      %v6471 = vmul.f32 %v6093, %v6467
      %v6472 = vmul.f32 %v6437, %v6467
      %v6473 = vmul.f32 %v6097, %v6467
      %v6474 = vmul.f32 %v6441, %v6467
      %v6475 = vmul.f32 %v6101, %v6467
      %v6476 = vmul.f32 %v6445, %v6467
      %v6477 = vmul.f32 %v6105, %v6467
      %v6478 = vmul.f32 %v6449, %v6467
      %v6479 = vmul.f32 %v6109, %v6467
      %v6480 = vmul.f32 %v6453, %v6467
      %v6481 = vmul.f32 %v6113, %v6467
      %v6482 = vmul.f32 %v6457, %v6467
      %v6483 = vmul.f32 %v6117, %v6467
      %v6484 = vmul.f32 %v6461, %v6467
      %v6501 = vrot.slane %v6469, 1
      %v6502 = vrot.slane %v6470, 1
      %v6503 = vsel %vm956, %v6501, %v6502
      %v6504 = vrot.slane %v6471, 1
      %v6505 = vrot.slane %v6472, 1
      %v6506 = vsel %vm956, %v6504, %v6505
      %v6507 = vrot.slane %v6473, 1
      %v6508 = vrot.slane %v6474, 1
      %v6509 = vsel %vm956, %v6507, %v6508
      %v6510 = vrot.slane %v6475, 1
      %v6511 = vrot.slane %v6476, 1
      %v6512 = vsel %vm956, %v6510, %v6511
      %v6513 = vrot.slane %v6477, 1
      %v6514 = vrot.slane %v6478, 1
      %v6515 = vsel %vm956, %v6513, %v6514
      %v6516 = vrot.slane %v6479, 1
      %v6517 = vrot.slane %v6480, 1
      %v6518 = vsel %vm956, %v6516, %v6517
      %v6519 = vrot.slane %v6481, 1
      %v6520 = vrot.slane %v6482, 1
      %v6521 = vsel %vm956, %v6519, %v6520
      %v6522 = vrot.slane %v6483, 1
      %v6523 = vrot.slane %v6484, 1
      %v6524 = vsel %vm956, %v6522, %v6523
      %v6533 = vadd.f32 %v6421, %v6503
      %v6534 = vadd.f32 %v6422, %v6506
      %v6535 = vadd.f32 %v6423, %v6509
      %v6536 = vadd.f32 %v6424, %v6512
      %v6537 = vadd.f32 %v6425, %v6515
      %v6538 = vadd.f32 %v6426, %v6518
      %v6539 = vadd.f32 %v6427, %v6521
      %v6540 = vadd.f32 %v6428, %v6524
      %s6541 = scalar_lea.vmem %s2, 79
      %v6542 = vld [vmem:[%s6541] sm:$0x1]
      %6543 = vset.pattern.permute.xlu0 3
      %6544 = vperm.xlu0 %6543, %v5946
      %v6545 = vpop.permute.xlu0 %6544
      %6547 = vset.pattern.permute.xlu0 3
      %6548 = vperm.xlu0 %6547, %v5948
      %v6549 = vpop.permute.xlu0 %6548
      %6551 = vset.pattern.permute.xlu0 3
      %6552 = vperm.xlu0 %6551, %v5950
      %v6553 = vpop.permute.xlu0 %6552
      %6555 = vset.pattern.permute.xlu0 3
      %6556 = vperm.xlu0 %6555, %v5952
      %v6557 = vpop.permute.xlu0 %6556
      %6559 = vset.pattern.permute.xlu0 3
      %6560 = vperm.xlu0 %6559, %v5954
      %v6561 = vpop.permute.xlu0 %6560
      %6563 = vset.pattern.permute.xlu0 3
      %6564 = vperm.xlu0 %6563, %v5956
      %v6565 = vpop.permute.xlu0 %6564
      %6567 = vset.pattern.permute.xlu0 3
      %6568 = vperm.xlu0 %6567, %v5958
      %v6569 = vpop.permute.xlu0 %6568
      %6571 = vset.pattern.permute.xlu0 3
      %6572 = vperm.xlu0 %6571, %v5960
      %v6573 = vpop.permute.xlu0 %6572
      %v6576 = vlaneseq
      %v6577 = vshrl.u32 %v6576, 7
      %v6578 = vsub.s32 0, %v6577
      %v6579 = vrot.slane %v6542, %v6578
      %v6581 = vmul.f32 %v6145, %v6579
      %v6582 = vmul.f32 %v6545, %v6579
      %v6583 = vmul.f32 %v6149, %v6579
      %v6584 = vmul.f32 %v6549, %v6579
      %v6585 = vmul.f32 %v6153, %v6579
      %v6586 = vmul.f32 %v6553, %v6579
      %v6587 = vmul.f32 %v6157, %v6579
      %v6588 = vmul.f32 %v6557, %v6579
      %v6589 = vmul.f32 %v6161, %v6579
      %v6590 = vmul.f32 %v6561, %v6579
      %v6591 = vmul.f32 %v6165, %v6579
      %v6592 = vmul.f32 %v6565, %v6579
      %v6593 = vmul.f32 %v6169, %v6579
      %v6594 = vmul.f32 %v6569, %v6579
      %v6595 = vmul.f32 %v6173, %v6579
      %v6596 = vmul.f32 %v6573, %v6579
      %v6613 = vrot.slane %v6581, 1
      %v6614 = vrot.slane %v6582, 1
      %v6615 = vsel %vm956, %v6613, %v6614
      %v6616 = vrot.slane %v6583, 1
      %v6617 = vrot.slane %v6584, 1
      %v6618 = vsel %vm956, %v6616, %v6617
      %v6619 = vrot.slane %v6585, 1
      %v6620 = vrot.slane %v6586, 1
      %v6621 = vsel %vm956, %v6619, %v6620
      %v6622 = vrot.slane %v6587, 1
      %v6623 = vrot.slane %v6588, 1
      %v6624 = vsel %vm956, %v6622, %v6623
      %v6625 = vrot.slane %v6589, 1
      %v6626 = vrot.slane %v6590, 1
      %v6627 = vsel %vm956, %v6625, %v6626
      %v6628 = vrot.slane %v6591, 1
      %v6629 = vrot.slane %v6592, 1
      %v6630 = vsel %vm956, %v6628, %v6629
      %v6631 = vrot.slane %v6593, 1
      %v6632 = vrot.slane %v6594, 1
      %v6633 = vsel %vm956, %v6631, %v6632
      %v6634 = vrot.slane %v6595, 1
      %v6635 = vrot.slane %v6596, 1
      %v6636 = vsel %vm956, %v6634, %v6635
      %v6645 = vadd.f32 %v6533, %v6615
      %v6646 = vadd.f32 %v6534, %v6618
      %v6647 = vadd.f32 %v6535, %v6621
      %v6648 = vadd.f32 %v6536, %v6624
      %v6649 = vadd.f32 %v6537, %v6627
      %v6650 = vadd.f32 %v6538, %v6630
      %v6651 = vadd.f32 %v6539, %v6633
      %v6652 = vadd.f32 %v6540, %v6636
      %s6653 = scalar_lea.vmem %s2, 80
      %v6654 = vld [vmem:[%s6653] sm:$0x1]
      %v6656 = vlaneseq
      %v6657 = vshrl.u32 %v6656, 7
      %v6658 = vsub.s32 0, %v6657
      %v6659 = vrot.slane %v6654, %v6658
      %v6661 = vmul.f32 %v5970, %v6659
      %v6662 = vmul.f32 %v6202, %v6659
      %v6663 = vmul.f32 %v5975, %v6659
      %v6664 = vmul.f32 %v6207, %v6659
      %v6665 = vmul.f32 %v5980, %v6659
      %v6666 = vmul.f32 %v6212, %v6659
      %v6667 = vmul.f32 %v5985, %v6659
      %v6668 = vmul.f32 %v6217, %v6659
      %v6669 = vmul.f32 %v5990, %v6659
      %v6670 = vmul.f32 %v6222, %v6659
      %v6671 = vmul.f32 %v5995, %v6659
      %v6672 = vmul.f32 %v6227, %v6659
      %v6673 = vmul.f32 %v6000, %v6659
      %v6674 = vmul.f32 %v6232, %v6659
      %v6675 = vmul.f32 %v6005, %v6659
      %v6676 = vmul.f32 %v6237, %v6659
      %v6693 = vrot.slane %v6661, 2
      %v6694 = vrot.slane %v6662, 2
      %v6695 = vsel %vm1373, %v6693, %v6694
      %v6696 = vrot.slane %v6663, 2
      %v6697 = vrot.slane %v6664, 2
      %v6698 = vsel %vm1373, %v6696, %v6697
      %v6699 = vrot.slane %v6665, 2
      %v6700 = vrot.slane %v6666, 2
      %v6701 = vsel %vm1373, %v6699, %v6700
      %v6702 = vrot.slane %v6667, 2
      %v6703 = vrot.slane %v6668, 2
      %v6704 = vsel %vm1373, %v6702, %v6703
      %v6705 = vrot.slane %v6669, 2
      %v6706 = vrot.slane %v6670, 2
      %v6707 = vsel %vm1373, %v6705, %v6706
      %v6708 = vrot.slane %v6671, 2
      %v6709 = vrot.slane %v6672, 2
      %v6710 = vsel %vm1373, %v6708, %v6709
      %v6711 = vrot.slane %v6673, 2
      %v6712 = vrot.slane %v6674, 2
      %v6713 = vsel %vm1373, %v6711, %v6712
      %v6714 = vrot.slane %v6675, 2
      %v6715 = vrot.slane %v6676, 2
      %v6716 = vsel %vm1373, %v6714, %v6715
      %v6725 = vadd.f32 %v6645, %v6695
      %v6726 = vadd.f32 %v6646, %v6698
      %v6727 = vadd.f32 %v6647, %v6701
      %v6728 = vadd.f32 %v6648, %v6704
      %v6729 = vadd.f32 %v6649, %v6707
      %v6730 = vadd.f32 %v6650, %v6710
      %v6731 = vadd.f32 %v6651, %v6713
      %v6732 = vadd.f32 %v6652, %v6716
      %s6733 = scalar_lea.vmem %s2, 81
      %v6734 = vld [vmem:[%s6733] sm:$0x1]
      %v6736 = vlaneseq
      %v6737 = vshrl.u32 %v6736, 7
      %v6738 = vsub.s32 0, %v6737
      %v6739 = vrot.slane %v6734, %v6738
      %v6741 = vmul.f32 %v6033, %v6739
      %v6742 = vmul.f32 %v6321, %v6739
      %v6743 = vmul.f32 %v6037, %v6739
      %v6744 = vmul.f32 %v6325, %v6739
      %v6745 = vmul.f32 %v6041, %v6739
      %v6746 = vmul.f32 %v6329, %v6739
      %v6747 = vmul.f32 %v6045, %v6739
      %v6748 = vmul.f32 %v6333, %v6739
      %v6749 = vmul.f32 %v6049, %v6739
      %v6750 = vmul.f32 %v6337, %v6739
      %v6751 = vmul.f32 %v6053, %v6739
      %v6752 = vmul.f32 %v6341, %v6739
      %v6753 = vmul.f32 %v6057, %v6739
      %v6754 = vmul.f32 %v6345, %v6739
      %v6755 = vmul.f32 %v6061, %v6739
      %v6756 = vmul.f32 %v6349, %v6739
      %v6773 = vrot.slane %v6741, 2
      %v6774 = vrot.slane %v6742, 2
      %v6775 = vsel %vm1373, %v6773, %v6774
      %v6776 = vrot.slane %v6743, 2
      %v6777 = vrot.slane %v6744, 2
      %v6778 = vsel %vm1373, %v6776, %v6777
      %v6779 = vrot.slane %v6745, 2
      %v6780 = vrot.slane %v6746, 2
      %v6781 = vsel %vm1373, %v6779, %v6780
      %v6782 = vrot.slane %v6747, 2
      %v6783 = vrot.slane %v6748, 2
      %v6784 = vsel %vm1373, %v6782, %v6783
      %v6785 = vrot.slane %v6749, 2
      %v6786 = vrot.slane %v6750, 2
      %v6787 = vsel %vm1373, %v6785, %v6786
      %v6788 = vrot.slane %v6751, 2
      %v6789 = vrot.slane %v6752, 2
      %v6790 = vsel %vm1373, %v6788, %v6789
      %v6791 = vrot.slane %v6753, 2
      %v6792 = vrot.slane %v6754, 2
      %v6793 = vsel %vm1373, %v6791, %v6792
      %v6794 = vrot.slane %v6755, 2
      %v6795 = vrot.slane %v6756, 2
      %v6796 = vsel %vm1373, %v6794, %v6795
      %v6805 = vadd.f32 %v6725, %v6775
      %v6806 = vadd.f32 %v6726, %v6778
      %v6807 = vadd.f32 %v6727, %v6781
      %v6808 = vadd.f32 %v6728, %v6784
      %v6809 = vadd.f32 %v6729, %v6787
      %v6810 = vadd.f32 %v6730, %v6790
      %v6811 = vadd.f32 %v6731, %v6793
      %v6812 = vadd.f32 %v6732, %v6796
      %s6813 = scalar_lea.vmem %s2, 82
      %v6814 = vld [vmem:[%s6813] sm:$0x1]
      %v6816 = vlaneseq
      %v6817 = vshrl.u32 %v6816, 7
      %v6818 = vsub.s32 0, %v6817
      %v6819 = vrot.slane %v6814, %v6818
      %v6821 = vmul.f32 %v6089, %v6819
      %v6822 = vmul.f32 %v6433, %v6819
      %v6823 = vmul.f32 %v6093, %v6819
      %v6824 = vmul.f32 %v6437, %v6819
      %v6825 = vmul.f32 %v6097, %v6819
      %v6826 = vmul.f32 %v6441, %v6819
      %v6827 = vmul.f32 %v6101, %v6819
      %v6828 = vmul.f32 %v6445, %v6819
      %v6829 = vmul.f32 %v6105, %v6819
      %v6830 = vmul.f32 %v6449, %v6819
      %v6831 = vmul.f32 %v6109, %v6819
      %v6832 = vmul.f32 %v6453, %v6819
      %v6833 = vmul.f32 %v6113, %v6819
      %v6834 = vmul.f32 %v6457, %v6819
      %v6835 = vmul.f32 %v6117, %v6819
      %v6836 = vmul.f32 %v6461, %v6819
      %v6853 = vrot.slane %v6821, 2
      %v6854 = vrot.slane %v6822, 2
      %v6855 = vsel %vm1373, %v6853, %v6854
      %v6856 = vrot.slane %v6823, 2
      %v6857 = vrot.slane %v6824, 2
      %v6858 = vsel %vm1373, %v6856, %v6857
      %v6859 = vrot.slane %v6825, 2
      %v6860 = vrot.slane %v6826, 2
      %v6861 = vsel %vm1373, %v6859, %v6860
      %v6862 = vrot.slane %v6827, 2
      %v6863 = vrot.slane %v6828, 2
      %v6864 = vsel %vm1373, %v6862, %v6863
      %v6865 = vrot.slane %v6829, 2
      %v6866 = vrot.slane %v6830, 2
      %v6867 = vsel %vm1373, %v6865, %v6866
      %v6868 = vrot.slane %v6831, 2
      %v6869 = vrot.slane %v6832, 2
      %v6870 = vsel %vm1373, %v6868, %v6869
      %v6871 = vrot.slane %v6833, 2
      %v6872 = vrot.slane %v6834, 2
      %v6873 = vsel %vm1373, %v6871, %v6872
      %v6874 = vrot.slane %v6835, 2
      %v6875 = vrot.slane %v6836, 2
      %v6876 = vsel %vm1373, %v6874, %v6875
      %v6885 = vadd.f32 %v6805, %v6855
      %v6886 = vadd.f32 %v6806, %v6858
      %v6887 = vadd.f32 %v6807, %v6861
      %v6888 = vadd.f32 %v6808, %v6864
      %v6889 = vadd.f32 %v6809, %v6867
      %v6890 = vadd.f32 %v6810, %v6870
      %v6891 = vadd.f32 %v6811, %v6873
      %v6892 = vadd.f32 %v6812, %v6876
      %s6893 = scalar_lea.vmem %s2, 83
      %v6894 = vld [vmem:[%s6893] sm:$0x1]
      %v6896 = vlaneseq
      %v6897 = vshrl.u32 %v6896, 7
      %v6898 = vsub.s32 0, %v6897
      %v6899 = vrot.slane %v6894, %v6898
      %v6901 = vmul.f32 %v6145, %v6899
      %v6902 = vmul.f32 %v6545, %v6899
      %v6903 = vmul.f32 %v6149, %v6899
      %v6904 = vmul.f32 %v6549, %v6899
      %v6905 = vmul.f32 %v6153, %v6899
      %v6906 = vmul.f32 %v6553, %v6899
      %v6907 = vmul.f32 %v6157, %v6899
      %v6908 = vmul.f32 %v6557, %v6899
      %v6909 = vmul.f32 %v6161, %v6899
      %v6910 = vmul.f32 %v6561, %v6899
      %v6911 = vmul.f32 %v6165, %v6899
      %v6912 = vmul.f32 %v6565, %v6899
      %v6913 = vmul.f32 %v6169, %v6899
      %v6914 = vmul.f32 %v6569, %v6899
      %v6915 = vmul.f32 %v6173, %v6899
      %v6916 = vmul.f32 %v6573, %v6899
      %v6933 = vrot.slane %v6901, 2
      %v6934 = vrot.slane %v6902, 2
      %v6935 = vsel %vm1373, %v6933, %v6934
      %v6936 = vrot.slane %v6903, 2
      %v6937 = vrot.slane %v6904, 2
      %v6938 = vsel %vm1373, %v6936, %v6937
      %v6939 = vrot.slane %v6905, 2
      %v6940 = vrot.slane %v6906, 2
      %v6941 = vsel %vm1373, %v6939, %v6940
      %v6942 = vrot.slane %v6907, 2
      %v6943 = vrot.slane %v6908, 2
      %v6944 = vsel %vm1373, %v6942, %v6943
      %v6945 = vrot.slane %v6909, 2
      %v6946 = vrot.slane %v6910, 2
      %v6947 = vsel %vm1373, %v6945, %v6946
      %v6948 = vrot.slane %v6911, 2
      %v6949 = vrot.slane %v6912, 2
      %v6950 = vsel %vm1373, %v6948, %v6949
      %v6951 = vrot.slane %v6913, 2
      %v6952 = vrot.slane %v6914, 2
      %v6953 = vsel %vm1373, %v6951, %v6952
      %v6954 = vrot.slane %v6915, 2
      %v6955 = vrot.slane %v6916, 2
      %v6956 = vsel %vm1373, %v6954, %v6955
      %v6965 = vadd.f32 %v6885, %v6935
      %v6966 = vadd.f32 %v6886, %v6938
      %v6967 = vadd.f32 %v6887, %v6941
      %v6968 = vadd.f32 %v6888, %v6944
      %v6969 = vadd.f32 %v6889, %v6947
      %v6970 = vadd.f32 %v6890, %v6950
      %v6971 = vadd.f32 %v6891, %v6953
      %v6972 = vadd.f32 %v6892, %v6956
      %s6973 = scalar_lea.vmem %s2, 84
      %v6974 = vld [vmem:[%s6973] sm:$0x1]
      %6976 = vset.pattern.permute.xlu0 0
      %6977 = vperm.xlu0 %6976, %v5961
      %v6978 = vpop.permute.xlu0 %6977
      %v6981 = vlaneseq
      %v6982 = vshrl.u32 %v6981, 7
      %v6983 = vsub.s32 0, %v6982
      %v6984 = vrot.slane %v6974, %v6983
      %v6986 = vmul.f32 %v5975, %v6984
      %v6987 = vmul.f32 %v5980, %v6984
      %v6988 = vmul.f32 %v5985, %v6984
      %v6989 = vmul.f32 %v5990, %v6984
      %v6990 = vmul.f32 %v5995, %v6984
      %v6991 = vmul.f32 %v6000, %v6984
      %v6992 = vmul.f32 %v6005, %v6984
      %v6993 = vmul.f32 %v6978, %v6984
      %v6994 = vadd.f32 %v6965, %v6986
      %v6995 = vadd.f32 %v6966, %v6987
      %v6996 = vadd.f32 %v6967, %v6988
      %v6997 = vadd.f32 %v6968, %v6989
      %v6998 = vadd.f32 %v6969, %v6990
      %v6999 = vadd.f32 %v6970, %v6991
      %v7000 = vadd.f32 %v6971, %v6992
      %v7001 = vadd.f32 %v6972, %v6993
      %s7002 = scalar_lea.vmem %s2, 85
      %v7003 = vld [vmem:[%s7002] sm:$0x1]
      %7004 = vset.pattern.permute.xlu0 1
      %7005 = vperm.xlu0 %7004, %v5961
      %v7006 = vpop.permute.xlu0 %7005
      %v7009 = vlaneseq
      %v7010 = vshrl.u32 %v7009, 7
      %v7011 = vsub.s32 0, %v7010
      %v7012 = vrot.slane %v7003, %v7011
      %v7014 = vmul.f32 %v6037, %v7012
      %v7015 = vmul.f32 %v6041, %v7012
      %v7016 = vmul.f32 %v6045, %v7012
      %v7017 = vmul.f32 %v6049, %v7012
      %v7018 = vmul.f32 %v6053, %v7012
      %v7019 = vmul.f32 %v6057, %v7012
      %v7020 = vmul.f32 %v6061, %v7012
      %v7021 = vmul.f32 %v7006, %v7012
      %v7022 = vadd.f32 %v6994, %v7014
      %v7023 = vadd.f32 %v6995, %v7015
      %v7024 = vadd.f32 %v6996, %v7016
      %v7025 = vadd.f32 %v6997, %v7017
      %v7026 = vadd.f32 %v6998, %v7018
      %v7027 = vadd.f32 %v6999, %v7019
      %v7028 = vadd.f32 %v7000, %v7020
      %v7029 = vadd.f32 %v7001, %v7021
      %s7030 = scalar_lea.vmem %s2, 86
      %v7031 = vld [vmem:[%s7030] sm:$0x1]
      %7032 = vset.pattern.permute.xlu0 2
      %7033 = vperm.xlu0 %7032, %v5961
      %v7034 = vpop.permute.xlu0 %7033
      %v7037 = vlaneseq
      %v7038 = vshrl.u32 %v7037, 7
      %v7039 = vsub.s32 0, %v7038
      %v7040 = vrot.slane %v7031, %v7039
      %v7042 = vmul.f32 %v6093, %v7040
      %v7043 = vmul.f32 %v6097, %v7040
      %v7044 = vmul.f32 %v6101, %v7040
      %v7045 = vmul.f32 %v6105, %v7040
      %v7046 = vmul.f32 %v6109, %v7040
      %v7047 = vmul.f32 %v6113, %v7040
      %v7048 = vmul.f32 %v6117, %v7040
      %v7049 = vmul.f32 %v7034, %v7040
      %v7050 = vadd.f32 %v7022, %v7042
      %v7051 = vadd.f32 %v7023, %v7043
      %v7052 = vadd.f32 %v7024, %v7044
      %v7053 = vadd.f32 %v7025, %v7045
      %v7054 = vadd.f32 %v7026, %v7046
      %v7055 = vadd.f32 %v7027, %v7047
      %v7056 = vadd.f32 %v7028, %v7048
      %v7057 = vadd.f32 %v7029, %v7049
      %s7058 = scalar_lea.vmem %s2, 87
      %v7059 = vld [vmem:[%s7058] sm:$0x1]
      %7060 = vset.pattern.permute.xlu0 3
      %7061 = vperm.xlu0 %7060, %v5961
      %v7062 = vpop.permute.xlu0 %7061
      %v7065 = vlaneseq
      %v7066 = vshrl.u32 %v7065, 7
      %v7067 = vsub.s32 0, %v7066
      %v7068 = vrot.slane %v7059, %v7067
      %v7070 = vmul.f32 %v6149, %v7068
      %v7071 = vmul.f32 %v6153, %v7068
      %v7072 = vmul.f32 %v6157, %v7068
      %v7073 = vmul.f32 %v6161, %v7068
      %v7074 = vmul.f32 %v6165, %v7068
      %v7075 = vmul.f32 %v6169, %v7068
      %v7076 = vmul.f32 %v6173, %v7068
      %v7077 = vmul.f32 %v7062, %v7068
      %v7078 = vadd.f32 %v7050, %v7070
      %v7079 = vadd.f32 %v7051, %v7071
      %v7080 = vadd.f32 %v7052, %v7072
      %v7081 = vadd.f32 %v7053, %v7073
      %v7082 = vadd.f32 %v7054, %v7074
      %v7083 = vadd.f32 %v7055, %v7075
      %v7084 = vadd.f32 %v7056, %v7076
      %v7085 = vadd.f32 %v7057, %v7077
      %s7086 = scalar_lea.vmem %s2, 88
      %v7087 = vld [vmem:[%s7086] sm:$0x1]
      %7089 = vset.pattern.permute.xlu0 0
      %7090 = vperm.xlu0 %7089, %v5962
      %v7091 = vpop.permute.xlu0 %7090
      %v7094 = vlaneseq
      %v7095 = vshrl.u32 %v7094, 7
      %v7096 = vsub.s32 0, %v7095
      %v7097 = vrot.slane %v7087, %v7096
      %v7099 = vmul.f32 %v5975, %v7097
      %v7100 = vmul.f32 %v6207, %v7097
      %v7101 = vmul.f32 %v5980, %v7097
      %v7102 = vmul.f32 %v6212, %v7097
      %v7103 = vmul.f32 %v5985, %v7097
      %v7104 = vmul.f32 %v6217, %v7097
      %v7105 = vmul.f32 %v5990, %v7097
      %v7106 = vmul.f32 %v6222, %v7097
      %v7107 = vmul.f32 %v5995, %v7097
      %v7108 = vmul.f32 %v6227, %v7097
      %v7109 = vmul.f32 %v6000, %v7097
      %v7110 = vmul.f32 %v6232, %v7097
      %v7111 = vmul.f32 %v6005, %v7097
      %v7112 = vmul.f32 %v6237, %v7097
      %v7113 = vmul.f32 %v6978, %v7097
      %v7114 = vmul.f32 %v7091, %v7097
      %v7131 = vrot.slane %v7099, 1
      %v7132 = vrot.slane %v7100, 1
      %v7133 = vsel %vm956, %v7131, %v7132
      %v7134 = vrot.slane %v7101, 1
      %v7135 = vrot.slane %v7102, 1
      %v7136 = vsel %vm956, %v7134, %v7135
      %v7137 = vrot.slane %v7103, 1
      %v7138 = vrot.slane %v7104, 1
      %v7139 = vsel %vm956, %v7137, %v7138
      %v7140 = vrot.slane %v7105, 1
      %v7141 = vrot.slane %v7106, 1
      %v7142 = vsel %vm956, %v7140, %v7141
      %v7143 = vrot.slane %v7107, 1
      %v7144 = vrot.slane %v7108, 1
      %v7145 = vsel %vm956, %v7143, %v7144
      %v7146 = vrot.slane %v7109, 1
      %v7147 = vrot.slane %v7110, 1
      %v7148 = vsel %vm956, %v7146, %v7147
      %v7149 = vrot.slane %v7111, 1
      %v7150 = vrot.slane %v7112, 1
      %v7151 = vsel %vm956, %v7149, %v7150
      %v7152 = vrot.slane %v7113, 1
      %v7153 = vrot.slane %v7114, 1
      %v7154 = vsel %vm956, %v7152, %v7153
      %v7163 = vadd.f32 %v7078, %v7133
      %v7164 = vadd.f32 %v7079, %v7136
      %v7165 = vadd.f32 %v7080, %v7139
      %v7166 = vadd.f32 %v7081, %v7142
      %v7167 = vadd.f32 %v7082, %v7145
      %v7168 = vadd.f32 %v7083, %v7148
      %v7169 = vadd.f32 %v7084, %v7151
      %v7170 = vadd.f32 %v7085, %v7154
      %s7171 = scalar_lea.vmem %s2, 89
      %v7172 = vld [vmem:[%s7171] sm:$0x1]
      %7173 = vset.pattern.permute.xlu0 1
      %7174 = vperm.xlu0 %7173, %v5962
      %v7175 = vpop.permute.xlu0 %7174
      %v7178 = vlaneseq
      %v7179 = vshrl.u32 %v7178, 7
      %v7180 = vsub.s32 0, %v7179
      %v7181 = vrot.slane %v7172, %v7180
      %v7183 = vmul.f32 %v6037, %v7181
      %v7184 = vmul.f32 %v6325, %v7181
      %v7185 = vmul.f32 %v6041, %v7181
      %v7186 = vmul.f32 %v6329, %v7181
      %v7187 = vmul.f32 %v6045, %v7181
      %v7188 = vmul.f32 %v6333, %v7181
      %v7189 = vmul.f32 %v6049, %v7181
      %v7190 = vmul.f32 %v6337, %v7181
      %v7191 = vmul.f32 %v6053, %v7181
      %v7192 = vmul.f32 %v6341, %v7181
      %v7193 = vmul.f32 %v6057, %v7181
      %v7194 = vmul.f32 %v6345, %v7181
      %v7195 = vmul.f32 %v6061, %v7181
      %v7196 = vmul.f32 %v6349, %v7181
      %v7197 = vmul.f32 %v7006, %v7181
      %v7198 = vmul.f32 %v7175, %v7181
      %v7215 = vrot.slane %v7183, 1
      %v7216 = vrot.slane %v7184, 1
      %v7217 = vsel %vm956, %v7215, %v7216
      %v7218 = vrot.slane %v7185, 1
      %v7219 = vrot.slane %v7186, 1
      %v7220 = vsel %vm956, %v7218, %v7219
      %v7221 = vrot.slane %v7187, 1
      %v7222 = vrot.slane %v7188, 1
      %v7223 = vsel %vm956, %v7221, %v7222
      %v7224 = vrot.slane %v7189, 1
      %v7225 = vrot.slane %v7190, 1
      %v7226 = vsel %vm956, %v7224, %v7225
      %v7227 = vrot.slane %v7191, 1
      %v7228 = vrot.slane %v7192, 1
      %v7229 = vsel %vm956, %v7227, %v7228
      %v7230 = vrot.slane %v7193, 1
      %v7231 = vrot.slane %v7194, 1
      %v7232 = vsel %vm956, %v7230, %v7231
      %v7233 = vrot.slane %v7195, 1
      %v7234 = vrot.slane %v7196, 1
      %v7235 = vsel %vm956, %v7233, %v7234
      %v7236 = vrot.slane %v7197, 1
      %v7237 = vrot.slane %v7198, 1
      %v7238 = vsel %vm956, %v7236, %v7237
      %v7247 = vadd.f32 %v7163, %v7217
      %v7248 = vadd.f32 %v7164, %v7220
      %v7249 = vadd.f32 %v7165, %v7223
      %v7250 = vadd.f32 %v7166, %v7226
      %v7251 = vadd.f32 %v7167, %v7229
      %v7252 = vadd.f32 %v7168, %v7232
      %v7253 = vadd.f32 %v7169, %v7235
      %v7254 = vadd.f32 %v7170, %v7238
      %s7255 = scalar_lea.vmem %s2, 90
      %v7256 = vld [vmem:[%s7255] sm:$0x1]
      %7257 = vset.pattern.permute.xlu0 2
      %7258 = vperm.xlu0 %7257, %v5962
      %v7259 = vpop.permute.xlu0 %7258
      %v7262 = vlaneseq
      %v7263 = vshrl.u32 %v7262, 7
      %v7264 = vsub.s32 0, %v7263
      %v7265 = vrot.slane %v7256, %v7264
      %v7267 = vmul.f32 %v6093, %v7265
      %v7268 = vmul.f32 %v6437, %v7265
      %v7269 = vmul.f32 %v6097, %v7265
      %v7270 = vmul.f32 %v6441, %v7265
      %v7271 = vmul.f32 %v6101, %v7265
      %v7272 = vmul.f32 %v6445, %v7265
      %v7273 = vmul.f32 %v6105, %v7265
      %v7274 = vmul.f32 %v6449, %v7265
      %v7275 = vmul.f32 %v6109, %v7265
      %v7276 = vmul.f32 %v6453, %v7265
      %v7277 = vmul.f32 %v6113, %v7265
      %v7278 = vmul.f32 %v6457, %v7265
      %v7279 = vmul.f32 %v6117, %v7265
      %v7280 = vmul.f32 %v6461, %v7265
      %v7281 = vmul.f32 %v7034, %v7265
      %v7282 = vmul.f32 %v7259, %v7265
      %v7299 = vrot.slane %v7267, 1
      %v7300 = vrot.slane %v7268, 1
      %v7301 = vsel %vm956, %v7299, %v7300
      %v7302 = vrot.slane %v7269, 1
      %v7303 = vrot.slane %v7270, 1
      %v7304 = vsel %vm956, %v7302, %v7303
      %v7305 = vrot.slane %v7271, 1
      %v7306 = vrot.slane %v7272, 1
      %v7307 = vsel %vm956, %v7305, %v7306
      %v7308 = vrot.slane %v7273, 1
      %v7309 = vrot.slane %v7274, 1
      %v7310 = vsel %vm956, %v7308, %v7309
      %v7311 = vrot.slane %v7275, 1
      %v7312 = vrot.slane %v7276, 1
      %v7313 = vsel %vm956, %v7311, %v7312
      %v7314 = vrot.slane %v7277, 1
      %v7315 = vrot.slane %v7278, 1
      %v7316 = vsel %vm956, %v7314, %v7315
      %v7317 = vrot.slane %v7279, 1
      %v7318 = vrot.slane %v7280, 1
      %v7319 = vsel %vm956, %v7317, %v7318
      %v7320 = vrot.slane %v7281, 1
      %v7321 = vrot.slane %v7282, 1
      %v7322 = vsel %vm956, %v7320, %v7321
      %v7331 = vadd.f32 %v7247, %v7301
      %v7332 = vadd.f32 %v7248, %v7304
      %v7333 = vadd.f32 %v7249, %v7307
      %v7334 = vadd.f32 %v7250, %v7310
      %v7335 = vadd.f32 %v7251, %v7313
      %v7336 = vadd.f32 %v7252, %v7316
      %v7337 = vadd.f32 %v7253, %v7319
      %v7338 = vadd.f32 %v7254, %v7322
      %s7339 = scalar_lea.vmem %s2, 91
      %v7340 = vld [vmem:[%s7339] sm:$0x1]
      %7341 = vset.pattern.permute.xlu0 3
      %7342 = vperm.xlu0 %7341, %v5962
      %v7343 = vpop.permute.xlu0 %7342
      %v7346 = vlaneseq
      %v7347 = vshrl.u32 %v7346, 7
      %v7348 = vsub.s32 0, %v7347
      %v7349 = vrot.slane %v7340, %v7348
      %v7351 = vmul.f32 %v6149, %v7349
      %v7352 = vmul.f32 %v6549, %v7349
      %v7353 = vmul.f32 %v6153, %v7349
      %v7354 = vmul.f32 %v6553, %v7349
      %v7355 = vmul.f32 %v6157, %v7349
      %v7356 = vmul.f32 %v6557, %v7349
      %v7357 = vmul.f32 %v6161, %v7349
      %v7358 = vmul.f32 %v6561, %v7349
      %v7359 = vmul.f32 %v6165, %v7349
      %v7360 = vmul.f32 %v6565, %v7349
      %v7361 = vmul.f32 %v6169, %v7349
      %v7362 = vmul.f32 %v6569, %v7349
      %v7363 = vmul.f32 %v6173, %v7349
      %v7364 = vmul.f32 %v6573, %v7349
      %v7365 = vmul.f32 %v7062, %v7349
      %v7366 = vmul.f32 %v7343, %v7349
      %v7383 = vrot.slane %v7351, 1
      %v7384 = vrot.slane %v7352, 1
      %v7385 = vsel %vm956, %v7383, %v7384
      %v7386 = vrot.slane %v7353, 1
      %v7387 = vrot.slane %v7354, 1
      %v7388 = vsel %vm956, %v7386, %v7387
      %v7389 = vrot.slane %v7355, 1
      %v7390 = vrot.slane %v7356, 1
      %v7391 = vsel %vm956, %v7389, %v7390
      %v7392 = vrot.slane %v7357, 1
      %v7393 = vrot.slane %v7358, 1
      %v7394 = vsel %vm956, %v7392, %v7393
      %v7395 = vrot.slane %v7359, 1
      %v7396 = vrot.slane %v7360, 1
      %v7397 = vsel %vm956, %v7395, %v7396
      %v7398 = vrot.slane %v7361, 1
      %v7399 = vrot.slane %v7362, 1
      %v7400 = vsel %vm956, %v7398, %v7399
      %v7401 = vrot.slane %v7363, 1
      %v7402 = vrot.slane %v7364, 1
      %v7403 = vsel %vm956, %v7401, %v7402
      %v7404 = vrot.slane %v7365, 1
      %v7405 = vrot.slane %v7366, 1
      %v7406 = vsel %vm956, %v7404, %v7405
      %v7415 = vadd.f32 %v7331, %v7385
      %v7416 = vadd.f32 %v7332, %v7388
      %v7417 = vadd.f32 %v7333, %v7391
      %v7418 = vadd.f32 %v7334, %v7394
      %v7419 = vadd.f32 %v7335, %v7397
      %v7420 = vadd.f32 %v7336, %v7400
      %v7421 = vadd.f32 %v7337, %v7403
      %v7422 = vadd.f32 %v7338, %v7406
      %s7423 = scalar_lea.vmem %s2, 92
      %v7424 = vld [vmem:[%s7423] sm:$0x1]
      %v7426 = vlaneseq
      %v7427 = vshrl.u32 %v7426, 7
      %v7428 = vsub.s32 0, %v7427
      %v7429 = vrot.slane %v7424, %v7428
      %v7431 = vmul.f32 %v5975, %v7429
      %v7432 = vmul.f32 %v6207, %v7429
      %v7433 = vmul.f32 %v5980, %v7429
      %v7434 = vmul.f32 %v6212, %v7429
      %v7435 = vmul.f32 %v5985, %v7429
      %v7436 = vmul.f32 %v6217, %v7429
      %v7437 = vmul.f32 %v5990, %v7429
      %v7438 = vmul.f32 %v6222, %v7429
      %v7439 = vmul.f32 %v5995, %v7429
      %v7440 = vmul.f32 %v6227, %v7429
      %v7441 = vmul.f32 %v6000, %v7429
      %v7442 = vmul.f32 %v6232, %v7429
      %v7443 = vmul.f32 %v6005, %v7429
      %v7444 = vmul.f32 %v6237, %v7429
      %v7445 = vmul.f32 %v6978, %v7429
      %v7446 = vmul.f32 %v7091, %v7429
      %v7463 = vrot.slane %v7431, 2
      %v7464 = vrot.slane %v7432, 2
      %v7465 = vsel %vm1373, %v7463, %v7464
      %v7466 = vrot.slane %v7433, 2
      %v7467 = vrot.slane %v7434, 2
      %v7468 = vsel %vm1373, %v7466, %v7467
      %v7469 = vrot.slane %v7435, 2
      %v7470 = vrot.slane %v7436, 2
      %v7471 = vsel %vm1373, %v7469, %v7470
      %v7472 = vrot.slane %v7437, 2
      %v7473 = vrot.slane %v7438, 2
      %v7474 = vsel %vm1373, %v7472, %v7473
      %v7475 = vrot.slane %v7439, 2
      %v7476 = vrot.slane %v7440, 2
      %v7477 = vsel %vm1373, %v7475, %v7476
      %v7478 = vrot.slane %v7441, 2
      %v7479 = vrot.slane %v7442, 2
      %v7480 = vsel %vm1373, %v7478, %v7479
      %v7481 = vrot.slane %v7443, 2
      %v7482 = vrot.slane %v7444, 2
      %v7483 = vsel %vm1373, %v7481, %v7482
      %v7484 = vrot.slane %v7445, 2
      %v7485 = vrot.slane %v7446, 2
      %v7486 = vsel %vm1373, %v7484, %v7485
      %v7495 = vadd.f32 %v7415, %v7465
      %v7496 = vadd.f32 %v7416, %v7468
      %v7497 = vadd.f32 %v7417, %v7471
      %v7498 = vadd.f32 %v7418, %v7474
      %v7499 = vadd.f32 %v7419, %v7477
      %v7500 = vadd.f32 %v7420, %v7480
      %v7501 = vadd.f32 %v7421, %v7483
      %v7502 = vadd.f32 %v7422, %v7486
      %s7503 = scalar_lea.vmem %s2, 93
      %v7504 = vld [vmem:[%s7503] sm:$0x1]
      %v7506 = vlaneseq
      %v7507 = vshrl.u32 %v7506, 7
      %v7508 = vsub.s32 0, %v7507
      %v7509 = vrot.slane %v7504, %v7508
      %v7511 = vmul.f32 %v6037, %v7509
      %v7512 = vmul.f32 %v6325, %v7509
      %v7513 = vmul.f32 %v6041, %v7509
      %v7514 = vmul.f32 %v6329, %v7509
      %v7515 = vmul.f32 %v6045, %v7509
      %v7516 = vmul.f32 %v6333, %v7509
      %v7517 = vmul.f32 %v6049, %v7509
      %v7518 = vmul.f32 %v6337, %v7509
      %v7519 = vmul.f32 %v6053, %v7509
      %v7520 = vmul.f32 %v6341, %v7509
      %v7521 = vmul.f32 %v6057, %v7509
      %v7522 = vmul.f32 %v6345, %v7509
      %v7523 = vmul.f32 %v6061, %v7509
      %v7524 = vmul.f32 %v6349, %v7509
      %v7525 = vmul.f32 %v7006, %v7509
      %v7526 = vmul.f32 %v7175, %v7509
      %v7543 = vrot.slane %v7511, 2
      %v7544 = vrot.slane %v7512, 2
      %v7545 = vsel %vm1373, %v7543, %v7544
      %v7546 = vrot.slane %v7513, 2
      %v7547 = vrot.slane %v7514, 2
      %v7548 = vsel %vm1373, %v7546, %v7547
      %v7549 = vrot.slane %v7515, 2
      %v7550 = vrot.slane %v7516, 2
      %v7551 = vsel %vm1373, %v7549, %v7550
      %v7552 = vrot.slane %v7517, 2
      %v7553 = vrot.slane %v7518, 2
      %v7554 = vsel %vm1373, %v7552, %v7553
      %v7555 = vrot.slane %v7519, 2
      %v7556 = vrot.slane %v7520, 2
      %v7557 = vsel %vm1373, %v7555, %v7556
      %v7558 = vrot.slane %v7521, 2
      %v7559 = vrot.slane %v7522, 2
      %v7560 = vsel %vm1373, %v7558, %v7559
      %v7561 = vrot.slane %v7523, 2
      %v7562 = vrot.slane %v7524, 2
      %v7563 = vsel %vm1373, %v7561, %v7562
      %v7564 = vrot.slane %v7525, 2
      %v7565 = vrot.slane %v7526, 2
      %v7566 = vsel %vm1373, %v7564, %v7565
      %v7575 = vadd.f32 %v7495, %v7545
      %v7576 = vadd.f32 %v7496, %v7548
      %v7577 = vadd.f32 %v7497, %v7551
      %v7578 = vadd.f32 %v7498, %v7554
      %v7579 = vadd.f32 %v7499, %v7557
      %v7580 = vadd.f32 %v7500, %v7560
      %v7581 = vadd.f32 %v7501, %v7563
      %v7582 = vadd.f32 %v7502, %v7566
      %s7583 = scalar_lea.vmem %s2, 94
      %v7584 = vld [vmem:[%s7583] sm:$0x1]
      %v7586 = vlaneseq
      %v7587 = vshrl.u32 %v7586, 7
      %v7588 = vsub.s32 0, %v7587
      %v7589 = vrot.slane %v7584, %v7588
      %v7591 = vmul.f32 %v6093, %v7589
      %v7592 = vmul.f32 %v6437, %v7589
      %v7593 = vmul.f32 %v6097, %v7589
      %v7594 = vmul.f32 %v6441, %v7589
      %v7595 = vmul.f32 %v6101, %v7589
      %v7596 = vmul.f32 %v6445, %v7589
      %v7597 = vmul.f32 %v6105, %v7589
      %v7598 = vmul.f32 %v6449, %v7589
      %v7599 = vmul.f32 %v6109, %v7589
      %v7600 = vmul.f32 %v6453, %v7589
      %v7601 = vmul.f32 %v6113, %v7589
      %v7602 = vmul.f32 %v6457, %v7589
      %v7603 = vmul.f32 %v6117, %v7589
      %v7604 = vmul.f32 %v6461, %v7589
      %v7605 = vmul.f32 %v7034, %v7589
      %v7606 = vmul.f32 %v7259, %v7589
      %v7623 = vrot.slane %v7591, 2
      %v7624 = vrot.slane %v7592, 2
      %v7625 = vsel %vm1373, %v7623, %v7624
      %v7626 = vrot.slane %v7593, 2
      %v7627 = vrot.slane %v7594, 2
      %v7628 = vsel %vm1373, %v7626, %v7627
      %v7629 = vrot.slane %v7595, 2
      %v7630 = vrot.slane %v7596, 2
      %v7631 = vsel %vm1373, %v7629, %v7630
      %v7632 = vrot.slane %v7597, 2
      %v7633 = vrot.slane %v7598, 2
      %v7634 = vsel %vm1373, %v7632, %v7633
      %v7635 = vrot.slane %v7599, 2
      %v7636 = vrot.slane %v7600, 2
      %v7637 = vsel %vm1373, %v7635, %v7636
      %v7638 = vrot.slane %v7601, 2
      %v7639 = vrot.slane %v7602, 2
      %v7640 = vsel %vm1373, %v7638, %v7639
      %v7641 = vrot.slane %v7603, 2
      %v7642 = vrot.slane %v7604, 2
      %v7643 = vsel %vm1373, %v7641, %v7642
      %v7644 = vrot.slane %v7605, 2
      %v7645 = vrot.slane %v7606, 2
      %v7646 = vsel %vm1373, %v7644, %v7645
      %v7655 = vadd.f32 %v7575, %v7625
      %v7656 = vadd.f32 %v7576, %v7628
      %v7657 = vadd.f32 %v7577, %v7631
      %v7658 = vadd.f32 %v7578, %v7634
      %v7659 = vadd.f32 %v7579, %v7637
      %v7660 = vadd.f32 %v7580, %v7640
      %v7661 = vadd.f32 %v7581, %v7643
      %v7662 = vadd.f32 %v7582, %v7646
      %s7663 = scalar_lea.vmem %s2, 95
      %v7664 = vld [vmem:[%s7663] sm:$0x1]
      %v7666 = vlaneseq
      %v7667 = vshrl.u32 %v7666, 7
      %v7668 = vsub.s32 0, %v7667
      %v7669 = vrot.slane %v7664, %v7668
      %v7671 = vmul.f32 %v6149, %v7669
      %v7672 = vmul.f32 %v6549, %v7669
      %v7673 = vmul.f32 %v6153, %v7669
      %v7674 = vmul.f32 %v6553, %v7669
      %v7675 = vmul.f32 %v6157, %v7669
      %v7676 = vmul.f32 %v6557, %v7669
      %v7677 = vmul.f32 %v6161, %v7669
      %v7678 = vmul.f32 %v6561, %v7669
      %v7679 = vmul.f32 %v6165, %v7669
      %v7680 = vmul.f32 %v6565, %v7669
      %v7681 = vmul.f32 %v6169, %v7669
      %v7682 = vmul.f32 %v6569, %v7669
      %v7683 = vmul.f32 %v6173, %v7669
      %v7684 = vmul.f32 %v6573, %v7669
      %v7685 = vmul.f32 %v7062, %v7669
      %v7686 = vmul.f32 %v7343, %v7669
      %v7703 = vrot.slane %v7671, 2
      %v7704 = vrot.slane %v7672, 2
      %v7705 = vsel %vm1373, %v7703, %v7704
      %v7706 = vrot.slane %v7673, 2
      %v7707 = vrot.slane %v7674, 2
      %v7708 = vsel %vm1373, %v7706, %v7707
      %v7709 = vrot.slane %v7675, 2
      %v7710 = vrot.slane %v7676, 2
      %v7711 = vsel %vm1373, %v7709, %v7710
      %v7712 = vrot.slane %v7677, 2
      %v7713 = vrot.slane %v7678, 2
      %v7714 = vsel %vm1373, %v7712, %v7713
      %v7715 = vrot.slane %v7679, 2
      %v7716 = vrot.slane %v7680, 2
      %v7717 = vsel %vm1373, %v7715, %v7716
      %v7718 = vrot.slane %v7681, 2
      %v7719 = vrot.slane %v7682, 2
      %v7720 = vsel %vm1373, %v7718, %v7719
      %v7721 = vrot.slane %v7683, 2
      %v7722 = vrot.slane %v7684, 2
      %v7723 = vsel %vm1373, %v7721, %v7722
      %v7724 = vrot.slane %v7685, 2
      %v7725 = vrot.slane %v7686, 2
      %v7726 = vsel %vm1373, %v7724, %v7725
      %v7735 = vadd.f32 %v7655, %v7705
      %v7736 = vadd.f32 %v7656, %v7708
      %v7737 = vadd.f32 %v7657, %v7711
      %v7738 = vadd.f32 %v7658, %v7714
      %v7739 = vadd.f32 %v7659, %v7717
      %v7740 = vadd.f32 %v7660, %v7720
      %v7741 = vadd.f32 %v7661, %v7723
      %v7742 = vadd.f32 %v7662, %v7726
      %s7743 = scalar_lea.vmem %s2, 96
      %v7744 = vld [vmem:[%s7743] sm:$0x1]
      %7746 = vset.pattern.permute.xlu0 0
      %7747 = vperm.xlu0 %7746, %v5963
      %v7748 = vpop.permute.xlu0 %7747
      %v7751 = vlaneseq
      %v7752 = vshrl.u32 %v7751, 7
      %v7753 = vsub.s32 0, %v7752
      %v7754 = vrot.slane %v7744, %v7753
      %v7756 = vmul.f32 %v5980, %v7754
      %v7757 = vmul.f32 %v5985, %v7754
      %v7758 = vmul.f32 %v5990, %v7754
      %v7759 = vmul.f32 %v5995, %v7754
      %v7760 = vmul.f32 %v6000, %v7754
      %v7761 = vmul.f32 %v6005, %v7754
      %v7762 = vmul.f32 %v6978, %v7754
      %v7763 = vmul.f32 %v7748, %v7754
      %v7764 = vadd.f32 %v7735, %v7756
      %v7765 = vadd.f32 %v7736, %v7757
      %v7766 = vadd.f32 %v7737, %v7758
      %v7767 = vadd.f32 %v7738, %v7759
      %v7768 = vadd.f32 %v7739, %v7760
      %v7769 = vadd.f32 %v7740, %v7761
      %v7770 = vadd.f32 %v7741, %v7762
      %v7771 = vadd.f32 %v7742, %v7763
      %s7772 = scalar_lea.vmem %s2, 97
      %v7773 = vld [vmem:[%s7772] sm:$0x1]
      %7774 = vset.pattern.permute.xlu0 1
      %7775 = vperm.xlu0 %7774, %v5963
      %v7776 = vpop.permute.xlu0 %7775
      %v7779 = vlaneseq
      %v7780 = vshrl.u32 %v7779, 7
      %v7781 = vsub.s32 0, %v7780
      %v7782 = vrot.slane %v7773, %v7781
      %v7784 = vmul.f32 %v6041, %v7782
      %v7785 = vmul.f32 %v6045, %v7782
      %v7786 = vmul.f32 %v6049, %v7782
      %v7787 = vmul.f32 %v6053, %v7782
      %v7788 = vmul.f32 %v6057, %v7782
      %v7789 = vmul.f32 %v6061, %v7782
      %v7790 = vmul.f32 %v7006, %v7782
      %v7791 = vmul.f32 %v7776, %v7782
      %v7792 = vadd.f32 %v7764, %v7784
      %v7793 = vadd.f32 %v7765, %v7785
      %v7794 = vadd.f32 %v7766, %v7786
      %v7795 = vadd.f32 %v7767, %v7787
      %v7796 = vadd.f32 %v7768, %v7788
      %v7797 = vadd.f32 %v7769, %v7789
      %v7798 = vadd.f32 %v7770, %v7790
      %v7799 = vadd.f32 %v7771, %v7791
      %s7800 = scalar_lea.vmem %s2, 98
      %v7801 = vld [vmem:[%s7800] sm:$0x1]
      %7802 = vset.pattern.permute.xlu0 2
      %7803 = vperm.xlu0 %7802, %v5963
      %v7804 = vpop.permute.xlu0 %7803
      %v7807 = vlaneseq
      %v7808 = vshrl.u32 %v7807, 7
      %v7809 = vsub.s32 0, %v7808
      %v7810 = vrot.slane %v7801, %v7809
      %v7812 = vmul.f32 %v6097, %v7810
      %v7813 = vmul.f32 %v6101, %v7810
      %v7814 = vmul.f32 %v6105, %v7810
      %v7815 = vmul.f32 %v6109, %v7810
      %v7816 = vmul.f32 %v6113, %v7810
      %v7817 = vmul.f32 %v6117, %v7810
      %v7818 = vmul.f32 %v7034, %v7810
      %v7819 = vmul.f32 %v7804, %v7810
      %v7820 = vadd.f32 %v7792, %v7812
      %v7821 = vadd.f32 %v7793, %v7813
      %v7822 = vadd.f32 %v7794, %v7814
      %v7823 = vadd.f32 %v7795, %v7815
      %v7824 = vadd.f32 %v7796, %v7816
      %v7825 = vadd.f32 %v7797, %v7817
      %v7826 = vadd.f32 %v7798, %v7818
      %v7827 = vadd.f32 %v7799, %v7819
      %s7828 = scalar_lea.vmem %s2, 99
      %v7829 = vld [vmem:[%s7828] sm:$0x1]
      %7830 = vset.pattern.permute.xlu0 3
      %7831 = vperm.xlu0 %7830, %v5963
      %v7832 = vpop.permute.xlu0 %7831
      %v7835 = vlaneseq
      %v7836 = vshrl.u32 %v7835, 7
      %v7837 = vsub.s32 0, %v7836
      %v7838 = vrot.slane %v7829, %v7837
      %v7840 = vmul.f32 %v6153, %v7838
      %v7841 = vmul.f32 %v6157, %v7838
      %v7842 = vmul.f32 %v6161, %v7838
      %v7843 = vmul.f32 %v6165, %v7838
      %v7844 = vmul.f32 %v6169, %v7838
      %v7845 = vmul.f32 %v6173, %v7838
      %v7846 = vmul.f32 %v7062, %v7838
      %v7847 = vmul.f32 %v7832, %v7838
      %v7848 = vadd.f32 %v7820, %v7840
      %v7849 = vadd.f32 %v7821, %v7841
      %v7850 = vadd.f32 %v7822, %v7842
      %v7851 = vadd.f32 %v7823, %v7843
      %v7852 = vadd.f32 %v7824, %v7844
      %v7853 = vadd.f32 %v7825, %v7845
      %v7854 = vadd.f32 %v7826, %v7846
      %v7855 = vadd.f32 %v7827, %v7847
      %s7856 = scalar_lea.vmem %s2, 100
      %v7857 = vld [vmem:[%s7856] sm:$0x1]
      %7859 = vset.pattern.permute.xlu0 0
      %7860 = vperm.xlu0 %7859, %v5964
      %v7861 = vpop.permute.xlu0 %7860
      %v7864 = vlaneseq
      %v7865 = vshrl.u32 %v7864, 7
      %v7866 = vsub.s32 0, %v7865
      %v7867 = vrot.slane %v7857, %v7866
      %v7869 = vmul.f32 %v5980, %v7867
      %v7870 = vmul.f32 %v6212, %v7867
      %v7871 = vmul.f32 %v5985, %v7867
      %v7872 = vmul.f32 %v6217, %v7867
      %v7873 = vmul.f32 %v5990, %v7867
      %v7874 = vmul.f32 %v6222, %v7867
      %v7875 = vmul.f32 %v5995, %v7867
      %v7876 = vmul.f32 %v6227, %v7867
      %v7877 = vmul.f32 %v6000, %v7867
      %v7878 = vmul.f32 %v6232, %v7867
      %v7879 = vmul.f32 %v6005, %v7867
      %v7880 = vmul.f32 %v6237, %v7867
      %v7881 = vmul.f32 %v6978, %v7867
      %v7882 = vmul.f32 %v7091, %v7867
      %v7883 = vmul.f32 %v7748, %v7867
      %v7884 = vmul.f32 %v7861, %v7867
      %v7901 = vrot.slane %v7869, 1
      %v7902 = vrot.slane %v7870, 1
      %v7903 = vsel %vm956, %v7901, %v7902
      %v7904 = vrot.slane %v7871, 1
      %v7905 = vrot.slane %v7872, 1
      %v7906 = vsel %vm956, %v7904, %v7905
      %v7907 = vrot.slane %v7873, 1
      %v7908 = vrot.slane %v7874, 1
      %v7909 = vsel %vm956, %v7907, %v7908
      %v7910 = vrot.slane %v7875, 1
      %v7911 = vrot.slane %v7876, 1
      %v7912 = vsel %vm956, %v7910, %v7911
      %v7913 = vrot.slane %v7877, 1
      %v7914 = vrot.slane %v7878, 1
      %v7915 = vsel %vm956, %v7913, %v7914
      %v7916 = vrot.slane %v7879, 1
      %v7917 = vrot.slane %v7880, 1
      %v7918 = vsel %vm956, %v7916, %v7917
      %v7919 = vrot.slane %v7881, 1
      %v7920 = vrot.slane %v7882, 1
      %v7921 = vsel %vm956, %v7919, %v7920
      %v7922 = vrot.slane %v7883, 1
      %v7923 = vrot.slane %v7884, 1
      %v7924 = vsel %vm956, %v7922, %v7923
      %v7933 = vadd.f32 %v7848, %v7903
      %v7934 = vadd.f32 %v7849, %v7906
      %v7935 = vadd.f32 %v7850, %v7909
      %v7936 = vadd.f32 %v7851, %v7912
      %v7937 = vadd.f32 %v7852, %v7915
      %v7938 = vadd.f32 %v7853, %v7918
      %v7939 = vadd.f32 %v7854, %v7921
      %v7940 = vadd.f32 %v7855, %v7924
      %s7941 = scalar_lea.vmem %s2, 101
      %v7942 = vld [vmem:[%s7941] sm:$0x1]
      %7943 = vset.pattern.permute.xlu0 1
      %7944 = vperm.xlu0 %7943, %v5964
      %v7945 = vpop.permute.xlu0 %7944
      %v7948 = vlaneseq
      %v7949 = vshrl.u32 %v7948, 7
      %v7950 = vsub.s32 0, %v7949
      %v7951 = vrot.slane %v7942, %v7950
      %v7953 = vmul.f32 %v6041, %v7951
      %v7954 = vmul.f32 %v6329, %v7951
      %v7955 = vmul.f32 %v6045, %v7951
      %v7956 = vmul.f32 %v6333, %v7951
      %v7957 = vmul.f32 %v6049, %v7951
      %v7958 = vmul.f32 %v6337, %v7951
      %v7959 = vmul.f32 %v6053, %v7951
      %v7960 = vmul.f32 %v6341, %v7951
      %v7961 = vmul.f32 %v6057, %v7951
      %v7962 = vmul.f32 %v6345, %v7951
      %v7963 = vmul.f32 %v6061, %v7951
      %v7964 = vmul.f32 %v6349, %v7951
      %v7965 = vmul.f32 %v7006, %v7951
      %v7966 = vmul.f32 %v7175, %v7951
      %v7967 = vmul.f32 %v7776, %v7951
      %v7968 = vmul.f32 %v7945, %v7951
      %v7985 = vrot.slane %v7953, 1
      %v7986 = vrot.slane %v7954, 1
      %v7987 = vsel %vm956, %v7985, %v7986
      %v7988 = vrot.slane %v7955, 1
      %v7989 = vrot.slane %v7956, 1
      %v7990 = vsel %vm956, %v7988, %v7989
      %v7991 = vrot.slane %v7957, 1
      %v7992 = vrot.slane %v7958, 1
      %v7993 = vsel %vm956, %v7991, %v7992
      %v7994 = vrot.slane %v7959, 1
      %v7995 = vrot.slane %v7960, 1
      %v7996 = vsel %vm956, %v7994, %v7995
      %v7997 = vrot.slane %v7961, 1
      %v7998 = vrot.slane %v7962, 1
      %v7999 = vsel %vm956, %v7997, %v7998
      %v8000 = vrot.slane %v7963, 1
      %v8001 = vrot.slane %v7964, 1
      %v8002 = vsel %vm956, %v8000, %v8001
      %v8003 = vrot.slane %v7965, 1
      %v8004 = vrot.slane %v7966, 1
      %v8005 = vsel %vm956, %v8003, %v8004
      %v8006 = vrot.slane %v7967, 1
      %v8007 = vrot.slane %v7968, 1
      %v8008 = vsel %vm956, %v8006, %v8007
      %v8017 = vadd.f32 %v7933, %v7987
      %v8018 = vadd.f32 %v7934, %v7990
      %v8019 = vadd.f32 %v7935, %v7993
      %v8020 = vadd.f32 %v7936, %v7996
      %v8021 = vadd.f32 %v7937, %v7999
      %v8022 = vadd.f32 %v7938, %v8002
      %v8023 = vadd.f32 %v7939, %v8005
      %v8024 = vadd.f32 %v7940, %v8008
      %s8025 = scalar_lea.vmem %s2, 102
      %v8026 = vld [vmem:[%s8025] sm:$0x1]
      %8027 = vset.pattern.permute.xlu0 2
      %8028 = vperm.xlu0 %8027, %v5964
      %v8029 = vpop.permute.xlu0 %8028
      %v8032 = vlaneseq
      %v8033 = vshrl.u32 %v8032, 7
      %v8034 = vsub.s32 0, %v8033
      %v8035 = vrot.slane %v8026, %v8034
      %v8037 = vmul.f32 %v6097, %v8035
      %v8038 = vmul.f32 %v6441, %v8035
      %v8039 = vmul.f32 %v6101, %v8035
      %v8040 = vmul.f32 %v6445, %v8035
      %v8041 = vmul.f32 %v6105, %v8035
      %v8042 = vmul.f32 %v6449, %v8035
      %v8043 = vmul.f32 %v6109, %v8035
      %v8044 = vmul.f32 %v6453, %v8035
      %v8045 = vmul.f32 %v6113, %v8035
      %v8046 = vmul.f32 %v6457, %v8035
      %v8047 = vmul.f32 %v6117, %v8035
      %v8048 = vmul.f32 %v6461, %v8035
      %v8049 = vmul.f32 %v7034, %v8035
      %v8050 = vmul.f32 %v7259, %v8035
      %v8051 = vmul.f32 %v7804, %v8035
      %v8052 = vmul.f32 %v8029, %v8035
      %v8069 = vrot.slane %v8037, 1
      %v8070 = vrot.slane %v8038, 1
      %v8071 = vsel %vm956, %v8069, %v8070
      %v8072 = vrot.slane %v8039, 1
      %v8073 = vrot.slane %v8040, 1
      %v8074 = vsel %vm956, %v8072, %v8073
      %v8075 = vrot.slane %v8041, 1
      %v8076 = vrot.slane %v8042, 1
      %v8077 = vsel %vm956, %v8075, %v8076
      %v8078 = vrot.slane %v8043, 1
      %v8079 = vrot.slane %v8044, 1
      %v8080 = vsel %vm956, %v8078, %v8079
      %v8081 = vrot.slane %v8045, 1
      %v8082 = vrot.slane %v8046, 1
      %v8083 = vsel %vm956, %v8081, %v8082
      %v8084 = vrot.slane %v8047, 1
      %v8085 = vrot.slane %v8048, 1
      %v8086 = vsel %vm956, %v8084, %v8085
      %v8087 = vrot.slane %v8049, 1
      %v8088 = vrot.slane %v8050, 1
      %v8089 = vsel %vm956, %v8087, %v8088
      %v8090 = vrot.slane %v8051, 1
      %v8091 = vrot.slane %v8052, 1
      %v8092 = vsel %vm956, %v8090, %v8091
      %v8101 = vadd.f32 %v8017, %v8071
      %v8102 = vadd.f32 %v8018, %v8074
      %v8103 = vadd.f32 %v8019, %v8077
      %v8104 = vadd.f32 %v8020, %v8080
      %v8105 = vadd.f32 %v8021, %v8083
      %v8106 = vadd.f32 %v8022, %v8086
      %v8107 = vadd.f32 %v8023, %v8089
      %v8108 = vadd.f32 %v8024, %v8092
      %s8109 = scalar_lea.vmem %s2, 103
      %v8110 = vld [vmem:[%s8109] sm:$0x1]
      %8111 = vset.pattern.permute.xlu0 3
      %8112 = vperm.xlu0 %8111, %v5964
      %v8113 = vpop.permute.xlu0 %8112
      %v8116 = vlaneseq
      %v8117 = vshrl.u32 %v8116, 7
      %v8118 = vsub.s32 0, %v8117
      %v8119 = vrot.slane %v8110, %v8118
      %v8121 = vmul.f32 %v6153, %v8119
      %v8122 = vmul.f32 %v6553, %v8119
      %v8123 = vmul.f32 %v6157, %v8119
      %v8124 = vmul.f32 %v6557, %v8119
      %v8125 = vmul.f32 %v6161, %v8119
      %v8126 = vmul.f32 %v6561, %v8119
      %v8127 = vmul.f32 %v6165, %v8119
      %v8128 = vmul.f32 %v6565, %v8119
      %v8129 = vmul.f32 %v6169, %v8119
      %v8130 = vmul.f32 %v6569, %v8119
      %v8131 = vmul.f32 %v6173, %v8119
      %v8132 = vmul.f32 %v6573, %v8119
      %v8133 = vmul.f32 %v7062, %v8119
      %v8134 = vmul.f32 %v7343, %v8119
      %v8135 = vmul.f32 %v7832, %v8119
      %v8136 = vmul.f32 %v8113, %v8119
      %v8153 = vrot.slane %v8121, 1
      %v8154 = vrot.slane %v8122, 1
      %v8155 = vsel %vm956, %v8153, %v8154
      %v8156 = vrot.slane %v8123, 1
      %v8157 = vrot.slane %v8124, 1
      %v8158 = vsel %vm956, %v8156, %v8157
      %v8159 = vrot.slane %v8125, 1
      %v8160 = vrot.slane %v8126, 1
      %v8161 = vsel %vm956, %v8159, %v8160
      %v8162 = vrot.slane %v8127, 1
      %v8163 = vrot.slane %v8128, 1
      %v8164 = vsel %vm956, %v8162, %v8163
      %v8165 = vrot.slane %v8129, 1
      %v8166 = vrot.slane %v8130, 1
      %v8167 = vsel %vm956, %v8165, %v8166
      %v8168 = vrot.slane %v8131, 1
      %v8169 = vrot.slane %v8132, 1
      %v8170 = vsel %vm956, %v8168, %v8169
      %v8171 = vrot.slane %v8133, 1
      %v8172 = vrot.slane %v8134, 1
      %v8173 = vsel %vm956, %v8171, %v8172
      %v8174 = vrot.slane %v8135, 1
      %v8175 = vrot.slane %v8136, 1
      %v8176 = vsel %vm956, %v8174, %v8175
      %v8185 = vadd.f32 %v8101, %v8155
      %v8186 = vadd.f32 %v8102, %v8158
      %v8187 = vadd.f32 %v8103, %v8161
      %v8188 = vadd.f32 %v8104, %v8164
      %v8189 = vadd.f32 %v8105, %v8167
      %v8190 = vadd.f32 %v8106, %v8170
      %v8191 = vadd.f32 %v8107, %v8173
      %v8192 = vadd.f32 %v8108, %v8176
      %s8193 = scalar_lea.vmem %s2, 104
      %v8194 = vld [vmem:[%s8193] sm:$0x1]
      %v8196 = vlaneseq
      %v8197 = vshrl.u32 %v8196, 7
      %v8198 = vsub.s32 0, %v8197
      %v8199 = vrot.slane %v8194, %v8198
      %v8201 = vmul.f32 %v5980, %v8199
      %v8202 = vmul.f32 %v6212, %v8199
      %v8203 = vmul.f32 %v5985, %v8199
      %v8204 = vmul.f32 %v6217, %v8199
      %v8205 = vmul.f32 %v5990, %v8199
      %v8206 = vmul.f32 %v6222, %v8199
      %v8207 = vmul.f32 %v5995, %v8199
      %v8208 = vmul.f32 %v6227, %v8199
      %v8209 = vmul.f32 %v6000, %v8199
      %v8210 = vmul.f32 %v6232, %v8199
      %v8211 = vmul.f32 %v6005, %v8199
      %v8212 = vmul.f32 %v6237, %v8199
      %v8213 = vmul.f32 %v6978, %v8199
      %v8214 = vmul.f32 %v7091, %v8199
      %v8215 = vmul.f32 %v7748, %v8199
      %v8216 = vmul.f32 %v7861, %v8199
      %v8233 = vrot.slane %v8201, 2
      %v8234 = vrot.slane %v8202, 2
      %v8235 = vsel %vm1373, %v8233, %v8234
      %v8236 = vrot.slane %v8203, 2
      %v8237 = vrot.slane %v8204, 2
      %v8238 = vsel %vm1373, %v8236, %v8237
      %v8239 = vrot.slane %v8205, 2
      %v8240 = vrot.slane %v8206, 2
      %v8241 = vsel %vm1373, %v8239, %v8240
      %v8242 = vrot.slane %v8207, 2
      %v8243 = vrot.slane %v8208, 2
      %v8244 = vsel %vm1373, %v8242, %v8243
      %v8245 = vrot.slane %v8209, 2
      %v8246 = vrot.slane %v8210, 2
      %v8247 = vsel %vm1373, %v8245, %v8246
      %v8248 = vrot.slane %v8211, 2
      %v8249 = vrot.slane %v8212, 2
      %v8250 = vsel %vm1373, %v8248, %v8249
      %v8251 = vrot.slane %v8213, 2
      %v8252 = vrot.slane %v8214, 2
      %v8253 = vsel %vm1373, %v8251, %v8252
      %v8254 = vrot.slane %v8215, 2
      %v8255 = vrot.slane %v8216, 2
      %v8256 = vsel %vm1373, %v8254, %v8255
      %v8265 = vadd.f32 %v8185, %v8235
      %v8266 = vadd.f32 %v8186, %v8238
      %v8267 = vadd.f32 %v8187, %v8241
      %v8268 = vadd.f32 %v8188, %v8244
      %v8269 = vadd.f32 %v8189, %v8247
      %v8270 = vadd.f32 %v8190, %v8250
      %v8271 = vadd.f32 %v8191, %v8253
      %v8272 = vadd.f32 %v8192, %v8256
      %s8273 = scalar_lea.vmem %s2, 105
      %v8274 = vld [vmem:[%s8273] sm:$0x1]
      %v8276 = vlaneseq
      %v8277 = vshrl.u32 %v8276, 7
      %v8278 = vsub.s32 0, %v8277
      %v8279 = vrot.slane %v8274, %v8278
      %v8281 = vmul.f32 %v6041, %v8279
      %v8282 = vmul.f32 %v6329, %v8279
      %v8283 = vmul.f32 %v6045, %v8279
      %v8284 = vmul.f32 %v6333, %v8279
      %v8285 = vmul.f32 %v6049, %v8279
      %v8286 = vmul.f32 %v6337, %v8279
      %v8287 = vmul.f32 %v6053, %v8279
      %v8288 = vmul.f32 %v6341, %v8279
      %v8289 = vmul.f32 %v6057, %v8279
      %v8290 = vmul.f32 %v6345, %v8279
      %v8291 = vmul.f32 %v6061, %v8279
      %v8292 = vmul.f32 %v6349, %v8279
      %v8293 = vmul.f32 %v7006, %v8279
      %v8294 = vmul.f32 %v7175, %v8279
      %v8295 = vmul.f32 %v7776, %v8279
      %v8296 = vmul.f32 %v7945, %v8279
      %v8313 = vrot.slane %v8281, 2
      %v8314 = vrot.slane %v8282, 2
      %v8315 = vsel %vm1373, %v8313, %v8314
      %v8316 = vrot.slane %v8283, 2
      %v8317 = vrot.slane %v8284, 2
      %v8318 = vsel %vm1373, %v8316, %v8317
      %v8319 = vrot.slane %v8285, 2
      %v8320 = vrot.slane %v8286, 2
      %v8321 = vsel %vm1373, %v8319, %v8320
      %v8322 = vrot.slane %v8287, 2
      %v8323 = vrot.slane %v8288, 2
      %v8324 = vsel %vm1373, %v8322, %v8323
      %v8325 = vrot.slane %v8289, 2
      %v8326 = vrot.slane %v8290, 2
      %v8327 = vsel %vm1373, %v8325, %v8326
      %v8328 = vrot.slane %v8291, 2
      %v8329 = vrot.slane %v8292, 2
      %v8330 = vsel %vm1373, %v8328, %v8329
      %v8331 = vrot.slane %v8293, 2
      %v8332 = vrot.slane %v8294, 2
      %v8333 = vsel %vm1373, %v8331, %v8332
      %v8334 = vrot.slane %v8295, 2
      %v8335 = vrot.slane %v8296, 2
      %v8336 = vsel %vm1373, %v8334, %v8335
      %v8345 = vadd.f32 %v8265, %v8315
      %v8346 = vadd.f32 %v8266, %v8318
      %v8347 = vadd.f32 %v8267, %v8321
      %v8348 = vadd.f32 %v8268, %v8324
      %v8349 = vadd.f32 %v8269, %v8327
      %v8350 = vadd.f32 %v8270, %v8330
      %v8351 = vadd.f32 %v8271, %v8333
      %v8352 = vadd.f32 %v8272, %v8336
      %s8353 = scalar_lea.vmem %s2, 106
      %v8354 = vld [vmem:[%s8353] sm:$0x1]
      %v8356 = vlaneseq
      %v8357 = vshrl.u32 %v8356, 7
      %v8358 = vsub.s32 0, %v8357
      %v8359 = vrot.slane %v8354, %v8358
      %v8361 = vmul.f32 %v6097, %v8359
      %v8362 = vmul.f32 %v6441, %v8359
      %v8363 = vmul.f32 %v6101, %v8359
      %v8364 = vmul.f32 %v6445, %v8359
      %v8365 = vmul.f32 %v6105, %v8359
      %v8366 = vmul.f32 %v6449, %v8359
      %v8367 = vmul.f32 %v6109, %v8359
      %v8368 = vmul.f32 %v6453, %v8359
      %v8369 = vmul.f32 %v6113, %v8359
      %v8370 = vmul.f32 %v6457, %v8359
      %v8371 = vmul.f32 %v6117, %v8359
      %v8372 = vmul.f32 %v6461, %v8359
      %v8373 = vmul.f32 %v7034, %v8359
      %v8374 = vmul.f32 %v7259, %v8359
      %v8375 = vmul.f32 %v7804, %v8359
      %v8376 = vmul.f32 %v8029, %v8359
      %v8393 = vrot.slane %v8361, 2
      %v8394 = vrot.slane %v8362, 2
      %v8395 = vsel %vm1373, %v8393, %v8394
      %v8396 = vrot.slane %v8363, 2
      %v8397 = vrot.slane %v8364, 2
      %v8398 = vsel %vm1373, %v8396, %v8397
      %v8399 = vrot.slane %v8365, 2
      %v8400 = vrot.slane %v8366, 2
      %v8401 = vsel %vm1373, %v8399, %v8400
      %v8402 = vrot.slane %v8367, 2
      %v8403 = vrot.slane %v8368, 2
      %v8404 = vsel %vm1373, %v8402, %v8403
      %v8405 = vrot.slane %v8369, 2
      %v8406 = vrot.slane %v8370, 2
      %v8407 = vsel %vm1373, %v8405, %v8406
      %v8408 = vrot.slane %v8371, 2
      %v8409 = vrot.slane %v8372, 2
      %v8410 = vsel %vm1373, %v8408, %v8409
      %v8411 = vrot.slane %v8373, 2
      %v8412 = vrot.slane %v8374, 2
      %v8413 = vsel %vm1373, %v8411, %v8412
      %v8414 = vrot.slane %v8375, 2
      %v8415 = vrot.slane %v8376, 2
      %v8416 = vsel %vm1373, %v8414, %v8415
      %v8425 = vadd.f32 %v8345, %v8395
      %v8426 = vadd.f32 %v8346, %v8398
      %v8427 = vadd.f32 %v8347, %v8401
      %v8428 = vadd.f32 %v8348, %v8404
      %v8429 = vadd.f32 %v8349, %v8407
      %v8430 = vadd.f32 %v8350, %v8410
      %v8431 = vadd.f32 %v8351, %v8413
      %v8432 = vadd.f32 %v8352, %v8416
      %s8433 = scalar_lea.vmem %s2, 107
      %v8434 = vld [vmem:[%s8433] sm:$0x1]
      %v8436 = vlaneseq
      %v8437 = vshrl.u32 %v8436, 7
      %v8438 = vsub.s32 0, %v8437
      %v8439 = vrot.slane %v8434, %v8438
      %v8441 = vmul.f32 %v6153, %v8439
      %v8442 = vmul.f32 %v6553, %v8439
      %v8443 = vmul.f32 %v6157, %v8439
      %v8444 = vmul.f32 %v6557, %v8439
      %v8445 = vmul.f32 %v6161, %v8439
      %v8446 = vmul.f32 %v6561, %v8439
      %v8447 = vmul.f32 %v6165, %v8439
      %v8448 = vmul.f32 %v6565, %v8439
      %v8449 = vmul.f32 %v6169, %v8439
      %v8450 = vmul.f32 %v6569, %v8439
      %v8451 = vmul.f32 %v6173, %v8439
      %v8452 = vmul.f32 %v6573, %v8439
      %v8453 = vmul.f32 %v7062, %v8439
      %v8454 = vmul.f32 %v7343, %v8439
      %v8455 = vmul.f32 %v7832, %v8439
      %v8456 = vmul.f32 %v8113, %v8439
      %v8473 = vrot.slane %v8441, 2
      %v8474 = vrot.slane %v8442, 2
      %v8475 = vsel %vm1373, %v8473, %v8474
      %v8476 = vrot.slane %v8443, 2
      %v8477 = vrot.slane %v8444, 2
      %v8478 = vsel %vm1373, %v8476, %v8477
      %v8479 = vrot.slane %v8445, 2
      %v8480 = vrot.slane %v8446, 2
      %v8481 = vsel %vm1373, %v8479, %v8480
      %v8482 = vrot.slane %v8447, 2
      %v8483 = vrot.slane %v8448, 2
      %v8484 = vsel %vm1373, %v8482, %v8483
      %v8485 = vrot.slane %v8449, 2
      %v8486 = vrot.slane %v8450, 2
      %v8487 = vsel %vm1373, %v8485, %v8486
      %v8488 = vrot.slane %v8451, 2
      %v8489 = vrot.slane %v8452, 2
      %v8490 = vsel %vm1373, %v8488, %v8489
      %v8491 = vrot.slane %v8453, 2
      %v8492 = vrot.slane %v8454, 2
      %v8493 = vsel %vm1373, %v8491, %v8492
      %v8494 = vrot.slane %v8455, 2
      %v8495 = vrot.slane %v8456, 2
      %v8496 = vsel %vm1373, %v8494, %v8495
      %v8505 = vadd.f32 %v8425, %v8475
      %v8506 = vadd.f32 %v8426, %v8478
      %v8507 = vadd.f32 %v8427, %v8481
      %v8508 = vadd.f32 %v8428, %v8484
      %v8509 = vadd.f32 %v8429, %v8487
      %v8510 = vadd.f32 %v8430, %v8490
      %v8511 = vadd.f32 %v8431, %v8493
      %v8512 = vadd.f32 %v8432, %v8496
      %vm8513 = vcmask 31744
      %8514 = vst.msk [vmem:[%s471] sm:$0xff] %vm8513, %v8505
      %8515 = vst.msk [vmem:[%s471 + $0x8] sm:$0xff] %vm8513, %v8506
      %8516 = vst.msk [vmem:[%s471 + $0x10] sm:$0xff] %vm8513, %v8507
      %8517 = vst.msk [vmem:[%s471 + $0x18] sm:$0xff] %vm8513, %v8508
      %8518 = vst.msk [vmem:[%s471 + $0x20] sm:$0xff] %vm8513, %v8509
      %8519 = vst.msk [vmem:[%s471 + $0x28] sm:$0xff] %vm8513, %v8510
      %8520 = vst.msk [vmem:[%s471 + $0x30] sm:$0xff] %vm8513, %v8511
      %8521 = vst.msk [vmem:[%s471 + $0x38] sm:$0xff] %vm8513, %v8512
      %v8522 = vsel %vm8513, %v8505, 0.0
      %v8523 = vsel %vm8513, %v8506, 0.0
      %v8524 = vadd.f32 %v8522, %v8523
      %v8525 = vsel %vm8513, %v8507, 0.0
      %v8526 = vadd.f32 %v8524, %v8525
      %v8527 = vsel %vm8513, %v8508, 0.0
      %v8528 = vadd.f32 %v8526, %v8527
      %v8529 = vsel %vm8513, %v8509, 0.0
      %v8530 = vadd.f32 %v8528, %v8529
      %v8531 = vsel %vm8513, %v8510, 0.0
      %v8532 = vadd.f32 %v8530, %v8531
      %v8533 = vsel %vm8513, %v8511, 0.0
      %v8534 = vadd.f32 %v8532, %v8533
      %v8535 = vsel %vm8513, %v8512, 0.0
      %v8536 = vadd.f32 %v8534, %v8535
      %v8537 = vsel %vm8513, %v8536, 0.0
      %v8538 = vrot.slane %v8537, 4
      %v8539 = vadd.f32 %v8537, %v8538
      %v8540 = vrot.slane %v8539, 2
      %v8541 = vadd.f32 %v8539, %v8540
      %v8542 = vrot.slane %v8541, 1
      %v8543 = vadd.f32 %v8541, %v8542
      %vm8544 = vcmask 24576
      %8545 = vst.msk [vmem:[%s478] sm:$0x1] %vm8544, %v8543
      %v8546 = vmul.f32 %v8505, %v8505
      %v8547 = vmul.f32 %v8506, %v8506
      %v8548 = vmul.f32 %v8507, %v8507
      %v8549 = vmul.f32 %v8508, %v8508
      %v8550 = vmul.f32 %v8509, %v8509
      %v8551 = vmul.f32 %v8510, %v8510
      %v8552 = vmul.f32 %v8511, %v8511
      %v8553 = vmul.f32 %v8512, %v8512
      %v8554 = vsel %vm8513, %v8546, 0.0
      %v8555 = vsel %vm8513, %v8547, 0.0
      %v8556 = vadd.f32 %v8554, %v8555
      %v8557 = vsel %vm8513, %v8548, 0.0
      %v8558 = vadd.f32 %v8556, %v8557
      %v8559 = vsel %vm8513, %v8549, 0.0
      %v8560 = vadd.f32 %v8558, %v8559
      %v8561 = vsel %vm8513, %v8550, 0.0
      %v8562 = vadd.f32 %v8560, %v8561
      %v8563 = vsel %vm8513, %v8551, 0.0
      %v8564 = vadd.f32 %v8562, %v8563
      %v8565 = vsel %vm8513, %v8552, 0.0
      %v8566 = vadd.f32 %v8564, %v8565
      %v8567 = vsel %vm8513, %v8553, 0.0
      %v8568 = vadd.f32 %v8566, %v8567
      %v8569 = vsel %vm8513, %v8568, 0.0
      %v8570 = vrot.slane %v8569, 4
      %v8571 = vadd.f32 %v8569, %v8570
      %v8572 = vrot.slane %v8571, 2
      %v8573 = vadd.f32 %v8571, %v8572
      %v8574 = vrot.slane %v8573, 1
      %v8575 = vadd.f32 %v8573, %v8574
      %8576 = vst.msk [vmem:[%s485] sm:$0x1] %vm8544, %v8575
      %s8577 = smul.u32 %s25, 4
      %s8578 = sadd.s32 %s8577, %s26
      %p8579 = scmp.lt.s32.totalorder %s8578, 7
      %s8580 = scalar_select %p8579, %s8578, 7
      %s8581 = smul.addr %s8580, 8
      %s8582 = smul.addr %s8581, 8
      %s8583 = scalar_lea.vmem %s7, %s8582
      %s8584 = smul.u32 %s25, 4
      %s8585 = sadd.s32 %s8584, %s26
      %p8586 = scmp.lt.s32.totalorder %s8585, 7
      %s8587 = scalar_select %p8586, %s8585, 7
      %s8588 = scalar_lea.vmem %s8, %s8587
      %s8589 = smul.u32 %s25, 4
      %s8590 = sadd.s32 %s8589, %s26
      %p8591 = scmp.lt.s32.totalorder %s8590, 7
      %s8592 = scalar_select %p8591, %s8590, 7
      %s8593 = scalar_lea.vmem %s9, %s8592
      // Predicated region
      $region49: #{bottleneck_forward.5} parent=47 // pred_check
        %p8594 = pneg %p233
      $region50: #{bottleneck_forward.5} parent=47 // pred_check_branch
        %8596 = sbr.rel (%p8594) target = $region52
      $region51: #{bottleneck_forward.5} parent=47 // pred_region
        %s8597 = smul.u32 %s25, 4
        %s8598 = sadd.s32 %s8597, %s26
      $region52: #{bottleneck_forward.5} parent=47 // pred_fallthru
        _
      // Predicated region
      $region53: #{bottleneck_forward.5} parent=47 // pred_check
        %p8599 = pneg %p263
      $region54: #{bottleneck_forward.5} parent=47 // pred_check_branch
        %8601 = sbr.rel (%p8599) target = $region56
      $region55: #{bottleneck_forward.5} parent=47 // pred_region
        %s8602 = smul.u32 %s25, 4
        %s8603 = sadd.s32 %s8602, %s26
      $region56: #{bottleneck_forward.5} parent=47 // pred_fallthru
        _
      // Predicated region
      $region57: #{bottleneck_forward.5} parent=47 // pred_check
        %p8604 = pneg %p293
      $region58: #{bottleneck_forward.5} parent=47 // pred_check_branch
        %8606 = sbr.rel (%p8604) target = $region60
      $region59: #{bottleneck_forward.5} parent=47 // pred_region
        %s8607 = smul.u32 %s25, 4
        %s8608 = sadd.s32 %s8607, %s26
      $region60: #{bottleneck_forward.5} parent=47 // pred_fallthru
        _
    $region48: #{bottleneck_forward.5} parent=5 // pred_fallthru
      _
    %p8609 = scmp.le.s32.totalorder 2, %s16
    // Predicated region
    $region61: #{bottleneck_forward.5} parent=5 // pred_check
      %p8610 = pneg %p8609
    $region62: #{bottleneck_forward.5} parent=5 // pred_check_branch
      %8612 = sbr.rel (%p8610) target = $region64
    $region63: #{bottleneck_forward.5} parent=5 // pred_region
      %s8613 = ssub.s32 %s16, 2
      // Predicated region
      $region65: #{bottleneck_forward.5} parent=63 // pred_check
        %p8614 = pneg %p239
      $region66: #{bottleneck_forward.5} parent=63 // pred_check_branch
        %8616 = sbr.rel (%p8614) target = $region68
      $region67: #{bottleneck_forward.5} parent=63 // pred_region
        %s8617 = smul.u32 %s27, 4
        %s8618 = sadd.s32 %s8617, %s28
        %p8619 = scmp.lt.s32.totalorder %s8618, 7
        %s8620 = scalar_select %p8619, %s8618, 7
        %s8621 = smul.addr %s8620, 8
        %s8622 = smul.addr %s8621, 8
        %s8623 = scalar_lea.vmem %s7, %s8622
      $region68: #{bottleneck_forward.5} parent=63 // pred_fallthru
        _
      // Predicated region
      $region69: #{bottleneck_forward.5} parent=63 // pred_check
        %p8624 = pneg %p269
      $region70: #{bottleneck_forward.5} parent=63 // pred_check_branch
        %8626 = sbr.rel (%p8624) target = $region72
      $region71: #{bottleneck_forward.5} parent=63 // pred_region
        %s8627 = smul.u32 %s27, 4
        %s8628 = sadd.s32 %s8627, %s28
        %p8629 = scmp.lt.s32.totalorder %s8628, 7
        %s8630 = scalar_select %p8629, %s8628, 7
        %s8631 = scalar_lea.vmem %s8, %s8630
      $region72: #{bottleneck_forward.5} parent=63 // pred_fallthru
        _
      // Predicated region
      $region73: #{bottleneck_forward.5} parent=63 // pred_check
        %p8632 = pneg %p299
      $region74: #{bottleneck_forward.5} parent=63 // pred_check_branch
        %8634 = sbr.rel (%p8632) target = $region76
      $region75: #{bottleneck_forward.5} parent=63 // pred_region
        %s8635 = smul.u32 %s27, 4
        %s8636 = sadd.s32 %s8635, %s28
        %p8637 = scmp.lt.s32.totalorder %s8636, 7
        %s8638 = scalar_select %p8637, %s8636, 7
        %s8639 = scalar_lea.vmem %s9, %s8638
      $region76: #{bottleneck_forward.5} parent=63 // pred_fallthru
        _
    $region64: #{bottleneck_forward.5} parent=5 // pred_fallthru
      _
  $region6: #{bottleneck_forward.5} parent=0 // loop_footer
    %s20 = sadd.s32 1, %s16
  $region7: #{bottleneck_forward.5} parent=0 // loop_footer_branch
    %15 = sbr.rel target = $region3
  $region8: #{bottleneck_forward.5} parent=0 // loop_exit
    _

</llo_original>
